<compile_context>
chip_gen: v7x
topology: tpu7x:2x2x1
jax: 0.10.0
libtpu: 0.0.40
codegen_flags: <defaults>
</compile_context>

<pallas_src>
import functools

import jax
import jax.numpy as jnp
from jax.experimental import pallas as pl
from jax.experimental.pallas import tpu as pltpu

LANE = 128
_VMEM_LIMIT = 32 * 1024 * 1024  # explicit scoped-VMEM request (safe on v5e/v6e/v7x)


def _round_up(x, m):
    return (x + m - 1) // m * m


def _pick_m_tile(m8):
    """M-tile: multiple of 16 (bf16 sublane packing), <=512, prefer >=2 tiles so
    the 'parallel' grid axis can shard across TensorCores (v7x megacore)."""
    if m8 >= 1024:
        return 512
    half = m8 // 2
    if half >= 16 and half % 16 == 0:
        return half
    return m8


# ---------------------------------------------------------------------------
# Pallas kernels
# ---------------------------------------------------------------------------
def _make_conv_kernel(apply_relu: bool, has_residual: bool):
    """One M-tile of conv-as-single-GEMM + folded-BN (+residual)(+ReLU)."""

    def kernel(*refs):
        if has_residual:
            p_ref, w_ref, s_ref, b_ref, r_ref, o_ref = refs
        else:
            p_ref, w_ref, s_ref, b_ref, o_ref = refs
        # (tile_m, k*k*Cin) bf16 @ (k*k*Cin, Cpad) bf16 -> f32 on the MXU.
        acc = jnp.dot(p_ref[...], w_ref[...], preferred_element_type=jnp.float32)
        y = acc * s_ref[...] + b_ref[...]            # folded BatchNorm (f32 epilogue)
        if has_residual:
            y = y + r_ref[...].astype(jnp.float32)
        if apply_relu:
            y = jnp.maximum(y, 0.0)
        o_ref[...] = y.astype(o_ref.dtype)

    return kernel


def _pool_linear_kernel(f_ref, w_ref, b_ref, o_ref):
    """Global average pool over spatial dim + Linear layer (lane-padded)."""
    pooled = jnp.mean(f_ref[...].astype(jnp.float32), axis=1)      # (N, Cpad)
    o_ref[...] = (
        jnp.dot(pooled, w_ref[...], preferred_element_type=jnp.float32)
        + b_ref[...]
    )


# ---------------------------------------------------------------------------
# Wrappers around pallas_call
# ---------------------------------------------------------------------------
def conv_bn_act(x, w, scale, bias, *, stride=1, pad=0, relu=True, residual=None):
    """x: (N, H, W, Cx>=Cin) [bf16/f32, channel-padded]; w: (k, k, Cin, Cout)."""
    N, H, W, _ = x.shape
    k, _, Cin, Cout = w.shape
    H_out = (H + 2 * pad - k) // stride + 1
    W_out = (W + 2 * pad - k) // stride + 1
    M = N * H_out * W_out
    K = k * k * Cin
    CPAD = _round_up(Cout, LANE)

    # --- JAX glue: im2col with the taps folded into the contraction dim -----
    xs = x[..., :Cin].astype(jnp.bfloat16)
    xp = jnp.pad(xs, ((0, 0), (pad, pad), (pad, pad), (0, 0)))
    taps = []
    for ky in range(k):
        for kx in range(k):
            taps.append(
                xp[
                    :,
                    ky : ky + (H_out - 1) * stride + 1 : stride,
                    kx : kx + (W_out - 1) * stride + 1 : stride,
                    :,
                ]
            )
    patches = jnp.stack(taps, axis=3).reshape(M, K)          # (M, k*k*Cin) bf16

    tile_m = _pick_m_tile(_round_up(M, 8))
    M_pad = _round_up(M, tile_m)
    if M_pad != M:
        patches = jnp.pad(patches, ((0, M_pad - M), (0, 0)))

    w2 = jnp.pad(w.reshape(K, Cout), ((0, 0), (0, CPAD - Cout))).astype(jnp.bfloat16)
    s2 = jnp.pad(scale, (0, CPAD - Cout)).reshape(1, CPAD).astype(jnp.float32)
    b2 = jnp.pad(bias, (0, CPAD - Cout)).reshape(1, CPAD).astype(jnp.float32)

    inputs = [patches, w2, s2, b2]
    in_specs = [
        pl.BlockSpec((tile_m, K), lambda i: (i, 0)),          # per-M-tile patches
        pl.BlockSpec((K, CPAD), lambda i: (0, 0)),            # weight resident
        pl.BlockSpec((1, CPAD), lambda i: (0, 0)),            # BN scale
        pl.BlockSpec((1, CPAD), lambda i: (0, 0)),            # BN bias
    ]
    if residual is not None:
        r = residual.reshape(M, -1).astype(jnp.bfloat16)      # already CPAD channels
        if M_pad != M:
            r = jnp.pad(r, ((0, M_pad - M), (0, 0)))
        inputs.append(r)
        in_specs.append(pl.BlockSpec((tile_m, CPAD), lambda i: (i, 0)))

    out = pl.pallas_call(
        _make_conv_kernel(relu, residual is not None),
        out_shape=jax.ShapeDtypeStruct((M_pad, CPAD), jnp.bfloat16),
        grid_spec=pltpu.PrefetchScalarGridSpec(
            num_scalar_prefetch=0,
            grid=(M_pad // tile_m,),
            in_specs=in_specs,
            out_specs=pl.BlockSpec((tile_m, CPAD), lambda i: (i, 0)),
        ),
        compiler_params=pltpu.CompilerParams(
            dimension_semantics=("parallel",),
            vmem_limit_bytes=_VMEM_LIMIT,
        ),
    )(*inputs)
    return out[:M].reshape(N, H_out, W_out, CPAD)


def pool_linear(feat, w, b):
    """feat: (N, H, W, Cpad) bf16;  F.avg_pool2d(out, W) + flatten + Linear."""
    N, H, W, CPAD = feat.shape
    Cfeat, num_classes = w.shape
    NCPAD = _round_up(num_classes, LANE)
    f2 = feat.reshape(N, H * W, CPAD)
    w2 = jnp.pad(w, ((0, CPAD - Cfeat), (0, NCPAD - num_classes))).astype(jnp.float32)
    b2 = jnp.pad(b, (0, NCPAD - num_classes)).reshape(1, NCPAD).astype(jnp.float32)

    out = pl.pallas_call(
        _pool_linear_kernel,
        out_shape=jax.ShapeDtypeStruct((N, NCPAD), jnp.float32),
        grid_spec=pltpu.PrefetchScalarGridSpec(
            num_scalar_prefetch=0,
            grid=(1,),
            in_specs=[
                pl.BlockSpec((N, H * W, CPAD), lambda i: (0, 0, 0)),
                pl.BlockSpec((CPAD, NCPAD), lambda i: (0, 0)),
                pl.BlockSpec((1, NCPAD), lambda i: (0, 0)),
            ],
            out_specs=pl.BlockSpec((N, NCPAD), lambda i: (0, 0)),
        ),
        compiler_params=pltpu.CompilerParams(
            dimension_semantics=("arbitrary",),
            vmem_limit_bytes=_VMEM_LIMIT,
        ),
    )(f2, w2, b2)
    return out[:, :num_classes]


# ---------------------------------------------------------------------------
# Parameter initialization (deterministic, synthetic)
# ---------------------------------------------------------------------------
def _fold_bn(gamma, beta, mean, var, conv_bias=None, eps=1e-5):
    scale = gamma / jnp.sqrt(var + eps)
    bias = beta - mean * scale
    if conv_bias is not None:
        bias = bias + conv_bias * scale
    return scale, bias


def _conv_bn_params(key, k, cin, cout, conv_bias=False):
    ks = jax.random.split(key, 6)
    w = 0.1 * jax.random.normal(ks[0], (k, k, cin, cout), jnp.float32)
    gamma = 1.0 + 0.1 * jax.random.normal(ks[1], (cout,), jnp.float32)
    beta = 0.1 * jax.random.normal(ks[2], (cout,), jnp.float32)
    mean = 0.1 * jax.random.normal(ks[3], (cout,), jnp.float32)
    var = 1.0 + 0.1 * jnp.abs(jax.random.normal(ks[4], (cout,), jnp.float32))
    cb = (
        0.1 * jax.random.normal(ks[5], (cout,), jnp.float32)
        if conv_bias
        else None
    )
    scale, bias = _fold_bn(gamma, beta, mean, var, cb)
    return {"w": w, "scale": scale, "bias": bias}


def init_params(key, num_blocks=(1, 1, 1), width_scaler=1, num_classes=10):
    params = {}
    key, k0 = jax.random.split(key)
    in_planes = 16 * width_scaler
    # conv1: Conv2d(3, 16*w, 3, s=1, p=1, bias=True) + BN + ReLU
    params["conv1"] = _conv_bn_params(k0, 3, 3, in_planes, conv_bias=True)

    blocks = []
    stage_cfg = [
        (16 * width_scaler, num_blocks[0], 1),
        (32 * width_scaler, num_blocks[1], 2),
        (64 * width_scaler, num_blocks[2], 2),
    ]
    for planes, nb, stride0 in stage_cfg:
        strides = [stride0] + [1] * (nb - 1)
        for s in strides:
            key, k1, k2, k3 = jax.random.split(key, 4)
            blk = {
                "stride": s,
                "c1": _conv_bn_params(k1, 3, in_planes, planes),
                "c2": _conv_bn_params(k2, 3, planes, planes),
            }
            if s != 1 or in_planes != planes:
                blk["sc"] = _conv_bn_params(k3, 1, in_planes, planes)
            blocks.append(blk)
            in_planes = planes
    params["blocks"] = blocks

    key, kl, kb = jax.random.split(key, 3)
    params["linear_w"] = 0.1 * jax.random.normal(
        kl, (64 * width_scaler, num_classes), jnp.float32
    )
    params["linear_b"] = 0.1 * jax.random.normal(
        kb, (num_classes,), jnp.float32
    )
    return params


# ---------------------------------------------------------------------------
# Forward pass
# ---------------------------------------------------------------------------
def _basic_block(x, p):
    stride = p["stride"]
    out = conv_bn_act(
        x, p["c1"]["w"], p["c1"]["scale"], p["c1"]["bias"],
        stride=stride, pad=1, relu=True,
    )
    if "sc" in p:
        shortcut = conv_bn_act(
            x, p["sc"]["w"], p["sc"]["scale"], p["sc"]["bias"],
            stride=stride, pad=0, relu=False,
        )
    else:
        shortcut = x
    out = conv_bn_act(
        out, p["c2"]["w"], p["c2"]["scale"], p["c2"]["bias"],
        stride=1, pad=1, relu=True, residual=shortcut,
    )
    return out


def shrinknet_forward(x_nchw, params):
    # PyTorch input is NCHW; convert to NHWC for the TPU kernels.
    x = jnp.transpose(x_nchw, (0, 2, 3, 1))
    p = params["conv1"]
    out = conv_bn_act(x, p["w"], p["scale"], p["bias"], stride=1, pad=1, relu=True)
    for blk in params["blocks"]:
        out = _basic_block(out, blk)
    logits = pool_linear(out, params["linear_w"], params["linear_b"])
    return logits


# ---------------------------------------------------------------------------
if __name__ == "__main__":
    key = jax.random.PRNGKey(0)
    kp, kx = jax.random.split(key)

    params = init_params(kp, num_blocks=(1, 1, 1), width_scaler=1, num_classes=10)
    x = jax.random.normal(kx, (2, 3, 16, 16), jnp.float32)  # small NCHW input

    fwd = jax.jit(functools.partial(shrinknet_forward, params=params))
    out = fwd(x)
    jax.block_until_ready(out)

    assert out.shape == (2, 10), out.shape
    assert bool(jnp.all(jnp.isfinite(out)))
    print("KERNEL_OK")
</pallas_src>

<mosaic_0001>
module attributes {stable_mosaic.version = 11 : i64} {
  func.func @kernel(%arg0: i32, %arg1: memref<256x27xbf16, #tpu.memory_space<vmem>>, %arg2: memref<27x128xbf16, #tpu.memory_space<vmem>>, %arg3: memref<1x128xf32, #tpu.memory_space<vmem>>, %arg4: memref<1x128xf32, #tpu.memory_space<vmem>>, %arg5: memref<256x128xbf16, #tpu.memory_space<vmem>>) attributes {dimension_semantics = [#tpu.dimension_semantics<parallel>], iteration_bounds = array<i64: 2>, scalar_prefetch = 0 : i64, scratch_operands = 0 : i64, tpu.core_type = #tpu.core_type<tc>, window_params = [{transform_indices = @transform_0, window_bounds = array<i64: 256, 27>}, {pipeline_mode = #tpu.pipeline_mode<synchronous>, transform_indices = @transform_1, window_bounds = array<i64: 27, 128>}, {pipeline_mode = #tpu.pipeline_mode<synchronous>, transform_indices = @transform_2, window_bounds = array<i64: 1, 128>}, {pipeline_mode = #tpu.pipeline_mode<synchronous>, transform_indices = @transform_3, window_bounds = array<i64: 1, 128>}, {transform_indices = @transform_4, window_bounds = array<i64: 256, 128>}]} {
    %c0 = arith.constant 0 : index
    %c0_0 = arith.constant 0 : index
    %0 = vector.load %arg1[%c0, %c0_0] : memref<256x27xbf16, #tpu.memory_space<vmem>>, vector<256x27xbf16>
    %c0_1 = arith.constant 0 : index
    %c0_2 = arith.constant 0 : index
    %1 = vector.load %arg2[%c0_1, %c0_2] : memref<27x128xbf16, #tpu.memory_space<vmem>>, vector<27x128xbf16>
    %cst = arith.constant dense<0.000000e+00> : vector<256x128xf32>
    %2 = tpu.matmul %0, %1, %cst {dimension_numbers = #tpu.dot_dimension_numbers<[1], [0], [0], [1], [0, 0, 1, 1], [], []>} : vector<256x27xbf16>, vector<27x128xbf16>, vector<256x128xf32> -> vector<256x128xf32>
    %c0_3 = arith.constant 0 : index
    %c0_4 = arith.constant 0 : index
    %3 = vector.load %arg3[%c0_3, %c0_4] : memref<1x128xf32, #tpu.memory_space<vmem>>, vector<1x128xf32>
    %4 = vector.broadcast %3 : vector<1x128xf32> to vector<256x128xf32>
    %5 = arith.mulf %2, %4 : vector<256x128xf32>
    %c0_5 = arith.constant 0 : index
    %c0_6 = arith.constant 0 : index
    %6 = vector.load %arg4[%c0_5, %c0_6] : memref<1x128xf32, #tpu.memory_space<vmem>>, vector<1x128xf32>
    %7 = vector.broadcast %6 : vector<1x128xf32> to vector<256x128xf32>
    %8 = arith.addf %5, %7 : vector<256x128xf32>
    %cst_7 = arith.constant 0.000000e+00 : f32
    %9 = vector.broadcast %cst_7 : f32 to vector<256x128xf32>
    %10 = arith.maximumf %8, %9 : vector<256x128xf32>
    %11 = arith.truncf %10 : vector<256x128xf32> to vector<256x128xbf16>
    %c0_8 = arith.constant 0 : index
    %c0_9 = arith.constant 0 : index
    %12 = vector.load %arg5[%c0_8, %c0_9] : memref<256x128xbf16, #tpu.memory_space<vmem>>, vector<256x128xbf16>
    tpu.vector_store %arg5[%c0_8, %c0_9], %11 {strides = array<i32>} : memref<256x128xbf16, #tpu.memory_space<vmem>>, vector<256x128xbf16>,
    return
  }
  func.func @transform_0(%arg0: i32) -> (i32, i32) {
    %c0_i32 = arith.constant 0 : i32
    %c0_i32_0 = arith.constant 0 : i32
    return %arg0, %c0_i32 : i32, i32
  }
  func.func @transform_1(%arg0: i32) -> (i32, i32) {
    %c0_i32 = arith.constant 0 : i32
    %c0_i32_0 = arith.constant 0 : i32
    %c0_i32_1 = arith.constant 0 : i32
    return %c0_i32, %c0_i32_0 : i32, i32
  }
  func.func @transform_2(%arg0: i32) -> (i32, i32) {
    %c0_i32 = arith.constant 0 : i32
    %c0_i32_0 = arith.constant 0 : i32
    %c0_i32_1 = arith.constant 0 : i32
    return %c0_i32, %c0_i32_0 : i32, i32
  }
  func.func @transform_3(%arg0: i32) -> (i32, i32) {
    %c0_i32 = arith.constant 0 : i32
    %c0_i32_0 = arith.constant 0 : i32
    %c0_i32_1 = arith.constant 0 : i32
    return %c0_i32, %c0_i32_0 : i32, i32
  }
  func.func @transform_4(%arg0: i32) -> (i32, i32) {
    %c0_i32 = arith.constant 0 : i32
    %c0_i32_0 = arith.constant 0 : i32
    return %arg0, %c0_i32 : i32, i32
  }
}

module attributes {stable_mosaic.version = 11 : i64} {
  func.func @kernel(%arg0: i32, %arg1: memref<256x144xbf16, #tpu.memory_space<vmem>>, %arg2: memref<144x128xbf16, #tpu.memory_space<vmem>>, %arg3: memref<1x128xf32, #tpu.memory_space<vmem>>, %arg4: memref<1x128xf32, #tpu.memory_space<vmem>>, %arg5: memref<256x128xbf16, #tpu.memory_space<vmem>>) attributes {dimension_semantics = [#tpu.dimension_semantics<parallel>], iteration_bounds = array<i64: 2>, scalar_prefetch = 0 : i64, scratch_operands = 0 : i64, tpu.core_type = #tpu.core_type<tc>, window_params = [{transform_indices = @transform_0, window_bounds = array<i64: 256, 144>}, {pipeline_mode = #tpu.pipeline_mode<synchronous>, transform_indices = @transform_1, window_bounds = array<i64: 144, 128>}, {pipeline_mode = #tpu.pipeline_mode<synchronous>, transform_indices = @transform_2, window_bounds = array<i64: 1, 128>}, {pipeline_mode = #tpu.pipeline_mode<synchronous>, transform_indices = @transform_3, window_bounds = array<i64: 1, 128>}, {transform_indices = @transform_4, window_bounds = array<i64: 256, 128>}]} {
    %c0 = arith.constant 0 : index
    %c0_0 = arith.constant 0 : index
    %0 = vector.load %arg1[%c0, %c0_0] : memref<256x144xbf16, #tpu.memory_space<vmem>>, vector<256x144xbf16>
    %c0_1 = arith.constant 0 : index
    %c0_2 = arith.constant 0 : index
    %1 = vector.load %arg2[%c0_1, %c0_2] : memref<144x128xbf16, #tpu.memory_space<vmem>>, vector<144x128xbf16>
    %cst = arith.constant dense<0.000000e+00> : vector<256x128xf32>
    %2 = tpu.matmul %0, %1, %cst {dimension_numbers = #tpu.dot_dimension_numbers<[1], [0], [0], [1], [0, 0, 1, 1], [], []>} : vector<256x144xbf16>, vector<144x128xbf16>, vector<256x128xf32> -> vector<256x128xf32>
    %c0_3 = arith.constant 0 : index
    %c0_4 = arith.constant 0 : index
    %3 = vector.load %arg3[%c0_3, %c0_4] : memref<1x128xf32, #tpu.memory_space<vmem>>, vector<1x128xf32>
    %4 = vector.broadcast %3 : vector<1x128xf32> to vector<256x128xf32>
    %5 = arith.mulf %2, %4 : vector<256x128xf32>
    %c0_5 = arith.constant 0 : index
    %c0_6 = arith.constant 0 : index
    %6 = vector.load %arg4[%c0_5, %c0_6] : memref<1x128xf32, #tpu.memory_space<vmem>>, vector<1x128xf32>
    %7 = vector.broadcast %6 : vector<1x128xf32> to vector<256x128xf32>
    %8 = arith.addf %5, %7 : vector<256x128xf32>
    %cst_7 = arith.constant 0.000000e+00 : f32
    %9 = vector.broadcast %cst_7 : f32 to vector<256x128xf32>
    %10 = arith.maximumf %8, %9 : vector<256x128xf32>
    %11 = arith.truncf %10 : vector<256x128xf32> to vector<256x128xbf16>
    %c0_8 = arith.constant 0 : index
    %c0_9 = arith.constant 0 : index
    %12 = vector.load %arg5[%c0_8, %c0_9] : memref<256x128xbf16, #tpu.memory_space<vmem>>, vector<256x128xbf16>
    tpu.vector_store %arg5[%c0_8, %c0_9], %11 {strides = array<i32>} : memref<256x128xbf16, #tpu.memory_space<vmem>>, vector<256x128xbf16>,
    return
  }
  func.func @transform_0(%arg0: i32) -> (i32, i32) {
    %c0_i32 = arith.constant 0 : i32
    %c0_i32_0 = arith.constant 0 : i32
    return %arg0, %c0_i32 : i32, i32
  }
  func.func @transform_1(%arg0: i32) -> (i32, i32) {
    %c0_i32 = arith.constant 0 : i32
    %c0_i32_0 = arith.constant 0 : i32
    %c0_i32_1 = arith.constant 0 : i32
    return %c0_i32, %c0_i32_0 : i32, i32
  }
  func.func @transform_2(%arg0: i32) -> (i32, i32) {
    %c0_i32 = arith.constant 0 : i32
    %c0_i32_0 = arith.constant 0 : i32
    %c0_i32_1 = arith.constant 0 : i32
    return %c0_i32, %c0_i32_0 : i32, i32
  }
  func.func @transform_3(%arg0: i32) -> (i32, i32) {
    %c0_i32 = arith.constant 0 : i32
    %c0_i32_0 = arith.constant 0 : i32
    %c0_i32_1 = arith.constant 0 : i32
    return %c0_i32, %c0_i32_0 : i32, i32
  }
  func.func @transform_4(%arg0: i32) -> (i32, i32) {
    %c0_i32 = arith.constant 0 : i32
    %c0_i32_0 = arith.constant 0 : i32
    return %arg0, %c0_i32 : i32, i32
  }
}

module attributes {stable_mosaic.version = 11 : i64} {
  func.func @kernel(%arg0: i32, %arg1: memref<256x144xbf16, #tpu.memory_space<vmem>>, %arg2: memref<144x128xbf16, #tpu.memory_space<vmem>>, %arg3: memref<1x128xf32, #tpu.memory_space<vmem>>, %arg4: memref<1x128xf32, #tpu.memory_space<vmem>>, %arg5: memref<256x128xbf16, #tpu.memory_space<vmem>>, %arg6: memref<256x128xbf16, #tpu.memory_space<vmem>>) attributes {dimension_semantics = [#tpu.dimension_semantics<parallel>], iteration_bounds = array<i64: 2>, scalar_prefetch = 0 : i64, scratch_operands = 0 : i64, tpu.core_type = #tpu.core_type<tc>, window_params = [{transform_indices = @transform_0, window_bounds = array<i64: 256, 144>}, {pipeline_mode = #tpu.pipeline_mode<synchronous>, transform_indices = @transform_1, window_bounds = array<i64: 144, 128>}, {pipeline_mode = #tpu.pipeline_mode<synchronous>, transform_indices = @transform_2, window_bounds = array<i64: 1, 128>}, {pipeline_mode = #tpu.pipeline_mode<synchronous>, transform_indices = @transform_3, window_bounds = array<i64: 1, 128>}, {transform_indices = @transform_4, window_bounds = array<i64: 256, 128>}, {transform_indices = @transform_5, window_bounds = array<i64: 256, 128>}]} {
    %c0 = arith.constant 0 : index
    %c0_0 = arith.constant 0 : index
    %0 = vector.load %arg1[%c0, %c0_0] : memref<256x144xbf16, #tpu.memory_space<vmem>>, vector<256x144xbf16>
    %c0_1 = arith.constant 0 : index
    %c0_2 = arith.constant 0 : index
    %1 = vector.load %arg2[%c0_1, %c0_2] : memref<144x128xbf16, #tpu.memory_space<vmem>>, vector<144x128xbf16>
    %cst = arith.constant dense<0.000000e+00> : vector<256x128xf32>
    %2 = tpu.matmul %0, %1, %cst {dimension_numbers = #tpu.dot_dimension_numbers<[1], [0], [0], [1], [0, 0, 1, 1], [], []>} : vector<256x144xbf16>, vector<144x128xbf16>, vector<256x128xf32> -> vector<256x128xf32>
    %c0_3 = arith.constant 0 : index
    %c0_4 = arith.constant 0 : index
    %3 = vector.load %arg3[%c0_3, %c0_4] : memref<1x128xf32, #tpu.memory_space<vmem>>, vector<1x128xf32>
    %4 = vector.broadcast %3 : vector<1x128xf32> to vector<256x128xf32>
    %5 = arith.mulf %2, %4 : vector<256x128xf32>
    %c0_5 = arith.constant 0 : index
    %c0_6 = arith.constant 0 : index
    %6 = vector.load %arg4[%c0_5, %c0_6] : memref<1x128xf32, #tpu.memory_space<vmem>>, vector<1x128xf32>
    %7 = vector.broadcast %6 : vector<1x128xf32> to vector<256x128xf32>
    %8 = arith.addf %5, %7 : vector<256x128xf32>
    %c0_7 = arith.constant 0 : index
    %c0_8 = arith.constant 0 : index
    %9 = vector.load %arg5[%c0_7, %c0_8] : memref<256x128xbf16, #tpu.memory_space<vmem>>, vector<256x128xbf16>
    %10 = arith.extf %9 : vector<256x128xbf16> to vector<256x128xf32>
    %11 = arith.addf %8, %10 : vector<256x128xf32>
    %cst_9 = arith.constant 0.000000e+00 : f32
    %12 = vector.broadcast %cst_9 : f32 to vector<256x128xf32>
    %13 = arith.maximumf %11, %12 : vector<256x128xf32>
    %14 = arith.truncf %13 : vector<256x128xf32> to vector<256x128xbf16>
    %c0_10 = arith.constant 0 : index
    %c0_11 = arith.constant 0 : index
    %15 = vector.load %arg6[%c0_10, %c0_11] : memref<256x128xbf16, #tpu.memory_space<vmem>>, vector<256x128xbf16>
    tpu.vector_store %arg6[%c0_10, %c0_11], %14 {strides = array<i32>} : memref<256x128xbf16, #tpu.memory_space<vmem>>, vector<256x128xbf16>,
    return
  }
  func.func @transform_0(%arg0: i32) -> (i32, i32) {
    %c0_i32 = arith.constant 0 : i32
    %c0_i32_0 = arith.constant 0 : i32
    return %arg0, %c0_i32 : i32, i32
  }
  func.func @transform_1(%arg0: i32) -> (i32, i32) {
    %c0_i32 = arith.constant 0 : i32
    %c0_i32_0 = arith.constant 0 : i32
    %c0_i32_1 = arith.constant 0 : i32
    return %c0_i32, %c0_i32_0 : i32, i32
  }
  func.func @transform_2(%arg0: i32) -> (i32, i32) {
    %c0_i32 = arith.constant 0 : i32
    %c0_i32_0 = arith.constant 0 : i32
    %c0_i32_1 = arith.constant 0 : i32
    return %c0_i32, %c0_i32_0 : i32, i32
  }
  func.func @transform_3(%arg0: i32) -> (i32, i32) {
    %c0_i32 = arith.constant 0 : i32
    %c0_i32_0 = arith.constant 0 : i32
    %c0_i32_1 = arith.constant 0 : i32
    return %c0_i32, %c0_i32_0 : i32, i32
  }
  func.func @transform_4(%arg0: i32) -> (i32, i32) {
    %c0_i32 = arith.constant 0 : i32
    %c0_i32_0 = arith.constant 0 : i32
    return %arg0, %c0_i32 : i32, i32
  }
  func.func @transform_5(%arg0: i32) -> (i32, i32) {
    %c0_i32 = arith.constant 0 : i32
    %c0_i32_0 = arith.constant 0 : i32
    return %arg0, %c0_i32 : i32, i32
  }
}

module attributes {stable_mosaic.version = 11 : i64} {
  func.func @kernel(%arg0: i32, %arg1: memref<64x16xbf16, #tpu.memory_space<vmem>>, %arg2: memref<16x128xbf16, #tpu.memory_space<vmem>>, %arg3: memref<1x128xf32, #tpu.memory_space<vmem>>, %arg4: memref<1x128xf32, #tpu.memory_space<vmem>>, %arg5: memref<64x128xbf16, #tpu.memory_space<vmem>>) attributes {dimension_semantics = [#tpu.dimension_semantics<parallel>], iteration_bounds = array<i64: 2>, scalar_prefetch = 0 : i64, scratch_operands = 0 : i64, tpu.core_type = #tpu.core_type<tc>, window_params = [{transform_indices = @transform_0, window_bounds = array<i64: 64, 16>}, {pipeline_mode = #tpu.pipeline_mode<synchronous>, transform_indices = @transform_1, window_bounds = array<i64: 16, 128>}, {pipeline_mode = #tpu.pipeline_mode<synchronous>, transform_indices = @transform_2, window_bounds = array<i64: 1, 128>}, {pipeline_mode = #tpu.pipeline_mode<synchronous>, transform_indices = @transform_3, window_bounds = array<i64: 1, 128>}, {transform_indices = @transform_4, window_bounds = array<i64: 64, 128>}]} {
    %c0 = arith.constant 0 : index
    %c0_0 = arith.constant 0 : index
    %0 = vector.load %arg1[%c0, %c0_0] : memref<64x16xbf16, #tpu.memory_space<vmem>>, vector<64x16xbf16>
    %c0_1 = arith.constant 0 : index
    %c0_2 = arith.constant 0 : index
    %1 = vector.load %arg2[%c0_1, %c0_2] : memref<16x128xbf16, #tpu.memory_space<vmem>>, vector<16x128xbf16>
    %cst = arith.constant dense<0.000000e+00> : vector<64x128xf32>
    %2 = tpu.matmul %0, %1, %cst {dimension_numbers = #tpu.dot_dimension_numbers<[1], [0], [0], [1], [0, 0, 1, 1], [], []>} : vector<64x16xbf16>, vector<16x128xbf16>, vector<64x128xf32> -> vector<64x128xf32>
    %c0_3 = arith.constant 0 : index
    %c0_4 = arith.constant 0 : index
    %3 = vector.load %arg3[%c0_3, %c0_4] : memref<1x128xf32, #tpu.memory_space<vmem>>, vector<1x128xf32>
    %4 = vector.broadcast %3 : vector<1x128xf32> to vector<64x128xf32>
    %5 = arith.mulf %2, %4 : vector<64x128xf32>
    %c0_5 = arith.constant 0 : index
    %c0_6 = arith.constant 0 : index
    %6 = vector.load %arg4[%c0_5, %c0_6] : memref<1x128xf32, #tpu.memory_space<vmem>>, vector<1x128xf32>
    %7 = vector.broadcast %6 : vector<1x128xf32> to vector<64x128xf32>
    %8 = arith.addf %5, %7 : vector<64x128xf32>
    %9 = arith.truncf %8 : vector<64x128xf32> to vector<64x128xbf16>
    %c0_7 = arith.constant 0 : index
    %c0_8 = arith.constant 0 : index
    %10 = vector.load %arg5[%c0_7, %c0_8] : memref<64x128xbf16, #tpu.memory_space<vmem>>, vector<64x128xbf16>
    tpu.vector_store %arg5[%c0_7, %c0_8], %9 {strides = array<i32>} : memref<64x128xbf16, #tpu.memory_space<vmem>>, vector<64x128xbf16>,
    return
  }
  func.func @transform_0(%arg0: i32) -> (i32, i32) {
    %c0_i32 = arith.constant 0 : i32
    %c0_i32_0 = arith.constant 0 : i32
    return %arg0, %c0_i32 : i32, i32
  }
  func.func @transform_1(%arg0: i32) -> (i32, i32) {
    %c0_i32 = arith.constant 0 : i32
    %c0_i32_0 = arith.constant 0 : i32
    %c0_i32_1 = arith.constant 0 : i32
    return %c0_i32, %c0_i32_0 : i32, i32
  }
  func.func @transform_2(%arg0: i32) -> (i32, i32) {
    %c0_i32 = arith.constant 0 : i32
    %c0_i32_0 = arith.constant 0 : i32
    %c0_i32_1 = arith.constant 0 : i32
    return %c0_i32, %c0_i32_0 : i32, i32
  }
  func.func @transform_3(%arg0: i32) -> (i32, i32) {
    %c0_i32 = arith.constant 0 : i32
    %c0_i32_0 = arith.constant 0 : i32
    %c0_i32_1 = arith.constant 0 : i32
    return %c0_i32, %c0_i32_0 : i32, i32
  }
  func.func @transform_4(%arg0: i32) -> (i32, i32) {
    %c0_i32 = arith.constant 0 : i32
    %c0_i32_0 = arith.constant 0 : i32
    return %arg0, %c0_i32 : i32, i32
  }
}

module attributes {stable_mosaic.version = 11 : i64} {
  func.func @kernel(%arg0: i32, %arg1: memref<64x144xbf16, #tpu.memory_space<vmem>>, %arg2: memref<144x128xbf16, #tpu.memory_space<vmem>>, %arg3: memref<1x128xf32, #tpu.memory_space<vmem>>, %arg4: memref<1x128xf32, #tpu.memory_space<vmem>>, %arg5: memref<64x128xbf16, #tpu.memory_space<vmem>>) attributes {dimension_semantics = [#tpu.dimension_semantics<parallel>], iteration_bounds = array<i64: 2>, scalar_prefetch = 0 : i64, scratch_operands = 0 : i64, tpu.core_type = #tpu.core_type<tc>, window_params = [{transform_indices = @transform_0, window_bounds = array<i64: 64, 144>}, {pipeline_mode = #tpu.pipeline_mode<synchronous>, transform_indices = @transform_1, window_bounds = array<i64: 144, 128>}, {pipeline_mode = #tpu.pipeline_mode<synchronous>, transform_indices = @transform_2, window_bounds = array<i64: 1, 128>}, {pipeline_mode = #tpu.pipeline_mode<synchronous>, transform_indices = @transform_3, window_bounds = array<i64: 1, 128>}, {transform_indices = @transform_4, window_bounds = array<i64: 64, 128>}]} {
    %c0 = arith.constant 0 : index
    %c0_0 = arith.constant 0 : index
    %0 = vector.load %arg1[%c0, %c0_0] : memref<64x144xbf16, #tpu.memory_space<vmem>>, vector<64x144xbf16>
    %c0_1 = arith.constant 0 : index
    %c0_2 = arith.constant 0 : index
    %1 = vector.load %arg2[%c0_1, %c0_2] : memref<144x128xbf16, #tpu.memory_space<vmem>>, vector<144x128xbf16>
    %cst = arith.constant dense<0.000000e+00> : vector<64x128xf32>
    %2 = tpu.matmul %0, %1, %cst {dimension_numbers = #tpu.dot_dimension_numbers<[1], [0], [0], [1], [0, 0, 1, 1], [], []>} : vector<64x144xbf16>, vector<144x128xbf16>, vector<64x128xf32> -> vector<64x128xf32>
    %c0_3 = arith.constant 0 : index
    %c0_4 = arith.constant 0 : index
    %3 = vector.load %arg3[%c0_3, %c0_4] : memref<1x128xf32, #tpu.memory_space<vmem>>, vector<1x128xf32>
    %4 = vector.broadcast %3 : vector<1x128xf32> to vector<64x128xf32>
    %5 = arith.mulf %2, %4 : vector<64x128xf32>
    %c0_5 = arith.constant 0 : index
    %c0_6 = arith.constant 0 : index
    %6 = vector.load %arg4[%c0_5, %c0_6] : memref<1x128xf32, #tpu.memory_space<vmem>>, vector<1x128xf32>
    %7 = vector.broadcast %6 : vector<1x128xf32> to vector<64x128xf32>
    %8 = arith.addf %5, %7 : vector<64x128xf32>
    %cst_7 = arith.constant 0.000000e+00 : f32
    %9 = vector.broadcast %cst_7 : f32 to vector<64x128xf32>
    %10 = arith.maximumf %8, %9 : vector<64x128xf32>
    %11 = arith.truncf %10 : vector<64x128xf32> to vector<64x128xbf16>
    %c0_8 = arith.constant 0 : index
    %c0_9 = arith.constant 0 : index
    %12 = vector.load %arg5[%c0_8, %c0_9] : memref<64x128xbf16, #tpu.memory_space<vmem>>, vector<64x128xbf16>
    tpu.vector_store %arg5[%c0_8, %c0_9], %11 {strides = array<i32>} : memref<64x128xbf16, #tpu.memory_space<vmem>>, vector<64x128xbf16>,
    return
  }
  func.func @transform_0(%arg0: i32) -> (i32, i32) {
    %c0_i32 = arith.constant 0 : i32
    %c0_i32_0 = arith.constant 0 : i32
    return %arg0, %c0_i32 : i32, i32
  }
  func.func @transform_1(%arg0: i32) -> (i32, i32) {
    %c0_i32 = arith.constant 0 : i32
    %c0_i32_0 = arith.constant 0 : i32
    %c0_i32_1 = arith.constant 0 : i32
    return %c0_i32, %c0_i32_0 : i32, i32
  }
  func.func @transform_2(%arg0: i32) -> (i32, i32) {
    %c0_i32 = arith.constant 0 : i32
    %c0_i32_0 = arith.constant 0 : i32
    %c0_i32_1 = arith.constant 0 : i32
    return %c0_i32, %c0_i32_0 : i32, i32
  }
  func.func @transform_3(%arg0: i32) -> (i32, i32) {
    %c0_i32 = arith.constant 0 : i32
    %c0_i32_0 = arith.constant 0 : i32
    %c0_i32_1 = arith.constant 0 : i32
    return %c0_i32, %c0_i32_0 : i32, i32
  }
  func.func @transform_4(%arg0: i32) -> (i32, i32) {
    %c0_i32 = arith.constant 0 : i32
    %c0_i32_0 = arith.constant 0 : i32
    return %arg0, %c0_i32 : i32, i32
  }
}

module attributes {stable_mosaic.version = 11 : i64} {
  func.func @kernel(%arg0: i32, %arg1: memref<64x288xbf16, #tpu.memory_space<vmem>>, %arg2: memref<288x128xbf16, #tpu.memory_space<vmem>>, %arg3: memref<1x128xf32, #tpu.memory_space<vmem>>, %arg4: memref<1x128xf32, #tpu.memory_space<vmem>>, %arg5: memref<64x128xbf16, #tpu.memory_space<vmem>>, %arg6: memref<64x128xbf16, #tpu.memory_space<vmem>>) attributes {dimension_semantics = [#tpu.dimension_semantics<parallel>], iteration_bounds = array<i64: 2>, scalar_prefetch = 0 : i64, scratch_operands = 0 : i64, tpu.core_type = #tpu.core_type<tc>, window_params = [{transform_indices = @transform_0, window_bounds = array<i64: 64, 288>}, {pipeline_mode = #tpu.pipeline_mode<synchronous>, transform_indices = @transform_1, window_bounds = array<i64: 288, 128>}, {pipeline_mode = #tpu.pipeline_mode<synchronous>, transform_indices = @transform_2, window_bounds = array<i64: 1, 128>}, {pipeline_mode = #tpu.pipeline_mode<synchronous>, transform_indices = @transform_3, window_bounds = array<i64: 1, 128>}, {transform_indices = @transform_4, window_bounds = array<i64: 64, 128>}, {transform_indices = @transform_5, window_bounds = array<i64: 64, 128>}]} {
    %c0 = arith.constant 0 : index
    %c0_0 = arith.constant 0 : index
    %0 = vector.load %arg1[%c0, %c0_0] : memref<64x288xbf16, #tpu.memory_space<vmem>>, vector<64x288xbf16>
    %c0_1 = arith.constant 0 : index
    %c0_2 = arith.constant 0 : index
    %1 = vector.load %arg2[%c0_1, %c0_2] : memref<288x128xbf16, #tpu.memory_space<vmem>>, vector<288x128xbf16>
    %cst = arith.constant dense<0.000000e+00> : vector<64x128xf32>
    %2 = tpu.matmul %0, %1, %cst {dimension_numbers = #tpu.dot_dimension_numbers<[1], [0], [0], [1], [0, 0, 1, 1], [], []>} : vector<64x288xbf16>, vector<288x128xbf16>, vector<64x128xf32> -> vector<64x128xf32>
    %c0_3 = arith.constant 0 : index
    %c0_4 = arith.constant 0 : index
    %3 = vector.load %arg3[%c0_3, %c0_4] : memref<1x128xf32, #tpu.memory_space<vmem>>, vector<1x128xf32>
    %4 = vector.broadcast %3 : vector<1x128xf32> to vector<64x128xf32>
    %5 = arith.mulf %2, %4 : vector<64x128xf32>
    %c0_5 = arith.constant 0 : index
    %c0_6 = arith.constant 0 : index
    %6 = vector.load %arg4[%c0_5, %c0_6] : memref<1x128xf32, #tpu.memory_space<vmem>>, vector<1x128xf32>
    %7 = vector.broadcast %6 : vector<1x128xf32> to vector<64x128xf32>
    %8 = arith.addf %5, %7 : vector<64x128xf32>
    %c0_7 = arith.constant 0 : index
    %c0_8 = arith.constant 0 : index
    %9 = vector.load %arg5[%c0_7, %c0_8] : memref<64x128xbf16, #tpu.memory_space<vmem>>, vector<64x128xbf16>
    %10 = arith.extf %9 : vector<64x128xbf16> to vector<64x128xf32>
    %11 = arith.addf %8, %10 : vector<64x128xf32>
    %cst_9 = arith.constant 0.000000e+00 : f32
    %12 = vector.broadcast %cst_9 : f32 to vector<64x128xf32>
    %13 = arith.maximumf %11, %12 : vector<64x128xf32>
    %14 = arith.truncf %13 : vector<64x128xf32> to vector<64x128xbf16>
    %c0_10 = arith.constant 0 : index
    %c0_11 = arith.constant 0 : index
    %15 = vector.load %arg6[%c0_10, %c0_11] : memref<64x128xbf16, #tpu.memory_space<vmem>>, vector<64x128xbf16>
    tpu.vector_store %arg6[%c0_10, %c0_11], %14 {strides = array<i32>} : memref<64x128xbf16, #tpu.memory_space<vmem>>, vector<64x128xbf16>,
    return
  }
  func.func @transform_0(%arg0: i32) -> (i32, i32) {
    %c0_i32 = arith.constant 0 : i32
    %c0_i32_0 = arith.constant 0 : i32
    return %arg0, %c0_i32 : i32, i32
  }
  func.func @transform_1(%arg0: i32) -> (i32, i32) {
    %c0_i32 = arith.constant 0 : i32
    %c0_i32_0 = arith.constant 0 : i32
    %c0_i32_1 = arith.constant 0 : i32
    return %c0_i32, %c0_i32_0 : i32, i32
  }
  func.func @transform_2(%arg0: i32) -> (i32, i32) {
    %c0_i32 = arith.constant 0 : i32
    %c0_i32_0 = arith.constant 0 : i32
    %c0_i32_1 = arith.constant 0 : i32
    return %c0_i32, %c0_i32_0 : i32, i32
  }
  func.func @transform_3(%arg0: i32) -> (i32, i32) {
    %c0_i32 = arith.constant 0 : i32
    %c0_i32_0 = arith.constant 0 : i32
    %c0_i32_1 = arith.constant 0 : i32
    return %c0_i32, %c0_i32_0 : i32, i32
  }
  func.func @transform_4(%arg0: i32) -> (i32, i32) {
    %c0_i32 = arith.constant 0 : i32
    %c0_i32_0 = arith.constant 0 : i32
    return %arg0, %c0_i32 : i32, i32
  }
  func.func @transform_5(%arg0: i32) -> (i32, i32) {
    %c0_i32 = arith.constant 0 : i32
    %c0_i32_0 = arith.constant 0 : i32
    return %arg0, %c0_i32 : i32, i32
  }
}

module attributes {stable_mosaic.version = 11 : i64} {
  func.func @kernel(%arg0: i32, %arg1: memref<16x32xbf16, #tpu.memory_space<vmem>>, %arg2: memref<32x128xbf16, #tpu.memory_space<vmem>>, %arg3: memref<1x128xf32, #tpu.memory_space<vmem>>, %arg4: memref<1x128xf32, #tpu.memory_space<vmem>>, %arg5: memref<16x128xbf16, #tpu.memory_space<vmem>>) attributes {dimension_semantics = [#tpu.dimension_semantics<parallel>], iteration_bounds = array<i64: 2>, scalar_prefetch = 0 : i64, scratch_operands = 0 : i64, tpu.core_type = #tpu.core_type<tc>, window_params = [{transform_indices = @transform_0, window_bounds = array<i64: 16, 32>}, {pipeline_mode = #tpu.pipeline_mode<synchronous>, transform_indices = @transform_1, window_bounds = array<i64: 32, 128>}, {pipeline_mode = #tpu.pipeline_mode<synchronous>, transform_indices = @transform_2, window_bounds = array<i64: 1, 128>}, {pipeline_mode = #tpu.pipeline_mode<synchronous>, transform_indices = @transform_3, window_bounds = array<i64: 1, 128>}, {transform_indices = @transform_4, window_bounds = array<i64: 16, 128>}]} {
    %c0 = arith.constant 0 : index
    %c0_0 = arith.constant 0 : index
    %0 = vector.load %arg1[%c0, %c0_0] : memref<16x32xbf16, #tpu.memory_space<vmem>>, vector<16x32xbf16>
    %c0_1 = arith.constant 0 : index
    %c0_2 = arith.constant 0 : index
    %1 = vector.load %arg2[%c0_1, %c0_2] : memref<32x128xbf16, #tpu.memory_space<vmem>>, vector<32x128xbf16>
    %cst = arith.constant dense<0.000000e+00> : vector<16x128xf32>
    %2 = tpu.matmul %0, %1, %cst {dimension_numbers = #tpu.dot_dimension_numbers<[1], [0], [0], [1], [0, 0, 1, 1], [], []>} : vector<16x32xbf16>, vector<32x128xbf16>, vector<16x128xf32> -> vector<16x128xf32>
    %c0_3 = arith.constant 0 : index
    %c0_4 = arith.constant 0 : index
    %3 = vector.load %arg3[%c0_3, %c0_4] : memref<1x128xf32, #tpu.memory_space<vmem>>, vector<1x128xf32>
    %4 = vector.broadcast %3 : vector<1x128xf32> to vector<16x128xf32>
    %5 = arith.mulf %2, %4 : vector<16x128xf32>
    %c0_5 = arith.constant 0 : index
    %c0_6 = arith.constant 0 : index
    %6 = vector.load %arg4[%c0_5, %c0_6] : memref<1x128xf32, #tpu.memory_space<vmem>>, vector<1x128xf32>
    %7 = vector.broadcast %6 : vector<1x128xf32> to vector<16x128xf32>
    %8 = arith.addf %5, %7 : vector<16x128xf32>
    %9 = arith.truncf %8 : vector<16x128xf32> to vector<16x128xbf16>
    %c0_7 = arith.constant 0 : index
    %c0_8 = arith.constant 0 : index
    %10 = vector.load %arg5[%c0_7, %c0_8] : memref<16x128xbf16, #tpu.memory_space<vmem>>, vector<16x128xbf16>
    tpu.vector_store %arg5[%c0_7, %c0_8], %9 {strides = array<i32>} : memref<16x128xbf16, #tpu.memory_space<vmem>>, vector<16x128xbf16>,
    return
  }
  func.func @transform_0(%arg0: i32) -> (i32, i32) {
    %c0_i32 = arith.constant 0 : i32
    %c0_i32_0 = arith.constant 0 : i32
    return %arg0, %c0_i32 : i32, i32
  }
  func.func @transform_1(%arg0: i32) -> (i32, i32) {
    %c0_i32 = arith.constant 0 : i32
    %c0_i32_0 = arith.constant 0 : i32
    %c0_i32_1 = arith.constant 0 : i32
    return %c0_i32, %c0_i32_0 : i32, i32
  }
  func.func @transform_2(%arg0: i32) -> (i32, i32) {
    %c0_i32 = arith.constant 0 : i32
    %c0_i32_0 = arith.constant 0 : i32
    %c0_i32_1 = arith.constant 0 : i32
    return %c0_i32, %c0_i32_0 : i32, i32
  }
  func.func @transform_3(%arg0: i32) -> (i32, i32) {
    %c0_i32 = arith.constant 0 : i32
    %c0_i32_0 = arith.constant 0 : i32
    %c0_i32_1 = arith.constant 0 : i32
    return %c0_i32, %c0_i32_0 : i32, i32
  }
  func.func @transform_4(%arg0: i32) -> (i32, i32) {
    %c0_i32 = arith.constant 0 : i32
    %c0_i32_0 = arith.constant 0 : i32
    return %arg0, %c0_i32 : i32, i32
  }
}

module attributes {stable_mosaic.version = 11 : i64} {
  func.func @kernel(%arg0: i32, %arg1: memref<16x288xbf16, #tpu.memory_space<vmem>>, %arg2: memref<288x128xbf16, #tpu.memory_space<vmem>>, %arg3: memref<1x128xf32, #tpu.memory_space<vmem>>, %arg4: memref<1x128xf32, #tpu.memory_space<vmem>>, %arg5: memref<16x128xbf16, #tpu.memory_space<vmem>>) attributes {dimension_semantics = [#tpu.dimension_semantics<parallel>], iteration_bounds = array<i64: 2>, scalar_prefetch = 0 : i64, scratch_operands = 0 : i64, tpu.core_type = #tpu.core_type<tc>, window_params = [{transform_indices = @transform_0, window_bounds = array<i64: 16, 288>}, {pipeline_mode = #tpu.pipeline_mode<synchronous>, transform_indices = @transform_1, window_bounds = array<i64: 288, 128>}, {pipeline_mode = #tpu.pipeline_mode<synchronous>, transform_indices = @transform_2, window_bounds = array<i64: 1, 128>}, {pipeline_mode = #tpu.pipeline_mode<synchronous>, transform_indices = @transform_3, window_bounds = array<i64: 1, 128>}, {transform_indices = @transform_4, window_bounds = array<i64: 16, 128>}]} {
    %c0 = arith.constant 0 : index
    %c0_0 = arith.constant 0 : index
    %0 = vector.load %arg1[%c0, %c0_0] : memref<16x288xbf16, #tpu.memory_space<vmem>>, vector<16x288xbf16>
    %c0_1 = arith.constant 0 : index
    %c0_2 = arith.constant 0 : index
    %1 = vector.load %arg2[%c0_1, %c0_2] : memref<288x128xbf16, #tpu.memory_space<vmem>>, vector<288x128xbf16>
    %cst = arith.constant dense<0.000000e+00> : vector<16x128xf32>
    %2 = tpu.matmul %0, %1, %cst {dimension_numbers = #tpu.dot_dimension_numbers<[1], [0], [0], [1], [0, 0, 1, 1], [], []>} : vector<16x288xbf16>, vector<288x128xbf16>, vector<16x128xf32> -> vector<16x128xf32>
    %c0_3 = arith.constant 0 : index
    %c0_4 = arith.constant 0 : index
    %3 = vector.load %arg3[%c0_3, %c0_4] : memref<1x128xf32, #tpu.memory_space<vmem>>, vector<1x128xf32>
    %4 = vector.broadcast %3 : vector<1x128xf32> to vector<16x128xf32>
    %5 = arith.mulf %2, %4 : vector<16x128xf32>
    %c0_5 = arith.constant 0 : index
    %c0_6 = arith.constant 0 : index
    %6 = vector.load %arg4[%c0_5, %c0_6] : memref<1x128xf32, #tpu.memory_space<vmem>>, vector<1x128xf32>
    %7 = vector.broadcast %6 : vector<1x128xf32> to vector<16x128xf32>
    %8 = arith.addf %5, %7 : vector<16x128xf32>
    %cst_7 = arith.constant 0.000000e+00 : f32
    %9 = vector.broadcast %cst_7 : f32 to vector<16x128xf32>
    %10 = arith.maximumf %8, %9 : vector<16x128xf32>
    %11 = arith.truncf %10 : vector<16x128xf32> to vector<16x128xbf16>
    %c0_8 = arith.constant 0 : index
    %c0_9 = arith.constant 0 : index
    %12 = vector.load %arg5[%c0_8, %c0_9] : memref<16x128xbf16, #tpu.memory_space<vmem>>, vector<16x128xbf16>
    tpu.vector_store %arg5[%c0_8, %c0_9], %11 {strides = array<i32>} : memref<16x128xbf16, #tpu.memory_space<vmem>>, vector<16x128xbf16>,
    return
  }
  func.func @transform_0(%arg0: i32) -> (i32, i32) {
    %c0_i32 = arith.constant 0 : i32
    %c0_i32_0 = arith.constant 0 : i32
    return %arg0, %c0_i32 : i32, i32
  }
  func.func @transform_1(%arg0: i32) -> (i32, i32) {
    %c0_i32 = arith.constant 0 : i32
    %c0_i32_0 = arith.constant 0 : i32
    %c0_i32_1 = arith.constant 0 : i32
    return %c0_i32, %c0_i32_0 : i32, i32
  }
  func.func @transform_2(%arg0: i32) -> (i32, i32) {
    %c0_i32 = arith.constant 0 : i32
    %c0_i32_0 = arith.constant 0 : i32
    %c0_i32_1 = arith.constant 0 : i32
    return %c0_i32, %c0_i32_0 : i32, i32
  }
  func.func @transform_3(%arg0: i32) -> (i32, i32) {
    %c0_i32 = arith.constant 0 : i32
    %c0_i32_0 = arith.constant 0 : i32
    %c0_i32_1 = arith.constant 0 : i32
    return %c0_i32, %c0_i32_0 : i32, i32
  }
  func.func @transform_4(%arg0: i32) -> (i32, i32) {
    %c0_i32 = arith.constant 0 : i32
    %c0_i32_0 = arith.constant 0 : i32
    return %arg0, %c0_i32 : i32, i32
  }
}

module attributes {stable_mosaic.version = 11 : i64} {
  func.func @_pool_linear_kernel(%arg0: i32, %arg1: memref<2x16x128xbf16, #tpu.memory_space<vmem>>, %arg2: memref<128x128xf32, #tpu.memory_space<vmem>>, %arg3: memref<1x128xf32, #tpu.memory_space<vmem>>, %arg4: memref<2x128xf32, #tpu.memory_space<vmem>>) attributes {dimension_semantics = [#tpu.dimension_semantics<arbitrary>], iteration_bounds = array<i64: 1>, scalar_prefetch = 0 : i64, scratch_operands = 0 : i64, tpu.core_type = #tpu.core_type<tc>, window_params = [{pipeline_mode = #tpu.pipeline_mode<synchronous>, transform_indices = @transform_0, window_bounds = array<i64: 2, 16, 128>}, {pipeline_mode = #tpu.pipeline_mode<synchronous>, transform_indices = @transform_1, window_bounds = array<i64: 128, 128>}, {pipeline_mode = #tpu.pipeline_mode<synchronous>, transform_indices = @transform_2, window_bounds = array<i64: 1, 128>}, {pipeline_mode = #tpu.pipeline_mode<synchronous>, transform_indices = @transform_3, window_bounds = array<i64: 2, 128>}]} {
    %c0 = arith.constant 0 : index
    %c0_0 = arith.constant 0 : index
    %c0_1 = arith.constant 0 : index
    %0 = vector.load %arg1[%c0, %c0_0, %c0_1] : memref<2x16x128xbf16, #tpu.memory_space<vmem>>, vector<2x16x128xbf16>
    %1 = arith.extf %0 : vector<2x16x128xbf16> to vector<2x16x128xf32>
    %cst = arith.constant dense<0.000000e+00> : vector<2x128xf32>
    %2 = vector.multi_reduction <add>, %1, %cst [1] : vector<2x16x128xf32> to vector<2x128xf32>
    %cst_2 = arith.constant 1.600000e+01 : f32
    %3 = vector.broadcast %cst_2 : f32 to vector<2x128xf32>
    %4 = arith.divf %2, %3 : vector<2x128xf32>
    %c0_3 = arith.constant 0 : index
    %c0_4 = arith.constant 0 : index
    %5 = vector.load %arg2[%c0_3, %c0_4] : memref<128x128xf32, #tpu.memory_space<vmem>>, vector<128x128xf32>
    %cst_5 = arith.constant dense<0.000000e+00> : vector<2x128xf32>
    %6 = tpu.matmul %4, %5, %cst_5 {dimension_numbers = #tpu.dot_dimension_numbers<[1], [0], [0], [1], [0, 0, 1, 1], [], []>} : vector<2x128xf32>, vector<128x128xf32>, vector<2x128xf32> -> vector<2x128xf32>
    %c0_6 = arith.constant 0 : index
    %c0_7 = arith.constant 0 : index
    %7 = vector.load %arg3[%c0_6, %c0_7] : memref<1x128xf32, #tpu.memory_space<vmem>>, vector<1x128xf32>
    %8 = vector.broadcast %7 : vector<1x128xf32> to vector<2x128xf32>
    %9 = arith.addf %6, %8 : vector<2x128xf32>
    %c0_8 = arith.constant 0 : index
    %c0_9 = arith.constant 0 : index
    %10 = vector.load %arg4[%c0_8, %c0_9] : memref<2x128xf32, #tpu.memory_space<vmem>>, vector<2x128xf32>
    tpu.vector_store %arg4[%c0_8, %c0_9], %9 {strides = array<i32>} : memref<2x128xf32, #tpu.memory_space<vmem>>, vector<2x128xf32>,
    return
  }
  func.func @transform_0(%arg0: i32) -> (i32, i32, i32) {
    %c0_i32 = arith.constant 0 : i32
    %c0_i32_0 = arith.constant 0 : i32
    %c0_i32_1 = arith.constant 0 : i32
    %c0_i32_2 = arith.constant 0 : i32
    return %c0_i32, %c0_i32_0, %c0_i32_1 : i32, i32, i32
  }
  func.func @transform_1(%arg0: i32) -> (i32, i32) {
    %c0_i32 = arith.constant 0 : i32
    %c0_i32_0 = arith.constant 0 : i32
    %c0_i32_1 = arith.constant 0 : i32
    return %c0_i32, %c0_i32_0 : i32, i32
  }
  func.func @transform_2(%arg0: i32) -> (i32, i32) {
    %c0_i32 = arith.constant 0 : i32
    %c0_i32_0 = arith.constant 0 : i32
    %c0_i32_1 = arith.constant 0 : i32
    return %c0_i32, %c0_i32_0 : i32, i32
  }
  func.func @transform_3(%arg0: i32) -> (i32, i32) {
    %c0_i32 = arith.constant 0 : i32
    %c0_i32_0 = arith.constant 0 : i32
    %c0_i32_1 = arith.constant 0 : i32
    return %c0_i32, %c0_i32_0 : i32, i32
  }
}

module attributes {stable_mosaic.version = 11 : i64} {
  func.func @kernel(%arg0: i32, %arg1: memref<16x576xbf16, #tpu.memory_space<vmem>>, %arg2: memref<576x128xbf16, #tpu.memory_space<vmem>>, %arg3: memref<1x128xf32, #tpu.memory_space<vmem>>, %arg4: memref<1x128xf32, #tpu.memory_space<vmem>>, %arg5: memref<16x128xbf16, #tpu.memory_space<vmem>>, %arg6: memref<16x128xbf16, #tpu.memory_space<vmem>>) attributes {dimension_semantics = [#tpu.dimension_semantics<parallel>], iteration_bounds = array<i64: 2>, scalar_prefetch = 0 : i64, scratch_operands = 0 : i64, tpu.core_type = #tpu.core_type<tc>, window_params = [{transform_indices = @transform_0, window_bounds = array<i64: 16, 576>}, {pipeline_mode = #tpu.pipeline_mode<synchronous>, transform_indices = @transform_1, window_bounds = array<i64: 576, 128>}, {pipeline_mode = #tpu.pipeline_mode<synchronous>, transform_indices = @transform_2, window_bounds = array<i64: 1, 128>}, {pipeline_mode = #tpu.pipeline_mode<synchronous>, transform_indices = @transform_3, window_bounds = array<i64: 1, 128>}, {transform_indices = @transform_4, window_bounds = array<i64: 16, 128>}, {transform_indices = @transform_5, window_bounds = array<i64: 16, 128>}]} {
    %c0 = arith.constant 0 : index
    %c0_0 = arith.constant 0 : index
    %0 = vector.load %arg1[%c0, %c0_0] : memref<16x576xbf16, #tpu.memory_space<vmem>>, vector<16x576xbf16>
    %c0_1 = arith.constant 0 : index
    %c0_2 = arith.constant 0 : index
    %1 = vector.load %arg2[%c0_1, %c0_2] : memref<576x128xbf16, #tpu.memory_space<vmem>>, vector<576x128xbf16>
    %cst = arith.constant dense<0.000000e+00> : vector<16x128xf32>
    %2 = tpu.matmul %0, %1, %cst {dimension_numbers = #tpu.dot_dimension_numbers<[1], [0], [0], [1], [0, 0, 1, 1], [], []>} : vector<16x576xbf16>, vector<576x128xbf16>, vector<16x128xf32> -> vector<16x128xf32>
    %c0_3 = arith.constant 0 : index
    %c0_4 = arith.constant 0 : index
    %3 = vector.load %arg3[%c0_3, %c0_4] : memref<1x128xf32, #tpu.memory_space<vmem>>, vector<1x128xf32>
    %4 = vector.broadcast %3 : vector<1x128xf32> to vector<16x128xf32>
    %5 = arith.mulf %2, %4 : vector<16x128xf32>
    %c0_5 = arith.constant 0 : index
    %c0_6 = arith.constant 0 : index
    %6 = vector.load %arg4[%c0_5, %c0_6] : memref<1x128xf32, #tpu.memory_space<vmem>>, vector<1x128xf32>
    %7 = vector.broadcast %6 : vector<1x128xf32> to vector<16x128xf32>
    %8 = arith.addf %5, %7 : vector<16x128xf32>
    %c0_7 = arith.constant 0 : index
    %c0_8 = arith.constant 0 : index
    %9 = vector.load %arg5[%c0_7, %c0_8] : memref<16x128xbf16, #tpu.memory_space<vmem>>, vector<16x128xbf16>
    %10 = arith.extf %9 : vector<16x128xbf16> to vector<16x128xf32>
    %11 = arith.addf %8, %10 : vector<16x128xf32>
    %cst_9 = arith.constant 0.000000e+00 : f32
    %12 = vector.broadcast %cst_9 : f32 to vector<16x128xf32>
    %13 = arith.maximumf %11, %12 : vector<16x128xf32>
    %14 = arith.truncf %13 : vector<16x128xf32> to vector<16x128xbf16>
    %c0_10 = arith.constant 0 : index
    %c0_11 = arith.constant 0 : index
    %15 = vector.load %arg6[%c0_10, %c0_11] : memref<16x128xbf16, #tpu.memory_space<vmem>>, vector<16x128xbf16>
    tpu.vector_store %arg6[%c0_10, %c0_11], %14 {strides = array<i32>} : memref<16x128xbf16, #tpu.memory_space<vmem>>, vector<16x128xbf16>,
    return
  }
  func.func @transform_0(%arg0: i32) -> (i32, i32) {
    %c0_i32 = arith.constant 0 : i32
    %c0_i32_0 = arith.constant 0 : i32
    return %arg0, %c0_i32 : i32, i32
  }
  func.func @transform_1(%arg0: i32) -> (i32, i32) {
    %c0_i32 = arith.constant 0 : i32
    %c0_i32_0 = arith.constant 0 : i32
    %c0_i32_1 = arith.constant 0 : i32
    return %c0_i32, %c0_i32_0 : i32, i32
  }
  func.func @transform_2(%arg0: i32) -> (i32, i32) {
    %c0_i32 = arith.constant 0 : i32
    %c0_i32_0 = arith.constant 0 : i32
    %c0_i32_1 = arith.constant 0 : i32
    return %c0_i32, %c0_i32_0 : i32, i32
  }
  func.func @transform_3(%arg0: i32) -> (i32, i32) {
    %c0_i32 = arith.constant 0 : i32
    %c0_i32_0 = arith.constant 0 : i32
    %c0_i32_1 = arith.constant 0 : i32
    return %c0_i32, %c0_i32_0 : i32, i32
  }
  func.func @transform_4(%arg0: i32) -> (i32, i32) {
    %c0_i32 = arith.constant 0 : i32
    %c0_i32_0 = arith.constant 0 : i32
    return %arg0, %c0_i32 : i32, i32
  }
  func.func @transform_5(%arg0: i32) -> (i32, i32) {
    %c0_i32 = arith.constant 0 : i32
    %c0_i32_0 = arith.constant 0 : i32
    return %arg0, %c0_i32 : i32, i32
  }
}

</mosaic_0001>

<llo_original>
// kernel: shrinknet_forward.10
$region0: #{shrinknet_forward.10}
  #allocation0 [shape = 'u32[]', space=smem, size = 0x4, offset = 0x4, fixed_abs, tag = 'smem constant byte address 0x4 - core index']
  #allocation1 [shape = 'u32[144,128]{1,0:T(1,128)}', space=vmem, size = 0x12000, scoped, tag = 'internal scratch']
  %s0 = inlined_call_operand.vmem [shape: bf16[512,27], index: 0, kind: input, shape index: {}]
  %s1 = inlined_call_operand.vmem [shape: bf16[27,128], index: 1, kind: input, shape index: {}]
  %s2 = inlined_call_operand.vmem [shape: f32[1,128], index: 2, kind: input, shape index: {}]
  %s3 = inlined_call_operand.vmem [shape: f32[1,128], index: 3, kind: input, shape index: {}]
  %s4 = inlined_call_operand.vmem [shape: bf16[512,128], index: 4, kind: output, shape index: {}]
  %s5 = sld [smem:[#allocation0]]
  $region49: #{shrinknet_forward.10} parent=0
    _
  %s7 = ssub.s32 1, %s5
  %s8 = scalar_select 0, %s7, %s5
  loop: start=0, step=1, limit=4
  $region2: #{shrinknet_forward.10} parent=0 // loop_pre_header
    _
  $region3: #{shrinknet_forward.10} parent=0 // loop_header
    %s10 = sphi 0, %s14
    %p11 = scmp.ge.s32.totalorder %s10, 4
    %s20 = sphi 0, %s22
    %s23 = sphi 0, %s20
    %s24 = sphi 0, %s23
    %s40 = sphi 0, %s24
    %s44 = sphi 0, %s44
    %s46 = sphi 0, %s44
    %s47 = sphi 0, %s46
    %s61 = sphi 0, %s47
    %s65 = sphi 0, %s65
    %s67 = sphi 0, %s65
    %s68 = sphi 0, %s67
    %s82 = sphi 0, %s68
    %s86 = sphi 0, %s86
    %s88 = sphi 0, %s86
    %s89 = sphi 0, %s88
    %s103 = sphi 0, %s89
    %s109 = sphi 0, %s111
    %s112 = sphi 0, %s109
    %s113 = sphi 0, %s112
    %s129 = sphi 0, %s113
  $region4: #{shrinknet_forward.10} parent=0 // loop_header_branch
    %13 = sbr.rel (%p11) target = $region8
  $region5: #{shrinknet_forward.10} parent=0 // loop_body
    %s15 = ssub.s32 %s10, 1
    %s16 = ssub.s32 %s10, 2
    %s17 = sadd.s32 %s10, 1
    %s18 = ssub.s32 %s10, %s17
    %p19 = scmp.eq.s32.totalorder %s18, 0
    %s21 = sadd.s32 %s20, 1
    %s22 = scalar_select %p19, %s20, %s21
    %p25 = pneg %p19
    %p26 = scmp.eq.s32.totalorder %s10, 1
    %p27 = por %p25, %p26
    %p28 = scmp.ne.s32.totalorder %s20, %s23
    %p29 = scmp.eq.s32.totalorder %s10, 0
    %p30 = por %p28, %p29
    %p31 = scmp.ne.s32.totalorder %s20, %s23
    %p32 = scmp.eq.s32.totalorder %s15, 1
    %p33 = por %p31, %p32
    %p34 = scmp.ne.s32.totalorder %s23, %s24
    %p35 = scmp.eq.s32.totalorder %s15, 0
    %p36 = por %p34, %p35
    %p37 = scmp.ne.s32.totalorder %s23, %s24
    %p38 = scmp.eq.s32.totalorder %s16, 1
    %p39 = por %p37, %p38
    %p41 = scmp.ne.s32.totalorder %s24, %s40
    %p42 = scmp.eq.s32.totalorder %s16, 0
    %p43 = por %p41, %p42
    %s45 = sadd.s32 %s44, 1
    %p48 = scmp.eq.s32.totalorder %s10, 1
    %p49 = scmp.ne.s32.totalorder %s44, %s46
    %p50 = scmp.eq.s32.totalorder %s10, 0
    %p51 = por %p49, %p50
    %p52 = scmp.ne.s32.totalorder %s44, %s46
    %p53 = scmp.eq.s32.totalorder %s15, 1
    %p54 = por %p52, %p53
    %p55 = scmp.ne.s32.totalorder %s46, %s47
    %p56 = scmp.eq.s32.totalorder %s15, 0
    %p57 = por %p55, %p56
    %p58 = scmp.ne.s32.totalorder %s46, %s47
    %p59 = scmp.eq.s32.totalorder %s16, 1
    %p60 = por %p58, %p59
    %p62 = scmp.ne.s32.totalorder %s47, %s61
    %p63 = scmp.eq.s32.totalorder %s16, 0
    %p64 = por %p62, %p63
    %s66 = sadd.s32 %s65, 1
    %p69 = scmp.eq.s32.totalorder %s10, 1
    %p70 = scmp.ne.s32.totalorder %s65, %s67
    %p71 = scmp.eq.s32.totalorder %s10, 0
    %p72 = por %p70, %p71
    %p73 = scmp.ne.s32.totalorder %s65, %s67
    %p74 = scmp.eq.s32.totalorder %s15, 1
    %p75 = por %p73, %p74
    %p76 = scmp.ne.s32.totalorder %s67, %s68
    %p77 = scmp.eq.s32.totalorder %s15, 0
    %p78 = por %p76, %p77
    %p79 = scmp.ne.s32.totalorder %s67, %s68
    %p80 = scmp.eq.s32.totalorder %s16, 1
    %p81 = por %p79, %p80
    %p83 = scmp.ne.s32.totalorder %s68, %s82
    %p84 = scmp.eq.s32.totalorder %s16, 0
    %p85 = por %p83, %p84
    %s87 = sadd.s32 %s86, 1
    %p90 = scmp.eq.s32.totalorder %s10, 1
    %p91 = scmp.ne.s32.totalorder %s86, %s88
    %p92 = scmp.eq.s32.totalorder %s10, 0
    %p93 = por %p91, %p92
    %p94 = scmp.ne.s32.totalorder %s86, %s88
    %p95 = scmp.eq.s32.totalorder %s15, 1
    %p96 = por %p94, %p95
    %p97 = scmp.ne.s32.totalorder %s88, %s89
    %p98 = scmp.eq.s32.totalorder %s15, 0
    %p99 = por %p97, %p98
    %p100 = scmp.ne.s32.totalorder %s88, %s89
    %p101 = scmp.eq.s32.totalorder %s16, 1
    %p102 = por %p100, %p101
    %p104 = scmp.ne.s32.totalorder %s89, %s103
    %p105 = scmp.eq.s32.totalorder %s16, 0
    %p106 = por %p104, %p105
    %s107 = ssub.s32 %s10, %s17
    %p108 = scmp.eq.s32.totalorder %s107, 0
    %s110 = sadd.s32 %s109, 1
    %s111 = scalar_select %p108, %s109, %s110
    %p114 = pneg %p108
    %p115 = scmp.eq.s32.totalorder %s10, 1
    %p116 = por %p114, %p115
    %p117 = scmp.ne.s32.totalorder %s109, %s112
    %p118 = scmp.eq.s32.totalorder %s10, 0
    %p119 = por %p117, %p118
    %p120 = scmp.ne.s32.totalorder %s109, %s112
    %p121 = scmp.eq.s32.totalorder %s15, 1
    %p122 = por %p120, %p121
    %p123 = scmp.ne.s32.totalorder %s112, %s113
    %p124 = scmp.eq.s32.totalorder %s15, 0
    %p125 = por %p123, %p124
    %p126 = scmp.ne.s32.totalorder %s112, %s113
    %p127 = scmp.eq.s32.totalorder %s16, 1
    %p128 = por %p126, %p127
    %p130 = scmp.ne.s32.totalorder %s113, %s129
    %p131 = scmp.eq.s32.totalorder %s16, 0
    %p132 = por %p130, %p131
    %p133 = scmp.le.s32.totalorder 1, %s10
    %p134 = scmp.lt.s32.totalorder %s10, 3
    %p135 = pnand %p133, %p134
    %p136 = pneg %p135
    // Predicated region
    $region9: #{shrinknet_forward.10} parent=5 // pred_check
      _
    $region10: #{shrinknet_forward.10} parent=5 // pred_check_branch
      %138 = sbr.rel (%p135) target = $region12
    $region11: #{shrinknet_forward.10} parent=5 // pred_region
      %s139 = ssub.s32 %s10, 1
      // Predicated region
      $region13: #{shrinknet_forward.10} parent=11 // pred_check
        %p140 = pneg %p57
      $region14: #{shrinknet_forward.10} parent=11 // pred_check_branch
        %142 = sbr.rel (%p140) target = $region16
      $region15: #{shrinknet_forward.10} parent=11 // pred_region
        _
      $region16: #{shrinknet_forward.10} parent=11 // pred_fallthru
        _
      // Predicated region
      $region17: #{shrinknet_forward.10} parent=11 // pred_check
        %p143 = pneg %p78
      $region18: #{shrinknet_forward.10} parent=11 // pred_check_branch
        %145 = sbr.rel (%p143) target = $region20
      $region19: #{shrinknet_forward.10} parent=11 // pred_region
        _
      $region20: #{shrinknet_forward.10} parent=11 // pred_fallthru
        _
      // Predicated region
      $region21: #{shrinknet_forward.10} parent=11 // pred_check
        %p146 = pneg %p99
      $region22: #{shrinknet_forward.10} parent=11 // pred_check_branch
        %148 = sbr.rel (%p146) target = $region24
      $region23: #{shrinknet_forward.10} parent=11 // pred_region
        _
      $region24: #{shrinknet_forward.10} parent=11 // pred_fallthru
        _
    $region12: #{shrinknet_forward.10} parent=5 // pred_fallthru
      _
    %p149 = scmp.lt.s32.totalorder %s10, 2
    // Predicated region
    $region25: #{shrinknet_forward.10} parent=5 // pred_check
      %p150 = pneg %p149
    $region26: #{shrinknet_forward.10} parent=5 // pred_check_branch
      %152 = sbr.rel (%p150) target = $region28
    $region27: #{shrinknet_forward.10} parent=5 // pred_region
      // Predicated region
      $region29: #{shrinknet_forward.10} parent=27 // pred_check
        %p153 = pneg %p30
      $region30: #{shrinknet_forward.10} parent=27 // pred_check_branch
        %155 = sbr.rel (%p153) target = $region32
      $region31: #{shrinknet_forward.10} parent=27 // pred_region
        %s156 = smul.u32 32, %s10
        %p157 = scmp.lt.s32.totalorder %s156, 63
        %s158 = scalar_select %p157, %s156, 63
        %s159 = smul.addr %s158, 4
        %s160 = scalar_lea.vmem %s0, %s159
        %s161 = smul.u32 32, %s10
      $region32: #{shrinknet_forward.10} parent=27 // pred_fallthru
        _
    $region28: #{shrinknet_forward.10} parent=5 // pred_fallthru
      _
    %p162 = scmp.le.s32.totalorder 1, %s10
    %p163 = scmp.lt.s32.totalorder %s10, 3
    %p164 = pnand %p162, %p163
    %p165 = pneg %p164
    // Predicated region
    $region33: #{shrinknet_forward.10} parent=5 // pred_check
      _
    $region34: #{shrinknet_forward.10} parent=5 // pred_check_branch
      %167 = sbr.rel (%p164) target = $region36
    $region35: #{shrinknet_forward.10} parent=5 // pred_region
      %s168 = ssub.s32 %s10, 1
      %s169 = smul.u32 32, %s15
      %p170 = scmp.lt.s32.totalorder %s169, 63
      %s171 = scalar_select %p170, %s169, 63
      %s172 = smul.addr %s171, 4
      %s173 = scalar_lea.vmem %s0, %s172
      %p174 = pneg %p36
      %p175 = pneg %p33
      %p176 = pneg %p57
      %p177 = pneg %p54
      %p178 = pneg %p78
      %p179 = pneg %p75
      %p180 = pneg %p99
      %p181 = pneg %p96
      %p182 = pneg %p125
      %p183 = pneg %p122
      %s184 = smul.u32 32, %s15
      %p185 = scmp.lt.s32.totalorder %s184, 63
      %s186 = scalar_select %p185, %s184, 63
      %s187 = smul.addr %s186, 4
      %s188 = scalar_lea.vmem %s4, %s187
      %s189 = smul.u32 32, %s15
      %p190 = scmp.lt.s32.totalorder %s189, 63
      %s191 = scalar_select %p190, %s189, 63
      %s192 = smul.addr %s191, 4
      %s193 = scalar_lea.vmem %s0, %s192
      %s194 = smul.u32 32, %s15
      %s195 = smul.u32 32, %s15
      %p196 = scmp.lt.s32.totalorder %s195, 63
      %s197 = scalar_select %p196, %s195, 63
      %s198 = smul.addr %s197, 4
      %s199 = scalar_lea.vmem %s4, %s198
      %s200 = smul.u32 32, %s15
      %v202 = vld [vmem:[%s193] sm:$0xf]
      %v203 = vld [vmem:[%s193 + $0x4] sm:$0xf]
      %v204 = vld [vmem:[%s193 + $0x8] sm:$0xf]
      %v205 = vld [vmem:[%s193 + $0xc] sm:$0xf]
      %v206 = vld [vmem:[%s193 + $0x10] sm:$0xf]
      %v207 = vld [vmem:[%s193 + $0x14] sm:$0xf]
      %v208 = vld [vmem:[%s193 + $0x18] sm:$0xf]
      %v209 = vld [vmem:[%s193 + $0x1c] sm:$0xf]
      %v210 = vld [vmem:[%s193 + $0x20] sm:$0xf]
      %v211 = vld [vmem:[%s193 + $0x24] sm:$0xf]
      %v212 = vld [vmem:[%s193 + $0x28] sm:$0xf]
      %v213 = vld [vmem:[%s193 + $0x2c] sm:$0xf]
      %v214 = vld [vmem:[%s193 + $0x30] sm:$0xf]
      %v215 = vld [vmem:[%s193 + $0x34] sm:$0xf]
      %v216 = vld [vmem:[%s193 + $0x38] sm:$0xf]
      %v217 = vld [vmem:[%s193 + $0x3c] sm:$0xf]
      %v218 = vld [vmem:[%s193 + $0x40] sm:$0xf]
      %v219 = vld [vmem:[%s193 + $0x44] sm:$0xf]
      %v220 = vld [vmem:[%s193 + $0x48] sm:$0xf]
      %v221 = vld [vmem:[%s193 + $0x4c] sm:$0xf]
      %v222 = vld [vmem:[%s193 + $0x50] sm:$0xf]
      %v223 = vld [vmem:[%s193 + $0x54] sm:$0xf]
      %v224 = vld [vmem:[%s193 + $0x58] sm:$0xf]
      %v225 = vld [vmem:[%s193 + $0x5c] sm:$0xf]
      %v226 = vld [vmem:[%s193 + $0x60] sm:$0xf]
      %v227 = vld [vmem:[%s193 + $0x64] sm:$0xf]
      %v228 = vld [vmem:[%s193 + $0x68] sm:$0xf]
      %v229 = vld [vmem:[%s193 + $0x6c] sm:$0xf]
      %v230 = vld [vmem:[%s193 + $0x70] sm:$0xf]
      %v231 = vld [vmem:[%s193 + $0x74] sm:$0xf]
      %v232 = vld [vmem:[%s193 + $0x78] sm:$0xf]
      %v233 = vld [vmem:[%s193 + $0x7c] sm:$0xf]
      %v234 = vld [vmem:[%s1] sm:$0xf]
      %v235 = vld [vmem:[%s1 + $0x4] sm:$0xf]
      %v236 = vld [vmem:[%s1 + $0x8] sm:$0xf]
      %v237 = vld [vmem:[%s1 + $0xc] sm:$0x3]
      %v270 = vunpack.c.l.b16 %v202
      %v271 = vunpack.c.l.b16 %v203
      %v272 = vunpack.c.l.b16 %v204
      %v273 = vunpack.c.l.b16 %v205
      %v274 = vunpack.c.l.b16 %v206
      %v275 = vunpack.c.l.b16 %v207
      %v276 = vunpack.c.l.b16 %v208
      %v277 = vunpack.c.l.b16 %v209
      %v278 = vunpack.c.l.b16 %v210
      %v279 = vunpack.c.l.b16 %v211
      %v280 = vunpack.c.l.b16 %v212
      %v281 = vunpack.c.l.b16 %v213
      %v282 = vunpack.c.l.b16 %v214
      %v283 = vunpack.c.l.b16 %v215
      %v284 = vunpack.c.l.b16 %v216
      %v285 = vunpack.c.l.b16 %v217
      %v286 = vunpack.c.l.b16 %v218
      %v287 = vunpack.c.l.b16 %v219
      %v288 = vunpack.c.l.b16 %v220
      %v289 = vunpack.c.l.b16 %v221
      %v290 = vunpack.c.l.b16 %v222
      %v291 = vunpack.c.l.b16 %v223
      %v292 = vunpack.c.l.b16 %v224
      %v293 = vunpack.c.l.b16 %v225
      %v294 = vunpack.c.l.b16 %v226
      %v295 = vunpack.c.l.b16 %v227
      %v296 = vunpack.c.l.b16 %v228
      %v297 = vunpack.c.l.b16 %v229
      %v298 = vunpack.c.l.b16 %v230
      %v299 = vunpack.c.l.b16 %v231
      %v300 = vunpack.c.l.b16 %v232
      %v301 = vunpack.c.l.b16 %v233
      %v302 = vpack.c.b16 %v271, %v270
      %v303 = vpack.c.b16 %v273, %v272
      %v304 = vpack.c.b16 %v275, %v274
      %v305 = vpack.c.b16 %v277, %v276
      %v306 = vpack.c.b16 %v279, %v278
      %v307 = vpack.c.b16 %v281, %v280
      %v308 = vpack.c.b16 %v283, %v282
      %v309 = vpack.c.b16 %v285, %v284
      %v310 = vpack.c.b16 %v287, %v286
      %v311 = vpack.c.b16 %v289, %v288
      %v312 = vpack.c.b16 %v291, %v290
      %v313 = vpack.c.b16 %v293, %v292
      %v314 = vpack.c.b16 %v295, %v294
      %v315 = vpack.c.b16 %v297, %v296
      %v316 = vpack.c.b16 %v299, %v298
      %v317 = vpack.c.b16 %v301, %v300
      %v322 = vunpack.c.l.b16 %v234
      %v323 = vunpack.c.l.b16 %v235
      %v324 = vunpack.c.l.b16 %v236
      %v325 = vunpack.c.l.b16 %v237
      %v326 = vpack.c.b16 %v323, %v322
      %v327 = vpack.c.b16 %v325, %v324
      %vm329 = vcmask 220160
      %v331 = vsel %vm329, %v302, 0
      %v334 = vsel %vm329, %v303, 0
      %v337 = vsel %vm329, %v304, 0
      %v340 = vsel %vm329, %v305, 0
      %v343 = vsel %vm329, %v306, 0
      %v346 = vsel %vm329, %v307, 0
      %v349 = vsel %vm329, %v308, 0
      %v352 = vsel %vm329, %v309, 0
      %v355 = vsel %vm329, %v310, 0
      %v358 = vsel %vm329, %v311, 0
      %v361 = vsel %vm329, %v312, 0
      %v364 = vsel %vm329, %v313, 0
      %v367 = vsel %vm329, %v314, 0
      %v370 = vsel %vm329, %v315, 0
      %v373 = vsel %vm329, %v316, 0
      %v376 = vsel %vm329, %v317, 0
      %vm378 = vcmask 1044480
      %vm379 = vcmask 1045504
      %v380 = vsel %vm378, 4294967295, 65535
      %v381 = vsel %vm379, %v380, 0
      %v383 = vand.u32 %v327, %v381
      %385 = vmatprep.subr.bf16.mxu0 0
      %386 = vmatpush1.bf16.msra.mxu0 %v326
      %387 = vmatprep.subr.bf16.mxu0 0
      %388 = vmatpush1.bf16.msra.mxu0 %v383
      %389 = vmatprep.subr.bf16.mxu0 0
      %390 = vmatpush1.bf16.msra.mxu0 0
      %391 = vmatprep.subr.bf16.mxu0 0
      %392 = vmatpush1.bf16.msra.mxu0 0
      %393 = vmatprep.subr.bf16.mxu0 0
      %394 = vmatpush1.bf16.msra.mxu0 0
      %395 = vmatprep.subr.bf16.mxu0 0
      %396 = vmatpush1.bf16.msra.mxu0 0
      %397 = vmatprep.subr.bf16.mxu0 0
      %398 = vmatpush1.bf16.msra.mxu0 0
      %399 = vmatprep.subr.bf16.mxu0 0
      %400 = vmatpush1.bf16.msra.mxu0 0
      %401 = vmatprep.subr.bf16.mxu0 0
      %402 = vmatpush1.bf16.msra.mxu0 0
      %403 = vmatprep.subr.bf16.mxu0 0
      %404 = vmatpush1.bf16.msra.mxu0 0
      %405 = vmatprep.subr.bf16.mxu0 0
      %406 = vmatpush1.bf16.msra.mxu0 0
      %407 = vmatprep.subr.bf16.mxu0 0
      %408 = vmatpush1.bf16.msra.mxu0 0
      %409 = vmatprep.subr.bf16.mxu0 0
      %410 = vmatpush1.bf16.msra.mxu0 0
      %411 = vmatprep.subr.bf16.mxu0 0
      %412 = vmatpush1.bf16.msra.mxu0 0
      %413 = vmatprep.subr.bf16.mxu0 0
      %414 = vmatpush1.bf16.msra.mxu0 0
      %415 = vmatprep.subr.bf16.mxu0 0
      %416 = vmatpush1.bf16.msra.mxu0 0
      %417 = vmatprep.mubr.bf16.mxu0 0
      %418 = vmatmul.mubr.bf16.gmra.mrb[0].mxu0 %v331
      %v419 = vpop.f32.mrb[0].mxu0
      %v420 = vadd.f32 0.0, %v419
      %v421 = vpop.f32.mrb[0].mxu0
      %v422 = vpop.f32.mrb[0].mxu0
      %v423 = vadd.f32 0.0, %v422
      %v424 = vpop.f32.mrb[0].mxu0
      %425 = vmatprep.mubr.bf16.mxu0 0
      %426 = vmatmul.mubr.bf16.gmra.mrb[0].mxu0 %v334
      %v427 = vpop.f32.mrb[0].mxu0
      %v428 = vadd.f32 0.0, %v427
      %v429 = vpop.f32.mrb[0].mxu0
      %v430 = vpop.f32.mrb[0].mxu0
      %v431 = vadd.f32 0.0, %v430
      %v432 = vpop.f32.mrb[0].mxu0
      %433 = vmatprep.mubr.bf16.mxu0 0
      %434 = vmatmul.mubr.bf16.gmra.mrb[0].mxu0 %v337
      %v435 = vpop.f32.mrb[0].mxu0
      %v436 = vadd.f32 0.0, %v435
      %v437 = vpop.f32.mrb[0].mxu0
      %v438 = vpop.f32.mrb[0].mxu0
      %v439 = vadd.f32 0.0, %v438
      %v440 = vpop.f32.mrb[0].mxu0
      %441 = vmatprep.mubr.bf16.mxu0 0
      %442 = vmatmul.mubr.bf16.gmra.mrb[0].mxu0 %v340
      %v443 = vpop.f32.mrb[0].mxu0
      %v444 = vadd.f32 0.0, %v443
      %v445 = vpop.f32.mrb[0].mxu0
      %v446 = vpop.f32.mrb[0].mxu0
      %v447 = vadd.f32 0.0, %v446
      %v448 = vpop.f32.mrb[0].mxu0
      %449 = vmatprep.mubr.bf16.mxu0 0
      %450 = vmatmul.mubr.bf16.gmra.mrb[0].mxu0 %v343
      %v451 = vpop.f32.mrb[0].mxu0
      %v452 = vadd.f32 0.0, %v451
      %v453 = vpop.f32.mrb[0].mxu0
      %v454 = vpop.f32.mrb[0].mxu0
      %v455 = vadd.f32 0.0, %v454
      %v456 = vpop.f32.mrb[0].mxu0
      %457 = vmatprep.mubr.bf16.mxu0 0
      %458 = vmatmul.mubr.bf16.gmra.mrb[0].mxu0 %v346
      %v459 = vpop.f32.mrb[0].mxu0
      %v460 = vadd.f32 0.0, %v459
      %v461 = vpop.f32.mrb[0].mxu0
      %v462 = vpop.f32.mrb[0].mxu0
      %v463 = vadd.f32 0.0, %v462
      %v464 = vpop.f32.mrb[0].mxu0
      %465 = vmatprep.mubr.bf16.mxu0 0
      %466 = vmatmul.mubr.bf16.gmra.mrb[0].mxu0 %v349
      %v467 = vpop.f32.mrb[0].mxu0
      %v468 = vadd.f32 0.0, %v467
      %v469 = vpop.f32.mrb[0].mxu0
      %v470 = vpop.f32.mrb[0].mxu0
      %v471 = vadd.f32 0.0, %v470
      %v472 = vpop.f32.mrb[0].mxu0
      %473 = vmatprep.mubr.bf16.mxu0 0
      %474 = vmatmul.mubr.bf16.gmra.mrb[0].mxu0 %v352
      %v475 = vpop.f32.mrb[0].mxu0
      %v476 = vadd.f32 0.0, %v475
      %v477 = vpop.f32.mrb[0].mxu0
      %v478 = vpop.f32.mrb[0].mxu0
      %v479 = vadd.f32 0.0, %v478
      %v480 = vpop.f32.mrb[0].mxu0
      %481 = vmatprep.mubr.bf16.mxu0 0
      %482 = vmatmul.mubr.bf16.gmra.mrb[0].mxu0 %v355
      %v483 = vpop.f32.mrb[0].mxu0
      %v484 = vadd.f32 0.0, %v483
      %v485 = vpop.f32.mrb[0].mxu0
      %v486 = vpop.f32.mrb[0].mxu0
      %v487 = vadd.f32 0.0, %v486
      %v488 = vpop.f32.mrb[0].mxu0
      %489 = vmatprep.mubr.bf16.mxu0 0
      %490 = vmatmul.mubr.bf16.gmra.mrb[0].mxu0 %v358
      %v491 = vpop.f32.mrb[0].mxu0
      %v492 = vadd.f32 0.0, %v491
      %v493 = vpop.f32.mrb[0].mxu0
      %v494 = vpop.f32.mrb[0].mxu0
      %v495 = vadd.f32 0.0, %v494
      %v496 = vpop.f32.mrb[0].mxu0
      %497 = vmatprep.mubr.bf16.mxu0 0
      %498 = vmatmul.mubr.bf16.gmra.mrb[0].mxu0 %v361
      %v499 = vpop.f32.mrb[0].mxu0
      %v500 = vadd.f32 0.0, %v499
      %v501 = vpop.f32.mrb[0].mxu0
      %v502 = vpop.f32.mrb[0].mxu0
      %v503 = vadd.f32 0.0, %v502
      %v504 = vpop.f32.mrb[0].mxu0
      %505 = vmatprep.mubr.bf16.mxu0 0
      %506 = vmatmul.mubr.bf16.gmra.mrb[0].mxu0 %v364
      %v507 = vpop.f32.mrb[0].mxu0
      %v508 = vadd.f32 0.0, %v507
      %v509 = vpop.f32.mrb[0].mxu0
      %v510 = vpop.f32.mrb[0].mxu0
      %v511 = vadd.f32 0.0, %v510
      %v512 = vpop.f32.mrb[0].mxu0
      %513 = vmatprep.mubr.bf16.mxu0 0
      %514 = vmatmul.mubr.bf16.gmra.mrb[0].mxu0 %v367
      %v515 = vpop.f32.mrb[0].mxu0
      %v516 = vadd.f32 0.0, %v515
      %v517 = vpop.f32.mrb[0].mxu0
      %v518 = vpop.f32.mrb[0].mxu0
      %v519 = vadd.f32 0.0, %v518
      %v520 = vpop.f32.mrb[0].mxu0
      %521 = vmatprep.mubr.bf16.mxu0 0
      %522 = vmatmul.mubr.bf16.gmra.mrb[0].mxu0 %v370
      %v523 = vpop.f32.mrb[0].mxu0
      %v524 = vadd.f32 0.0, %v523
      %v525 = vpop.f32.mrb[0].mxu0
      %v526 = vpop.f32.mrb[0].mxu0
      %v527 = vadd.f32 0.0, %v526
      %v528 = vpop.f32.mrb[0].mxu0
      %529 = vmatprep.mubr.bf16.mxu0 0
      %530 = vmatmul.mubr.bf16.gmra.mrb[0].mxu0 %v373
      %v531 = vpop.f32.mrb[0].mxu0
      %v532 = vadd.f32 0.0, %v531
      %v533 = vpop.f32.mrb[0].mxu0
      %v534 = vpop.f32.mrb[0].mxu0
      %v535 = vadd.f32 0.0, %v534
      %v536 = vpop.f32.mrb[0].mxu0
      %537 = vmatprep.mubr.bf16.mxu0 0
      %538 = vmatmul.mubr.bf16.gmra.mrb[0].mxu0 %v376
      %v539 = vpop.f32.mrb[0].mxu0
      %v540 = vadd.f32 0.0, %v539
      %v541 = vpop.f32.mrb[0].mxu0
      %v542 = vpop.f32.mrb[0].mxu0
      %v543 = vadd.f32 0.0, %v542
      %v544 = vpop.f32.mrb[0].mxu0
      %545 = vdwg.mxu0
      %v546 = vld [vmem:[%s2] sm:$0x1]
      %v548 = vlaneseq
      %v549 = vshrl.u32 %v548, 7
      %v550 = vsub.s32 0, %v549
      %v551 = vrot.slane %v546, %v550
      %v553 = vmul.f32 %v420, %v551
      %v554 = vmul.f32 %v423, %v551
      %v555 = vmul.f32 %v428, %v551
      %v556 = vmul.f32 %v431, %v551
      %v557 = vmul.f32 %v436, %v551
      %v558 = vmul.f32 %v439, %v551
      %v559 = vmul.f32 %v444, %v551
      %v560 = vmul.f32 %v447, %v551
      %v561 = vmul.f32 %v452, %v551
      %v562 = vmul.f32 %v455, %v551
      %v563 = vmul.f32 %v460, %v551
      %v564 = vmul.f32 %v463, %v551
      %v565 = vmul.f32 %v468, %v551
      %v566 = vmul.f32 %v471, %v551
      %v567 = vmul.f32 %v476, %v551
      %v568 = vmul.f32 %v479, %v551
      %v569 = vmul.f32 %v484, %v551
      %v570 = vmul.f32 %v487, %v551
      %v571 = vmul.f32 %v492, %v551
      %v572 = vmul.f32 %v495, %v551
      %v573 = vmul.f32 %v500, %v551
      %v574 = vmul.f32 %v503, %v551
      %v575 = vmul.f32 %v508, %v551
      %v576 = vmul.f32 %v511, %v551
      %v577 = vmul.f32 %v516, %v551
      %v578 = vmul.f32 %v519, %v551
      %v579 = vmul.f32 %v524, %v551
      %v580 = vmul.f32 %v527, %v551
      %v581 = vmul.f32 %v532, %v551
      %v582 = vmul.f32 %v535, %v551
      %v583 = vmul.f32 %v540, %v551
      %v584 = vmul.f32 %v543, %v551
      %v585 = vld [vmem:[%s3] sm:$0x1]
      %v587 = vlaneseq
      %v588 = vshrl.u32 %v587, 7
      %v589 = vsub.s32 0, %v588
      %v590 = vrot.slane %v585, %v589
      %v592 = vadd.f32 %v553, %v590
      %v593 = vadd.f32 %v554, %v590
      %v594 = vadd.f32 %v555, %v590
      %v595 = vadd.f32 %v556, %v590
      %v596 = vadd.f32 %v557, %v590
      %v597 = vadd.f32 %v558, %v590
      %v598 = vadd.f32 %v559, %v590
      %v599 = vadd.f32 %v560, %v590
      %v600 = vadd.f32 %v561, %v590
      %v601 = vadd.f32 %v562, %v590
      %v602 = vadd.f32 %v563, %v590
      %v603 = vadd.f32 %v564, %v590
      %v604 = vadd.f32 %v565, %v590
      %v605 = vadd.f32 %v566, %v590
      %v606 = vadd.f32 %v567, %v590
      %v607 = vadd.f32 %v568, %v590
      %v608 = vadd.f32 %v569, %v590
      %v609 = vadd.f32 %v570, %v590
      %v610 = vadd.f32 %v571, %v590
      %v611 = vadd.f32 %v572, %v590
      %v612 = vadd.f32 %v573, %v590
      %v613 = vadd.f32 %v574, %v590
      %v614 = vadd.f32 %v575, %v590
      %v615 = vadd.f32 %v576, %v590
      %v616 = vadd.f32 %v577, %v590
      %v617 = vadd.f32 %v578, %v590
      %v618 = vadd.f32 %v579, %v590
      %v619 = vadd.f32 %v580, %v590
      %v620 = vadd.f32 %v581, %v590
      %v621 = vadd.f32 %v582, %v590
      %v622 = vadd.f32 %v583, %v590
      %v623 = vadd.f32 %v584, %v590
      %v624 = vmax.f32 %v592, 0.0
      %v625 = vmax.f32 %v593, 0.0
      %v626 = vmax.f32 %v594, 0.0
      %v627 = vmax.f32 %v595, 0.0
      %v628 = vmax.f32 %v596, 0.0
      %v629 = vmax.f32 %v597, 0.0
      %v630 = vmax.f32 %v598, 0.0
      %v631 = vmax.f32 %v599, 0.0
      %v632 = vmax.f32 %v600, 0.0
      %v633 = vmax.f32 %v601, 0.0
      %v634 = vmax.f32 %v602, 0.0
      %v635 = vmax.f32 %v603, 0.0
      %v636 = vmax.f32 %v604, 0.0
      %v637 = vmax.f32 %v605, 0.0
      %v638 = vmax.f32 %v606, 0.0
      %v639 = vmax.f32 %v607, 0.0
      %v640 = vmax.f32 %v608, 0.0
      %v641 = vmax.f32 %v609, 0.0
      %v642 = vmax.f32 %v610, 0.0
      %v643 = vmax.f32 %v611, 0.0
      %v644 = vmax.f32 %v612, 0.0
      %v645 = vmax.f32 %v613, 0.0
      %v646 = vmax.f32 %v614, 0.0
      %v647 = vmax.f32 %v615, 0.0
      %v648 = vmax.f32 %v616, 0.0
      %v649 = vmax.f32 %v617, 0.0
      %v650 = vmax.f32 %v618, 0.0
      %v651 = vmax.f32 %v619, 0.0
      %v652 = vmax.f32 %v620, 0.0
      %v653 = vmax.f32 %v621, 0.0
      %v654 = vmax.f32 %v622, 0.0
      %v655 = vmax.f32 %v623, 0.0
      %v656 = vpack.c.bf16 %v625, %v624
      %v657 = vpack.c.bf16 %v627, %v626
      %v658 = vpack.c.bf16 %v629, %v628
      %v659 = vpack.c.bf16 %v631, %v630
      %v660 = vpack.c.bf16 %v633, %v632
      %v661 = vpack.c.bf16 %v635, %v634
      %v662 = vpack.c.bf16 %v637, %v636
      %v663 = vpack.c.bf16 %v639, %v638
      %v664 = vpack.c.bf16 %v641, %v640
      %v665 = vpack.c.bf16 %v643, %v642
      %v666 = vpack.c.bf16 %v645, %v644
      %v667 = vpack.c.bf16 %v647, %v646
      %v668 = vpack.c.bf16 %v649, %v648
      %v669 = vpack.c.bf16 %v651, %v650
      %v670 = vpack.c.bf16 %v653, %v652
      %v671 = vpack.c.bf16 %v655, %v654
      %v688 = vunpack.c.l.b16 %v656
      %v689 = vunpack.c.h.b16 %v656
      %v690 = vunpack.c.l.b16 %v657
      %v691 = vunpack.c.h.b16 %v657
      %v692 = vunpack.c.l.b16 %v658
      %v693 = vunpack.c.h.b16 %v658
      %v694 = vunpack.c.l.b16 %v659
      %v695 = vunpack.c.h.b16 %v659
      %v696 = vunpack.c.l.b16 %v660
      %v697 = vunpack.c.h.b16 %v660
      %v698 = vunpack.c.l.b16 %v661
      %v699 = vunpack.c.h.b16 %v661
      %v700 = vunpack.c.l.b16 %v662
      %v701 = vunpack.c.h.b16 %v662
      %v702 = vunpack.c.l.b16 %v663
      %v703 = vunpack.c.h.b16 %v663
      %v704 = vunpack.c.l.b16 %v664
      %v705 = vunpack.c.h.b16 %v664
      %v706 = vunpack.c.l.b16 %v665
      %v707 = vunpack.c.h.b16 %v665
      %v708 = vunpack.c.l.b16 %v666
      %v709 = vunpack.c.h.b16 %v666
      %v710 = vunpack.c.l.b16 %v667
      %v711 = vunpack.c.h.b16 %v667
      %v712 = vunpack.c.l.b16 %v668
      %v713 = vunpack.c.h.b16 %v668
      %v714 = vunpack.c.l.b16 %v669
      %v715 = vunpack.c.h.b16 %v669
      %v716 = vunpack.c.l.b16 %v670
      %v717 = vunpack.c.h.b16 %v670
      %v718 = vunpack.c.l.b16 %v671
      %v719 = vunpack.c.h.b16 %v671
      %v720 = vpack.c.b16 %v688, %v688
      %v721 = vpack.c.b16 %v689, %v689
      %v722 = vpack.c.b16 %v690, %v690
      %v723 = vpack.c.b16 %v691, %v691
      %v724 = vpack.c.b16 %v692, %v692
      %v725 = vpack.c.b16 %v693, %v693
      %v726 = vpack.c.b16 %v694, %v694
      %v727 = vpack.c.b16 %v695, %v695
      %v728 = vpack.c.b16 %v696, %v696
      %v729 = vpack.c.b16 %v697, %v697
      %v730 = vpack.c.b16 %v698, %v698
      %v731 = vpack.c.b16 %v699, %v699
      %v732 = vpack.c.b16 %v700, %v700
      %v733 = vpack.c.b16 %v701, %v701
      %v734 = vpack.c.b16 %v702, %v702
      %v735 = vpack.c.b16 %v703, %v703
      %v736 = vpack.c.b16 %v704, %v704
      %v737 = vpack.c.b16 %v705, %v705
      %v738 = vpack.c.b16 %v706, %v706
      %v739 = vpack.c.b16 %v707, %v707
      %v740 = vpack.c.b16 %v708, %v708
      %v741 = vpack.c.b16 %v709, %v709
      %v742 = vpack.c.b16 %v710, %v710
      %v743 = vpack.c.b16 %v711, %v711
      %v744 = vpack.c.b16 %v712, %v712
      %v745 = vpack.c.b16 %v713, %v713
      %v746 = vpack.c.b16 %v714, %v714
      %v747 = vpack.c.b16 %v715, %v715
      %v748 = vpack.c.b16 %v716, %v716
      %v749 = vpack.c.b16 %v717, %v717
      %v750 = vpack.c.b16 %v718, %v718
      %v751 = vpack.c.b16 %v719, %v719
      %784 = vst [vmem:[%s199] sm:$0xf] %v720
      %785 = vst [vmem:[%s199 + $0x4] sm:$0xf] %v721
      %786 = vst [vmem:[%s199 + $0x8] sm:$0xf] %v722
      %787 = vst [vmem:[%s199 + $0xc] sm:$0xf] %v723
      %788 = vst [vmem:[%s199 + $0x10] sm:$0xf] %v724
      %789 = vst [vmem:[%s199 + $0x14] sm:$0xf] %v725
      %790 = vst [vmem:[%s199 + $0x18] sm:$0xf] %v726
      %791 = vst [vmem:[%s199 + $0x1c] sm:$0xf] %v727
      %792 = vst [vmem:[%s199 + $0x20] sm:$0xf] %v728
      %793 = vst [vmem:[%s199 + $0x24] sm:$0xf] %v729
      %794 = vst [vmem:[%s199 + $0x28] sm:$0xf] %v730
      %795 = vst [vmem:[%s199 + $0x2c] sm:$0xf] %v731
      %796 = vst [vmem:[%s199 + $0x30] sm:$0xf] %v732
      %797 = vst [vmem:[%s199 + $0x34] sm:$0xf] %v733
      %798 = vst [vmem:[%s199 + $0x38] sm:$0xf] %v734
      %799 = vst [vmem:[%s199 + $0x3c] sm:$0xf] %v735
      %800 = vst [vmem:[%s199 + $0x40] sm:$0xf] %v736
      %801 = vst [vmem:[%s199 + $0x44] sm:$0xf] %v737
      %802 = vst [vmem:[%s199 + $0x48] sm:$0xf] %v738
      %803 = vst [vmem:[%s199 + $0x4c] sm:$0xf] %v739
      %804 = vst [vmem:[%s199 + $0x50] sm:$0xf] %v740
      %805 = vst [vmem:[%s199 + $0x54] sm:$0xf] %v741
      %806 = vst [vmem:[%s199 + $0x58] sm:$0xf] %v742
      %807 = vst [vmem:[%s199 + $0x5c] sm:$0xf] %v743
      %808 = vst [vmem:[%s199 + $0x60] sm:$0xf] %v744
      %809 = vst [vmem:[%s199 + $0x64] sm:$0xf] %v745
      %810 = vst [vmem:[%s199 + $0x68] sm:$0xf] %v746
      %811 = vst [vmem:[%s199 + $0x6c] sm:$0xf] %v747
      %812 = vst [vmem:[%s199 + $0x70] sm:$0xf] %v748
      %813 = vst [vmem:[%s199 + $0x74] sm:$0xf] %v749
      %814 = vst [vmem:[%s199 + $0x78] sm:$0xf] %v750
      %815 = vst [vmem:[%s199 + $0x7c] sm:$0xf] %v751
      %s816 = smul.u32 32, %s15
      %p817 = scmp.lt.s32.totalorder %s816, 63
      %s818 = scalar_select %p817, %s816, 63
      %s819 = smul.addr %s818, 4
      %s820 = scalar_lea.vmem %s4, %s819
      // Predicated region
      $region37: #{shrinknet_forward.10} parent=35 // pred_check
        %p821 = pneg %p122
      $region38: #{shrinknet_forward.10} parent=35 // pred_check_branch
        %823 = sbr.rel (%p821) target = $region40
      $region39: #{shrinknet_forward.10} parent=35 // pred_region
        %s824 = smul.u32 32, %s15
      $region40: #{shrinknet_forward.10} parent=35 // pred_fallthru
        _
    $region36: #{shrinknet_forward.10} parent=5 // pred_fallthru
      _
    %p825 = scmp.le.s32.totalorder 2, %s10
    // Predicated region
    $region41: #{shrinknet_forward.10} parent=5 // pred_check
      %p826 = pneg %p825
    $region42: #{shrinknet_forward.10} parent=5 // pred_check_branch
      %828 = sbr.rel (%p826) target = $region44
    $region43: #{shrinknet_forward.10} parent=5 // pred_region
      %s829 = ssub.s32 %s10, 2
      // Predicated region
      $region45: #{shrinknet_forward.10} parent=43 // pred_check
        %p830 = pneg %p128
      $region46: #{shrinknet_forward.10} parent=43 // pred_check_branch
        %832 = sbr.rel (%p830) target = $region48
      $region47: #{shrinknet_forward.10} parent=43 // pred_region
        %s833 = smul.u32 32, %s16
        %p834 = scmp.lt.s32.totalorder %s833, 63
        %s835 = scalar_select %p834, %s833, 63
        %s836 = smul.addr %s835, 4
        %s837 = scalar_lea.vmem %s4, %s836
      $region48: #{shrinknet_forward.10} parent=43 // pred_fallthru
        _
    $region44: #{shrinknet_forward.10} parent=5 // pred_fallthru
      _
  $region6: #{shrinknet_forward.10} parent=0 // loop_footer
    %s14 = sadd.s32 1, %s10
  $region7: #{shrinknet_forward.10} parent=0 // loop_footer_branch
    %9 = sbr.rel target = $region3
  $region8: #{shrinknet_forward.10} parent=0 // loop_exit
    _

// kernel: shrinknet_forward.11
$region0: #{shrinknet_forward.11}
  #allocation0 [shape = 'u32[]', space=smem, size = 0x4, offset = 0x4, fixed_abs, tag = 'smem constant byte address 0x4 - core index']
  #allocation1 [shape = 'u32[144,128]{1,0:T(1,128)}', space=vmem, size = 0x12000, scoped, tag = 'internal scratch']
  %s0 = inlined_call_operand.vmem [shape: bf16[512,144], index: 0, kind: input, shape index: {}]
  %s1 = inlined_call_operand.vmem [shape: bf16[144,128], index: 1, kind: input, shape index: {}]
  %s2 = inlined_call_operand.vmem [shape: f32[1,128], index: 2, kind: input, shape index: {}]
  %s3 = inlined_call_operand.vmem [shape: f32[1,128], index: 3, kind: input, shape index: {}]
  %s4 = inlined_call_operand.vmem [shape: bf16[512,128], index: 4, kind: output, shape index: {}]
  %s5 = sld [smem:[#allocation0]]
  $region49: #{shrinknet_forward.11} parent=0
    _
  %s7 = ssub.s32 1, %s5
  %s8 = scalar_select 0, %s7, %s5
  loop: start=0, step=1, limit=4
  $region2: #{shrinknet_forward.11} parent=0 // loop_pre_header
    _
  $region3: #{shrinknet_forward.11} parent=0 // loop_header
    %s10 = sphi 0, %s14
    %p11 = scmp.ge.s32.totalorder %s10, 4
    %s20 = sphi 0, %s22
    %s23 = sphi 0, %s20
    %s24 = sphi 0, %s23
    %s40 = sphi 0, %s24
    %s44 = sphi 0, %s44
    %s46 = sphi 0, %s44
    %s47 = sphi 0, %s46
    %s61 = sphi 0, %s47
    %s65 = sphi 0, %s65
    %s67 = sphi 0, %s65
    %s68 = sphi 0, %s67
    %s82 = sphi 0, %s68
    %s86 = sphi 0, %s86
    %s88 = sphi 0, %s86
    %s89 = sphi 0, %s88
    %s103 = sphi 0, %s89
    %s109 = sphi 0, %s111
    %s112 = sphi 0, %s109
    %s113 = sphi 0, %s112
    %s129 = sphi 0, %s113
  $region4: #{shrinknet_forward.11} parent=0 // loop_header_branch
    %13 = sbr.rel (%p11) target = $region8
  $region5: #{shrinknet_forward.11} parent=0 // loop_body
    %s15 = ssub.s32 %s10, 1
    %s16 = ssub.s32 %s10, 2
    %s17 = sadd.s32 %s10, 1
    %s18 = ssub.s32 %s10, %s17
    %p19 = scmp.eq.s32.totalorder %s18, 0
    %s21 = sadd.s32 %s20, 1
    %s22 = scalar_select %p19, %s20, %s21
    %p25 = pneg %p19
    %p26 = scmp.eq.s32.totalorder %s10, 1
    %p27 = por %p25, %p26
    %p28 = scmp.ne.s32.totalorder %s20, %s23
    %p29 = scmp.eq.s32.totalorder %s10, 0
    %p30 = por %p28, %p29
    %p31 = scmp.ne.s32.totalorder %s20, %s23
    %p32 = scmp.eq.s32.totalorder %s15, 1
    %p33 = por %p31, %p32
    %p34 = scmp.ne.s32.totalorder %s23, %s24
    %p35 = scmp.eq.s32.totalorder %s15, 0
    %p36 = por %p34, %p35
    %p37 = scmp.ne.s32.totalorder %s23, %s24
    %p38 = scmp.eq.s32.totalorder %s16, 1
    %p39 = por %p37, %p38
    %p41 = scmp.ne.s32.totalorder %s24, %s40
    %p42 = scmp.eq.s32.totalorder %s16, 0
    %p43 = por %p41, %p42
    %s45 = sadd.s32 %s44, 1
    %p48 = scmp.eq.s32.totalorder %s10, 1
    %p49 = scmp.ne.s32.totalorder %s44, %s46
    %p50 = scmp.eq.s32.totalorder %s10, 0
    %p51 = por %p49, %p50
    %p52 = scmp.ne.s32.totalorder %s44, %s46
    %p53 = scmp.eq.s32.totalorder %s15, 1
    %p54 = por %p52, %p53
    %p55 = scmp.ne.s32.totalorder %s46, %s47
    %p56 = scmp.eq.s32.totalorder %s15, 0
    %p57 = por %p55, %p56
    %p58 = scmp.ne.s32.totalorder %s46, %s47
    %p59 = scmp.eq.s32.totalorder %s16, 1
    %p60 = por %p58, %p59
    %p62 = scmp.ne.s32.totalorder %s47, %s61
    %p63 = scmp.eq.s32.totalorder %s16, 0
    %p64 = por %p62, %p63
    %s66 = sadd.s32 %s65, 1
    %p69 = scmp.eq.s32.totalorder %s10, 1
    %p70 = scmp.ne.s32.totalorder %s65, %s67
    %p71 = scmp.eq.s32.totalorder %s10, 0
    %p72 = por %p70, %p71
    %p73 = scmp.ne.s32.totalorder %s65, %s67
    %p74 = scmp.eq.s32.totalorder %s15, 1
    %p75 = por %p73, %p74
    %p76 = scmp.ne.s32.totalorder %s67, %s68
    %p77 = scmp.eq.s32.totalorder %s15, 0
    %p78 = por %p76, %p77
    %p79 = scmp.ne.s32.totalorder %s67, %s68
    %p80 = scmp.eq.s32.totalorder %s16, 1
    %p81 = por %p79, %p80
    %p83 = scmp.ne.s32.totalorder %s68, %s82
    %p84 = scmp.eq.s32.totalorder %s16, 0
    %p85 = por %p83, %p84
    %s87 = sadd.s32 %s86, 1
    %p90 = scmp.eq.s32.totalorder %s10, 1
    %p91 = scmp.ne.s32.totalorder %s86, %s88
    %p92 = scmp.eq.s32.totalorder %s10, 0
    %p93 = por %p91, %p92
    %p94 = scmp.ne.s32.totalorder %s86, %s88
    %p95 = scmp.eq.s32.totalorder %s15, 1
    %p96 = por %p94, %p95
    %p97 = scmp.ne.s32.totalorder %s88, %s89
    %p98 = scmp.eq.s32.totalorder %s15, 0
    %p99 = por %p97, %p98
    %p100 = scmp.ne.s32.totalorder %s88, %s89
    %p101 = scmp.eq.s32.totalorder %s16, 1
    %p102 = por %p100, %p101
    %p104 = scmp.ne.s32.totalorder %s89, %s103
    %p105 = scmp.eq.s32.totalorder %s16, 0
    %p106 = por %p104, %p105
    %s107 = ssub.s32 %s10, %s17
    %p108 = scmp.eq.s32.totalorder %s107, 0
    %s110 = sadd.s32 %s109, 1
    %s111 = scalar_select %p108, %s109, %s110
    %p114 = pneg %p108
    %p115 = scmp.eq.s32.totalorder %s10, 1
    %p116 = por %p114, %p115
    %p117 = scmp.ne.s32.totalorder %s109, %s112
    %p118 = scmp.eq.s32.totalorder %s10, 0
    %p119 = por %p117, %p118
    %p120 = scmp.ne.s32.totalorder %s109, %s112
    %p121 = scmp.eq.s32.totalorder %s15, 1
    %p122 = por %p120, %p121
    %p123 = scmp.ne.s32.totalorder %s112, %s113
    %p124 = scmp.eq.s32.totalorder %s15, 0
    %p125 = por %p123, %p124
    %p126 = scmp.ne.s32.totalorder %s112, %s113
    %p127 = scmp.eq.s32.totalorder %s16, 1
    %p128 = por %p126, %p127
    %p130 = scmp.ne.s32.totalorder %s113, %s129
    %p131 = scmp.eq.s32.totalorder %s16, 0
    %p132 = por %p130, %p131
    %p133 = scmp.le.s32.totalorder 1, %s10
    %p134 = scmp.lt.s32.totalorder %s10, 3
    %p135 = pnand %p133, %p134
    %p136 = pneg %p135
    // Predicated region
    $region9: #{shrinknet_forward.11} parent=5 // pred_check
      _
    $region10: #{shrinknet_forward.11} parent=5 // pred_check_branch
      %138 = sbr.rel (%p135) target = $region12
    $region11: #{shrinknet_forward.11} parent=5 // pred_region
      %s139 = ssub.s32 %s10, 1
      // Predicated region
      $region13: #{shrinknet_forward.11} parent=11 // pred_check
        %p140 = pneg %p57
      $region14: #{shrinknet_forward.11} parent=11 // pred_check_branch
        %142 = sbr.rel (%p140) target = $region16
      $region15: #{shrinknet_forward.11} parent=11 // pred_region
        _
      $region16: #{shrinknet_forward.11} parent=11 // pred_fallthru
        _
      // Predicated region
      $region17: #{shrinknet_forward.11} parent=11 // pred_check
        %p143 = pneg %p78
      $region18: #{shrinknet_forward.11} parent=11 // pred_check_branch
        %145 = sbr.rel (%p143) target = $region20
      $region19: #{shrinknet_forward.11} parent=11 // pred_region
        _
      $region20: #{shrinknet_forward.11} parent=11 // pred_fallthru
        _
      // Predicated region
      $region21: #{shrinknet_forward.11} parent=11 // pred_check
        %p146 = pneg %p99
      $region22: #{shrinknet_forward.11} parent=11 // pred_check_branch
        %148 = sbr.rel (%p146) target = $region24
      $region23: #{shrinknet_forward.11} parent=11 // pred_region
        _
      $region24: #{shrinknet_forward.11} parent=11 // pred_fallthru
        _
    $region12: #{shrinknet_forward.11} parent=5 // pred_fallthru
      _
    %p149 = scmp.lt.s32.totalorder %s10, 2
    // Predicated region
    $region25: #{shrinknet_forward.11} parent=5 // pred_check
      %p150 = pneg %p149
    $region26: #{shrinknet_forward.11} parent=5 // pred_check_branch
      %152 = sbr.rel (%p150) target = $region28
    $region27: #{shrinknet_forward.11} parent=5 // pred_region
      // Predicated region
      $region29: #{shrinknet_forward.11} parent=27 // pred_check
        %p153 = pneg %p30
      $region30: #{shrinknet_forward.11} parent=27 // pred_check_branch
        %155 = sbr.rel (%p153) target = $region32
      $region31: #{shrinknet_forward.11} parent=27 // pred_region
        %s156 = smul.u32 32, %s10
        %p157 = scmp.lt.s32.totalorder %s156, 63
        %s158 = scalar_select %p157, %s156, 63
        %s159 = smul.addr %s158, 2
        %s160 = smul.addr %s159, 4
        %s161 = scalar_lea.vmem %s0, %s160
        %s162 = smul.u32 32, %s10
      $region32: #{shrinknet_forward.11} parent=27 // pred_fallthru
        _
    $region28: #{shrinknet_forward.11} parent=5 // pred_fallthru
      _
    %p163 = scmp.le.s32.totalorder 1, %s10
    %p164 = scmp.lt.s32.totalorder %s10, 3
    %p165 = pnand %p163, %p164
    %p166 = pneg %p165
    // Predicated region
    $region33: #{shrinknet_forward.11} parent=5 // pred_check
      _
    $region34: #{shrinknet_forward.11} parent=5 // pred_check_branch
      %168 = sbr.rel (%p165) target = $region36
    $region35: #{shrinknet_forward.11} parent=5 // pred_region
      %s169 = ssub.s32 %s10, 1
      %s170 = smul.u32 32, %s15
      %p171 = scmp.lt.s32.totalorder %s170, 63
      %s172 = scalar_select %p171, %s170, 63
      %s173 = smul.addr %s172, 2
      %s174 = smul.addr %s173, 4
      %s175 = scalar_lea.vmem %s0, %s174
      %p176 = pneg %p36
      %p177 = pneg %p33
      %p178 = pneg %p57
      %p179 = pneg %p54
      %p180 = pneg %p78
      %p181 = pneg %p75
      %p182 = pneg %p99
      %p183 = pneg %p96
      %p184 = pneg %p125
      %p185 = pneg %p122
      %s186 = smul.u32 32, %s15
      %p187 = scmp.lt.s32.totalorder %s186, 63
      %s188 = scalar_select %p187, %s186, 63
      %s189 = smul.addr %s188, 4
      %s190 = scalar_lea.vmem %s4, %s189
      %s191 = smul.u32 32, %s15
      %p192 = scmp.lt.s32.totalorder %s191, 63
      %s193 = scalar_select %p192, %s191, 63
      %s194 = smul.addr %s193, 2
      %s195 = smul.addr %s194, 4
      %s196 = scalar_lea.vmem %s0, %s195
      %s197 = smul.u32 32, %s15
      %s198 = smul.u32 32, %s15
      %p199 = scmp.lt.s32.totalorder %s198, 63
      %s200 = scalar_select %p199, %s198, 63
      %s201 = smul.addr %s200, 4
      %s202 = scalar_lea.vmem %s4, %s201
      %s203 = smul.u32 32, %s15
      %v205 = vld [vmem:[%s196] sm:$0xff]
      %v206 = vld [vmem:[%s196 + $0x8] sm:$0xff]
      %v207 = vld [vmem:[%s196 + $0x10] sm:$0xff]
      %v208 = vld [vmem:[%s196 + $0x18] sm:$0xff]
      %v209 = vld [vmem:[%s196 + $0x20] sm:$0xff]
      %v210 = vld [vmem:[%s196 + $0x28] sm:$0xff]
      %v211 = vld [vmem:[%s196 + $0x30] sm:$0xff]
      %v212 = vld [vmem:[%s196 + $0x38] sm:$0xff]
      %v213 = vld [vmem:[%s196 + $0x40] sm:$0xff]
      %v214 = vld [vmem:[%s196 + $0x48] sm:$0xff]
      %v215 = vld [vmem:[%s196 + $0x50] sm:$0xff]
      %v216 = vld [vmem:[%s196 + $0x58] sm:$0xff]
      %v217 = vld [vmem:[%s196 + $0x60] sm:$0xff]
      %v218 = vld [vmem:[%s196 + $0x68] sm:$0xff]
      %v219 = vld [vmem:[%s196 + $0x70] sm:$0xff]
      %v220 = vld [vmem:[%s196 + $0x78] sm:$0xff]
      %v221 = vld [vmem:[%s196 + $0x80] sm:$0xff]
      %v222 = vld [vmem:[%s196 + $0x88] sm:$0xff]
      %v223 = vld [vmem:[%s196 + $0x90] sm:$0xff]
      %v224 = vld [vmem:[%s196 + $0x98] sm:$0xff]
      %v225 = vld [vmem:[%s196 + $0xa0] sm:$0xff]
      %v226 = vld [vmem:[%s196 + $0xa8] sm:$0xff]
      %v227 = vld [vmem:[%s196 + $0xb0] sm:$0xff]
      %v228 = vld [vmem:[%s196 + $0xb8] sm:$0xff]
      %v229 = vld [vmem:[%s196 + $0xc0] sm:$0xff]
      %v230 = vld [vmem:[%s196 + $0xc8] sm:$0xff]
      %v231 = vld [vmem:[%s196 + $0xd0] sm:$0xff]
      %v232 = vld [vmem:[%s196 + $0xd8] sm:$0xff]
      %v233 = vld [vmem:[%s196 + $0xe0] sm:$0xff]
      %v234 = vld [vmem:[%s196 + $0xe8] sm:$0xff]
      %v235 = vld [vmem:[%s196 + $0xf0] sm:$0xff]
      %v236 = vld [vmem:[%s196 + $0xf8] sm:$0xff]
      %v237 = vld [vmem:[%s1] sm:$0xf]
      %v238 = vld [vmem:[%s1 + $0x4] sm:$0xf]
      %v239 = vld [vmem:[%s1 + $0x8] sm:$0xf]
      %v240 = vld [vmem:[%s1 + $0xc] sm:$0xf]
      %v241 = vld [vmem:[%s1 + $0x10] sm:$0xf]
      %v242 = vld [vmem:[%s1 + $0x14] sm:$0xf]
      %v243 = vld [vmem:[%s1 + $0x18] sm:$0xf]
      %v244 = vld [vmem:[%s1 + $0x1c] sm:$0xf]
      %v245 = vld [vmem:[%s1 + $0x20] sm:$0xf]
      %v246 = vld [vmem:[%s1 + $0x24] sm:$0xf]
      %v247 = vld [vmem:[%s1 + $0x28] sm:$0xf]
      %v248 = vld [vmem:[%s1 + $0x2c] sm:$0xf]
      %v249 = vld [vmem:[%s1 + $0x30] sm:$0xf]
      %v250 = vld [vmem:[%s1 + $0x34] sm:$0xf]
      %v251 = vld [vmem:[%s1 + $0x38] sm:$0xf]
      %v252 = vld [vmem:[%s1 + $0x3c] sm:$0xf]
      %v253 = vld [vmem:[%s1 + $0x40] sm:$0xf]
      %v254 = vld [vmem:[%s1 + $0x44] sm:$0xf]
      %v287 = vunpack.c.l.b16 %v205
      %v288 = vunpack.c.h.b16 %v205
      %v289 = vunpack.c.l.b16 %v206
      %v290 = vunpack.c.h.b16 %v206
      %v291 = vunpack.c.l.b16 %v207
      %v292 = vunpack.c.h.b16 %v207
      %v293 = vunpack.c.l.b16 %v208
      %v294 = vunpack.c.h.b16 %v208
      %v295 = vunpack.c.l.b16 %v209
      %v296 = vunpack.c.h.b16 %v209
      %v297 = vunpack.c.l.b16 %v210
      %v298 = vunpack.c.h.b16 %v210
      %v299 = vunpack.c.l.b16 %v211
      %v300 = vunpack.c.h.b16 %v211
      %v301 = vunpack.c.l.b16 %v212
      %v302 = vunpack.c.h.b16 %v212
      %v303 = vunpack.c.l.b16 %v213
      %v304 = vunpack.c.h.b16 %v213
      %v305 = vunpack.c.l.b16 %v214
      %v306 = vunpack.c.h.b16 %v214
      %v307 = vunpack.c.l.b16 %v215
      %v308 = vunpack.c.h.b16 %v215
      %v309 = vunpack.c.l.b16 %v216
      %v310 = vunpack.c.h.b16 %v216
      %v311 = vunpack.c.l.b16 %v217
      %v312 = vunpack.c.h.b16 %v217
      %v313 = vunpack.c.l.b16 %v218
      %v314 = vunpack.c.h.b16 %v218
      %v315 = vunpack.c.l.b16 %v219
      %v316 = vunpack.c.h.b16 %v219
      %v317 = vunpack.c.l.b16 %v220
      %v318 = vunpack.c.h.b16 %v220
      %v319 = vunpack.c.l.b16 %v221
      %v320 = vunpack.c.h.b16 %v221
      %v321 = vunpack.c.l.b16 %v222
      %v322 = vunpack.c.h.b16 %v222
      %v323 = vunpack.c.l.b16 %v223
      %v324 = vunpack.c.h.b16 %v223
      %v325 = vunpack.c.l.b16 %v224
      %v326 = vunpack.c.h.b16 %v224
      %v327 = vunpack.c.l.b16 %v225
      %v328 = vunpack.c.h.b16 %v225
      %v329 = vunpack.c.l.b16 %v226
      %v330 = vunpack.c.h.b16 %v226
      %v331 = vunpack.c.l.b16 %v227
      %v332 = vunpack.c.h.b16 %v227
      %v333 = vunpack.c.l.b16 %v228
      %v334 = vunpack.c.h.b16 %v228
      %v335 = vunpack.c.l.b16 %v229
      %v336 = vunpack.c.h.b16 %v229
      %v337 = vunpack.c.l.b16 %v230
      %v338 = vunpack.c.h.b16 %v230
      %v339 = vunpack.c.l.b16 %v231
      %v340 = vunpack.c.h.b16 %v231
      %v341 = vunpack.c.l.b16 %v232
      %v342 = vunpack.c.h.b16 %v232
      %v343 = vunpack.c.l.b16 %v233
      %v344 = vunpack.c.h.b16 %v233
      %v345 = vunpack.c.l.b16 %v234
      %v346 = vunpack.c.h.b16 %v234
      %v347 = vunpack.c.l.b16 %v235
      %v348 = vunpack.c.h.b16 %v235
      %v349 = vunpack.c.l.b16 %v236
      %v350 = vunpack.c.h.b16 %v236
      %v351 = vpack.c.b16 %v289, %v287
      %v352 = vpack.c.b16 %v290, %v288
      %v353 = vpack.c.b16 %v293, %v291
      %v354 = vpack.c.b16 %v294, %v292
      %v355 = vpack.c.b16 %v297, %v295
      %v356 = vpack.c.b16 %v298, %v296
      %v357 = vpack.c.b16 %v301, %v299
      %v358 = vpack.c.b16 %v302, %v300
      %v359 = vpack.c.b16 %v305, %v303
      %v360 = vpack.c.b16 %v306, %v304
      %v361 = vpack.c.b16 %v309, %v307
      %v362 = vpack.c.b16 %v310, %v308
      %v363 = vpack.c.b16 %v313, %v311
      %v364 = vpack.c.b16 %v314, %v312
      %v365 = vpack.c.b16 %v317, %v315
      %v366 = vpack.c.b16 %v318, %v316
      %v367 = vpack.c.b16 %v321, %v319
      %v368 = vpack.c.b16 %v322, %v320
      %v369 = vpack.c.b16 %v325, %v323
      %v370 = vpack.c.b16 %v326, %v324
      %v371 = vpack.c.b16 %v329, %v327
      %v372 = vpack.c.b16 %v330, %v328
      %v373 = vpack.c.b16 %v333, %v331
      %v374 = vpack.c.b16 %v334, %v332
      %v375 = vpack.c.b16 %v337, %v335
      %v376 = vpack.c.b16 %v338, %v336
      %v377 = vpack.c.b16 %v341, %v339
      %v378 = vpack.c.b16 %v342, %v340
      %v379 = vpack.c.b16 %v345, %v343
      %v380 = vpack.c.b16 %v346, %v344
      %v381 = vpack.c.b16 %v349, %v347
      %v382 = vpack.c.b16 %v350, %v348
      %v417 = vunpack.c.l.b16 %v237
      %v418 = vunpack.c.l.b16 %v238
      %v419 = vunpack.c.l.b16 %v239
      %v420 = vunpack.c.l.b16 %v240
      %v421 = vunpack.c.l.b16 %v241
      %v422 = vunpack.c.l.b16 %v242
      %v423 = vunpack.c.l.b16 %v243
      %v424 = vunpack.c.l.b16 %v244
      %v425 = vunpack.c.l.b16 %v245
      %v426 = vunpack.c.l.b16 %v246
      %v427 = vunpack.c.l.b16 %v247
      %v428 = vunpack.c.l.b16 %v248
      %v429 = vunpack.c.l.b16 %v249
      %v430 = vunpack.c.l.b16 %v250
      %v431 = vunpack.c.l.b16 %v251
      %v432 = vunpack.c.l.b16 %v252
      %v433 = vunpack.c.l.b16 %v253
      %v434 = vunpack.c.l.b16 %v254
      %v435 = vpack.c.b16 %v418, %v417
      %v436 = vpack.c.b16 %v420, %v419
      %v437 = vpack.c.b16 %v422, %v421
      %v438 = vpack.c.b16 %v424, %v423
      %v439 = vpack.c.b16 %v426, %v425
      %v440 = vpack.c.b16 %v428, %v427
      %v441 = vpack.c.b16 %v430, %v429
      %v442 = vpack.c.b16 %v432, %v431
      %v443 = vpack.c.b16 %v434, %v433
      %vm453 = vcmask 130048
      %v455 = vsel %vm453, %v352, 0
      %v458 = vsel %vm453, %v354, 0
      %v461 = vsel %vm453, %v356, 0
      %v464 = vsel %vm453, %v358, 0
      %v467 = vsel %vm453, %v360, 0
      %v470 = vsel %vm453, %v362, 0
      %v473 = vsel %vm453, %v364, 0
      %v476 = vsel %vm453, %v366, 0
      %v479 = vsel %vm453, %v368, 0
      %v482 = vsel %vm453, %v370, 0
      %v485 = vsel %vm453, %v372, 0
      %v488 = vsel %vm453, %v374, 0
      %v491 = vsel %vm453, %v376, 0
      %v494 = vsel %vm453, %v378, 0
      %v497 = vsel %vm453, %v380, 0
      %v500 = vsel %vm453, %v382, 0
      %502 = vmatprep.subr.bf16.mxu0 0
      %503 = vmatpush1.bf16.msra.mxu0 %v435
      %504 = vmatprep.subr.bf16.mxu0 0
      %505 = vmatpush1.bf16.msra.mxu0 %v436
      %506 = vmatprep.subr.bf16.mxu0 0
      %507 = vmatpush1.bf16.msra.mxu0 %v437
      %508 = vmatprep.subr.bf16.mxu0 0
      %509 = vmatpush1.bf16.msra.mxu0 %v438
      %510 = vmatprep.subr.bf16.mxu0 0
      %511 = vmatpush1.bf16.msra.mxu0 %v439
      %512 = vmatprep.subr.bf16.mxu0 0
      %513 = vmatpush1.bf16.msra.mxu0 %v440
      %514 = vmatprep.subr.bf16.mxu0 0
      %515 = vmatpush1.bf16.msra.mxu0 %v441
      %516 = vmatprep.subr.bf16.mxu0 0
      %517 = vmatpush1.bf16.msra.mxu0 %v442
      %518 = vmatprep.subr.bf16.mxu0 0
      %519 = vmatpush1.bf16.msra.mxu0 %v443
      %520 = vmatprep.subr.bf16.mxu0 0
      %521 = vmatpush1.bf16.msra.mxu0 0
      %522 = vmatprep.subr.bf16.mxu0 0
      %523 = vmatpush1.bf16.msra.mxu0 0
      %524 = vmatprep.subr.bf16.mxu0 0
      %525 = vmatpush1.bf16.msra.mxu0 0
      %526 = vmatprep.subr.bf16.mxu0 0
      %527 = vmatpush1.bf16.msra.mxu0 0
      %528 = vmatprep.subr.bf16.mxu0 0
      %529 = vmatpush1.bf16.msra.mxu0 0
      %530 = vmatprep.subr.bf16.mxu0 0
      %531 = vmatpush1.bf16.msra.mxu0 0
      %532 = vmatprep.subr.bf16.mxu0 0
      %533 = vmatpush1.bf16.msra.mxu0 0
      %534 = vmatprep.mubr.bf16.mxu0 %v455
      %535 = vmatmul.mubr.bf16.gmra.mrb[0].mxu0 %v351
      %v536 = vpop.f32.mrb[0].mxu0
      %v537 = vadd.f32 0.0, %v536
      %v538 = vpop.f32.mrb[0].mxu0
      %v539 = vpop.f32.mrb[0].mxu0
      %v540 = vadd.f32 0.0, %v539
      %v541 = vpop.f32.mrb[0].mxu0
      %542 = vmatprep.mubr.bf16.mxu0 %v458
      %543 = vmatmul.mubr.bf16.gmra.mrb[0].mxu0 %v353
      %v544 = vpop.f32.mrb[0].mxu0
      %v545 = vadd.f32 0.0, %v544
      %v546 = vpop.f32.mrb[0].mxu0
      %v547 = vpop.f32.mrb[0].mxu0
      %v548 = vadd.f32 0.0, %v547
      %v549 = vpop.f32.mrb[0].mxu0
      %550 = vmatprep.mubr.bf16.mxu0 %v461
      %551 = vmatmul.mubr.bf16.gmra.mrb[0].mxu0 %v355
      %v552 = vpop.f32.mrb[0].mxu0
      %v553 = vadd.f32 0.0, %v552
      %v554 = vpop.f32.mrb[0].mxu0
      %v555 = vpop.f32.mrb[0].mxu0
      %v556 = vadd.f32 0.0, %v555
      %v557 = vpop.f32.mrb[0].mxu0
      %558 = vmatprep.mubr.bf16.mxu0 %v464
      %559 = vmatmul.mubr.bf16.gmra.mrb[0].mxu0 %v357
      %v560 = vpop.f32.mrb[0].mxu0
      %v561 = vadd.f32 0.0, %v560
      %v562 = vpop.f32.mrb[0].mxu0
      %v563 = vpop.f32.mrb[0].mxu0
      %v564 = vadd.f32 0.0, %v563
      %v565 = vpop.f32.mrb[0].mxu0
      %566 = vmatprep.mubr.bf16.mxu0 %v467
      %567 = vmatmul.mubr.bf16.gmra.mrb[0].mxu0 %v359
      %v568 = vpop.f32.mrb[0].mxu0
      %v569 = vadd.f32 0.0, %v568
      %v570 = vpop.f32.mrb[0].mxu0
      %v571 = vpop.f32.mrb[0].mxu0
      %v572 = vadd.f32 0.0, %v571
      %v573 = vpop.f32.mrb[0].mxu0
      %574 = vmatprep.mubr.bf16.mxu0 %v470
      %575 = vmatmul.mubr.bf16.gmra.mrb[0].mxu0 %v361
      %v576 = vpop.f32.mrb[0].mxu0
      %v577 = vadd.f32 0.0, %v576
      %v578 = vpop.f32.mrb[0].mxu0
      %v579 = vpop.f32.mrb[0].mxu0
      %v580 = vadd.f32 0.0, %v579
      %v581 = vpop.f32.mrb[0].mxu0
      %582 = vmatprep.mubr.bf16.mxu0 %v473
      %583 = vmatmul.mubr.bf16.gmra.mrb[0].mxu0 %v363
      %v584 = vpop.f32.mrb[0].mxu0
      %v585 = vadd.f32 0.0, %v584
      %v586 = vpop.f32.mrb[0].mxu0
      %v587 = vpop.f32.mrb[0].mxu0
      %v588 = vadd.f32 0.0, %v587
      %v589 = vpop.f32.mrb[0].mxu0
      %590 = vmatprep.mubr.bf16.mxu0 %v476
      %591 = vmatmul.mubr.bf16.gmra.mrb[0].mxu0 %v365
      %v592 = vpop.f32.mrb[0].mxu0
      %v593 = vadd.f32 0.0, %v592
      %v594 = vpop.f32.mrb[0].mxu0
      %v595 = vpop.f32.mrb[0].mxu0
      %v596 = vadd.f32 0.0, %v595
      %v597 = vpop.f32.mrb[0].mxu0
      %598 = vmatprep.mubr.bf16.mxu0 %v479
      %599 = vmatmul.mubr.bf16.gmra.mrb[0].mxu0 %v367
      %v600 = vpop.f32.mrb[0].mxu0
      %v601 = vadd.f32 0.0, %v600
      %v602 = vpop.f32.mrb[0].mxu0
      %v603 = vpop.f32.mrb[0].mxu0
      %v604 = vadd.f32 0.0, %v603
      %v605 = vpop.f32.mrb[0].mxu0
      %606 = vmatprep.mubr.bf16.mxu0 %v482
      %607 = vmatmul.mubr.bf16.gmra.mrb[0].mxu0 %v369
      %v608 = vpop.f32.mrb[0].mxu0
      %v609 = vadd.f32 0.0, %v608
      %v610 = vpop.f32.mrb[0].mxu0
      %v611 = vpop.f32.mrb[0].mxu0
      %v612 = vadd.f32 0.0, %v611
      %v613 = vpop.f32.mrb[0].mxu0
      %614 = vmatprep.mubr.bf16.mxu0 %v485
      %615 = vmatmul.mubr.bf16.gmra.mrb[0].mxu0 %v371
      %v616 = vpop.f32.mrb[0].mxu0
      %v617 = vadd.f32 0.0, %v616
      %v618 = vpop.f32.mrb[0].mxu0
      %v619 = vpop.f32.mrb[0].mxu0
      %v620 = vadd.f32 0.0, %v619
      %v621 = vpop.f32.mrb[0].mxu0
      %622 = vmatprep.mubr.bf16.mxu0 %v488
      %623 = vmatmul.mubr.bf16.gmra.mrb[0].mxu0 %v373
      %v624 = vpop.f32.mrb[0].mxu0
      %v625 = vadd.f32 0.0, %v624
      %v626 = vpop.f32.mrb[0].mxu0
      %v627 = vpop.f32.mrb[0].mxu0
      %v628 = vadd.f32 0.0, %v627
      %v629 = vpop.f32.mrb[0].mxu0
      %630 = vmatprep.mubr.bf16.mxu0 %v491
      %631 = vmatmul.mubr.bf16.gmra.mrb[0].mxu0 %v375
      %v632 = vpop.f32.mrb[0].mxu0
      %v633 = vadd.f32 0.0, %v632
      %v634 = vpop.f32.mrb[0].mxu0
      %v635 = vpop.f32.mrb[0].mxu0
      %v636 = vadd.f32 0.0, %v635
      %v637 = vpop.f32.mrb[0].mxu0
      %638 = vmatprep.mubr.bf16.mxu0 %v494
      %639 = vmatmul.mubr.bf16.gmra.mrb[0].mxu0 %v377
      %v640 = vpop.f32.mrb[0].mxu0
      %v641 = vadd.f32 0.0, %v640
      %v642 = vpop.f32.mrb[0].mxu0
      %v643 = vpop.f32.mrb[0].mxu0
      %v644 = vadd.f32 0.0, %v643
      %v645 = vpop.f32.mrb[0].mxu0
      %646 = vmatprep.mubr.bf16.mxu0 %v497
      %647 = vmatmul.mubr.bf16.gmra.mrb[0].mxu0 %v379
      %v648 = vpop.f32.mrb[0].mxu0
      %v649 = vadd.f32 0.0, %v648
      %v650 = vpop.f32.mrb[0].mxu0
      %v651 = vpop.f32.mrb[0].mxu0
      %v652 = vadd.f32 0.0, %v651
      %v653 = vpop.f32.mrb[0].mxu0
      %654 = vmatprep.mubr.bf16.mxu0 %v500
      %655 = vmatmul.mubr.bf16.gmra.mrb[0].mxu0 %v381
      %v656 = vpop.f32.mrb[0].mxu0
      %v657 = vadd.f32 0.0, %v656
      %v658 = vpop.f32.mrb[0].mxu0
      %v659 = vpop.f32.mrb[0].mxu0
      %v660 = vadd.f32 0.0, %v659
      %v661 = vpop.f32.mrb[0].mxu0
      %662 = vdwg.mxu0
      %v663 = vld [vmem:[%s2] sm:$0x1]
      %v665 = vlaneseq
      %v666 = vshrl.u32 %v665, 7
      %v667 = vsub.s32 0, %v666
      %v668 = vrot.slane %v663, %v667
      %v670 = vmul.f32 %v537, %v668
      %v671 = vmul.f32 %v540, %v668
      %v672 = vmul.f32 %v545, %v668
      %v673 = vmul.f32 %v548, %v668
      %v674 = vmul.f32 %v553, %v668
      %v675 = vmul.f32 %v556, %v668
      %v676 = vmul.f32 %v561, %v668
      %v677 = vmul.f32 %v564, %v668
      %v678 = vmul.f32 %v569, %v668
      %v679 = vmul.f32 %v572, %v668
      %v680 = vmul.f32 %v577, %v668
      %v681 = vmul.f32 %v580, %v668
      %v682 = vmul.f32 %v585, %v668
      %v683 = vmul.f32 %v588, %v668
      %v684 = vmul.f32 %v593, %v668
      %v685 = vmul.f32 %v596, %v668
      %v686 = vmul.f32 %v601, %v668
      %v687 = vmul.f32 %v604, %v668
      %v688 = vmul.f32 %v609, %v668
      %v689 = vmul.f32 %v612, %v668
      %v690 = vmul.f32 %v617, %v668
      %v691 = vmul.f32 %v620, %v668
      %v692 = vmul.f32 %v625, %v668
      %v693 = vmul.f32 %v628, %v668
      %v694 = vmul.f32 %v633, %v668
      %v695 = vmul.f32 %v636, %v668
      %v696 = vmul.f32 %v641, %v668
      %v697 = vmul.f32 %v644, %v668
      %v698 = vmul.f32 %v649, %v668
      %v699 = vmul.f32 %v652, %v668
      %v700 = vmul.f32 %v657, %v668
      %v701 = vmul.f32 %v660, %v668
      %v702 = vld [vmem:[%s3] sm:$0x1]
      %v704 = vlaneseq
      %v705 = vshrl.u32 %v704, 7
      %v706 = vsub.s32 0, %v705
      %v707 = vrot.slane %v702, %v706
      %v709 = vadd.f32 %v670, %v707
      %v710 = vadd.f32 %v671, %v707
      %v711 = vadd.f32 %v672, %v707
      %v712 = vadd.f32 %v673, %v707
      %v713 = vadd.f32 %v674, %v707
      %v714 = vadd.f32 %v675, %v707
      %v715 = vadd.f32 %v676, %v707
      %v716 = vadd.f32 %v677, %v707
      %v717 = vadd.f32 %v678, %v707
      %v718 = vadd.f32 %v679, %v707
      %v719 = vadd.f32 %v680, %v707
      %v720 = vadd.f32 %v681, %v707
      %v721 = vadd.f32 %v682, %v707
      %v722 = vadd.f32 %v683, %v707
      %v723 = vadd.f32 %v684, %v707
      %v724 = vadd.f32 %v685, %v707
      %v725 = vadd.f32 %v686, %v707
      %v726 = vadd.f32 %v687, %v707
      %v727 = vadd.f32 %v688, %v707
      %v728 = vadd.f32 %v689, %v707
      %v729 = vadd.f32 %v690, %v707
      %v730 = vadd.f32 %v691, %v707
      %v731 = vadd.f32 %v692, %v707
      %v732 = vadd.f32 %v693, %v707
      %v733 = vadd.f32 %v694, %v707
      %v734 = vadd.f32 %v695, %v707
      %v735 = vadd.f32 %v696, %v707
      %v736 = vadd.f32 %v697, %v707
      %v737 = vadd.f32 %v698, %v707
      %v738 = vadd.f32 %v699, %v707
      %v739 = vadd.f32 %v700, %v707
      %v740 = vadd.f32 %v701, %v707
      %v741 = vmax.f32 %v709, 0.0
      %v742 = vmax.f32 %v710, 0.0
      %v743 = vmax.f32 %v711, 0.0
      %v744 = vmax.f32 %v712, 0.0
      %v745 = vmax.f32 %v713, 0.0
      %v746 = vmax.f32 %v714, 0.0
      %v747 = vmax.f32 %v715, 0.0
      %v748 = vmax.f32 %v716, 0.0
      %v749 = vmax.f32 %v717, 0.0
      %v750 = vmax.f32 %v718, 0.0
      %v751 = vmax.f32 %v719, 0.0
      %v752 = vmax.f32 %v720, 0.0
      %v753 = vmax.f32 %v721, 0.0
      %v754 = vmax.f32 %v722, 0.0
      %v755 = vmax.f32 %v723, 0.0
      %v756 = vmax.f32 %v724, 0.0
      %v757 = vmax.f32 %v725, 0.0
      %v758 = vmax.f32 %v726, 0.0
      %v759 = vmax.f32 %v727, 0.0
      %v760 = vmax.f32 %v728, 0.0
      %v761 = vmax.f32 %v729, 0.0
      %v762 = vmax.f32 %v730, 0.0
      %v763 = vmax.f32 %v731, 0.0
      %v764 = vmax.f32 %v732, 0.0
      %v765 = vmax.f32 %v733, 0.0
      %v766 = vmax.f32 %v734, 0.0
      %v767 = vmax.f32 %v735, 0.0
      %v768 = vmax.f32 %v736, 0.0
      %v769 = vmax.f32 %v737, 0.0
      %v770 = vmax.f32 %v738, 0.0
      %v771 = vmax.f32 %v739, 0.0
      %v772 = vmax.f32 %v740, 0.0
      %v773 = vpack.c.bf16 %v742, %v741
      %v774 = vpack.c.bf16 %v744, %v743
      %v775 = vpack.c.bf16 %v746, %v745
      %v776 = vpack.c.bf16 %v748, %v747
      %v777 = vpack.c.bf16 %v750, %v749
      %v778 = vpack.c.bf16 %v752, %v751
      %v779 = vpack.c.bf16 %v754, %v753
      %v780 = vpack.c.bf16 %v756, %v755
      %v781 = vpack.c.bf16 %v758, %v757
      %v782 = vpack.c.bf16 %v760, %v759
      %v783 = vpack.c.bf16 %v762, %v761
      %v784 = vpack.c.bf16 %v764, %v763
      %v785 = vpack.c.bf16 %v766, %v765
      %v786 = vpack.c.bf16 %v768, %v767
      %v787 = vpack.c.bf16 %v770, %v769
      %v788 = vpack.c.bf16 %v772, %v771
      %v805 = vunpack.c.l.b16 %v773
      %v806 = vunpack.c.h.b16 %v773
      %v807 = vunpack.c.l.b16 %v774
      %v808 = vunpack.c.h.b16 %v774
      %v809 = vunpack.c.l.b16 %v775
      %v810 = vunpack.c.h.b16 %v775
      %v811 = vunpack.c.l.b16 %v776
      %v812 = vunpack.c.h.b16 %v776
      %v813 = vunpack.c.l.b16 %v777
      %v814 = vunpack.c.h.b16 %v777
      %v815 = vunpack.c.l.b16 %v778
      %v816 = vunpack.c.h.b16 %v778
      %v817 = vunpack.c.l.b16 %v779
      %v818 = vunpack.c.h.b16 %v779
      %v819 = vunpack.c.l.b16 %v780
      %v820 = vunpack.c.h.b16 %v780
      %v821 = vunpack.c.l.b16 %v781
      %v822 = vunpack.c.h.b16 %v781
      %v823 = vunpack.c.l.b16 %v782
      %v824 = vunpack.c.h.b16 %v782
      %v825 = vunpack.c.l.b16 %v783
      %v826 = vunpack.c.h.b16 %v783
      %v827 = vunpack.c.l.b16 %v784
      %v828 = vunpack.c.h.b16 %v784
      %v829 = vunpack.c.l.b16 %v785
      %v830 = vunpack.c.h.b16 %v785
      %v831 = vunpack.c.l.b16 %v786
      %v832 = vunpack.c.h.b16 %v786
      %v833 = vunpack.c.l.b16 %v787
      %v834 = vunpack.c.h.b16 %v787
      %v835 = vunpack.c.l.b16 %v788
      %v836 = vunpack.c.h.b16 %v788
      %v837 = vpack.c.b16 %v805, %v805
      %v838 = vpack.c.b16 %v806, %v806
      %v839 = vpack.c.b16 %v807, %v807
      %v840 = vpack.c.b16 %v808, %v808
      %v841 = vpack.c.b16 %v809, %v809
      %v842 = vpack.c.b16 %v810, %v810
      %v843 = vpack.c.b16 %v811, %v811
      %v844 = vpack.c.b16 %v812, %v812
      %v845 = vpack.c.b16 %v813, %v813
      %v846 = vpack.c.b16 %v814, %v814
      %v847 = vpack.c.b16 %v815, %v815
      %v848 = vpack.c.b16 %v816, %v816
      %v849 = vpack.c.b16 %v817, %v817
      %v850 = vpack.c.b16 %v818, %v818
      %v851 = vpack.c.b16 %v819, %v819
      %v852 = vpack.c.b16 %v820, %v820
      %v853 = vpack.c.b16 %v821, %v821
      %v854 = vpack.c.b16 %v822, %v822
      %v855 = vpack.c.b16 %v823, %v823
      %v856 = vpack.c.b16 %v824, %v824
      %v857 = vpack.c.b16 %v825, %v825
      %v858 = vpack.c.b16 %v826, %v826
      %v859 = vpack.c.b16 %v827, %v827
      %v860 = vpack.c.b16 %v828, %v828
      %v861 = vpack.c.b16 %v829, %v829
      %v862 = vpack.c.b16 %v830, %v830
      %v863 = vpack.c.b16 %v831, %v831
      %v864 = vpack.c.b16 %v832, %v832
      %v865 = vpack.c.b16 %v833, %v833
      %v866 = vpack.c.b16 %v834, %v834
      %v867 = vpack.c.b16 %v835, %v835
      %v868 = vpack.c.b16 %v836, %v836
      %901 = vst [vmem:[%s202] sm:$0xf] %v837
      %902 = vst [vmem:[%s202 + $0x4] sm:$0xf] %v838
      %903 = vst [vmem:[%s202 + $0x8] sm:$0xf] %v839
      %904 = vst [vmem:[%s202 + $0xc] sm:$0xf] %v840
      %905 = vst [vmem:[%s202 + $0x10] sm:$0xf] %v841
      %906 = vst [vmem:[%s202 + $0x14] sm:$0xf] %v842
      %907 = vst [vmem:[%s202 + $0x18] sm:$0xf] %v843
      %908 = vst [vmem:[%s202 + $0x1c] sm:$0xf] %v844
      %909 = vst [vmem:[%s202 + $0x20] sm:$0xf] %v845
      %910 = vst [vmem:[%s202 + $0x24] sm:$0xf] %v846
      %911 = vst [vmem:[%s202 + $0x28] sm:$0xf] %v847
      %912 = vst [vmem:[%s202 + $0x2c] sm:$0xf] %v848
      %913 = vst [vmem:[%s202 + $0x30] sm:$0xf] %v849
      %914 = vst [vmem:[%s202 + $0x34] sm:$0xf] %v850
      %915 = vst [vmem:[%s202 + $0x38] sm:$0xf] %v851
      %916 = vst [vmem:[%s202 + $0x3c] sm:$0xf] %v852
      %917 = vst [vmem:[%s202 + $0x40] sm:$0xf] %v853
      %918 = vst [vmem:[%s202 + $0x44] sm:$0xf] %v854
      %919 = vst [vmem:[%s202 + $0x48] sm:$0xf] %v855
      %920 = vst [vmem:[%s202 + $0x4c] sm:$0xf] %v856
      %921 = vst [vmem:[%s202 + $0x50] sm:$0xf] %v857
      %922 = vst [vmem:[%s202 + $0x54] sm:$0xf] %v858
      %923 = vst [vmem:[%s202 + $0x58] sm:$0xf] %v859
      %924 = vst [vmem:[%s202 + $0x5c] sm:$0xf] %v860
      %925 = vst [vmem:[%s202 + $0x60] sm:$0xf] %v861
      %926 = vst [vmem:[%s202 + $0x64] sm:$0xf] %v862
      %927 = vst [vmem:[%s202 + $0x68] sm:$0xf] %v863
      %928 = vst [vmem:[%s202 + $0x6c] sm:$0xf] %v864
      %929 = vst [vmem:[%s202 + $0x70] sm:$0xf] %v865
      %930 = vst [vmem:[%s202 + $0x74] sm:$0xf] %v866
      %931 = vst [vmem:[%s202 + $0x78] sm:$0xf] %v867
      %932 = vst [vmem:[%s202 + $0x7c] sm:$0xf] %v868
      %s933 = smul.u32 32, %s15
      %p934 = scmp.lt.s32.totalorder %s933, 63
      %s935 = scalar_select %p934, %s933, 63
      %s936 = smul.addr %s935, 4
      %s937 = scalar_lea.vmem %s4, %s936
      // Predicated region
      $region37: #{shrinknet_forward.11} parent=35 // pred_check
        %p938 = pneg %p122
      $region38: #{shrinknet_forward.11} parent=35 // pred_check_branch
        %940 = sbr.rel (%p938) target = $region40
      $region39: #{shrinknet_forward.11} parent=35 // pred_region
        %s941 = smul.u32 32, %s15
      $region40: #{shrinknet_forward.11} parent=35 // pred_fallthru
        _
    $region36: #{shrinknet_forward.11} parent=5 // pred_fallthru
      _
    %p942 = scmp.le.s32.totalorder 2, %s10
    // Predicated region
    $region41: #{shrinknet_forward.11} parent=5 // pred_check
      %p943 = pneg %p942
    $region42: #{shrinknet_forward.11} parent=5 // pred_check_branch
      %945 = sbr.rel (%p943) target = $region44
    $region43: #{shrinknet_forward.11} parent=5 // pred_region
      %s946 = ssub.s32 %s10, 2
      // Predicated region
      $region45: #{shrinknet_forward.11} parent=43 // pred_check
        %p947 = pneg %p128
      $region46: #{shrinknet_forward.11} parent=43 // pred_check_branch
        %949 = sbr.rel (%p947) target = $region48
      $region47: #{shrinknet_forward.11} parent=43 // pred_region
        %s950 = smul.u32 32, %s16
        %p951 = scmp.lt.s32.totalorder %s950, 63
        %s952 = scalar_select %p951, %s950, 63
        %s953 = smul.addr %s952, 4
        %s954 = scalar_lea.vmem %s4, %s953
      $region48: #{shrinknet_forward.11} parent=43 // pred_fallthru
        _
    $region44: #{shrinknet_forward.11} parent=5 // pred_fallthru
      _
  $region6: #{shrinknet_forward.11} parent=0 // loop_footer
    %s14 = sadd.s32 1, %s10
  $region7: #{shrinknet_forward.11} parent=0 // loop_footer_branch
    %9 = sbr.rel target = $region3
  $region8: #{shrinknet_forward.11} parent=0 // loop_exit
    _

// kernel: shrinknet_forward.14
$region0: #{shrinknet_forward.14}
  #allocation0 [shape = 'u32[]', space=smem, size = 0x4, offset = 0x4, fixed_abs, tag = 'smem constant byte address 0x4 - core index']
  #allocation1 [shape = 'u32[144,128]{1,0:T(1,128)}', space=vmem, size = 0x12000, scoped, tag = 'internal scratch']
  %s0 = inlined_call_operand.vmem [shape: bf16[128,16], index: 0, kind: input, shape index: {}]
  %s1 = inlined_call_operand.vmem [shape: bf16[16,128], index: 1, kind: input, shape index: {}]
  %s2 = inlined_call_operand.vmem [shape: f32[1,128], index: 2, kind: input, shape index: {}]
  %s3 = inlined_call_operand.vmem [shape: f32[1,128], index: 3, kind: input, shape index: {}]
  %s4 = inlined_call_operand.vmem [shape: bf16[128,128], index: 4, kind: output, shape index: {}]
  %s5 = sld [smem:[#allocation0]]
  $region49: #{shrinknet_forward.14} parent=0
    _
  %s7 = ssub.s32 1, %s5
  %s8 = scalar_select 0, %s7, %s5
  loop: start=0, step=1, limit=4
  $region2: #{shrinknet_forward.14} parent=0 // loop_pre_header
    _
  $region3: #{shrinknet_forward.14} parent=0 // loop_header
    %s10 = sphi 0, %s14
    %p11 = scmp.ge.s32.totalorder %s10, 4
    %s20 = sphi 0, %s22
    %s23 = sphi 0, %s20
    %s24 = sphi 0, %s23
    %s40 = sphi 0, %s24
    %s44 = sphi 0, %s44
    %s46 = sphi 0, %s44
    %s47 = sphi 0, %s46
    %s61 = sphi 0, %s47
    %s65 = sphi 0, %s65
    %s67 = sphi 0, %s65
    %s68 = sphi 0, %s67
    %s82 = sphi 0, %s68
    %s86 = sphi 0, %s86
    %s88 = sphi 0, %s86
    %s89 = sphi 0, %s88
    %s103 = sphi 0, %s89
    %s109 = sphi 0, %s111
    %s112 = sphi 0, %s109
    %s113 = sphi 0, %s112
    %s129 = sphi 0, %s113
  $region4: #{shrinknet_forward.14} parent=0 // loop_header_branch
    %13 = sbr.rel (%p11) target = $region8
  $region5: #{shrinknet_forward.14} parent=0 // loop_body
    %s15 = ssub.s32 %s10, 1
    %s16 = ssub.s32 %s10, 2
    %s17 = sadd.s32 %s10, 1
    %s18 = ssub.s32 %s10, %s17
    %p19 = scmp.eq.s32.totalorder %s18, 0
    %s21 = sadd.s32 %s20, 1
    %s22 = scalar_select %p19, %s20, %s21
    %p25 = pneg %p19
    %p26 = scmp.eq.s32.totalorder %s10, 1
    %p27 = por %p25, %p26
    %p28 = scmp.ne.s32.totalorder %s20, %s23
    %p29 = scmp.eq.s32.totalorder %s10, 0
    %p30 = por %p28, %p29
    %p31 = scmp.ne.s32.totalorder %s20, %s23
    %p32 = scmp.eq.s32.totalorder %s15, 1
    %p33 = por %p31, %p32
    %p34 = scmp.ne.s32.totalorder %s23, %s24
    %p35 = scmp.eq.s32.totalorder %s15, 0
    %p36 = por %p34, %p35
    %p37 = scmp.ne.s32.totalorder %s23, %s24
    %p38 = scmp.eq.s32.totalorder %s16, 1
    %p39 = por %p37, %p38
    %p41 = scmp.ne.s32.totalorder %s24, %s40
    %p42 = scmp.eq.s32.totalorder %s16, 0
    %p43 = por %p41, %p42
    %s45 = sadd.s32 %s44, 1
    %p48 = scmp.eq.s32.totalorder %s10, 1
    %p49 = scmp.ne.s32.totalorder %s44, %s46
    %p50 = scmp.eq.s32.totalorder %s10, 0
    %p51 = por %p49, %p50
    %p52 = scmp.ne.s32.totalorder %s44, %s46
    %p53 = scmp.eq.s32.totalorder %s15, 1
    %p54 = por %p52, %p53
    %p55 = scmp.ne.s32.totalorder %s46, %s47
    %p56 = scmp.eq.s32.totalorder %s15, 0
    %p57 = por %p55, %p56
    %p58 = scmp.ne.s32.totalorder %s46, %s47
    %p59 = scmp.eq.s32.totalorder %s16, 1
    %p60 = por %p58, %p59
    %p62 = scmp.ne.s32.totalorder %s47, %s61
    %p63 = scmp.eq.s32.totalorder %s16, 0
    %p64 = por %p62, %p63
    %s66 = sadd.s32 %s65, 1
    %p69 = scmp.eq.s32.totalorder %s10, 1
    %p70 = scmp.ne.s32.totalorder %s65, %s67
    %p71 = scmp.eq.s32.totalorder %s10, 0
    %p72 = por %p70, %p71
    %p73 = scmp.ne.s32.totalorder %s65, %s67
    %p74 = scmp.eq.s32.totalorder %s15, 1
    %p75 = por %p73, %p74
    %p76 = scmp.ne.s32.totalorder %s67, %s68
    %p77 = scmp.eq.s32.totalorder %s15, 0
    %p78 = por %p76, %p77
    %p79 = scmp.ne.s32.totalorder %s67, %s68
    %p80 = scmp.eq.s32.totalorder %s16, 1
    %p81 = por %p79, %p80
    %p83 = scmp.ne.s32.totalorder %s68, %s82
    %p84 = scmp.eq.s32.totalorder %s16, 0
    %p85 = por %p83, %p84
    %s87 = sadd.s32 %s86, 1
    %p90 = scmp.eq.s32.totalorder %s10, 1
    %p91 = scmp.ne.s32.totalorder %s86, %s88
    %p92 = scmp.eq.s32.totalorder %s10, 0
    %p93 = por %p91, %p92
    %p94 = scmp.ne.s32.totalorder %s86, %s88
    %p95 = scmp.eq.s32.totalorder %s15, 1
    %p96 = por %p94, %p95
    %p97 = scmp.ne.s32.totalorder %s88, %s89
    %p98 = scmp.eq.s32.totalorder %s15, 0
    %p99 = por %p97, %p98
    %p100 = scmp.ne.s32.totalorder %s88, %s89
    %p101 = scmp.eq.s32.totalorder %s16, 1
    %p102 = por %p100, %p101
    %p104 = scmp.ne.s32.totalorder %s89, %s103
    %p105 = scmp.eq.s32.totalorder %s16, 0
    %p106 = por %p104, %p105
    %s107 = ssub.s32 %s10, %s17
    %p108 = scmp.eq.s32.totalorder %s107, 0
    %s110 = sadd.s32 %s109, 1
    %s111 = scalar_select %p108, %s109, %s110
    %p114 = pneg %p108
    %p115 = scmp.eq.s32.totalorder %s10, 1
    %p116 = por %p114, %p115
    %p117 = scmp.ne.s32.totalorder %s109, %s112
    %p118 = scmp.eq.s32.totalorder %s10, 0
    %p119 = por %p117, %p118
    %p120 = scmp.ne.s32.totalorder %s109, %s112
    %p121 = scmp.eq.s32.totalorder %s15, 1
    %p122 = por %p120, %p121
    %p123 = scmp.ne.s32.totalorder %s112, %s113
    %p124 = scmp.eq.s32.totalorder %s15, 0
    %p125 = por %p123, %p124
    %p126 = scmp.ne.s32.totalorder %s112, %s113
    %p127 = scmp.eq.s32.totalorder %s16, 1
    %p128 = por %p126, %p127
    %p130 = scmp.ne.s32.totalorder %s113, %s129
    %p131 = scmp.eq.s32.totalorder %s16, 0
    %p132 = por %p130, %p131
    %p133 = scmp.le.s32.totalorder 1, %s10
    %p134 = scmp.lt.s32.totalorder %s10, 3
    %p135 = pnand %p133, %p134
    %p136 = pneg %p135
    // Predicated region
    $region9: #{shrinknet_forward.14} parent=5 // pred_check
      _
    $region10: #{shrinknet_forward.14} parent=5 // pred_check_branch
      %138 = sbr.rel (%p135) target = $region12
    $region11: #{shrinknet_forward.14} parent=5 // pred_region
      %s139 = ssub.s32 %s10, 1
      // Predicated region
      $region13: #{shrinknet_forward.14} parent=11 // pred_check
        %p140 = pneg %p57
      $region14: #{shrinknet_forward.14} parent=11 // pred_check_branch
        %142 = sbr.rel (%p140) target = $region16
      $region15: #{shrinknet_forward.14} parent=11 // pred_region
        _
      $region16: #{shrinknet_forward.14} parent=11 // pred_fallthru
        _
      // Predicated region
      $region17: #{shrinknet_forward.14} parent=11 // pred_check
        %p143 = pneg %p78
      $region18: #{shrinknet_forward.14} parent=11 // pred_check_branch
        %145 = sbr.rel (%p143) target = $region20
      $region19: #{shrinknet_forward.14} parent=11 // pred_region
        _
      $region20: #{shrinknet_forward.14} parent=11 // pred_fallthru
        _
      // Predicated region
      $region21: #{shrinknet_forward.14} parent=11 // pred_check
        %p146 = pneg %p99
      $region22: #{shrinknet_forward.14} parent=11 // pred_check_branch
        %148 = sbr.rel (%p146) target = $region24
      $region23: #{shrinknet_forward.14} parent=11 // pred_region
        _
      $region24: #{shrinknet_forward.14} parent=11 // pred_fallthru
        _
    $region12: #{shrinknet_forward.14} parent=5 // pred_fallthru
      _
    %p149 = scmp.lt.s32.totalorder %s10, 2
    // Predicated region
    $region25: #{shrinknet_forward.14} parent=5 // pred_check
      %p150 = pneg %p149
    $region26: #{shrinknet_forward.14} parent=5 // pred_check_branch
      %152 = sbr.rel (%p150) target = $region28
    $region27: #{shrinknet_forward.14} parent=5 // pred_region
      // Predicated region
      $region29: #{shrinknet_forward.14} parent=27 // pred_check
        %p153 = pneg %p30
      $region30: #{shrinknet_forward.14} parent=27 // pred_check_branch
        %155 = sbr.rel (%p153) target = $region32
      $region31: #{shrinknet_forward.14} parent=27 // pred_region
        %s156 = smul.u32 8, %s10
        %p157 = scmp.lt.s32.totalorder %s156, 15
        %s158 = scalar_select %p157, %s156, 15
        %s159 = smul.addr %s158, 4
        %s160 = scalar_lea.vmem %s0, %s159
        %s161 = smul.u32 8, %s10
      $region32: #{shrinknet_forward.14} parent=27 // pred_fallthru
        _
    $region28: #{shrinknet_forward.14} parent=5 // pred_fallthru
      _
    %p162 = scmp.le.s32.totalorder 1, %s10
    %p163 = scmp.lt.s32.totalorder %s10, 3
    %p164 = pnand %p162, %p163
    %p165 = pneg %p164
    // Predicated region
    $region33: #{shrinknet_forward.14} parent=5 // pred_check
      _
    $region34: #{shrinknet_forward.14} parent=5 // pred_check_branch
      %167 = sbr.rel (%p164) target = $region36
    $region35: #{shrinknet_forward.14} parent=5 // pred_region
      %s168 = ssub.s32 %s10, 1
      %s169 = smul.u32 8, %s15
      %p170 = scmp.lt.s32.totalorder %s169, 15
      %s171 = scalar_select %p170, %s169, 15
      %s172 = smul.addr %s171, 4
      %s173 = scalar_lea.vmem %s0, %s172
      %p174 = pneg %p36
      %p175 = pneg %p33
      %p176 = pneg %p57
      %p177 = pneg %p54
      %p178 = pneg %p78
      %p179 = pneg %p75
      %p180 = pneg %p99
      %p181 = pneg %p96
      %p182 = pneg %p125
      %p183 = pneg %p122
      %s184 = smul.u32 8, %s15
      %p185 = scmp.lt.s32.totalorder %s184, 15
      %s186 = scalar_select %p185, %s184, 15
      %s187 = smul.addr %s186, 4
      %s188 = scalar_lea.vmem %s4, %s187
      %s189 = smul.u32 8, %s15
      %p190 = scmp.lt.s32.totalorder %s189, 15
      %s191 = scalar_select %p190, %s189, 15
      %s192 = smul.addr %s191, 4
      %s193 = scalar_lea.vmem %s0, %s192
      %s194 = smul.u32 8, %s15
      %s195 = smul.u32 8, %s15
      %p196 = scmp.lt.s32.totalorder %s195, 15
      %s197 = scalar_select %p196, %s195, 15
      %s198 = smul.addr %s197, 4
      %s199 = scalar_lea.vmem %s4, %s198
      %s200 = smul.u32 8, %s15
      %v202 = vld [vmem:[%s193] sm:$0xf]
      %v203 = vld [vmem:[%s193 + $0x4] sm:$0xf]
      %v204 = vld [vmem:[%s193 + $0x8] sm:$0xf]
      %v205 = vld [vmem:[%s193 + $0xc] sm:$0xf]
      %v206 = vld [vmem:[%s193 + $0x10] sm:$0xf]
      %v207 = vld [vmem:[%s193 + $0x14] sm:$0xf]
      %v208 = vld [vmem:[%s193 + $0x18] sm:$0xf]
      %v209 = vld [vmem:[%s193 + $0x1c] sm:$0xf]
      %v210 = vld [vmem:[%s1] sm:$0xf]
      %v211 = vld [vmem:[%s1 + $0x4] sm:$0xf]
      %v220 = vunpack.c.l.b16 %v202
      %v221 = vunpack.c.l.b16 %v203
      %v222 = vunpack.c.l.b16 %v204
      %v223 = vunpack.c.l.b16 %v205
      %v224 = vunpack.c.l.b16 %v206
      %v225 = vunpack.c.l.b16 %v207
      %v226 = vunpack.c.l.b16 %v208
      %v227 = vunpack.c.l.b16 %v209
      %v228 = vpack.c.b16 %v221, %v220
      %v229 = vpack.c.b16 %v223, %v222
      %v230 = vpack.c.b16 %v225, %v224
      %v231 = vpack.c.b16 %v227, %v226
      %v234 = vunpack.c.l.b16 %v210
      %v235 = vunpack.c.l.b16 %v211
      %v236 = vpack.c.b16 %v235, %v234
      %vm238 = vcmask 130048
      %v240 = vsel %vm238, %v228, 0
      %v243 = vsel %vm238, %v229, 0
      %v246 = vsel %vm238, %v230, 0
      %v249 = vsel %vm238, %v231, 0
      %251 = vmatprep.subr.bf16.mxu0 0
      %252 = vmatpush1.bf16.msra.mxu0 %v236
      %253 = vmatprep.subr.bf16.mxu0 0
      %254 = vmatpush1.bf16.msra.mxu0 0
      %255 = vmatprep.subr.bf16.mxu0 0
      %256 = vmatpush1.bf16.msra.mxu0 0
      %257 = vmatprep.subr.bf16.mxu0 0
      %258 = vmatpush1.bf16.msra.mxu0 0
      %259 = vmatprep.subr.bf16.mxu0 0
      %260 = vmatpush1.bf16.msra.mxu0 0
      %261 = vmatprep.subr.bf16.mxu0 0
      %262 = vmatpush1.bf16.msra.mxu0 0
      %263 = vmatprep.subr.bf16.mxu0 0
      %264 = vmatpush1.bf16.msra.mxu0 0
      %265 = vmatprep.subr.bf16.mxu0 0
      %266 = vmatpush1.bf16.msra.mxu0 0
      %267 = vmatprep.subr.bf16.mxu0 0
      %268 = vmatpush1.bf16.msra.mxu0 0
      %269 = vmatprep.subr.bf16.mxu0 0
      %270 = vmatpush1.bf16.msra.mxu0 0
      %271 = vmatprep.subr.bf16.mxu0 0
      %272 = vmatpush1.bf16.msra.mxu0 0
      %273 = vmatprep.subr.bf16.mxu0 0
      %274 = vmatpush1.bf16.msra.mxu0 0
      %275 = vmatprep.subr.bf16.mxu0 0
      %276 = vmatpush1.bf16.msra.mxu0 0
      %277 = vmatprep.subr.bf16.mxu0 0
      %278 = vmatpush1.bf16.msra.mxu0 0
      %279 = vmatprep.subr.bf16.mxu0 0
      %280 = vmatpush1.bf16.msra.mxu0 0
      %281 = vmatprep.subr.bf16.mxu0 0
      %282 = vmatpush1.bf16.msra.mxu0 0
      %283 = vmatprep.mubr.bf16.mxu0 0
      %284 = vmatmul.mubr.bf16.gmra.mrb[0].mxu0 %v240
      %v285 = vpop.f32.mrb[0].mxu0
      %v286 = vadd.f32 0.0, %v285
      %v287 = vpop.f32.mrb[0].mxu0
      %v288 = vpop.f32.mrb[0].mxu0
      %v289 = vadd.f32 0.0, %v288
      %v290 = vpop.f32.mrb[0].mxu0
      %291 = vmatprep.mubr.bf16.mxu0 0
      %292 = vmatmul.mubr.bf16.gmra.mrb[0].mxu0 %v243
      %v293 = vpop.f32.mrb[0].mxu0
      %v294 = vadd.f32 0.0, %v293
      %v295 = vpop.f32.mrb[0].mxu0
      %v296 = vpop.f32.mrb[0].mxu0
      %v297 = vadd.f32 0.0, %v296
      %v298 = vpop.f32.mrb[0].mxu0
      %299 = vmatprep.mubr.bf16.mxu0 0
      %300 = vmatmul.mubr.bf16.gmra.mrb[0].mxu0 %v246
      %v301 = vpop.f32.mrb[0].mxu0
      %v302 = vadd.f32 0.0, %v301
      %v303 = vpop.f32.mrb[0].mxu0
      %v304 = vpop.f32.mrb[0].mxu0
      %v305 = vadd.f32 0.0, %v304
      %v306 = vpop.f32.mrb[0].mxu0
      %307 = vmatprep.mubr.bf16.mxu0 0
      %308 = vmatmul.mubr.bf16.gmra.mrb[0].mxu0 %v249
      %v309 = vpop.f32.mrb[0].mxu0
      %v310 = vadd.f32 0.0, %v309
      %v311 = vpop.f32.mrb[0].mxu0
      %v312 = vpop.f32.mrb[0].mxu0
      %v313 = vadd.f32 0.0, %v312
      %v314 = vpop.f32.mrb[0].mxu0
      %315 = vdwg.mxu0
      %v316 = vld [vmem:[%s2] sm:$0x1]
      %v318 = vlaneseq
      %v319 = vshrl.u32 %v318, 7
      %v320 = vsub.s32 0, %v319
      %v321 = vrot.slane %v316, %v320
      %v323 = vmul.f32 %v286, %v321
      %v324 = vmul.f32 %v289, %v321
      %v325 = vmul.f32 %v294, %v321
      %v326 = vmul.f32 %v297, %v321
      %v327 = vmul.f32 %v302, %v321
      %v328 = vmul.f32 %v305, %v321
      %v329 = vmul.f32 %v310, %v321
      %v330 = vmul.f32 %v313, %v321
      %v331 = vld [vmem:[%s3] sm:$0x1]
      %v333 = vlaneseq
      %v334 = vshrl.u32 %v333, 7
      %v335 = vsub.s32 0, %v334
      %v336 = vrot.slane %v331, %v335
      %v338 = vadd.f32 %v323, %v336
      %v339 = vadd.f32 %v324, %v336
      %v340 = vadd.f32 %v325, %v336
      %v341 = vadd.f32 %v326, %v336
      %v342 = vadd.f32 %v327, %v336
      %v343 = vadd.f32 %v328, %v336
      %v344 = vadd.f32 %v329, %v336
      %v345 = vadd.f32 %v330, %v336
      %v346 = vpack.c.bf16 %v339, %v338
      %v347 = vpack.c.bf16 %v341, %v340
      %v348 = vpack.c.bf16 %v343, %v342
      %v349 = vpack.c.bf16 %v345, %v344
      %v354 = vunpack.c.l.b16 %v346
      %v355 = vunpack.c.h.b16 %v346
      %v356 = vunpack.c.l.b16 %v347
      %v357 = vunpack.c.h.b16 %v347
      %v358 = vunpack.c.l.b16 %v348
      %v359 = vunpack.c.h.b16 %v348
      %v360 = vunpack.c.l.b16 %v349
      %v361 = vunpack.c.h.b16 %v349
      %v362 = vpack.c.b16 %v354, %v354
      %v363 = vpack.c.b16 %v355, %v355
      %v364 = vpack.c.b16 %v356, %v356
      %v365 = vpack.c.b16 %v357, %v357
      %v366 = vpack.c.b16 %v358, %v358
      %v367 = vpack.c.b16 %v359, %v359
      %v368 = vpack.c.b16 %v360, %v360
      %v369 = vpack.c.b16 %v361, %v361
      %378 = vst [vmem:[%s199] sm:$0xf] %v362
      %379 = vst [vmem:[%s199 + $0x4] sm:$0xf] %v363
      %380 = vst [vmem:[%s199 + $0x8] sm:$0xf] %v364
      %381 = vst [vmem:[%s199 + $0xc] sm:$0xf] %v365
      %382 = vst [vmem:[%s199 + $0x10] sm:$0xf] %v366
      %383 = vst [vmem:[%s199 + $0x14] sm:$0xf] %v367
      %384 = vst [vmem:[%s199 + $0x18] sm:$0xf] %v368
      %385 = vst [vmem:[%s199 + $0x1c] sm:$0xf] %v369
      %s386 = smul.u32 8, %s15
      %p387 = scmp.lt.s32.totalorder %s386, 15
      %s388 = scalar_select %p387, %s386, 15
      %s389 = smul.addr %s388, 4
      %s390 = scalar_lea.vmem %s4, %s389
      // Predicated region
      $region37: #{shrinknet_forward.14} parent=35 // pred_check
        %p391 = pneg %p122
      $region38: #{shrinknet_forward.14} parent=35 // pred_check_branch
        %393 = sbr.rel (%p391) target = $region40
      $region39: #{shrinknet_forward.14} parent=35 // pred_region
        %s394 = smul.u32 8, %s15
      $region40: #{shrinknet_forward.14} parent=35 // pred_fallthru
        _
    $region36: #{shrinknet_forward.14} parent=5 // pred_fallthru
      _
    %p395 = scmp.le.s32.totalorder 2, %s10
    // Predicated region
    $region41: #{shrinknet_forward.14} parent=5 // pred_check
      %p396 = pneg %p395
    $region42: #{shrinknet_forward.14} parent=5 // pred_check_branch
      %398 = sbr.rel (%p396) target = $region44
    $region43: #{shrinknet_forward.14} parent=5 // pred_region
      %s399 = ssub.s32 %s10, 2
      // Predicated region
      $region45: #{shrinknet_forward.14} parent=43 // pred_check
        %p400 = pneg %p128
      $region46: #{shrinknet_forward.14} parent=43 // pred_check_branch
        %402 = sbr.rel (%p400) target = $region48
      $region47: #{shrinknet_forward.14} parent=43 // pred_region
        %s403 = smul.u32 8, %s16
        %p404 = scmp.lt.s32.totalorder %s403, 15
        %s405 = scalar_select %p404, %s403, 15
        %s406 = smul.addr %s405, 4
        %s407 = scalar_lea.vmem %s4, %s406
      $region48: #{shrinknet_forward.14} parent=43 // pred_fallthru
        _
    $region44: #{shrinknet_forward.14} parent=5 // pred_fallthru
      _
  $region6: #{shrinknet_forward.14} parent=0 // loop_footer
    %s14 = sadd.s32 1, %s10
  $region7: #{shrinknet_forward.14} parent=0 // loop_footer_branch
    %9 = sbr.rel target = $region3
  $region8: #{shrinknet_forward.14} parent=0 // loop_exit
    _

// kernel: shrinknet_forward.12
$region0: #{shrinknet_forward.12}
  #allocation0 [shape = 'u32[]', space=smem, size = 0x4, offset = 0x4, fixed_abs, tag = 'smem constant byte address 0x4 - core index']
  #allocation1 [shape = 'u32[144,128]{1,0:T(1,128)}', space=vmem, size = 0x12000, scoped, tag = 'internal scratch']
  %s0 = inlined_call_operand.vmem [shape: bf16[512,144], index: 0, kind: input, shape index: {}]
  %s1 = inlined_call_operand.vmem [shape: bf16[144,128], index: 1, kind: input, shape index: {}]
  %s2 = inlined_call_operand.vmem [shape: f32[1,128], index: 2, kind: input, shape index: {}]
  %s3 = inlined_call_operand.vmem [shape: f32[1,128], index: 3, kind: input, shape index: {}]
  %s4 = inlined_call_operand.vmem [shape: bf16[512,128], index: 4, kind: input, shape index: {}]
  %s5 = inlined_call_operand.vmem [shape: bf16[512,128], index: 5, kind: output, shape index: {}]
  %s6 = sld [smem:[#allocation0]]
  $region53: #{shrinknet_forward.12} parent=0
    _
  %s8 = ssub.s32 1, %s6
  %s9 = scalar_select 0, %s8, %s6
  loop: start=0, step=1, limit=4
  $region2: #{shrinknet_forward.12} parent=0 // loop_pre_header
    _
  $region3: #{shrinknet_forward.12} parent=0 // loop_header
    %s11 = sphi 0, %s15
    %p12 = scmp.ge.s32.totalorder %s11, 4
    %s21 = sphi 0, %s23
    %s24 = sphi 0, %s21
    %s25 = sphi 0, %s24
    %s41 = sphi 0, %s25
    %s45 = sphi 0, %s45
    %s47 = sphi 0, %s45
    %s48 = sphi 0, %s47
    %s62 = sphi 0, %s48
    %s66 = sphi 0, %s66
    %s68 = sphi 0, %s66
    %s69 = sphi 0, %s68
    %s83 = sphi 0, %s69
    %s87 = sphi 0, %s87
    %s89 = sphi 0, %s87
    %s90 = sphi 0, %s89
    %s104 = sphi 0, %s90
    %s110 = sphi 0, %s112
    %s113 = sphi 0, %s110
    %s114 = sphi 0, %s113
    %s130 = sphi 0, %s114
    %s136 = sphi 0, %s138
    %s139 = sphi 0, %s136
    %s140 = sphi 0, %s139
    %s156 = sphi 0, %s140
  $region4: #{shrinknet_forward.12} parent=0 // loop_header_branch
    %14 = sbr.rel (%p12) target = $region8
  $region5: #{shrinknet_forward.12} parent=0 // loop_body
    %s16 = ssub.s32 %s11, 1
    %s17 = ssub.s32 %s11, 2
    %s18 = sadd.s32 %s11, 1
    %s19 = ssub.s32 %s11, %s18
    %p20 = scmp.eq.s32.totalorder %s19, 0
    %s22 = sadd.s32 %s21, 1
    %s23 = scalar_select %p20, %s21, %s22
    %p26 = pneg %p20
    %p27 = scmp.eq.s32.totalorder %s11, 1
    %p28 = por %p26, %p27
    %p29 = scmp.ne.s32.totalorder %s21, %s24
    %p30 = scmp.eq.s32.totalorder %s11, 0
    %p31 = por %p29, %p30
    %p32 = scmp.ne.s32.totalorder %s21, %s24
    %p33 = scmp.eq.s32.totalorder %s16, 1
    %p34 = por %p32, %p33
    %p35 = scmp.ne.s32.totalorder %s24, %s25
    %p36 = scmp.eq.s32.totalorder %s16, 0
    %p37 = por %p35, %p36
    %p38 = scmp.ne.s32.totalorder %s24, %s25
    %p39 = scmp.eq.s32.totalorder %s17, 1
    %p40 = por %p38, %p39
    %p42 = scmp.ne.s32.totalorder %s25, %s41
    %p43 = scmp.eq.s32.totalorder %s17, 0
    %p44 = por %p42, %p43
    %s46 = sadd.s32 %s45, 1
    %p49 = scmp.eq.s32.totalorder %s11, 1
    %p50 = scmp.ne.s32.totalorder %s45, %s47
    %p51 = scmp.eq.s32.totalorder %s11, 0
    %p52 = por %p50, %p51
    %p53 = scmp.ne.s32.totalorder %s45, %s47
    %p54 = scmp.eq.s32.totalorder %s16, 1
    %p55 = por %p53, %p54
    %p56 = scmp.ne.s32.totalorder %s47, %s48
    %p57 = scmp.eq.s32.totalorder %s16, 0
    %p58 = por %p56, %p57
    %p59 = scmp.ne.s32.totalorder %s47, %s48
    %p60 = scmp.eq.s32.totalorder %s17, 1
    %p61 = por %p59, %p60
    %p63 = scmp.ne.s32.totalorder %s48, %s62
    %p64 = scmp.eq.s32.totalorder %s17, 0
    %p65 = por %p63, %p64
    %s67 = sadd.s32 %s66, 1
    %p70 = scmp.eq.s32.totalorder %s11, 1
    %p71 = scmp.ne.s32.totalorder %s66, %s68
    %p72 = scmp.eq.s32.totalorder %s11, 0
    %p73 = por %p71, %p72
    %p74 = scmp.ne.s32.totalorder %s66, %s68
    %p75 = scmp.eq.s32.totalorder %s16, 1
    %p76 = por %p74, %p75
    %p77 = scmp.ne.s32.totalorder %s68, %s69
    %p78 = scmp.eq.s32.totalorder %s16, 0
    %p79 = por %p77, %p78
    %p80 = scmp.ne.s32.totalorder %s68, %s69
    %p81 = scmp.eq.s32.totalorder %s17, 1
    %p82 = por %p80, %p81
    %p84 = scmp.ne.s32.totalorder %s69, %s83
    %p85 = scmp.eq.s32.totalorder %s17, 0
    %p86 = por %p84, %p85
    %s88 = sadd.s32 %s87, 1
    %p91 = scmp.eq.s32.totalorder %s11, 1
    %p92 = scmp.ne.s32.totalorder %s87, %s89
    %p93 = scmp.eq.s32.totalorder %s11, 0
    %p94 = por %p92, %p93
    %p95 = scmp.ne.s32.totalorder %s87, %s89
    %p96 = scmp.eq.s32.totalorder %s16, 1
    %p97 = por %p95, %p96
    %p98 = scmp.ne.s32.totalorder %s89, %s90
    %p99 = scmp.eq.s32.totalorder %s16, 0
    %p100 = por %p98, %p99
    %p101 = scmp.ne.s32.totalorder %s89, %s90
    %p102 = scmp.eq.s32.totalorder %s17, 1
    %p103 = por %p101, %p102
    %p105 = scmp.ne.s32.totalorder %s90, %s104
    %p106 = scmp.eq.s32.totalorder %s17, 0
    %p107 = por %p105, %p106
    %s108 = ssub.s32 %s11, %s18
    %p109 = scmp.eq.s32.totalorder %s108, 0
    %s111 = sadd.s32 %s110, 1
    %s112 = scalar_select %p109, %s110, %s111
    %p115 = pneg %p109
    %p116 = scmp.eq.s32.totalorder %s11, 1
    %p117 = por %p115, %p116
    %p118 = scmp.ne.s32.totalorder %s110, %s113
    %p119 = scmp.eq.s32.totalorder %s11, 0
    %p120 = por %p118, %p119
    %p121 = scmp.ne.s32.totalorder %s110, %s113
    %p122 = scmp.eq.s32.totalorder %s16, 1
    %p123 = por %p121, %p122
    %p124 = scmp.ne.s32.totalorder %s113, %s114
    %p125 = scmp.eq.s32.totalorder %s16, 0
    %p126 = por %p124, %p125
    %p127 = scmp.ne.s32.totalorder %s113, %s114
    %p128 = scmp.eq.s32.totalorder %s17, 1
    %p129 = por %p127, %p128
    %p131 = scmp.ne.s32.totalorder %s114, %s130
    %p132 = scmp.eq.s32.totalorder %s17, 0
    %p133 = por %p131, %p132
    %s134 = ssub.s32 %s11, %s18
    %p135 = scmp.eq.s32.totalorder %s134, 0
    %s137 = sadd.s32 %s136, 1
    %s138 = scalar_select %p135, %s136, %s137
    %p141 = pneg %p135
    %p142 = scmp.eq.s32.totalorder %s11, 1
    %p143 = por %p141, %p142
    %p144 = scmp.ne.s32.totalorder %s136, %s139
    %p145 = scmp.eq.s32.totalorder %s11, 0
    %p146 = por %p144, %p145
    %p147 = scmp.ne.s32.totalorder %s136, %s139
    %p148 = scmp.eq.s32.totalorder %s16, 1
    %p149 = por %p147, %p148
    %p150 = scmp.ne.s32.totalorder %s139, %s140
    %p151 = scmp.eq.s32.totalorder %s16, 0
    %p152 = por %p150, %p151
    %p153 = scmp.ne.s32.totalorder %s139, %s140
    %p154 = scmp.eq.s32.totalorder %s17, 1
    %p155 = por %p153, %p154
    %p157 = scmp.ne.s32.totalorder %s140, %s156
    %p158 = scmp.eq.s32.totalorder %s17, 0
    %p159 = por %p157, %p158
    %p160 = scmp.le.s32.totalorder 1, %s11
    %p161 = scmp.lt.s32.totalorder %s11, 3
    %p162 = pnand %p160, %p161
    %p163 = pneg %p162
    // Predicated region
    $region9: #{shrinknet_forward.12} parent=5 // pred_check
      _
    $region10: #{shrinknet_forward.12} parent=5 // pred_check_branch
      %165 = sbr.rel (%p162) target = $region12
    $region11: #{shrinknet_forward.12} parent=5 // pred_region
      %s166 = ssub.s32 %s11, 1
      // Predicated region
      $region13: #{shrinknet_forward.12} parent=11 // pred_check
        %p167 = pneg %p58
      $region14: #{shrinknet_forward.12} parent=11 // pred_check_branch
        %169 = sbr.rel (%p167) target = $region16
      $region15: #{shrinknet_forward.12} parent=11 // pred_region
        _
      $region16: #{shrinknet_forward.12} parent=11 // pred_fallthru
        _
      // Predicated region
      $region17: #{shrinknet_forward.12} parent=11 // pred_check
        %p170 = pneg %p79
      $region18: #{shrinknet_forward.12} parent=11 // pred_check_branch
        %172 = sbr.rel (%p170) target = $region20
      $region19: #{shrinknet_forward.12} parent=11 // pred_region
        _
      $region20: #{shrinknet_forward.12} parent=11 // pred_fallthru
        _
      // Predicated region
      $region21: #{shrinknet_forward.12} parent=11 // pred_check
        %p173 = pneg %p100
      $region22: #{shrinknet_forward.12} parent=11 // pred_check_branch
        %175 = sbr.rel (%p173) target = $region24
      $region23: #{shrinknet_forward.12} parent=11 // pred_region
        _
      $region24: #{shrinknet_forward.12} parent=11 // pred_fallthru
        _
    $region12: #{shrinknet_forward.12} parent=5 // pred_fallthru
      _
    %p176 = scmp.lt.s32.totalorder %s11, 2
    // Predicated region
    $region25: #{shrinknet_forward.12} parent=5 // pred_check
      %p177 = pneg %p176
    $region26: #{shrinknet_forward.12} parent=5 // pred_check_branch
      %179 = sbr.rel (%p177) target = $region28
    $region27: #{shrinknet_forward.12} parent=5 // pred_region
      // Predicated region
      $region29: #{shrinknet_forward.12} parent=27 // pred_check
        %p180 = pneg %p31
      $region30: #{shrinknet_forward.12} parent=27 // pred_check_branch
        %182 = sbr.rel (%p180) target = $region32
      $region31: #{shrinknet_forward.12} parent=27 // pred_region
        %s183 = smul.u32 32, %s11
        %p184 = scmp.lt.s32.totalorder %s183, 63
        %s185 = scalar_select %p184, %s183, 63
        %s186 = smul.addr %s185, 2
        %s187 = smul.addr %s186, 4
        %s188 = scalar_lea.vmem %s0, %s187
        %s189 = smul.u32 32, %s11
      $region32: #{shrinknet_forward.12} parent=27 // pred_fallthru
        _
      // Predicated region
      $region33: #{shrinknet_forward.12} parent=27 // pred_check
        %p190 = pneg %p120
      $region34: #{shrinknet_forward.12} parent=27 // pred_check_branch
        %192 = sbr.rel (%p190) target = $region36
      $region35: #{shrinknet_forward.12} parent=27 // pred_region
        %s193 = smul.u32 32, %s11
        %p194 = scmp.lt.s32.totalorder %s193, 63
        %s195 = scalar_select %p194, %s193, 63
        %s196 = smul.addr %s195, 4
        %s197 = scalar_lea.vmem %s4, %s196
        %s198 = smul.u32 32, %s11
      $region36: #{shrinknet_forward.12} parent=27 // pred_fallthru
        _
    $region28: #{shrinknet_forward.12} parent=5 // pred_fallthru
      _
    %p199 = scmp.le.s32.totalorder 1, %s11
    %p200 = scmp.lt.s32.totalorder %s11, 3
    %p201 = pnand %p199, %p200
    %p202 = pneg %p201
    // Predicated region
    $region37: #{shrinknet_forward.12} parent=5 // pred_check
      _
    $region38: #{shrinknet_forward.12} parent=5 // pred_check_branch
      %204 = sbr.rel (%p201) target = $region40
    $region39: #{shrinknet_forward.12} parent=5 // pred_region
      %s205 = ssub.s32 %s11, 1
      %s206 = smul.u32 32, %s16
      %p207 = scmp.lt.s32.totalorder %s206, 63
      %s208 = scalar_select %p207, %s206, 63
      %s209 = smul.addr %s208, 2
      %s210 = smul.addr %s209, 4
      %s211 = scalar_lea.vmem %s0, %s210
      %p212 = pneg %p37
      %p213 = pneg %p34
      %p214 = pneg %p58
      %p215 = pneg %p55
      %p216 = pneg %p79
      %p217 = pneg %p76
      %p218 = pneg %p100
      %p219 = pneg %p97
      %s220 = smul.u32 32, %s16
      %p221 = scmp.lt.s32.totalorder %s220, 63
      %s222 = scalar_select %p221, %s220, 63
      %s223 = smul.addr %s222, 4
      %s224 = scalar_lea.vmem %s4, %s223
      %p225 = pneg %p126
      %p226 = pneg %p123
      %p227 = pneg %p152
      %p228 = pneg %p149
      %s229 = smul.u32 32, %s16
      %p230 = scmp.lt.s32.totalorder %s229, 63
      %s231 = scalar_select %p230, %s229, 63
      %s232 = smul.addr %s231, 4
      %s233 = scalar_lea.vmem %s5, %s232
      %s234 = smul.u32 32, %s16
      %p235 = scmp.lt.s32.totalorder %s234, 63
      %s236 = scalar_select %p235, %s234, 63
      %s237 = smul.addr %s236, 2
      %s238 = smul.addr %s237, 4
      %s239 = scalar_lea.vmem %s0, %s238
      %s240 = smul.u32 32, %s16
      %s241 = smul.u32 32, %s16
      %p242 = scmp.lt.s32.totalorder %s241, 63
      %s243 = scalar_select %p242, %s241, 63
      %s244 = smul.addr %s243, 4
      %s245 = scalar_lea.vmem %s4, %s244
      %s246 = smul.u32 32, %s16
      %s247 = smul.u32 32, %s16
      %p248 = scmp.lt.s32.totalorder %s247, 63
      %s249 = scalar_select %p248, %s247, 63
      %s250 = smul.addr %s249, 4
      %s251 = scalar_lea.vmem %s5, %s250
      %s252 = smul.u32 32, %s16
      %v254 = vld [vmem:[%s239] sm:$0xff]
      %v255 = vld [vmem:[%s239 + $0x8] sm:$0xff]
      %v256 = vld [vmem:[%s239 + $0x10] sm:$0xff]
      %v257 = vld [vmem:[%s239 + $0x18] sm:$0xff]
      %v258 = vld [vmem:[%s239 + $0x20] sm:$0xff]
      %v259 = vld [vmem:[%s239 + $0x28] sm:$0xff]
      %v260 = vld [vmem:[%s239 + $0x30] sm:$0xff]
      %v261 = vld [vmem:[%s239 + $0x38] sm:$0xff]
      %v262 = vld [vmem:[%s239 + $0x40] sm:$0xff]
      %v263 = vld [vmem:[%s239 + $0x48] sm:$0xff]
      %v264 = vld [vmem:[%s239 + $0x50] sm:$0xff]
      %v265 = vld [vmem:[%s239 + $0x58] sm:$0xff]
      %v266 = vld [vmem:[%s239 + $0x60] sm:$0xff]
      %v267 = vld [vmem:[%s239 + $0x68] sm:$0xff]
      %v268 = vld [vmem:[%s239 + $0x70] sm:$0xff]
      %v269 = vld [vmem:[%s239 + $0x78] sm:$0xff]
      %v270 = vld [vmem:[%s239 + $0x80] sm:$0xff]
      %v271 = vld [vmem:[%s239 + $0x88] sm:$0xff]
      %v272 = vld [vmem:[%s239 + $0x90] sm:$0xff]
      %v273 = vld [vmem:[%s239 + $0x98] sm:$0xff]
      %v274 = vld [vmem:[%s239 + $0xa0] sm:$0xff]
      %v275 = vld [vmem:[%s239 + $0xa8] sm:$0xff]
      %v276 = vld [vmem:[%s239 + $0xb0] sm:$0xff]
      %v277 = vld [vmem:[%s239 + $0xb8] sm:$0xff]
      %v278 = vld [vmem:[%s239 + $0xc0] sm:$0xff]
      %v279 = vld [vmem:[%s239 + $0xc8] sm:$0xff]
      %v280 = vld [vmem:[%s239 + $0xd0] sm:$0xff]
      %v281 = vld [vmem:[%s239 + $0xd8] sm:$0xff]
      %v282 = vld [vmem:[%s239 + $0xe0] sm:$0xff]
      %v283 = vld [vmem:[%s239 + $0xe8] sm:$0xff]
      %v284 = vld [vmem:[%s239 + $0xf0] sm:$0xff]
      %v285 = vld [vmem:[%s239 + $0xf8] sm:$0xff]
      %v286 = vld [vmem:[%s1] sm:$0xf]
      %v287 = vld [vmem:[%s1 + $0x4] sm:$0xf]
      %v288 = vld [vmem:[%s1 + $0x8] sm:$0xf]
      %v289 = vld [vmem:[%s1 + $0xc] sm:$0xf]
      %v290 = vld [vmem:[%s1 + $0x10] sm:$0xf]
      %v291 = vld [vmem:[%s1 + $0x14] sm:$0xf]
      %v292 = vld [vmem:[%s1 + $0x18] sm:$0xf]
      %v293 = vld [vmem:[%s1 + $0x1c] sm:$0xf]
      %v294 = vld [vmem:[%s1 + $0x20] sm:$0xf]
      %v295 = vld [vmem:[%s1 + $0x24] sm:$0xf]
      %v296 = vld [vmem:[%s1 + $0x28] sm:$0xf]
      %v297 = vld [vmem:[%s1 + $0x2c] sm:$0xf]
      %v298 = vld [vmem:[%s1 + $0x30] sm:$0xf]
      %v299 = vld [vmem:[%s1 + $0x34] sm:$0xf]
      %v300 = vld [vmem:[%s1 + $0x38] sm:$0xf]
      %v301 = vld [vmem:[%s1 + $0x3c] sm:$0xf]
      %v302 = vld [vmem:[%s1 + $0x40] sm:$0xf]
      %v303 = vld [vmem:[%s1 + $0x44] sm:$0xf]
      %v336 = vunpack.c.l.b16 %v254
      %v337 = vunpack.c.h.b16 %v254
      %v338 = vunpack.c.l.b16 %v255
      %v339 = vunpack.c.h.b16 %v255
      %v340 = vunpack.c.l.b16 %v256
      %v341 = vunpack.c.h.b16 %v256
      %v342 = vunpack.c.l.b16 %v257
      %v343 = vunpack.c.h.b16 %v257
      %v344 = vunpack.c.l.b16 %v258
      %v345 = vunpack.c.h.b16 %v258
      %v346 = vunpack.c.l.b16 %v259
      %v347 = vunpack.c.h.b16 %v259
      %v348 = vunpack.c.l.b16 %v260
      %v349 = vunpack.c.h.b16 %v260
      %v350 = vunpack.c.l.b16 %v261
      %v351 = vunpack.c.h.b16 %v261
      %v352 = vunpack.c.l.b16 %v262
      %v353 = vunpack.c.h.b16 %v262
      %v354 = vunpack.c.l.b16 %v263
      %v355 = vunpack.c.h.b16 %v263
      %v356 = vunpack.c.l.b16 %v264
      %v357 = vunpack.c.h.b16 %v264
      %v358 = vunpack.c.l.b16 %v265
      %v359 = vunpack.c.h.b16 %v265
      %v360 = vunpack.c.l.b16 %v266
      %v361 = vunpack.c.h.b16 %v266
      %v362 = vunpack.c.l.b16 %v267
      %v363 = vunpack.c.h.b16 %v267
      %v364 = vunpack.c.l.b16 %v268
      %v365 = vunpack.c.h.b16 %v268
      %v366 = vunpack.c.l.b16 %v269
      %v367 = vunpack.c.h.b16 %v269
      %v368 = vunpack.c.l.b16 %v270
      %v369 = vunpack.c.h.b16 %v270
      %v370 = vunpack.c.l.b16 %v271
      %v371 = vunpack.c.h.b16 %v271
      %v372 = vunpack.c.l.b16 %v272
      %v373 = vunpack.c.h.b16 %v272
      %v374 = vunpack.c.l.b16 %v273
      %v375 = vunpack.c.h.b16 %v273
      %v376 = vunpack.c.l.b16 %v274
      %v377 = vunpack.c.h.b16 %v274
      %v378 = vunpack.c.l.b16 %v275
      %v379 = vunpack.c.h.b16 %v275
      %v380 = vunpack.c.l.b16 %v276
      %v381 = vunpack.c.h.b16 %v276
      %v382 = vunpack.c.l.b16 %v277
      %v383 = vunpack.c.h.b16 %v277
      %v384 = vunpack.c.l.b16 %v278
      %v385 = vunpack.c.h.b16 %v278
      %v386 = vunpack.c.l.b16 %v279
      %v387 = vunpack.c.h.b16 %v279
      %v388 = vunpack.c.l.b16 %v280
      %v389 = vunpack.c.h.b16 %v280
      %v390 = vunpack.c.l.b16 %v281
      %v391 = vunpack.c.h.b16 %v281
      %v392 = vunpack.c.l.b16 %v282
      %v393 = vunpack.c.h.b16 %v282
      %v394 = vunpack.c.l.b16 %v283
      %v395 = vunpack.c.h.b16 %v283
      %v396 = vunpack.c.l.b16 %v284
      %v397 = vunpack.c.h.b16 %v284
      %v398 = vunpack.c.l.b16 %v285
      %v399 = vunpack.c.h.b16 %v285
      %v400 = vpack.c.b16 %v338, %v336
      %v401 = vpack.c.b16 %v339, %v337
      %v402 = vpack.c.b16 %v342, %v340
      %v403 = vpack.c.b16 %v343, %v341
      %v404 = vpack.c.b16 %v346, %v344
      %v405 = vpack.c.b16 %v347, %v345
      %v406 = vpack.c.b16 %v350, %v348
      %v407 = vpack.c.b16 %v351, %v349
      %v408 = vpack.c.b16 %v354, %v352
      %v409 = vpack.c.b16 %v355, %v353
      %v410 = vpack.c.b16 %v358, %v356
      %v411 = vpack.c.b16 %v359, %v357
      %v412 = vpack.c.b16 %v362, %v360
      %v413 = vpack.c.b16 %v363, %v361
      %v414 = vpack.c.b16 %v366, %v364
      %v415 = vpack.c.b16 %v367, %v365
      %v416 = vpack.c.b16 %v370, %v368
      %v417 = vpack.c.b16 %v371, %v369
      %v418 = vpack.c.b16 %v374, %v372
      %v419 = vpack.c.b16 %v375, %v373
      %v420 = vpack.c.b16 %v378, %v376
      %v421 = vpack.c.b16 %v379, %v377
      %v422 = vpack.c.b16 %v382, %v380
      %v423 = vpack.c.b16 %v383, %v381
      %v424 = vpack.c.b16 %v386, %v384
      %v425 = vpack.c.b16 %v387, %v385
      %v426 = vpack.c.b16 %v390, %v388
      %v427 = vpack.c.b16 %v391, %v389
      %v428 = vpack.c.b16 %v394, %v392
      %v429 = vpack.c.b16 %v395, %v393
      %v430 = vpack.c.b16 %v398, %v396
      %v431 = vpack.c.b16 %v399, %v397
      %v466 = vunpack.c.l.b16 %v286
      %v467 = vunpack.c.l.b16 %v287
      %v468 = vunpack.c.l.b16 %v288
      %v469 = vunpack.c.l.b16 %v289
      %v470 = vunpack.c.l.b16 %v290
      %v471 = vunpack.c.l.b16 %v291
      %v472 = vunpack.c.l.b16 %v292
      %v473 = vunpack.c.l.b16 %v293
      %v474 = vunpack.c.l.b16 %v294
      %v475 = vunpack.c.l.b16 %v295
      %v476 = vunpack.c.l.b16 %v296
      %v477 = vunpack.c.l.b16 %v297
      %v478 = vunpack.c.l.b16 %v298
      %v479 = vunpack.c.l.b16 %v299
      %v480 = vunpack.c.l.b16 %v300
      %v481 = vunpack.c.l.b16 %v301
      %v482 = vunpack.c.l.b16 %v302
      %v483 = vunpack.c.l.b16 %v303
      %v484 = vpack.c.b16 %v467, %v466
      %v485 = vpack.c.b16 %v469, %v468
      %v486 = vpack.c.b16 %v471, %v470
      %v487 = vpack.c.b16 %v473, %v472
      %v488 = vpack.c.b16 %v475, %v474
      %v489 = vpack.c.b16 %v477, %v476
      %v490 = vpack.c.b16 %v479, %v478
      %v491 = vpack.c.b16 %v481, %v480
      %v492 = vpack.c.b16 %v483, %v482
      %vm502 = vcmask 130048
      %v504 = vsel %vm502, %v401, 0
      %v507 = vsel %vm502, %v403, 0
      %v510 = vsel %vm502, %v405, 0
      %v513 = vsel %vm502, %v407, 0
      %v516 = vsel %vm502, %v409, 0
      %v519 = vsel %vm502, %v411, 0
      %v522 = vsel %vm502, %v413, 0
      %v525 = vsel %vm502, %v415, 0
      %v528 = vsel %vm502, %v417, 0
      %v531 = vsel %vm502, %v419, 0
      %v534 = vsel %vm502, %v421, 0
      %v537 = vsel %vm502, %v423, 0
      %v540 = vsel %vm502, %v425, 0
      %v543 = vsel %vm502, %v427, 0
      %v546 = vsel %vm502, %v429, 0
      %v549 = vsel %vm502, %v431, 0
      %551 = vmatprep.subr.bf16.mxu0 0
      %552 = vmatpush1.bf16.msra.mxu0 %v484
      %553 = vmatprep.subr.bf16.mxu0 0
      %554 = vmatpush1.bf16.msra.mxu0 %v485
      %555 = vmatprep.subr.bf16.mxu0 0
      %556 = vmatpush1.bf16.msra.mxu0 %v486
      %557 = vmatprep.subr.bf16.mxu0 0
      %558 = vmatpush1.bf16.msra.mxu0 %v487
      %559 = vmatprep.subr.bf16.mxu0 0
      %560 = vmatpush1.bf16.msra.mxu0 %v488
      %561 = vmatprep.subr.bf16.mxu0 0
      %562 = vmatpush1.bf16.msra.mxu0 %v489
      %563 = vmatprep.subr.bf16.mxu0 0
      %564 = vmatpush1.bf16.msra.mxu0 %v490
      %565 = vmatprep.subr.bf16.mxu0 0
      %566 = vmatpush1.bf16.msra.mxu0 %v491
      %567 = vmatprep.subr.bf16.mxu0 0
      %568 = vmatpush1.bf16.msra.mxu0 %v492
      %569 = vmatprep.subr.bf16.mxu0 0
      %570 = vmatpush1.bf16.msra.mxu0 0
      %571 = vmatprep.subr.bf16.mxu0 0
      %572 = vmatpush1.bf16.msra.mxu0 0
      %573 = vmatprep.subr.bf16.mxu0 0
      %574 = vmatpush1.bf16.msra.mxu0 0
      %575 = vmatprep.subr.bf16.mxu0 0
      %576 = vmatpush1.bf16.msra.mxu0 0
      %577 = vmatprep.subr.bf16.mxu0 0
      %578 = vmatpush1.bf16.msra.mxu0 0
      %579 = vmatprep.subr.bf16.mxu0 0
      %580 = vmatpush1.bf16.msra.mxu0 0
      %581 = vmatprep.subr.bf16.mxu0 0
      %582 = vmatpush1.bf16.msra.mxu0 0
      %583 = vmatprep.mubr.bf16.mxu0 %v504
      %584 = vmatmul.mubr.bf16.gmra.mrb[0].mxu0 %v400
      %v585 = vpop.f32.mrb[0].mxu0
      %v586 = vadd.f32 0.0, %v585
      %v587 = vpop.f32.mrb[0].mxu0
      %v588 = vpop.f32.mrb[0].mxu0
      %v589 = vadd.f32 0.0, %v588
      %v590 = vpop.f32.mrb[0].mxu0
      %591 = vmatprep.mubr.bf16.mxu0 %v507
      %592 = vmatmul.mubr.bf16.gmra.mrb[0].mxu0 %v402
      %v593 = vpop.f32.mrb[0].mxu0
      %v594 = vadd.f32 0.0, %v593
      %v595 = vpop.f32.mrb[0].mxu0
      %v596 = vpop.f32.mrb[0].mxu0
      %v597 = vadd.f32 0.0, %v596
      %v598 = vpop.f32.mrb[0].mxu0
      %599 = vmatprep.mubr.bf16.mxu0 %v510
      %600 = vmatmul.mubr.bf16.gmra.mrb[0].mxu0 %v404
      %v601 = vpop.f32.mrb[0].mxu0
      %v602 = vadd.f32 0.0, %v601
      %v603 = vpop.f32.mrb[0].mxu0
      %v604 = vpop.f32.mrb[0].mxu0
      %v605 = vadd.f32 0.0, %v604
      %v606 = vpop.f32.mrb[0].mxu0
      %607 = vmatprep.mubr.bf16.mxu0 %v513
      %608 = vmatmul.mubr.bf16.gmra.mrb[0].mxu0 %v406
      %v609 = vpop.f32.mrb[0].mxu0
      %v610 = vadd.f32 0.0, %v609
      %v611 = vpop.f32.mrb[0].mxu0
      %v612 = vpop.f32.mrb[0].mxu0
      %v613 = vadd.f32 0.0, %v612
      %v614 = vpop.f32.mrb[0].mxu0
      %615 = vmatprep.mubr.bf16.mxu0 %v516
      %616 = vmatmul.mubr.bf16.gmra.mrb[0].mxu0 %v408
      %v617 = vpop.f32.mrb[0].mxu0
      %v618 = vadd.f32 0.0, %v617
      %v619 = vpop.f32.mrb[0].mxu0
      %v620 = vpop.f32.mrb[0].mxu0
      %v621 = vadd.f32 0.0, %v620
      %v622 = vpop.f32.mrb[0].mxu0
      %623 = vmatprep.mubr.bf16.mxu0 %v519
      %624 = vmatmul.mubr.bf16.gmra.mrb[0].mxu0 %v410
      %v625 = vpop.f32.mrb[0].mxu0
      %v626 = vadd.f32 0.0, %v625
      %v627 = vpop.f32.mrb[0].mxu0
      %v628 = vpop.f32.mrb[0].mxu0
      %v629 = vadd.f32 0.0, %v628
      %v630 = vpop.f32.mrb[0].mxu0
      %631 = vmatprep.mubr.bf16.mxu0 %v522
      %632 = vmatmul.mubr.bf16.gmra.mrb[0].mxu0 %v412
      %v633 = vpop.f32.mrb[0].mxu0
      %v634 = vadd.f32 0.0, %v633
      %v635 = vpop.f32.mrb[0].mxu0
      %v636 = vpop.f32.mrb[0].mxu0
      %v637 = vadd.f32 0.0, %v636
      %v638 = vpop.f32.mrb[0].mxu0
      %639 = vmatprep.mubr.bf16.mxu0 %v525
      %640 = vmatmul.mubr.bf16.gmra.mrb[0].mxu0 %v414
      %v641 = vpop.f32.mrb[0].mxu0
      %v642 = vadd.f32 0.0, %v641
      %v643 = vpop.f32.mrb[0].mxu0
      %v644 = vpop.f32.mrb[0].mxu0
      %v645 = vadd.f32 0.0, %v644
      %v646 = vpop.f32.mrb[0].mxu0
      %647 = vmatprep.mubr.bf16.mxu0 %v528
      %648 = vmatmul.mubr.bf16.gmra.mrb[0].mxu0 %v416
      %v649 = vpop.f32.mrb[0].mxu0
      %v650 = vadd.f32 0.0, %v649
      %v651 = vpop.f32.mrb[0].mxu0
      %v652 = vpop.f32.mrb[0].mxu0
      %v653 = vadd.f32 0.0, %v652
      %v654 = vpop.f32.mrb[0].mxu0
      %655 = vmatprep.mubr.bf16.mxu0 %v531
      %656 = vmatmul.mubr.bf16.gmra.mrb[0].mxu0 %v418
      %v657 = vpop.f32.mrb[0].mxu0
      %v658 = vadd.f32 0.0, %v657
      %v659 = vpop.f32.mrb[0].mxu0
      %v660 = vpop.f32.mrb[0].mxu0
      %v661 = vadd.f32 0.0, %v660
      %v662 = vpop.f32.mrb[0].mxu0
      %663 = vmatprep.mubr.bf16.mxu0 %v534
      %664 = vmatmul.mubr.bf16.gmra.mrb[0].mxu0 %v420
      %v665 = vpop.f32.mrb[0].mxu0
      %v666 = vadd.f32 0.0, %v665
      %v667 = vpop.f32.mrb[0].mxu0
      %v668 = vpop.f32.mrb[0].mxu0
      %v669 = vadd.f32 0.0, %v668
      %v670 = vpop.f32.mrb[0].mxu0
      %671 = vmatprep.mubr.bf16.mxu0 %v537
      %672 = vmatmul.mubr.bf16.gmra.mrb[0].mxu0 %v422
      %v673 = vpop.f32.mrb[0].mxu0
      %v674 = vadd.f32 0.0, %v673
      %v675 = vpop.f32.mrb[0].mxu0
      %v676 = vpop.f32.mrb[0].mxu0
      %v677 = vadd.f32 0.0, %v676
      %v678 = vpop.f32.mrb[0].mxu0
      %679 = vmatprep.mubr.bf16.mxu0 %v540
      %680 = vmatmul.mubr.bf16.gmra.mrb[0].mxu0 %v424
      %v681 = vpop.f32.mrb[0].mxu0
      %v682 = vadd.f32 0.0, %v681
      %v683 = vpop.f32.mrb[0].mxu0
      %v684 = vpop.f32.mrb[0].mxu0
      %v685 = vadd.f32 0.0, %v684
      %v686 = vpop.f32.mrb[0].mxu0
      %687 = vmatprep.mubr.bf16.mxu0 %v543
      %688 = vmatmul.mubr.bf16.gmra.mrb[0].mxu0 %v426
      %v689 = vpop.f32.mrb[0].mxu0
      %v690 = vadd.f32 0.0, %v689
      %v691 = vpop.f32.mrb[0].mxu0
      %v692 = vpop.f32.mrb[0].mxu0
      %v693 = vadd.f32 0.0, %v692
      %v694 = vpop.f32.mrb[0].mxu0
      %695 = vmatprep.mubr.bf16.mxu0 %v546
      %696 = vmatmul.mubr.bf16.gmra.mrb[0].mxu0 %v428
      %v697 = vpop.f32.mrb[0].mxu0
      %v698 = vadd.f32 0.0, %v697
      %v699 = vpop.f32.mrb[0].mxu0
      %v700 = vpop.f32.mrb[0].mxu0
      %v701 = vadd.f32 0.0, %v700
      %v702 = vpop.f32.mrb[0].mxu0
      %703 = vmatprep.mubr.bf16.mxu0 %v549
      %704 = vmatmul.mubr.bf16.gmra.mrb[0].mxu0 %v430
      %v705 = vpop.f32.mrb[0].mxu0
      %v706 = vadd.f32 0.0, %v705
      %v707 = vpop.f32.mrb[0].mxu0
      %v708 = vpop.f32.mrb[0].mxu0
      %v709 = vadd.f32 0.0, %v708
      %v710 = vpop.f32.mrb[0].mxu0
      %711 = vdwg.mxu0
      %v712 = vld [vmem:[%s2] sm:$0x1]
      %v714 = vlaneseq
      %v715 = vshrl.u32 %v714, 7
      %v716 = vsub.s32 0, %v715
      %v717 = vrot.slane %v712, %v716
      %v719 = vmul.f32 %v586, %v717
      %v720 = vmul.f32 %v589, %v717
      %v721 = vmul.f32 %v594, %v717
      %v722 = vmul.f32 %v597, %v717
      %v723 = vmul.f32 %v602, %v717
      %v724 = vmul.f32 %v605, %v717
      %v725 = vmul.f32 %v610, %v717
      %v726 = vmul.f32 %v613, %v717
      %v727 = vmul.f32 %v618, %v717
      %v728 = vmul.f32 %v621, %v717
      %v729 = vmul.f32 %v626, %v717
      %v730 = vmul.f32 %v629, %v717
      %v731 = vmul.f32 %v634, %v717
      %v732 = vmul.f32 %v637, %v717
      %v733 = vmul.f32 %v642, %v717
      %v734 = vmul.f32 %v645, %v717
      %v735 = vmul.f32 %v650, %v717
      %v736 = vmul.f32 %v653, %v717
      %v737 = vmul.f32 %v658, %v717
      %v738 = vmul.f32 %v661, %v717
      %v739 = vmul.f32 %v666, %v717
      %v740 = vmul.f32 %v669, %v717
      %v741 = vmul.f32 %v674, %v717
      %v742 = vmul.f32 %v677, %v717
      %v743 = vmul.f32 %v682, %v717
      %v744 = vmul.f32 %v685, %v717
      %v745 = vmul.f32 %v690, %v717
      %v746 = vmul.f32 %v693, %v717
      %v747 = vmul.f32 %v698, %v717
      %v748 = vmul.f32 %v701, %v717
      %v749 = vmul.f32 %v706, %v717
      %v750 = vmul.f32 %v709, %v717
      %v751 = vld [vmem:[%s3] sm:$0x1]
      %v753 = vlaneseq
      %v754 = vshrl.u32 %v753, 7
      %v755 = vsub.s32 0, %v754
      %v756 = vrot.slane %v751, %v755
      %v758 = vadd.f32 %v719, %v756
      %v759 = vadd.f32 %v720, %v756
      %v760 = vadd.f32 %v721, %v756
      %v761 = vadd.f32 %v722, %v756
      %v762 = vadd.f32 %v723, %v756
      %v763 = vadd.f32 %v724, %v756
      %v764 = vadd.f32 %v725, %v756
      %v765 = vadd.f32 %v726, %v756
      %v766 = vadd.f32 %v727, %v756
      %v767 = vadd.f32 %v728, %v756
      %v768 = vadd.f32 %v729, %v756
      %v769 = vadd.f32 %v730, %v756
      %v770 = vadd.f32 %v731, %v756
      %v771 = vadd.f32 %v732, %v756
      %v772 = vadd.f32 %v733, %v756
      %v773 = vadd.f32 %v734, %v756
      %v774 = vadd.f32 %v735, %v756
      %v775 = vadd.f32 %v736, %v756
      %v776 = vadd.f32 %v737, %v756
      %v777 = vadd.f32 %v738, %v756
      %v778 = vadd.f32 %v739, %v756
      %v779 = vadd.f32 %v740, %v756
      %v780 = vadd.f32 %v741, %v756
      %v781 = vadd.f32 %v742, %v756
      %v782 = vadd.f32 %v743, %v756
      %v783 = vadd.f32 %v744, %v756
      %v784 = vadd.f32 %v745, %v756
      %v785 = vadd.f32 %v746, %v756
      %v786 = vadd.f32 %v747, %v756
      %v787 = vadd.f32 %v748, %v756
      %v788 = vadd.f32 %v749, %v756
      %v789 = vadd.f32 %v750, %v756
      %v790 = vld [vmem:[%s245] sm:$0xf]
      %v791 = vld [vmem:[%s245 + $0x4] sm:$0xf]
      %v792 = vld [vmem:[%s245 + $0x8] sm:$0xf]
      %v793 = vld [vmem:[%s245 + $0xc] sm:$0xf]
      %v794 = vld [vmem:[%s245 + $0x10] sm:$0xf]
      %v795 = vld [vmem:[%s245 + $0x14] sm:$0xf]
      %v796 = vld [vmem:[%s245 + $0x18] sm:$0xf]
      %v797 = vld [vmem:[%s245 + $0x1c] sm:$0xf]
      %v798 = vld [vmem:[%s245 + $0x20] sm:$0xf]
      %v799 = vld [vmem:[%s245 + $0x24] sm:$0xf]
      %v800 = vld [vmem:[%s245 + $0x28] sm:$0xf]
      %v801 = vld [vmem:[%s245 + $0x2c] sm:$0xf]
      %v802 = vld [vmem:[%s245 + $0x30] sm:$0xf]
      %v803 = vld [vmem:[%s245 + $0x34] sm:$0xf]
      %v804 = vld [vmem:[%s245 + $0x38] sm:$0xf]
      %v805 = vld [vmem:[%s245 + $0x3c] sm:$0xf]
      %v806 = vld [vmem:[%s245 + $0x40] sm:$0xf]
      %v807 = vld [vmem:[%s245 + $0x44] sm:$0xf]
      %v808 = vld [vmem:[%s245 + $0x48] sm:$0xf]
      %v809 = vld [vmem:[%s245 + $0x4c] sm:$0xf]
      %v810 = vld [vmem:[%s245 + $0x50] sm:$0xf]
      %v811 = vld [vmem:[%s245 + $0x54] sm:$0xf]
      %v812 = vld [vmem:[%s245 + $0x58] sm:$0xf]
      %v813 = vld [vmem:[%s245 + $0x5c] sm:$0xf]
      %v814 = vld [vmem:[%s245 + $0x60] sm:$0xf]
      %v815 = vld [vmem:[%s245 + $0x64] sm:$0xf]
      %v816 = vld [vmem:[%s245 + $0x68] sm:$0xf]
      %v817 = vld [vmem:[%s245 + $0x6c] sm:$0xf]
      %v818 = vld [vmem:[%s245 + $0x70] sm:$0xf]
      %v819 = vld [vmem:[%s245 + $0x74] sm:$0xf]
      %v820 = vld [vmem:[%s245 + $0x78] sm:$0xf]
      %v821 = vld [vmem:[%s245 + $0x7c] sm:$0xf]
      %v822 = vunpack.c.l.bf16 %v790
      %v823 = vunpack.c.l.bf16 %v791
      %v824 = vunpack.c.l.bf16 %v792
      %v825 = vunpack.c.l.bf16 %v793
      %v826 = vunpack.c.l.bf16 %v794
      %v827 = vunpack.c.l.bf16 %v795
      %v828 = vunpack.c.l.bf16 %v796
      %v829 = vunpack.c.l.bf16 %v797
      %v830 = vunpack.c.l.bf16 %v798
      %v831 = vunpack.c.l.bf16 %v799
      %v832 = vunpack.c.l.bf16 %v800
      %v833 = vunpack.c.l.bf16 %v801
      %v834 = vunpack.c.l.bf16 %v802
      %v835 = vunpack.c.l.bf16 %v803
      %v836 = vunpack.c.l.bf16 %v804
      %v837 = vunpack.c.l.bf16 %v805
      %v838 = vunpack.c.l.bf16 %v806
      %v839 = vunpack.c.l.bf16 %v807
      %v840 = vunpack.c.l.bf16 %v808
      %v841 = vunpack.c.l.bf16 %v809
      %v842 = vunpack.c.l.bf16 %v810
      %v843 = vunpack.c.l.bf16 %v811
      %v844 = vunpack.c.l.bf16 %v812
      %v845 = vunpack.c.l.bf16 %v813
      %v846 = vunpack.c.l.bf16 %v814
      %v847 = vunpack.c.l.bf16 %v815
      %v848 = vunpack.c.l.bf16 %v816
      %v849 = vunpack.c.l.bf16 %v817
      %v850 = vunpack.c.l.bf16 %v818
      %v851 = vunpack.c.l.bf16 %v819
      %v852 = vunpack.c.l.bf16 %v820
      %v853 = vunpack.c.l.bf16 %v821
      %v854 = vadd.f32 %v758, %v822
      %v855 = vadd.f32 %v759, %v823
      %v856 = vadd.f32 %v760, %v824
      %v857 = vadd.f32 %v761, %v825
      %v858 = vadd.f32 %v762, %v826
      %v859 = vadd.f32 %v763, %v827
      %v860 = vadd.f32 %v764, %v828
      %v861 = vadd.f32 %v765, %v829
      %v862 = vadd.f32 %v766, %v830
      %v863 = vadd.f32 %v767, %v831
      %v864 = vadd.f32 %v768, %v832
      %v865 = vadd.f32 %v769, %v833
      %v866 = vadd.f32 %v770, %v834
      %v867 = vadd.f32 %v771, %v835
      %v868 = vadd.f32 %v772, %v836
      %v869 = vadd.f32 %v773, %v837
      %v870 = vadd.f32 %v774, %v838
      %v871 = vadd.f32 %v775, %v839
      %v872 = vadd.f32 %v776, %v840
      %v873 = vadd.f32 %v777, %v841
      %v874 = vadd.f32 %v778, %v842
      %v875 = vadd.f32 %v779, %v843
      %v876 = vadd.f32 %v780, %v844
      %v877 = vadd.f32 %v781, %v845
      %v878 = vadd.f32 %v782, %v846
      %v879 = vadd.f32 %v783, %v847
      %v880 = vadd.f32 %v784, %v848
      %v881 = vadd.f32 %v785, %v849
      %v882 = vadd.f32 %v786, %v850
      %v883 = vadd.f32 %v787, %v851
      %v884 = vadd.f32 %v788, %v852
      %v885 = vadd.f32 %v789, %v853
      %v886 = vmax.f32 %v854, 0.0
      %v887 = vmax.f32 %v855, 0.0
      %v888 = vmax.f32 %v856, 0.0
      %v889 = vmax.f32 %v857, 0.0
      %v890 = vmax.f32 %v858, 0.0
      %v891 = vmax.f32 %v859, 0.0
      %v892 = vmax.f32 %v860, 0.0
      %v893 = vmax.f32 %v861, 0.0
      %v894 = vmax.f32 %v862, 0.0
      %v895 = vmax.f32 %v863, 0.0
      %v896 = vmax.f32 %v864, 0.0
      %v897 = vmax.f32 %v865, 0.0
      %v898 = vmax.f32 %v866, 0.0
      %v899 = vmax.f32 %v867, 0.0
      %v900 = vmax.f32 %v868, 0.0
      %v901 = vmax.f32 %v869, 0.0
      %v902 = vmax.f32 %v870, 0.0
      %v903 = vmax.f32 %v871, 0.0
      %v904 = vmax.f32 %v872, 0.0
      %v905 = vmax.f32 %v873, 0.0
      %v906 = vmax.f32 %v874, 0.0
      %v907 = vmax.f32 %v875, 0.0
      %v908 = vmax.f32 %v876, 0.0
      %v909 = vmax.f32 %v877, 0.0
      %v910 = vmax.f32 %v878, 0.0
      %v911 = vmax.f32 %v879, 0.0
      %v912 = vmax.f32 %v880, 0.0
      %v913 = vmax.f32 %v881, 0.0
      %v914 = vmax.f32 %v882, 0.0
      %v915 = vmax.f32 %v883, 0.0
      %v916 = vmax.f32 %v884, 0.0
      %v917 = vmax.f32 %v885, 0.0
      %v918 = vpack.c.bf16 %v887, %v886
      %v919 = vpack.c.bf16 %v889, %v888
      %v920 = vpack.c.bf16 %v891, %v890
      %v921 = vpack.c.bf16 %v893, %v892
      %v922 = vpack.c.bf16 %v895, %v894
      %v923 = vpack.c.bf16 %v897, %v896
      %v924 = vpack.c.bf16 %v899, %v898
      %v925 = vpack.c.bf16 %v901, %v900
      %v926 = vpack.c.bf16 %v903, %v902
      %v927 = vpack.c.bf16 %v905, %v904
      %v928 = vpack.c.bf16 %v907, %v906
      %v929 = vpack.c.bf16 %v909, %v908
      %v930 = vpack.c.bf16 %v911, %v910
      %v931 = vpack.c.bf16 %v913, %v912
      %v932 = vpack.c.bf16 %v915, %v914
      %v933 = vpack.c.bf16 %v917, %v916
      %v950 = vunpack.c.l.b16 %v918
      %v951 = vunpack.c.h.b16 %v918
      %v952 = vunpack.c.l.b16 %v919
      %v953 = vunpack.c.h.b16 %v919
      %v954 = vunpack.c.l.b16 %v920
      %v955 = vunpack.c.h.b16 %v920
      %v956 = vunpack.c.l.b16 %v921
      %v957 = vunpack.c.h.b16 %v921
      %v958 = vunpack.c.l.b16 %v922
      %v959 = vunpack.c.h.b16 %v922
      %v960 = vunpack.c.l.b16 %v923
      %v961 = vunpack.c.h.b16 %v923
      %v962 = vunpack.c.l.b16 %v924
      %v963 = vunpack.c.h.b16 %v924
      %v964 = vunpack.c.l.b16 %v925
      %v965 = vunpack.c.h.b16 %v925
      %v966 = vunpack.c.l.b16 %v926
      %v967 = vunpack.c.h.b16 %v926
      %v968 = vunpack.c.l.b16 %v927
      %v969 = vunpack.c.h.b16 %v927
      %v970 = vunpack.c.l.b16 %v928
      %v971 = vunpack.c.h.b16 %v928
      %v972 = vunpack.c.l.b16 %v929
      %v973 = vunpack.c.h.b16 %v929
      %v974 = vunpack.c.l.b16 %v930
      %v975 = vunpack.c.h.b16 %v930
      %v976 = vunpack.c.l.b16 %v931
      %v977 = vunpack.c.h.b16 %v931
      %v978 = vunpack.c.l.b16 %v932
      %v979 = vunpack.c.h.b16 %v932
      %v980 = vunpack.c.l.b16 %v933
      %v981 = vunpack.c.h.b16 %v933
      %v982 = vpack.c.b16 %v950, %v950
      %v983 = vpack.c.b16 %v951, %v951
      %v984 = vpack.c.b16 %v952, %v952
      %v985 = vpack.c.b16 %v953, %v953
      %v986 = vpack.c.b16 %v954, %v954
      %v987 = vpack.c.b16 %v955, %v955
      %v988 = vpack.c.b16 %v956, %v956
      %v989 = vpack.c.b16 %v957, %v957
      %v990 = vpack.c.b16 %v958, %v958
      %v991 = vpack.c.b16 %v959, %v959
      %v992 = vpack.c.b16 %v960, %v960
      %v993 = vpack.c.b16 %v961, %v961
      %v994 = vpack.c.b16 %v962, %v962
      %v995 = vpack.c.b16 %v963, %v963
      %v996 = vpack.c.b16 %v964, %v964
      %v997 = vpack.c.b16 %v965, %v965
      %v998 = vpack.c.b16 %v966, %v966
      %v999 = vpack.c.b16 %v967, %v967
      %v1000 = vpack.c.b16 %v968, %v968
      %v1001 = vpack.c.b16 %v969, %v969
      %v1002 = vpack.c.b16 %v970, %v970
      %v1003 = vpack.c.b16 %v971, %v971
      %v1004 = vpack.c.b16 %v972, %v972
      %v1005 = vpack.c.b16 %v973, %v973
      %v1006 = vpack.c.b16 %v974, %v974
      %v1007 = vpack.c.b16 %v975, %v975
      %v1008 = vpack.c.b16 %v976, %v976
      %v1009 = vpack.c.b16 %v977, %v977
      %v1010 = vpack.c.b16 %v978, %v978
      %v1011 = vpack.c.b16 %v979, %v979
      %v1012 = vpack.c.b16 %v980, %v980
      %v1013 = vpack.c.b16 %v981, %v981
      %1046 = vst [vmem:[%s251] sm:$0xf] %v982
      %1047 = vst [vmem:[%s251 + $0x4] sm:$0xf] %v983
      %1048 = vst [vmem:[%s251 + $0x8] sm:$0xf] %v984
      %1049 = vst [vmem:[%s251 + $0xc] sm:$0xf] %v985
      %1050 = vst [vmem:[%s251 + $0x10] sm:$0xf] %v986
      %1051 = vst [vmem:[%s251 + $0x14] sm:$0xf] %v987
      %1052 = vst [vmem:[%s251 + $0x18] sm:$0xf] %v988
      %1053 = vst [vmem:[%s251 + $0x1c] sm:$0xf] %v989
      %1054 = vst [vmem:[%s251 + $0x20] sm:$0xf] %v990
      %1055 = vst [vmem:[%s251 + $0x24] sm:$0xf] %v991
      %1056 = vst [vmem:[%s251 + $0x28] sm:$0xf] %v992
      %1057 = vst [vmem:[%s251 + $0x2c] sm:$0xf] %v993
      %1058 = vst [vmem:[%s251 + $0x30] sm:$0xf] %v994
      %1059 = vst [vmem:[%s251 + $0x34] sm:$0xf] %v995
      %1060 = vst [vmem:[%s251 + $0x38] sm:$0xf] %v996
      %1061 = vst [vmem:[%s251 + $0x3c] sm:$0xf] %v997
      %1062 = vst [vmem:[%s251 + $0x40] sm:$0xf] %v998
      %1063 = vst [vmem:[%s251 + $0x44] sm:$0xf] %v999
      %1064 = vst [vmem:[%s251 + $0x48] sm:$0xf] %v1000
      %1065 = vst [vmem:[%s251 + $0x4c] sm:$0xf] %v1001
      %1066 = vst [vmem:[%s251 + $0x50] sm:$0xf] %v1002
      %1067 = vst [vmem:[%s251 + $0x54] sm:$0xf] %v1003
      %1068 = vst [vmem:[%s251 + $0x58] sm:$0xf] %v1004
      %1069 = vst [vmem:[%s251 + $0x5c] sm:$0xf] %v1005
      %1070 = vst [vmem:[%s251 + $0x60] sm:$0xf] %v1006
      %1071 = vst [vmem:[%s251 + $0x64] sm:$0xf] %v1007
      %1072 = vst [vmem:[%s251 + $0x68] sm:$0xf] %v1008
      %1073 = vst [vmem:[%s251 + $0x6c] sm:$0xf] %v1009
      %1074 = vst [vmem:[%s251 + $0x70] sm:$0xf] %v1010
      %1075 = vst [vmem:[%s251 + $0x74] sm:$0xf] %v1011
      %1076 = vst [vmem:[%s251 + $0x78] sm:$0xf] %v1012
      %1077 = vst [vmem:[%s251 + $0x7c] sm:$0xf] %v1013
      %s1078 = smul.u32 32, %s16
      %p1079 = scmp.lt.s32.totalorder %s1078, 63
      %s1080 = scalar_select %p1079, %s1078, 63
      %s1081 = smul.addr %s1080, 4
      %s1082 = scalar_lea.vmem %s5, %s1081
      // Predicated region
      $region41: #{shrinknet_forward.12} parent=39 // pred_check
        %p1083 = pneg %p149
      $region42: #{shrinknet_forward.12} parent=39 // pred_check_branch
        %1085 = sbr.rel (%p1083) target = $region44
      $region43: #{shrinknet_forward.12} parent=39 // pred_region
        %s1086 = smul.u32 32, %s16
      $region44: #{shrinknet_forward.12} parent=39 // pred_fallthru
        _
    $region40: #{shrinknet_forward.12} parent=5 // pred_fallthru
      _
    %p1087 = scmp.le.s32.totalorder 2, %s11
    // Predicated region
    $region45: #{shrinknet_forward.12} parent=5 // pred_check
      %p1088 = pneg %p1087
    $region46: #{shrinknet_forward.12} parent=5 // pred_check_branch
      %1090 = sbr.rel (%p1088) target = $region48
    $region47: #{shrinknet_forward.12} parent=5 // pred_region
      %s1091 = ssub.s32 %s11, 2
      // Predicated region
      $region49: #{shrinknet_forward.12} parent=47 // pred_check
        %p1092 = pneg %p155
      $region50: #{shrinknet_forward.12} parent=47 // pred_check_branch
        %1094 = sbr.rel (%p1092) target = $region52
      $region51: #{shrinknet_forward.12} parent=47 // pred_region
        %s1095 = smul.u32 32, %s17
        %p1096 = scmp.lt.s32.totalorder %s1095, 63
        %s1097 = scalar_select %p1096, %s1095, 63
        %s1098 = smul.addr %s1097, 4
        %s1099 = scalar_lea.vmem %s5, %s1098
      $region52: #{shrinknet_forward.12} parent=47 // pred_fallthru
        _
    $region48: #{shrinknet_forward.12} parent=5 // pred_fallthru
      _
  $region6: #{shrinknet_forward.12} parent=0 // loop_footer
    %s15 = sadd.s32 1, %s11
  $region7: #{shrinknet_forward.12} parent=0 // loop_footer_branch
    %10 = sbr.rel target = $region3
  $region8: #{shrinknet_forward.12} parent=0 // loop_exit
    _

// kernel: shrinknet_forward.13
$region0: #{shrinknet_forward.13}
  #allocation0 [shape = 'u32[]', space=smem, size = 0x4, offset = 0x4, fixed_abs, tag = 'smem constant byte address 0x4 - core index']
  #allocation1 [shape = 'u32[144,128]{1,0:T(1,128)}', space=vmem, size = 0x12000, scoped, tag = 'internal scratch']
  %s0 = inlined_call_operand.vmem [shape: bf16[128,144], index: 0, kind: input, shape index: {}]
  %s1 = inlined_call_operand.vmem [shape: bf16[144,128], index: 1, kind: input, shape index: {}]
  %s2 = inlined_call_operand.vmem [shape: f32[1,128], index: 2, kind: input, shape index: {}]
  %s3 = inlined_call_operand.vmem [shape: f32[1,128], index: 3, kind: input, shape index: {}]
  %s4 = inlined_call_operand.vmem [shape: bf16[128,128], index: 4, kind: output, shape index: {}]
  %s5 = sld [smem:[#allocation0]]
  $region49: #{shrinknet_forward.13} parent=0
    _
  %s7 = ssub.s32 1, %s5
  %s8 = scalar_select 0, %s7, %s5
  loop: start=0, step=1, limit=4
  $region2: #{shrinknet_forward.13} parent=0 // loop_pre_header
    _
  $region3: #{shrinknet_forward.13} parent=0 // loop_header
    %s10 = sphi 0, %s14
    %p11 = scmp.ge.s32.totalorder %s10, 4
    %s20 = sphi 0, %s22
    %s23 = sphi 0, %s20
    %s24 = sphi 0, %s23
    %s40 = sphi 0, %s24
    %s44 = sphi 0, %s44
    %s46 = sphi 0, %s44
    %s47 = sphi 0, %s46
    %s61 = sphi 0, %s47
    %s65 = sphi 0, %s65
    %s67 = sphi 0, %s65
    %s68 = sphi 0, %s67
    %s82 = sphi 0, %s68
    %s86 = sphi 0, %s86
    %s88 = sphi 0, %s86
    %s89 = sphi 0, %s88
    %s103 = sphi 0, %s89
    %s109 = sphi 0, %s111
    %s112 = sphi 0, %s109
    %s113 = sphi 0, %s112
    %s129 = sphi 0, %s113
  $region4: #{shrinknet_forward.13} parent=0 // loop_header_branch
    %13 = sbr.rel (%p11) target = $region8
  $region5: #{shrinknet_forward.13} parent=0 // loop_body
    %s15 = ssub.s32 %s10, 1
    %s16 = ssub.s32 %s10, 2
    %s17 = sadd.s32 %s10, 1
    %s18 = ssub.s32 %s10, %s17
    %p19 = scmp.eq.s32.totalorder %s18, 0
    %s21 = sadd.s32 %s20, 1
    %s22 = scalar_select %p19, %s20, %s21
    %p25 = pneg %p19
    %p26 = scmp.eq.s32.totalorder %s10, 1
    %p27 = por %p25, %p26
    %p28 = scmp.ne.s32.totalorder %s20, %s23
    %p29 = scmp.eq.s32.totalorder %s10, 0
    %p30 = por %p28, %p29
    %p31 = scmp.ne.s32.totalorder %s20, %s23
    %p32 = scmp.eq.s32.totalorder %s15, 1
    %p33 = por %p31, %p32
    %p34 = scmp.ne.s32.totalorder %s23, %s24
    %p35 = scmp.eq.s32.totalorder %s15, 0
    %p36 = por %p34, %p35
    %p37 = scmp.ne.s32.totalorder %s23, %s24
    %p38 = scmp.eq.s32.totalorder %s16, 1
    %p39 = por %p37, %p38
    %p41 = scmp.ne.s32.totalorder %s24, %s40
    %p42 = scmp.eq.s32.totalorder %s16, 0
    %p43 = por %p41, %p42
    %s45 = sadd.s32 %s44, 1
    %p48 = scmp.eq.s32.totalorder %s10, 1
    %p49 = scmp.ne.s32.totalorder %s44, %s46
    %p50 = scmp.eq.s32.totalorder %s10, 0
    %p51 = por %p49, %p50
    %p52 = scmp.ne.s32.totalorder %s44, %s46
    %p53 = scmp.eq.s32.totalorder %s15, 1
    %p54 = por %p52, %p53
    %p55 = scmp.ne.s32.totalorder %s46, %s47
    %p56 = scmp.eq.s32.totalorder %s15, 0
    %p57 = por %p55, %p56
    %p58 = scmp.ne.s32.totalorder %s46, %s47
    %p59 = scmp.eq.s32.totalorder %s16, 1
    %p60 = por %p58, %p59
    %p62 = scmp.ne.s32.totalorder %s47, %s61
    %p63 = scmp.eq.s32.totalorder %s16, 0
    %p64 = por %p62, %p63
    %s66 = sadd.s32 %s65, 1
    %p69 = scmp.eq.s32.totalorder %s10, 1
    %p70 = scmp.ne.s32.totalorder %s65, %s67
    %p71 = scmp.eq.s32.totalorder %s10, 0
    %p72 = por %p70, %p71
    %p73 = scmp.ne.s32.totalorder %s65, %s67
    %p74 = scmp.eq.s32.totalorder %s15, 1
    %p75 = por %p73, %p74
    %p76 = scmp.ne.s32.totalorder %s67, %s68
    %p77 = scmp.eq.s32.totalorder %s15, 0
    %p78 = por %p76, %p77
    %p79 = scmp.ne.s32.totalorder %s67, %s68
    %p80 = scmp.eq.s32.totalorder %s16, 1
    %p81 = por %p79, %p80
    %p83 = scmp.ne.s32.totalorder %s68, %s82
    %p84 = scmp.eq.s32.totalorder %s16, 0
    %p85 = por %p83, %p84
    %s87 = sadd.s32 %s86, 1
    %p90 = scmp.eq.s32.totalorder %s10, 1
    %p91 = scmp.ne.s32.totalorder %s86, %s88
    %p92 = scmp.eq.s32.totalorder %s10, 0
    %p93 = por %p91, %p92
    %p94 = scmp.ne.s32.totalorder %s86, %s88
    %p95 = scmp.eq.s32.totalorder %s15, 1
    %p96 = por %p94, %p95
    %p97 = scmp.ne.s32.totalorder %s88, %s89
    %p98 = scmp.eq.s32.totalorder %s15, 0
    %p99 = por %p97, %p98
    %p100 = scmp.ne.s32.totalorder %s88, %s89
    %p101 = scmp.eq.s32.totalorder %s16, 1
    %p102 = por %p100, %p101
    %p104 = scmp.ne.s32.totalorder %s89, %s103
    %p105 = scmp.eq.s32.totalorder %s16, 0
    %p106 = por %p104, %p105
    %s107 = ssub.s32 %s10, %s17
    %p108 = scmp.eq.s32.totalorder %s107, 0
    %s110 = sadd.s32 %s109, 1
    %s111 = scalar_select %p108, %s109, %s110
    %p114 = pneg %p108
    %p115 = scmp.eq.s32.totalorder %s10, 1
    %p116 = por %p114, %p115
    %p117 = scmp.ne.s32.totalorder %s109, %s112
    %p118 = scmp.eq.s32.totalorder %s10, 0
    %p119 = por %p117, %p118
    %p120 = scmp.ne.s32.totalorder %s109, %s112
    %p121 = scmp.eq.s32.totalorder %s15, 1
    %p122 = por %p120, %p121
    %p123 = scmp.ne.s32.totalorder %s112, %s113
    %p124 = scmp.eq.s32.totalorder %s15, 0
    %p125 = por %p123, %p124
    %p126 = scmp.ne.s32.totalorder %s112, %s113
    %p127 = scmp.eq.s32.totalorder %s16, 1
    %p128 = por %p126, %p127
    %p130 = scmp.ne.s32.totalorder %s113, %s129
    %p131 = scmp.eq.s32.totalorder %s16, 0
    %p132 = por %p130, %p131
    %p133 = scmp.le.s32.totalorder 1, %s10
    %p134 = scmp.lt.s32.totalorder %s10, 3
    %p135 = pnand %p133, %p134
    %p136 = pneg %p135
    // Predicated region
    $region9: #{shrinknet_forward.13} parent=5 // pred_check
      _
    $region10: #{shrinknet_forward.13} parent=5 // pred_check_branch
      %138 = sbr.rel (%p135) target = $region12
    $region11: #{shrinknet_forward.13} parent=5 // pred_region
      %s139 = ssub.s32 %s10, 1
      // Predicated region
      $region13: #{shrinknet_forward.13} parent=11 // pred_check
        %p140 = pneg %p57
      $region14: #{shrinknet_forward.13} parent=11 // pred_check_branch
        %142 = sbr.rel (%p140) target = $region16
      $region15: #{shrinknet_forward.13} parent=11 // pred_region
        _
      $region16: #{shrinknet_forward.13} parent=11 // pred_fallthru
        _
      // Predicated region
      $region17: #{shrinknet_forward.13} parent=11 // pred_check
        %p143 = pneg %p78
      $region18: #{shrinknet_forward.13} parent=11 // pred_check_branch
        %145 = sbr.rel (%p143) target = $region20
      $region19: #{shrinknet_forward.13} parent=11 // pred_region
        _
      $region20: #{shrinknet_forward.13} parent=11 // pred_fallthru
        _
      // Predicated region
      $region21: #{shrinknet_forward.13} parent=11 // pred_check
        %p146 = pneg %p99
      $region22: #{shrinknet_forward.13} parent=11 // pred_check_branch
        %148 = sbr.rel (%p146) target = $region24
      $region23: #{shrinknet_forward.13} parent=11 // pred_region
        _
      $region24: #{shrinknet_forward.13} parent=11 // pred_fallthru
        _
    $region12: #{shrinknet_forward.13} parent=5 // pred_fallthru
      _
    %p149 = scmp.lt.s32.totalorder %s10, 2
    // Predicated region
    $region25: #{shrinknet_forward.13} parent=5 // pred_check
      %p150 = pneg %p149
    $region26: #{shrinknet_forward.13} parent=5 // pred_check_branch
      %152 = sbr.rel (%p150) target = $region28
    $region27: #{shrinknet_forward.13} parent=5 // pred_region
      // Predicated region
      $region29: #{shrinknet_forward.13} parent=27 // pred_check
        %p153 = pneg %p30
      $region30: #{shrinknet_forward.13} parent=27 // pred_check_branch
        %155 = sbr.rel (%p153) target = $region32
      $region31: #{shrinknet_forward.13} parent=27 // pred_region
        %s156 = smul.u32 8, %s10
        %p157 = scmp.lt.s32.totalorder %s156, 15
        %s158 = scalar_select %p157, %s156, 15
        %s159 = smul.addr %s158, 2
        %s160 = smul.addr %s159, 4
        %s161 = scalar_lea.vmem %s0, %s160
        %s162 = smul.u32 8, %s10
      $region32: #{shrinknet_forward.13} parent=27 // pred_fallthru
        _
    $region28: #{shrinknet_forward.13} parent=5 // pred_fallthru
      _
    %p163 = scmp.le.s32.totalorder 1, %s10
    %p164 = scmp.lt.s32.totalorder %s10, 3
    %p165 = pnand %p163, %p164
    %p166 = pneg %p165
    // Predicated region
    $region33: #{shrinknet_forward.13} parent=5 // pred_check
      _
    $region34: #{shrinknet_forward.13} parent=5 // pred_check_branch
      %168 = sbr.rel (%p165) target = $region36
    $region35: #{shrinknet_forward.13} parent=5 // pred_region
      %s169 = ssub.s32 %s10, 1
      %s170 = smul.u32 8, %s15
      %p171 = scmp.lt.s32.totalorder %s170, 15
      %s172 = scalar_select %p171, %s170, 15
      %s173 = smul.addr %s172, 2
      %s174 = smul.addr %s173, 4
      %s175 = scalar_lea.vmem %s0, %s174
      %p176 = pneg %p36
      %p177 = pneg %p33
      %p178 = pneg %p57
      %p179 = pneg %p54
      %p180 = pneg %p78
      %p181 = pneg %p75
      %p182 = pneg %p99
      %p183 = pneg %p96
      %p184 = pneg %p125
      %p185 = pneg %p122
      %s186 = smul.u32 8, %s15
      %p187 = scmp.lt.s32.totalorder %s186, 15
      %s188 = scalar_select %p187, %s186, 15
      %s189 = smul.addr %s188, 4
      %s190 = scalar_lea.vmem %s4, %s189
      %s191 = smul.u32 8, %s15
      %p192 = scmp.lt.s32.totalorder %s191, 15
      %s193 = scalar_select %p192, %s191, 15
      %s194 = smul.addr %s193, 2
      %s195 = smul.addr %s194, 4
      %s196 = scalar_lea.vmem %s0, %s195
      %s197 = smul.u32 8, %s15
      %s198 = smul.u32 8, %s15
      %p199 = scmp.lt.s32.totalorder %s198, 15
      %s200 = scalar_select %p199, %s198, 15
      %s201 = smul.addr %s200, 4
      %s202 = scalar_lea.vmem %s4, %s201
      %s203 = smul.u32 8, %s15
      %v205 = vld [vmem:[%s196] sm:$0xff]
      %v206 = vld [vmem:[%s196 + $0x8] sm:$0xff]
      %v207 = vld [vmem:[%s196 + $0x10] sm:$0xff]
      %v208 = vld [vmem:[%s196 + $0x18] sm:$0xff]
      %v209 = vld [vmem:[%s196 + $0x20] sm:$0xff]
      %v210 = vld [vmem:[%s196 + $0x28] sm:$0xff]
      %v211 = vld [vmem:[%s196 + $0x30] sm:$0xff]
      %v212 = vld [vmem:[%s196 + $0x38] sm:$0xff]
      %v213 = vld [vmem:[%s1] sm:$0xf]
      %v214 = vld [vmem:[%s1 + $0x4] sm:$0xf]
      %v215 = vld [vmem:[%s1 + $0x8] sm:$0xf]
      %v216 = vld [vmem:[%s1 + $0xc] sm:$0xf]
      %v217 = vld [vmem:[%s1 + $0x10] sm:$0xf]
      %v218 = vld [vmem:[%s1 + $0x14] sm:$0xf]
      %v219 = vld [vmem:[%s1 + $0x18] sm:$0xf]
      %v220 = vld [vmem:[%s1 + $0x1c] sm:$0xf]
      %v221 = vld [vmem:[%s1 + $0x20] sm:$0xf]
      %v222 = vld [vmem:[%s1 + $0x24] sm:$0xf]
      %v223 = vld [vmem:[%s1 + $0x28] sm:$0xf]
      %v224 = vld [vmem:[%s1 + $0x2c] sm:$0xf]
      %v225 = vld [vmem:[%s1 + $0x30] sm:$0xf]
      %v226 = vld [vmem:[%s1 + $0x34] sm:$0xf]
      %v227 = vld [vmem:[%s1 + $0x38] sm:$0xf]
      %v228 = vld [vmem:[%s1 + $0x3c] sm:$0xf]
      %v229 = vld [vmem:[%s1 + $0x40] sm:$0xf]
      %v230 = vld [vmem:[%s1 + $0x44] sm:$0xf]
      %v239 = vunpack.c.l.b16 %v205
      %v240 = vunpack.c.h.b16 %v205
      %v241 = vunpack.c.l.b16 %v206
      %v242 = vunpack.c.h.b16 %v206
      %v243 = vunpack.c.l.b16 %v207
      %v244 = vunpack.c.h.b16 %v207
      %v245 = vunpack.c.l.b16 %v208
      %v246 = vunpack.c.h.b16 %v208
      %v247 = vunpack.c.l.b16 %v209
      %v248 = vunpack.c.h.b16 %v209
      %v249 = vunpack.c.l.b16 %v210
      %v250 = vunpack.c.h.b16 %v210
      %v251 = vunpack.c.l.b16 %v211
      %v252 = vunpack.c.h.b16 %v211
      %v253 = vunpack.c.l.b16 %v212
      %v254 = vunpack.c.h.b16 %v212
      %v255 = vpack.c.b16 %v241, %v239
      %v256 = vpack.c.b16 %v242, %v240
      %v257 = vpack.c.b16 %v245, %v243
      %v258 = vpack.c.b16 %v246, %v244
      %v259 = vpack.c.b16 %v249, %v247
      %v260 = vpack.c.b16 %v250, %v248
      %v261 = vpack.c.b16 %v253, %v251
      %v262 = vpack.c.b16 %v254, %v252
      %v285 = vunpack.c.l.b16 %v213
      %v286 = vunpack.c.l.b16 %v214
      %v287 = vunpack.c.l.b16 %v215
      %v288 = vunpack.c.l.b16 %v216
      %v289 = vunpack.c.l.b16 %v217
      %v290 = vunpack.c.l.b16 %v218
      %v291 = vunpack.c.l.b16 %v219
      %v292 = vunpack.c.l.b16 %v220
      %v293 = vunpack.c.l.b16 %v221
      %v294 = vunpack.c.l.b16 %v222
      %v295 = vunpack.c.l.b16 %v223
      %v296 = vunpack.c.l.b16 %v224
      %v297 = vunpack.c.l.b16 %v225
      %v298 = vunpack.c.l.b16 %v226
      %v299 = vunpack.c.l.b16 %v227
      %v300 = vunpack.c.l.b16 %v228
      %v301 = vunpack.c.l.b16 %v229
      %v302 = vunpack.c.l.b16 %v230
      %v303 = vpack.c.b16 %v286, %v285
      %v304 = vpack.c.b16 %v288, %v287
      %v305 = vpack.c.b16 %v290, %v289
      %v306 = vpack.c.b16 %v292, %v291
      %v307 = vpack.c.b16 %v294, %v293
      %v308 = vpack.c.b16 %v296, %v295
      %v309 = vpack.c.b16 %v298, %v297
      %v310 = vpack.c.b16 %v300, %v299
      %v311 = vpack.c.b16 %v302, %v301
      %vm321 = vcmask 130048
      %v323 = vsel %vm321, %v256, 0
      %v326 = vsel %vm321, %v258, 0
      %v329 = vsel %vm321, %v260, 0
      %v332 = vsel %vm321, %v262, 0
      %334 = vmatprep.subr.bf16.mxu0 0
      %335 = vmatpush1.bf16.msra.mxu0 %v303
      %336 = vmatprep.subr.bf16.mxu0 0
      %337 = vmatpush1.bf16.msra.mxu0 %v304
      %338 = vmatprep.subr.bf16.mxu0 0
      %339 = vmatpush1.bf16.msra.mxu0 %v305
      %340 = vmatprep.subr.bf16.mxu0 0
      %341 = vmatpush1.bf16.msra.mxu0 %v306
      %342 = vmatprep.subr.bf16.mxu0 0
      %343 = vmatpush1.bf16.msra.mxu0 %v307
      %344 = vmatprep.subr.bf16.mxu0 0
      %345 = vmatpush1.bf16.msra.mxu0 %v308
      %346 = vmatprep.subr.bf16.mxu0 0
      %347 = vmatpush1.bf16.msra.mxu0 %v309
      %348 = vmatprep.subr.bf16.mxu0 0
      %349 = vmatpush1.bf16.msra.mxu0 %v310
      %350 = vmatprep.subr.bf16.mxu0 0
      %351 = vmatpush1.bf16.msra.mxu0 %v311
      %352 = vmatprep.subr.bf16.mxu0 0
      %353 = vmatpush1.bf16.msra.mxu0 0
      %354 = vmatprep.subr.bf16.mxu0 0
      %355 = vmatpush1.bf16.msra.mxu0 0
      %356 = vmatprep.subr.bf16.mxu0 0
      %357 = vmatpush1.bf16.msra.mxu0 0
      %358 = vmatprep.subr.bf16.mxu0 0
      %359 = vmatpush1.bf16.msra.mxu0 0
      %360 = vmatprep.subr.bf16.mxu0 0
      %361 = vmatpush1.bf16.msra.mxu0 0
      %362 = vmatprep.subr.bf16.mxu0 0
      %363 = vmatpush1.bf16.msra.mxu0 0
      %364 = vmatprep.subr.bf16.mxu0 0
      %365 = vmatpush1.bf16.msra.mxu0 0
      %366 = vmatprep.mubr.bf16.mxu0 %v323
      %367 = vmatmul.mubr.bf16.gmra.mrb[0].mxu0 %v255
      %v368 = vpop.f32.mrb[0].mxu0
      %v369 = vadd.f32 0.0, %v368
      %v370 = vpop.f32.mrb[0].mxu0
      %v371 = vpop.f32.mrb[0].mxu0
      %v372 = vadd.f32 0.0, %v371
      %v373 = vpop.f32.mrb[0].mxu0
      %374 = vmatprep.mubr.bf16.mxu0 %v326
      %375 = vmatmul.mubr.bf16.gmra.mrb[0].mxu0 %v257
      %v376 = vpop.f32.mrb[0].mxu0
      %v377 = vadd.f32 0.0, %v376
      %v378 = vpop.f32.mrb[0].mxu0
      %v379 = vpop.f32.mrb[0].mxu0
      %v380 = vadd.f32 0.0, %v379
      %v381 = vpop.f32.mrb[0].mxu0
      %382 = vmatprep.mubr.bf16.mxu0 %v329
      %383 = vmatmul.mubr.bf16.gmra.mrb[0].mxu0 %v259
      %v384 = vpop.f32.mrb[0].mxu0
      %v385 = vadd.f32 0.0, %v384
      %v386 = vpop.f32.mrb[0].mxu0
      %v387 = vpop.f32.mrb[0].mxu0
      %v388 = vadd.f32 0.0, %v387
      %v389 = vpop.f32.mrb[0].mxu0
      %390 = vmatprep.mubr.bf16.mxu0 %v332
      %391 = vmatmul.mubr.bf16.gmra.mrb[0].mxu0 %v261
      %v392 = vpop.f32.mrb[0].mxu0
      %v393 = vadd.f32 0.0, %v392
      %v394 = vpop.f32.mrb[0].mxu0
      %v395 = vpop.f32.mrb[0].mxu0
      %v396 = vadd.f32 0.0, %v395
      %v397 = vpop.f32.mrb[0].mxu0
      %398 = vdwg.mxu0
      %v399 = vld [vmem:[%s2] sm:$0x1]
      %v401 = vlaneseq
      %v402 = vshrl.u32 %v401, 7
      %v403 = vsub.s32 0, %v402
      %v404 = vrot.slane %v399, %v403
      %v406 = vmul.f32 %v369, %v404
      %v407 = vmul.f32 %v372, %v404
      %v408 = vmul.f32 %v377, %v404
      %v409 = vmul.f32 %v380, %v404
      %v410 = vmul.f32 %v385, %v404
      %v411 = vmul.f32 %v388, %v404
      %v412 = vmul.f32 %v393, %v404
      %v413 = vmul.f32 %v396, %v404
      %v414 = vld [vmem:[%s3] sm:$0x1]
      %v416 = vlaneseq
      %v417 = vshrl.u32 %v416, 7
      %v418 = vsub.s32 0, %v417
      %v419 = vrot.slane %v414, %v418
      %v421 = vadd.f32 %v406, %v419
      %v422 = vadd.f32 %v407, %v419
      %v423 = vadd.f32 %v408, %v419
      %v424 = vadd.f32 %v409, %v419
      %v425 = vadd.f32 %v410, %v419
      %v426 = vadd.f32 %v411, %v419
      %v427 = vadd.f32 %v412, %v419
      %v428 = vadd.f32 %v413, %v419
      %v429 = vmax.f32 %v421, 0.0
      %v430 = vmax.f32 %v422, 0.0
      %v431 = vmax.f32 %v423, 0.0
      %v432 = vmax.f32 %v424, 0.0
      %v433 = vmax.f32 %v425, 0.0
      %v434 = vmax.f32 %v426, 0.0
      %v435 = vmax.f32 %v427, 0.0
      %v436 = vmax.f32 %v428, 0.0
      %v437 = vpack.c.bf16 %v430, %v429
      %v438 = vpack.c.bf16 %v432, %v431
      %v439 = vpack.c.bf16 %v434, %v433
      %v440 = vpack.c.bf16 %v436, %v435
      %v445 = vunpack.c.l.b16 %v437
      %v446 = vunpack.c.h.b16 %v437
      %v447 = vunpack.c.l.b16 %v438
      %v448 = vunpack.c.h.b16 %v438
      %v449 = vunpack.c.l.b16 %v439
      %v450 = vunpack.c.h.b16 %v439
      %v451 = vunpack.c.l.b16 %v440
      %v452 = vunpack.c.h.b16 %v440
      %v453 = vpack.c.b16 %v445, %v445
      %v454 = vpack.c.b16 %v446, %v446
      %v455 = vpack.c.b16 %v447, %v447
      %v456 = vpack.c.b16 %v448, %v448
      %v457 = vpack.c.b16 %v449, %v449
      %v458 = vpack.c.b16 %v450, %v450
      %v459 = vpack.c.b16 %v451, %v451
      %v460 = vpack.c.b16 %v452, %v452
      %469 = vst [vmem:[%s202] sm:$0xf] %v453
      %470 = vst [vmem:[%s202 + $0x4] sm:$0xf] %v454
      %471 = vst [vmem:[%s202 + $0x8] sm:$0xf] %v455
      %472 = vst [vmem:[%s202 + $0xc] sm:$0xf] %v456
      %473 = vst [vmem:[%s202 + $0x10] sm:$0xf] %v457
      %474 = vst [vmem:[%s202 + $0x14] sm:$0xf] %v458
      %475 = vst [vmem:[%s202 + $0x18] sm:$0xf] %v459
      %476 = vst [vmem:[%s202 + $0x1c] sm:$0xf] %v460
      %s477 = smul.u32 8, %s15
      %p478 = scmp.lt.s32.totalorder %s477, 15
      %s479 = scalar_select %p478, %s477, 15
      %s480 = smul.addr %s479, 4
      %s481 = scalar_lea.vmem %s4, %s480
      // Predicated region
      $region37: #{shrinknet_forward.13} parent=35 // pred_check
        %p482 = pneg %p122
      $region38: #{shrinknet_forward.13} parent=35 // pred_check_branch
        %484 = sbr.rel (%p482) target = $region40
      $region39: #{shrinknet_forward.13} parent=35 // pred_region
        %s485 = smul.u32 8, %s15
      $region40: #{shrinknet_forward.13} parent=35 // pred_fallthru
        _
    $region36: #{shrinknet_forward.13} parent=5 // pred_fallthru
      _
    %p486 = scmp.le.s32.totalorder 2, %s10
    // Predicated region
    $region41: #{shrinknet_forward.13} parent=5 // pred_check
      %p487 = pneg %p486
    $region42: #{shrinknet_forward.13} parent=5 // pred_check_branch
      %489 = sbr.rel (%p487) target = $region44
    $region43: #{shrinknet_forward.13} parent=5 // pred_region
      %s490 = ssub.s32 %s10, 2
      // Predicated region
      $region45: #{shrinknet_forward.13} parent=43 // pred_check
        %p491 = pneg %p128
      $region46: #{shrinknet_forward.13} parent=43 // pred_check_branch
        %493 = sbr.rel (%p491) target = $region48
      $region47: #{shrinknet_forward.13} parent=43 // pred_region
        %s494 = smul.u32 8, %s16
        %p495 = scmp.lt.s32.totalorder %s494, 15
        %s496 = scalar_select %p495, %s494, 15
        %s497 = smul.addr %s496, 4
        %s498 = scalar_lea.vmem %s4, %s497
      $region48: #{shrinknet_forward.13} parent=43 // pred_fallthru
        _
    $region44: #{shrinknet_forward.13} parent=5 // pred_fallthru
      _
  $region6: #{shrinknet_forward.13} parent=0 // loop_footer
    %s14 = sadd.s32 1, %s10
  $region7: #{shrinknet_forward.13} parent=0 // loop_footer_branch
    %9 = sbr.rel target = $region3
  $region8: #{shrinknet_forward.13} parent=0 // loop_exit
    _

// kernel: shrinknet_forward.15
$region0: #{shrinknet_forward.15}
  #allocation0 [shape = 'u32[]', space=smem, size = 0x4, offset = 0x4, fixed_abs, tag = 'smem constant byte address 0x4 - core index']
  #allocation1 [shape = 'u32[144,128]{1,0:T(1,128)}', space=vmem, size = 0x12000, scoped, tag = 'internal scratch']
  %s0 = inlined_call_operand.vmem [shape: bf16[128,288], index: 0, kind: input, shape index: {}]
  %s1 = inlined_call_operand.vmem [shape: bf16[288,128], index: 1, kind: input, shape index: {}]
  %s2 = inlined_call_operand.vmem [shape: f32[1,128], index: 2, kind: input, shape index: {}]
  %s3 = inlined_call_operand.vmem [shape: f32[1,128], index: 3, kind: input, shape index: {}]
  %s4 = inlined_call_operand.vmem [shape: bf16[128,128], index: 4, kind: input, shape index: {}]
  %s5 = inlined_call_operand.vmem [shape: bf16[128,128], index: 5, kind: output, shape index: {}]
  %s6 = sld [smem:[#allocation0]]
  $region53: #{shrinknet_forward.15} parent=0
    _
  %s8 = ssub.s32 1, %s6
  %s9 = scalar_select 0, %s8, %s6
  loop: start=0, step=1, limit=4
  $region2: #{shrinknet_forward.15} parent=0 // loop_pre_header
    _
  $region3: #{shrinknet_forward.15} parent=0 // loop_header
    %s11 = sphi 0, %s15
    %p12 = scmp.ge.s32.totalorder %s11, 4
    %s21 = sphi 0, %s23
    %s24 = sphi 0, %s21
    %s25 = sphi 0, %s24
    %s41 = sphi 0, %s25
    %s45 = sphi 0, %s45
    %s47 = sphi 0, %s45
    %s48 = sphi 0, %s47
    %s62 = sphi 0, %s48
    %s66 = sphi 0, %s66
    %s68 = sphi 0, %s66
    %s69 = sphi 0, %s68
    %s83 = sphi 0, %s69
    %s87 = sphi 0, %s87
    %s89 = sphi 0, %s87
    %s90 = sphi 0, %s89
    %s104 = sphi 0, %s90
    %s110 = sphi 0, %s112
    %s113 = sphi 0, %s110
    %s114 = sphi 0, %s113
    %s130 = sphi 0, %s114
    %s136 = sphi 0, %s138
    %s139 = sphi 0, %s136
    %s140 = sphi 0, %s139
    %s156 = sphi 0, %s140
  $region4: #{shrinknet_forward.15} parent=0 // loop_header_branch
    %14 = sbr.rel (%p12) target = $region8
  $region5: #{shrinknet_forward.15} parent=0 // loop_body
    %s16 = ssub.s32 %s11, 1
    %s17 = ssub.s32 %s11, 2
    %s18 = sadd.s32 %s11, 1
    %s19 = ssub.s32 %s11, %s18
    %p20 = scmp.eq.s32.totalorder %s19, 0
    %s22 = sadd.s32 %s21, 1
    %s23 = scalar_select %p20, %s21, %s22
    %p26 = pneg %p20
    %p27 = scmp.eq.s32.totalorder %s11, 1
    %p28 = por %p26, %p27
    %p29 = scmp.ne.s32.totalorder %s21, %s24
    %p30 = scmp.eq.s32.totalorder %s11, 0
    %p31 = por %p29, %p30
    %p32 = scmp.ne.s32.totalorder %s21, %s24
    %p33 = scmp.eq.s32.totalorder %s16, 1
    %p34 = por %p32, %p33
    %p35 = scmp.ne.s32.totalorder %s24, %s25
    %p36 = scmp.eq.s32.totalorder %s16, 0
    %p37 = por %p35, %p36
    %p38 = scmp.ne.s32.totalorder %s24, %s25
    %p39 = scmp.eq.s32.totalorder %s17, 1
    %p40 = por %p38, %p39
    %p42 = scmp.ne.s32.totalorder %s25, %s41
    %p43 = scmp.eq.s32.totalorder %s17, 0
    %p44 = por %p42, %p43
    %s46 = sadd.s32 %s45, 1
    %p49 = scmp.eq.s32.totalorder %s11, 1
    %p50 = scmp.ne.s32.totalorder %s45, %s47
    %p51 = scmp.eq.s32.totalorder %s11, 0
    %p52 = por %p50, %p51
    %p53 = scmp.ne.s32.totalorder %s45, %s47
    %p54 = scmp.eq.s32.totalorder %s16, 1
    %p55 = por %p53, %p54
    %p56 = scmp.ne.s32.totalorder %s47, %s48
    %p57 = scmp.eq.s32.totalorder %s16, 0
    %p58 = por %p56, %p57
    %p59 = scmp.ne.s32.totalorder %s47, %s48
    %p60 = scmp.eq.s32.totalorder %s17, 1
    %p61 = por %p59, %p60
    %p63 = scmp.ne.s32.totalorder %s48, %s62
    %p64 = scmp.eq.s32.totalorder %s17, 0
    %p65 = por %p63, %p64
    %s67 = sadd.s32 %s66, 1
    %p70 = scmp.eq.s32.totalorder %s11, 1
    %p71 = scmp.ne.s32.totalorder %s66, %s68
    %p72 = scmp.eq.s32.totalorder %s11, 0
    %p73 = por %p71, %p72
    %p74 = scmp.ne.s32.totalorder %s66, %s68
    %p75 = scmp.eq.s32.totalorder %s16, 1
    %p76 = por %p74, %p75
    %p77 = scmp.ne.s32.totalorder %s68, %s69
    %p78 = scmp.eq.s32.totalorder %s16, 0
    %p79 = por %p77, %p78
    %p80 = scmp.ne.s32.totalorder %s68, %s69
    %p81 = scmp.eq.s32.totalorder %s17, 1
    %p82 = por %p80, %p81
    %p84 = scmp.ne.s32.totalorder %s69, %s83
    %p85 = scmp.eq.s32.totalorder %s17, 0
    %p86 = por %p84, %p85
    %s88 = sadd.s32 %s87, 1
    %p91 = scmp.eq.s32.totalorder %s11, 1
    %p92 = scmp.ne.s32.totalorder %s87, %s89
    %p93 = scmp.eq.s32.totalorder %s11, 0
    %p94 = por %p92, %p93
    %p95 = scmp.ne.s32.totalorder %s87, %s89
    %p96 = scmp.eq.s32.totalorder %s16, 1
    %p97 = por %p95, %p96
    %p98 = scmp.ne.s32.totalorder %s89, %s90
    %p99 = scmp.eq.s32.totalorder %s16, 0
    %p100 = por %p98, %p99
    %p101 = scmp.ne.s32.totalorder %s89, %s90
    %p102 = scmp.eq.s32.totalorder %s17, 1
    %p103 = por %p101, %p102
    %p105 = scmp.ne.s32.totalorder %s90, %s104
    %p106 = scmp.eq.s32.totalorder %s17, 0
    %p107 = por %p105, %p106
    %s108 = ssub.s32 %s11, %s18
    %p109 = scmp.eq.s32.totalorder %s108, 0
    %s111 = sadd.s32 %s110, 1
    %s112 = scalar_select %p109, %s110, %s111
    %p115 = pneg %p109
    %p116 = scmp.eq.s32.totalorder %s11, 1
    %p117 = por %p115, %p116
    %p118 = scmp.ne.s32.totalorder %s110, %s113
    %p119 = scmp.eq.s32.totalorder %s11, 0
    %p120 = por %p118, %p119
    %p121 = scmp.ne.s32.totalorder %s110, %s113
    %p122 = scmp.eq.s32.totalorder %s16, 1
    %p123 = por %p121, %p122
    %p124 = scmp.ne.s32.totalorder %s113, %s114
    %p125 = scmp.eq.s32.totalorder %s16, 0
    %p126 = por %p124, %p125
    %p127 = scmp.ne.s32.totalorder %s113, %s114
    %p128 = scmp.eq.s32.totalorder %s17, 1
    %p129 = por %p127, %p128
    %p131 = scmp.ne.s32.totalorder %s114, %s130
    %p132 = scmp.eq.s32.totalorder %s17, 0
    %p133 = por %p131, %p132
    %s134 = ssub.s32 %s11, %s18
    %p135 = scmp.eq.s32.totalorder %s134, 0
    %s137 = sadd.s32 %s136, 1
    %s138 = scalar_select %p135, %s136, %s137
    %p141 = pneg %p135
    %p142 = scmp.eq.s32.totalorder %s11, 1
    %p143 = por %p141, %p142
    %p144 = scmp.ne.s32.totalorder %s136, %s139
    %p145 = scmp.eq.s32.totalorder %s11, 0
    %p146 = por %p144, %p145
    %p147 = scmp.ne.s32.totalorder %s136, %s139
    %p148 = scmp.eq.s32.totalorder %s16, 1
    %p149 = por %p147, %p148
    %p150 = scmp.ne.s32.totalorder %s139, %s140
    %p151 = scmp.eq.s32.totalorder %s16, 0
    %p152 = por %p150, %p151
    %p153 = scmp.ne.s32.totalorder %s139, %s140
    %p154 = scmp.eq.s32.totalorder %s17, 1
    %p155 = por %p153, %p154
    %p157 = scmp.ne.s32.totalorder %s140, %s156
    %p158 = scmp.eq.s32.totalorder %s17, 0
    %p159 = por %p157, %p158
    %p160 = scmp.le.s32.totalorder 1, %s11
    %p161 = scmp.lt.s32.totalorder %s11, 3
    %p162 = pnand %p160, %p161
    %p163 = pneg %p162
    // Predicated region
    $region9: #{shrinknet_forward.15} parent=5 // pred_check
      _
    $region10: #{shrinknet_forward.15} parent=5 // pred_check_branch
      %165 = sbr.rel (%p162) target = $region12
    $region11: #{shrinknet_forward.15} parent=5 // pred_region
      %s166 = ssub.s32 %s11, 1
      // Predicated region
      $region13: #{shrinknet_forward.15} parent=11 // pred_check
        %p167 = pneg %p58
      $region14: #{shrinknet_forward.15} parent=11 // pred_check_branch
        %169 = sbr.rel (%p167) target = $region16
      $region15: #{shrinknet_forward.15} parent=11 // pred_region
        _
      $region16: #{shrinknet_forward.15} parent=11 // pred_fallthru
        _
      // Predicated region
      $region17: #{shrinknet_forward.15} parent=11 // pred_check
        %p170 = pneg %p79
      $region18: #{shrinknet_forward.15} parent=11 // pred_check_branch
        %172 = sbr.rel (%p170) target = $region20
      $region19: #{shrinknet_forward.15} parent=11 // pred_region
        _
      $region20: #{shrinknet_forward.15} parent=11 // pred_fallthru
        _
      // Predicated region
      $region21: #{shrinknet_forward.15} parent=11 // pred_check
        %p173 = pneg %p100
      $region22: #{shrinknet_forward.15} parent=11 // pred_check_branch
        %175 = sbr.rel (%p173) target = $region24
      $region23: #{shrinknet_forward.15} parent=11 // pred_region
        _
      $region24: #{shrinknet_forward.15} parent=11 // pred_fallthru
        _
    $region12: #{shrinknet_forward.15} parent=5 // pred_fallthru
      _
    %p176 = scmp.lt.s32.totalorder %s11, 2
    // Predicated region
    $region25: #{shrinknet_forward.15} parent=5 // pred_check
      %p177 = pneg %p176
    $region26: #{shrinknet_forward.15} parent=5 // pred_check_branch
      %179 = sbr.rel (%p177) target = $region28
    $region27: #{shrinknet_forward.15} parent=5 // pred_region
      // Predicated region
      $region29: #{shrinknet_forward.15} parent=27 // pred_check
        %p180 = pneg %p31
      $region30: #{shrinknet_forward.15} parent=27 // pred_check_branch
        %182 = sbr.rel (%p180) target = $region32
      $region31: #{shrinknet_forward.15} parent=27 // pred_region
        %s183 = smul.u32 8, %s11
        %p184 = scmp.lt.s32.totalorder %s183, 15
        %s185 = scalar_select %p184, %s183, 15
        %s186 = smul.addr %s185, 3
        %s187 = smul.addr %s186, 4
        %s188 = scalar_lea.vmem %s0, %s187
        %s189 = smul.u32 8, %s11
      $region32: #{shrinknet_forward.15} parent=27 // pred_fallthru
        _
      // Predicated region
      $region33: #{shrinknet_forward.15} parent=27 // pred_check
        %p190 = pneg %p120
      $region34: #{shrinknet_forward.15} parent=27 // pred_check_branch
        %192 = sbr.rel (%p190) target = $region36
      $region35: #{shrinknet_forward.15} parent=27 // pred_region
        %s193 = smul.u32 8, %s11
        %p194 = scmp.lt.s32.totalorder %s193, 15
        %s195 = scalar_select %p194, %s193, 15
        %s196 = smul.addr %s195, 4
        %s197 = scalar_lea.vmem %s4, %s196
        %s198 = smul.u32 8, %s11
      $region36: #{shrinknet_forward.15} parent=27 // pred_fallthru
        _
    $region28: #{shrinknet_forward.15} parent=5 // pred_fallthru
      _
    %p199 = scmp.le.s32.totalorder 1, %s11
    %p200 = scmp.lt.s32.totalorder %s11, 3
    %p201 = pnand %p199, %p200
    %p202 = pneg %p201
    // Predicated region
    $region37: #{shrinknet_forward.15} parent=5 // pred_check
      _
    $region38: #{shrinknet_forward.15} parent=5 // pred_check_branch
      %204 = sbr.rel (%p201) target = $region40
    $region39: #{shrinknet_forward.15} parent=5 // pred_region
      %s205 = ssub.s32 %s11, 1
      %s206 = smul.u32 8, %s16
      %p207 = scmp.lt.s32.totalorder %s206, 15
      %s208 = scalar_select %p207, %s206, 15
      %s209 = smul.addr %s208, 3
      %s210 = smul.addr %s209, 4
      %s211 = scalar_lea.vmem %s0, %s210
      %p212 = pneg %p37
      %p213 = pneg %p34
      %p214 = pneg %p58
      %p215 = pneg %p55
      %p216 = pneg %p79
      %p217 = pneg %p76
      %p218 = pneg %p100
      %p219 = pneg %p97
      %s220 = smul.u32 8, %s16
      %p221 = scmp.lt.s32.totalorder %s220, 15
      %s222 = scalar_select %p221, %s220, 15
      %s223 = smul.addr %s222, 4
      %s224 = scalar_lea.vmem %s4, %s223
      %p225 = pneg %p126
      %p226 = pneg %p123
      %p227 = pneg %p152
      %p228 = pneg %p149
      %s229 = smul.u32 8, %s16
      %p230 = scmp.lt.s32.totalorder %s229, 15
      %s231 = scalar_select %p230, %s229, 15
      %s232 = smul.addr %s231, 4
      %s233 = scalar_lea.vmem %s5, %s232
      %s234 = smul.u32 8, %s16
      %p235 = scmp.lt.s32.totalorder %s234, 15
      %s236 = scalar_select %p235, %s234, 15
      %s237 = smul.addr %s236, 3
      %s238 = smul.addr %s237, 4
      %s239 = scalar_lea.vmem %s0, %s238
      %s240 = smul.u32 8, %s16
      %s241 = smul.u32 8, %s16
      %p242 = scmp.lt.s32.totalorder %s241, 15
      %s243 = scalar_select %p242, %s241, 15
      %s244 = smul.addr %s243, 4
      %s245 = scalar_lea.vmem %s4, %s244
      %s246 = smul.u32 8, %s16
      %s247 = smul.u32 8, %s16
      %p248 = scmp.lt.s32.totalorder %s247, 15
      %s249 = scalar_select %p248, %s247, 15
      %s250 = smul.addr %s249, 4
      %s251 = scalar_lea.vmem %s5, %s250
      %s252 = smul.u32 8, %s16
      %v254 = vld [vmem:[%s239] sm:$0xff]
      %v255 = vld [vmem:[%s239 + $0x8] sm:$0xf]
      %v256 = vld [vmem:[%s239 + $0xc] sm:$0xff]
      %v257 = vld [vmem:[%s239 + $0x14] sm:$0xf]
      %v258 = vld [vmem:[%s239 + $0x18] sm:$0xff]
      %v259 = vld [vmem:[%s239 + $0x20] sm:$0xf]
      %v260 = vld [vmem:[%s239 + $0x24] sm:$0xff]
      %v261 = vld [vmem:[%s239 + $0x2c] sm:$0xf]
      %v262 = vld [vmem:[%s239 + $0x30] sm:$0xff]
      %v263 = vld [vmem:[%s239 + $0x38] sm:$0xf]
      %v264 = vld [vmem:[%s239 + $0x3c] sm:$0xff]
      %v265 = vld [vmem:[%s239 + $0x44] sm:$0xf]
      %v266 = vld [vmem:[%s239 + $0x48] sm:$0xff]
      %v267 = vld [vmem:[%s239 + $0x50] sm:$0xf]
      %v268 = vld [vmem:[%s239 + $0x54] sm:$0xff]
      %v269 = vld [vmem:[%s239 + $0x5c] sm:$0xf]
      %v270 = vld [vmem:[%s1] sm:$0xf]
      %v271 = vld [vmem:[%s1 + $0x4] sm:$0xf]
      %v272 = vld [vmem:[%s1 + $0x8] sm:$0xf]
      %v273 = vld [vmem:[%s1 + $0xc] sm:$0xf]
      %v274 = vld [vmem:[%s1 + $0x10] sm:$0xf]
      %v275 = vld [vmem:[%s1 + $0x14] sm:$0xf]
      %v276 = vld [vmem:[%s1 + $0x18] sm:$0xf]
      %v277 = vld [vmem:[%s1 + $0x1c] sm:$0xf]
      %v278 = vld [vmem:[%s1 + $0x20] sm:$0xf]
      %v279 = vld [vmem:[%s1 + $0x24] sm:$0xf]
      %v280 = vld [vmem:[%s1 + $0x28] sm:$0xf]
      %v281 = vld [vmem:[%s1 + $0x2c] sm:$0xf]
      %v282 = vld [vmem:[%s1 + $0x30] sm:$0xf]
      %v283 = vld [vmem:[%s1 + $0x34] sm:$0xf]
      %v284 = vld [vmem:[%s1 + $0x38] sm:$0xf]
      %v285 = vld [vmem:[%s1 + $0x3c] sm:$0xf]
      %v286 = vld [vmem:[%s1 + $0x40] sm:$0xf]
      %v287 = vld [vmem:[%s1 + $0x44] sm:$0xf]
      %v288 = vld [vmem:[%s1 + $0x48] sm:$0xf]
      %v289 = vld [vmem:[%s1 + $0x4c] sm:$0xf]
      %v290 = vld [vmem:[%s1 + $0x50] sm:$0xf]
      %v291 = vld [vmem:[%s1 + $0x54] sm:$0xf]
      %v292 = vld [vmem:[%s1 + $0x58] sm:$0xf]
      %v293 = vld [vmem:[%s1 + $0x5c] sm:$0xf]
      %v294 = vld [vmem:[%s1 + $0x60] sm:$0xf]
      %v295 = vld [vmem:[%s1 + $0x64] sm:$0xf]
      %v296 = vld [vmem:[%s1 + $0x68] sm:$0xf]
      %v297 = vld [vmem:[%s1 + $0x6c] sm:$0xf]
      %v298 = vld [vmem:[%s1 + $0x70] sm:$0xf]
      %v299 = vld [vmem:[%s1 + $0x74] sm:$0xf]
      %v300 = vld [vmem:[%s1 + $0x78] sm:$0xf]
      %v301 = vld [vmem:[%s1 + $0x7c] sm:$0xf]
      %v302 = vld [vmem:[%s1 + $0x80] sm:$0xf]
      %v303 = vld [vmem:[%s1 + $0x84] sm:$0xf]
      %v304 = vld [vmem:[%s1 + $0x88] sm:$0xf]
      %v305 = vld [vmem:[%s1 + $0x8c] sm:$0xf]
      %v322 = vunpack.c.l.b16 %v254
      %v323 = vunpack.c.h.b16 %v254
      %v324 = vunpack.c.l.b16 %v255
      %v325 = vunpack.c.l.b16 %v256
      %v326 = vunpack.c.h.b16 %v256
      %v327 = vunpack.c.l.b16 %v257
      %v328 = vunpack.c.l.b16 %v258
      %v329 = vunpack.c.h.b16 %v258
      %v330 = vunpack.c.l.b16 %v259
      %v331 = vunpack.c.l.b16 %v260
      %v332 = vunpack.c.h.b16 %v260
      %v333 = vunpack.c.l.b16 %v261
      %v334 = vunpack.c.l.b16 %v262
      %v335 = vunpack.c.h.b16 %v262
      %v336 = vunpack.c.l.b16 %v263
      %v337 = vunpack.c.l.b16 %v264
      %v338 = vunpack.c.h.b16 %v264
      %v339 = vunpack.c.l.b16 %v265
      %v340 = vunpack.c.l.b16 %v266
      %v341 = vunpack.c.h.b16 %v266
      %v342 = vunpack.c.l.b16 %v267
      %v343 = vunpack.c.l.b16 %v268
      %v344 = vunpack.c.h.b16 %v268
      %v345 = vunpack.c.l.b16 %v269
      %v346 = vpack.c.b16 %v325, %v322
      %v347 = vpack.c.b16 %v326, %v323
      %v348 = vpack.c.b16 %v327, %v324
      %v349 = vpack.c.b16 %v331, %v328
      %v350 = vpack.c.b16 %v332, %v329
      %v351 = vpack.c.b16 %v333, %v330
      %v352 = vpack.c.b16 %v337, %v334
      %v353 = vpack.c.b16 %v338, %v335
      %v354 = vpack.c.b16 %v339, %v336
      %v355 = vpack.c.b16 %v343, %v340
      %v356 = vpack.c.b16 %v344, %v341
      %v357 = vpack.c.b16 %v345, %v342
      %v402 = vunpack.c.l.b16 %v270
      %v403 = vunpack.c.l.b16 %v271
      %v404 = vunpack.c.l.b16 %v272
      %v405 = vunpack.c.l.b16 %v273
      %v406 = vunpack.c.l.b16 %v274
      %v407 = vunpack.c.l.b16 %v275
      %v408 = vunpack.c.l.b16 %v276
      %v409 = vunpack.c.l.b16 %v277
      %v410 = vunpack.c.l.b16 %v278
      %v411 = vunpack.c.l.b16 %v279
      %v412 = vunpack.c.l.b16 %v280
      %v413 = vunpack.c.l.b16 %v281
      %v414 = vunpack.c.l.b16 %v282
      %v415 = vunpack.c.l.b16 %v283
      %v416 = vunpack.c.l.b16 %v284
      %v417 = vunpack.c.l.b16 %v285
      %v418 = vunpack.c.l.b16 %v286
      %v419 = vunpack.c.l.b16 %v287
      %v420 = vunpack.c.l.b16 %v288
      %v421 = vunpack.c.l.b16 %v289
      %v422 = vunpack.c.l.b16 %v290
      %v423 = vunpack.c.l.b16 %v291
      %v424 = vunpack.c.l.b16 %v292
      %v425 = vunpack.c.l.b16 %v293
      %v426 = vunpack.c.l.b16 %v294
      %v427 = vunpack.c.l.b16 %v295
      %v428 = vunpack.c.l.b16 %v296
      %v429 = vunpack.c.l.b16 %v297
      %v430 = vunpack.c.l.b16 %v298
      %v431 = vunpack.c.l.b16 %v299
      %v432 = vunpack.c.l.b16 %v300
      %v433 = vunpack.c.l.b16 %v301
      %v434 = vunpack.c.l.b16 %v302
      %v435 = vunpack.c.l.b16 %v303
      %v436 = vunpack.c.l.b16 %v304
      %v437 = vunpack.c.l.b16 %v305
      %v438 = vpack.c.b16 %v403, %v402
      %v439 = vpack.c.b16 %v405, %v404
      %v440 = vpack.c.b16 %v407, %v406
      %v441 = vpack.c.b16 %v409, %v408
      %v442 = vpack.c.b16 %v411, %v410
      %v443 = vpack.c.b16 %v413, %v412
      %v444 = vpack.c.b16 %v415, %v414
      %v445 = vpack.c.b16 %v417, %v416
      %v446 = vpack.c.b16 %v419, %v418
      %v447 = vpack.c.b16 %v421, %v420
      %v448 = vpack.c.b16 %v423, %v422
      %v449 = vpack.c.b16 %v425, %v424
      %v450 = vpack.c.b16 %v427, %v426
      %v451 = vpack.c.b16 %v429, %v428
      %v452 = vpack.c.b16 %v431, %v430
      %v453 = vpack.c.b16 %v433, %v432
      %v454 = vpack.c.b16 %v435, %v434
      %v455 = vpack.c.b16 %v437, %v436
      %vm474 = vcmask 261120
      %v476 = vsel %vm474, %v348, 0
      %v479 = vsel %vm474, %v351, 0
      %v482 = vsel %vm474, %v354, 0
      %v485 = vsel %vm474, %v357, 0
      %487 = vmatprep.subr.bf16.mxu0 0
      %488 = vmatpush1.bf16.msra.mxu0 %v438
      %489 = vmatprep.subr.bf16.mxu0 0
      %490 = vmatpush1.bf16.msra.mxu0 %v439
      %491 = vmatprep.subr.bf16.mxu0 0
      %492 = vmatpush1.bf16.msra.mxu0 %v440
      %493 = vmatprep.subr.bf16.mxu0 0
      %494 = vmatpush1.bf16.msra.mxu0 %v441
      %495 = vmatprep.subr.bf16.mxu0 0
      %496 = vmatpush1.bf16.msra.mxu0 %v442
      %497 = vmatprep.subr.bf16.mxu0 0
      %498 = vmatpush1.bf16.msra.mxu0 %v443
      %499 = vmatprep.subr.bf16.mxu0 0
      %500 = vmatpush1.bf16.msra.mxu0 %v444
      %501 = vmatprep.subr.bf16.mxu0 0
      %502 = vmatpush1.bf16.msra.mxu0 %v445
      %503 = vmatprep.subr.bf16.mxu0 0
      %504 = vmatpush1.bf16.msra.mxu0 %v446
      %505 = vmatprep.subr.bf16.mxu0 0
      %506 = vmatpush1.bf16.msra.mxu0 %v447
      %507 = vmatprep.subr.bf16.mxu0 0
      %508 = vmatpush1.bf16.msra.mxu0 %v448
      %509 = vmatprep.subr.bf16.mxu0 0
      %510 = vmatpush1.bf16.msra.mxu0 %v449
      %511 = vmatprep.subr.bf16.mxu0 0
      %512 = vmatpush1.bf16.msra.mxu0 %v450
      %513 = vmatprep.subr.bf16.mxu0 0
      %514 = vmatpush1.bf16.msra.mxu0 %v451
      %515 = vmatprep.subr.bf16.mxu0 0
      %516 = vmatpush1.bf16.msra.mxu0 %v452
      %517 = vmatprep.subr.bf16.mxu0 0
      %518 = vmatpush1.bf16.msra.mxu0 %v453
      %519 = vmatprep.mubr.bf16.mxu0 %v347
      %520 = vmatmul.mubr.bf16.gmra.mrb[0].mxu0 %v346
      %v521 = vpop.f32.mrb[0].mxu0
      %v522 = vadd.f32 0.0, %v521
      %v523 = vpop.f32.mrb[0].mxu0
      %v524 = vpop.f32.mrb[0].mxu0
      %v525 = vadd.f32 0.0, %v524
      %v526 = vpop.f32.mrb[0].mxu0
      %527 = vmatprep.mubr.bf16.mxu0 %v350
      %528 = vmatmul.mubr.bf16.gmra.mrb[0].mxu0 %v349
      %v529 = vpop.f32.mrb[0].mxu0
      %v530 = vadd.f32 0.0, %v529
      %v531 = vpop.f32.mrb[0].mxu0
      %v532 = vpop.f32.mrb[0].mxu0
      %v533 = vadd.f32 0.0, %v532
      %v534 = vpop.f32.mrb[0].mxu0
      %535 = vmatprep.mubr.bf16.mxu0 %v353
      %536 = vmatmul.mubr.bf16.gmra.mrb[0].mxu0 %v352
      %v537 = vpop.f32.mrb[0].mxu0
      %v538 = vadd.f32 0.0, %v537
      %v539 = vpop.f32.mrb[0].mxu0
      %v540 = vpop.f32.mrb[0].mxu0
      %v541 = vadd.f32 0.0, %v540
      %v542 = vpop.f32.mrb[0].mxu0
      %543 = vmatprep.mubr.bf16.mxu0 %v356
      %544 = vmatmul.mubr.bf16.gmra.mrb[0].mxu0 %v355
      %v545 = vpop.f32.mrb[0].mxu0
      %v546 = vadd.f32 0.0, %v545
      %v547 = vpop.f32.mrb[0].mxu0
      %v548 = vpop.f32.mrb[0].mxu0
      %v549 = vadd.f32 0.0, %v548
      %v550 = vpop.f32.mrb[0].mxu0
      %551 = vdwg.mxu0
      %552 = vmatprep.subr.bf16.mxu0 0
      %553 = vmatpush1.bf16.msra.mxu0 %v454
      %554 = vmatprep.subr.bf16.mxu0 0
      %555 = vmatpush1.bf16.msra.mxu0 %v455
      %556 = vmatprep.subr.bf16.mxu0 0
      %557 = vmatpush1.bf16.msra.mxu0 0
      %558 = vmatprep.subr.bf16.mxu0 0
      %559 = vmatpush1.bf16.msra.mxu0 0
      %560 = vmatprep.subr.bf16.mxu0 0
      %561 = vmatpush1.bf16.msra.mxu0 0
      %562 = vmatprep.subr.bf16.mxu0 0
      %563 = vmatpush1.bf16.msra.mxu0 0
      %564 = vmatprep.subr.bf16.mxu0 0
      %565 = vmatpush1.bf16.msra.mxu0 0
      %566 = vmatprep.subr.bf16.mxu0 0
      %567 = vmatpush1.bf16.msra.mxu0 0
      %568 = vmatprep.subr.bf16.mxu0 0
      %569 = vmatpush1.bf16.msra.mxu0 0
      %570 = vmatprep.subr.bf16.mxu0 0
      %571 = vmatpush1.bf16.msra.mxu0 0
      %572 = vmatprep.subr.bf16.mxu0 0
      %573 = vmatpush1.bf16.msra.mxu0 0
      %574 = vmatprep.subr.bf16.mxu0 0
      %575 = vmatpush1.bf16.msra.mxu0 0
      %576 = vmatprep.subr.bf16.mxu0 0
      %577 = vmatpush1.bf16.msra.mxu0 0
      %578 = vmatprep.subr.bf16.mxu0 0
      %579 = vmatpush1.bf16.msra.mxu0 0
      %580 = vmatprep.subr.bf16.mxu0 0
      %581 = vmatpush1.bf16.msra.mxu0 0
      %582 = vmatprep.subr.bf16.mxu0 0
      %583 = vmatpush1.bf16.msra.mxu0 0
      %584 = vmatprep.mubr.bf16.mxu0 0
      %585 = vmatmul.mubr.bf16.gmra.mrb[0].mxu0 %v476
      %v586 = vpop.f32.mrb[0].mxu0
      %v587 = vadd.f32 %v522, %v586
      %v588 = vpop.f32.mrb[0].mxu0
      %v589 = vpop.f32.mrb[0].mxu0
      %v590 = vadd.f32 %v525, %v589
      %v591 = vpop.f32.mrb[0].mxu0
      %592 = vmatprep.mubr.bf16.mxu0 0
      %593 = vmatmul.mubr.bf16.gmra.mrb[0].mxu0 %v479
      %v594 = vpop.f32.mrb[0].mxu0
      %v595 = vadd.f32 %v530, %v594
      %v596 = vpop.f32.mrb[0].mxu0
      %v597 = vpop.f32.mrb[0].mxu0
      %v598 = vadd.f32 %v533, %v597
      %v599 = vpop.f32.mrb[0].mxu0
      %600 = vmatprep.mubr.bf16.mxu0 0
      %601 = vmatmul.mubr.bf16.gmra.mrb[0].mxu0 %v482
      %v602 = vpop.f32.mrb[0].mxu0
      %v603 = vadd.f32 %v538, %v602
      %v604 = vpop.f32.mrb[0].mxu0
      %v605 = vpop.f32.mrb[0].mxu0
      %v606 = vadd.f32 %v541, %v605
      %v607 = vpop.f32.mrb[0].mxu0
      %608 = vmatprep.mubr.bf16.mxu0 0
      %609 = vmatmul.mubr.bf16.gmra.mrb[0].mxu0 %v485
      %v610 = vpop.f32.mrb[0].mxu0
      %v611 = vadd.f32 %v546, %v610
      %v612 = vpop.f32.mrb[0].mxu0
      %v613 = vpop.f32.mrb[0].mxu0
      %v614 = vadd.f32 %v549, %v613
      %v615 = vpop.f32.mrb[0].mxu0
      %616 = vdwg.mxu0
      %v617 = vld [vmem:[%s2] sm:$0x1]
      %v619 = vlaneseq
      %v620 = vshrl.u32 %v619, 7
      %v621 = vsub.s32 0, %v620
      %v622 = vrot.slane %v617, %v621
      %v624 = vmul.f32 %v587, %v622
      %v625 = vmul.f32 %v590, %v622
      %v626 = vmul.f32 %v595, %v622
      %v627 = vmul.f32 %v598, %v622
      %v628 = vmul.f32 %v603, %v622
      %v629 = vmul.f32 %v606, %v622
      %v630 = vmul.f32 %v611, %v622
      %v631 = vmul.f32 %v614, %v622
      %v632 = vld [vmem:[%s3] sm:$0x1]
      %v634 = vlaneseq
      %v635 = vshrl.u32 %v634, 7
      %v636 = vsub.s32 0, %v635
      %v637 = vrot.slane %v632, %v636
      %v639 = vadd.f32 %v624, %v637
      %v640 = vadd.f32 %v625, %v637
      %v641 = vadd.f32 %v626, %v637
      %v642 = vadd.f32 %v627, %v637
      %v643 = vadd.f32 %v628, %v637
      %v644 = vadd.f32 %v629, %v637
      %v645 = vadd.f32 %v630, %v637
      %v646 = vadd.f32 %v631, %v637
      %v647 = vld [vmem:[%s245] sm:$0xf]
      %v648 = vld [vmem:[%s245 + $0x4] sm:$0xf]
      %v649 = vld [vmem:[%s245 + $0x8] sm:$0xf]
      %v650 = vld [vmem:[%s245 + $0xc] sm:$0xf]
      %v651 = vld [vmem:[%s245 + $0x10] sm:$0xf]
      %v652 = vld [vmem:[%s245 + $0x14] sm:$0xf]
      %v653 = vld [vmem:[%s245 + $0x18] sm:$0xf]
      %v654 = vld [vmem:[%s245 + $0x1c] sm:$0xf]
      %v655 = vunpack.c.l.bf16 %v647
      %v656 = vunpack.c.l.bf16 %v648
      %v657 = vunpack.c.l.bf16 %v649
      %v658 = vunpack.c.l.bf16 %v650
      %v659 = vunpack.c.l.bf16 %v651
      %v660 = vunpack.c.l.bf16 %v652
      %v661 = vunpack.c.l.bf16 %v653
      %v662 = vunpack.c.l.bf16 %v654
      %v663 = vadd.f32 %v639, %v655
      %v664 = vadd.f32 %v640, %v656
      %v665 = vadd.f32 %v641, %v657
      %v666 = vadd.f32 %v642, %v658
      %v667 = vadd.f32 %v643, %v659
      %v668 = vadd.f32 %v644, %v660
      %v669 = vadd.f32 %v645, %v661
      %v670 = vadd.f32 %v646, %v662
      %v671 = vmax.f32 %v663, 0.0
      %v672 = vmax.f32 %v664, 0.0
      %v673 = vmax.f32 %v665, 0.0
      %v674 = vmax.f32 %v666, 0.0
      %v675 = vmax.f32 %v667, 0.0
      %v676 = vmax.f32 %v668, 0.0
      %v677 = vmax.f32 %v669, 0.0
      %v678 = vmax.f32 %v670, 0.0
      %v679 = vpack.c.bf16 %v672, %v671
      %v680 = vpack.c.bf16 %v674, %v673
      %v681 = vpack.c.bf16 %v676, %v675
      %v682 = vpack.c.bf16 %v678, %v677
      %v687 = vunpack.c.l.b16 %v679
      %v688 = vunpack.c.h.b16 %v679
      %v689 = vunpack.c.l.b16 %v680
      %v690 = vunpack.c.h.b16 %v680
      %v691 = vunpack.c.l.b16 %v681
      %v692 = vunpack.c.h.b16 %v681
      %v693 = vunpack.c.l.b16 %v682
      %v694 = vunpack.c.h.b16 %v682
      %v695 = vpack.c.b16 %v687, %v687
      %v696 = vpack.c.b16 %v688, %v688
      %v697 = vpack.c.b16 %v689, %v689
      %v698 = vpack.c.b16 %v690, %v690
      %v699 = vpack.c.b16 %v691, %v691
      %v700 = vpack.c.b16 %v692, %v692
      %v701 = vpack.c.b16 %v693, %v693
      %v702 = vpack.c.b16 %v694, %v694
      %711 = vst [vmem:[%s251] sm:$0xf] %v695
      %712 = vst [vmem:[%s251 + $0x4] sm:$0xf] %v696
      %713 = vst [vmem:[%s251 + $0x8] sm:$0xf] %v697
      %714 = vst [vmem:[%s251 + $0xc] sm:$0xf] %v698
      %715 = vst [vmem:[%s251 + $0x10] sm:$0xf] %v699
      %716 = vst [vmem:[%s251 + $0x14] sm:$0xf] %v700
      %717 = vst [vmem:[%s251 + $0x18] sm:$0xf] %v701
      %718 = vst [vmem:[%s251 + $0x1c] sm:$0xf] %v702
      %s719 = smul.u32 8, %s16
      %p720 = scmp.lt.s32.totalorder %s719, 15
      %s721 = scalar_select %p720, %s719, 15
      %s722 = smul.addr %s721, 4
      %s723 = scalar_lea.vmem %s5, %s722
      // Predicated region
      $region41: #{shrinknet_forward.15} parent=39 // pred_check
        %p724 = pneg %p149
      $region42: #{shrinknet_forward.15} parent=39 // pred_check_branch
        %726 = sbr.rel (%p724) target = $region44
      $region43: #{shrinknet_forward.15} parent=39 // pred_region
        %s727 = smul.u32 8, %s16
      $region44: #{shrinknet_forward.15} parent=39 // pred_fallthru
        _
    $region40: #{shrinknet_forward.15} parent=5 // pred_fallthru
      _
    %p728 = scmp.le.s32.totalorder 2, %s11
    // Predicated region
    $region45: #{shrinknet_forward.15} parent=5 // pred_check
      %p729 = pneg %p728
    $region46: #{shrinknet_forward.15} parent=5 // pred_check_branch
      %731 = sbr.rel (%p729) target = $region48
    $region47: #{shrinknet_forward.15} parent=5 // pred_region
      %s732 = ssub.s32 %s11, 2
      // Predicated region
      $region49: #{shrinknet_forward.15} parent=47 // pred_check
        %p733 = pneg %p155
      $region50: #{shrinknet_forward.15} parent=47 // pred_check_branch
        %735 = sbr.rel (%p733) target = $region52
      $region51: #{shrinknet_forward.15} parent=47 // pred_region
        %s736 = smul.u32 8, %s17
        %p737 = scmp.lt.s32.totalorder %s736, 15
        %s738 = scalar_select %p737, %s736, 15
        %s739 = smul.addr %s738, 4
        %s740 = scalar_lea.vmem %s5, %s739
      $region52: #{shrinknet_forward.15} parent=47 // pred_fallthru
        _
    $region48: #{shrinknet_forward.15} parent=5 // pred_fallthru
      _
  $region6: #{shrinknet_forward.15} parent=0 // loop_footer
    %s15 = sadd.s32 1, %s11
  $region7: #{shrinknet_forward.15} parent=0 // loop_footer_branch
    %10 = sbr.rel target = $region3
  $region8: #{shrinknet_forward.15} parent=0 // loop_exit
    _

// kernel: shrinknet_forward.17
$region0: #{shrinknet_forward.17}
  #allocation0 [shape = 'u32[]', space=smem, size = 0x4, offset = 0x4, fixed_abs, tag = 'smem constant byte address 0x4 - core index']
  #allocation1 [shape = 'u32[144,128]{1,0:T(1,128)}', space=vmem, size = 0x12000, scoped, tag = 'internal scratch']
  %s0 = inlined_call_operand.vmem [shape: bf16[32,32], index: 0, kind: input, shape index: {}]
  %s1 = inlined_call_operand.vmem [shape: bf16[32,128], index: 1, kind: input, shape index: {}]
  %s2 = inlined_call_operand.vmem [shape: f32[1,128], index: 2, kind: input, shape index: {}]
  %s3 = inlined_call_operand.vmem [shape: f32[1,128], index: 3, kind: input, shape index: {}]
  %s4 = inlined_call_operand.vmem [shape: bf16[32,128], index: 4, kind: output, shape index: {}]
  %s5 = sld [smem:[#allocation0]]
  $region49: #{shrinknet_forward.17} parent=0
    _
  %s7 = ssub.s32 1, %s5
  %s8 = scalar_select 0, %s7, %s5
  loop: start=0, step=1, limit=4
  $region2: #{shrinknet_forward.17} parent=0 // loop_pre_header
    _
  $region3: #{shrinknet_forward.17} parent=0 // loop_header
    %s10 = sphi 0, %s14
    %p11 = scmp.ge.s32.totalorder %s10, 4
    %s20 = sphi 0, %s22
    %s23 = sphi 0, %s20
    %s24 = sphi 0, %s23
    %s40 = sphi 0, %s24
    %s44 = sphi 0, %s44
    %s46 = sphi 0, %s44
    %s47 = sphi 0, %s46
    %s61 = sphi 0, %s47
    %s65 = sphi 0, %s65
    %s67 = sphi 0, %s65
    %s68 = sphi 0, %s67
    %s82 = sphi 0, %s68
    %s86 = sphi 0, %s86
    %s88 = sphi 0, %s86
    %s89 = sphi 0, %s88
    %s103 = sphi 0, %s89
    %s109 = sphi 0, %s111
    %s112 = sphi 0, %s109
    %s113 = sphi 0, %s112
    %s129 = sphi 0, %s113
  $region4: #{shrinknet_forward.17} parent=0 // loop_header_branch
    %13 = sbr.rel (%p11) target = $region8
  $region5: #{shrinknet_forward.17} parent=0 // loop_body
    %s15 = ssub.s32 %s10, 1
    %s16 = ssub.s32 %s10, 2
    %s17 = sadd.s32 %s10, 1
    %s18 = ssub.s32 %s10, %s17
    %p19 = scmp.eq.s32.totalorder %s18, 0
    %s21 = sadd.s32 %s20, 1
    %s22 = scalar_select %p19, %s20, %s21
    %p25 = pneg %p19
    %p26 = scmp.eq.s32.totalorder %s10, 1
    %p27 = por %p25, %p26
    %p28 = scmp.ne.s32.totalorder %s20, %s23
    %p29 = scmp.eq.s32.totalorder %s10, 0
    %p30 = por %p28, %p29
    %p31 = scmp.ne.s32.totalorder %s20, %s23
    %p32 = scmp.eq.s32.totalorder %s15, 1
    %p33 = por %p31, %p32
    %p34 = scmp.ne.s32.totalorder %s23, %s24
    %p35 = scmp.eq.s32.totalorder %s15, 0
    %p36 = por %p34, %p35
    %p37 = scmp.ne.s32.totalorder %s23, %s24
    %p38 = scmp.eq.s32.totalorder %s16, 1
    %p39 = por %p37, %p38
    %p41 = scmp.ne.s32.totalorder %s24, %s40
    %p42 = scmp.eq.s32.totalorder %s16, 0
    %p43 = por %p41, %p42
    %s45 = sadd.s32 %s44, 1
    %p48 = scmp.eq.s32.totalorder %s10, 1
    %p49 = scmp.ne.s32.totalorder %s44, %s46
    %p50 = scmp.eq.s32.totalorder %s10, 0
    %p51 = por %p49, %p50
    %p52 = scmp.ne.s32.totalorder %s44, %s46
    %p53 = scmp.eq.s32.totalorder %s15, 1
    %p54 = por %p52, %p53
    %p55 = scmp.ne.s32.totalorder %s46, %s47
    %p56 = scmp.eq.s32.totalorder %s15, 0
    %p57 = por %p55, %p56
    %p58 = scmp.ne.s32.totalorder %s46, %s47
    %p59 = scmp.eq.s32.totalorder %s16, 1
    %p60 = por %p58, %p59
    %p62 = scmp.ne.s32.totalorder %s47, %s61
    %p63 = scmp.eq.s32.totalorder %s16, 0
    %p64 = por %p62, %p63
    %s66 = sadd.s32 %s65, 1
    %p69 = scmp.eq.s32.totalorder %s10, 1
    %p70 = scmp.ne.s32.totalorder %s65, %s67
    %p71 = scmp.eq.s32.totalorder %s10, 0
    %p72 = por %p70, %p71
    %p73 = scmp.ne.s32.totalorder %s65, %s67
    %p74 = scmp.eq.s32.totalorder %s15, 1
    %p75 = por %p73, %p74
    %p76 = scmp.ne.s32.totalorder %s67, %s68
    %p77 = scmp.eq.s32.totalorder %s15, 0
    %p78 = por %p76, %p77
    %p79 = scmp.ne.s32.totalorder %s67, %s68
    %p80 = scmp.eq.s32.totalorder %s16, 1
    %p81 = por %p79, %p80
    %p83 = scmp.ne.s32.totalorder %s68, %s82
    %p84 = scmp.eq.s32.totalorder %s16, 0
    %p85 = por %p83, %p84
    %s87 = sadd.s32 %s86, 1
    %p90 = scmp.eq.s32.totalorder %s10, 1
    %p91 = scmp.ne.s32.totalorder %s86, %s88
    %p92 = scmp.eq.s32.totalorder %s10, 0
    %p93 = por %p91, %p92
    %p94 = scmp.ne.s32.totalorder %s86, %s88
    %p95 = scmp.eq.s32.totalorder %s15, 1
    %p96 = por %p94, %p95
    %p97 = scmp.ne.s32.totalorder %s88, %s89
    %p98 = scmp.eq.s32.totalorder %s15, 0
    %p99 = por %p97, %p98
    %p100 = scmp.ne.s32.totalorder %s88, %s89
    %p101 = scmp.eq.s32.totalorder %s16, 1
    %p102 = por %p100, %p101
    %p104 = scmp.ne.s32.totalorder %s89, %s103
    %p105 = scmp.eq.s32.totalorder %s16, 0
    %p106 = por %p104, %p105
    %s107 = ssub.s32 %s10, %s17
    %p108 = scmp.eq.s32.totalorder %s107, 0
    %s110 = sadd.s32 %s109, 1
    %s111 = scalar_select %p108, %s109, %s110
    %p114 = pneg %p108
    %p115 = scmp.eq.s32.totalorder %s10, 1
    %p116 = por %p114, %p115
    %p117 = scmp.ne.s32.totalorder %s109, %s112
    %p118 = scmp.eq.s32.totalorder %s10, 0
    %p119 = por %p117, %p118
    %p120 = scmp.ne.s32.totalorder %s109, %s112
    %p121 = scmp.eq.s32.totalorder %s15, 1
    %p122 = por %p120, %p121
    %p123 = scmp.ne.s32.totalorder %s112, %s113
    %p124 = scmp.eq.s32.totalorder %s15, 0
    %p125 = por %p123, %p124
    %p126 = scmp.ne.s32.totalorder %s112, %s113
    %p127 = scmp.eq.s32.totalorder %s16, 1
    %p128 = por %p126, %p127
    %p130 = scmp.ne.s32.totalorder %s113, %s129
    %p131 = scmp.eq.s32.totalorder %s16, 0
    %p132 = por %p130, %p131
    %p133 = scmp.le.s32.totalorder 1, %s10
    %p134 = scmp.lt.s32.totalorder %s10, 3
    %p135 = pnand %p133, %p134
    %p136 = pneg %p135
    // Predicated region
    $region9: #{shrinknet_forward.17} parent=5 // pred_check
      _
    $region10: #{shrinknet_forward.17} parent=5 // pred_check_branch
      %138 = sbr.rel (%p135) target = $region12
    $region11: #{shrinknet_forward.17} parent=5 // pred_region
      %s139 = ssub.s32 %s10, 1
      // Predicated region
      $region13: #{shrinknet_forward.17} parent=11 // pred_check
        %p140 = pneg %p57
      $region14: #{shrinknet_forward.17} parent=11 // pred_check_branch
        %142 = sbr.rel (%p140) target = $region16
      $region15: #{shrinknet_forward.17} parent=11 // pred_region
        _
      $region16: #{shrinknet_forward.17} parent=11 // pred_fallthru
        _
      // Predicated region
      $region17: #{shrinknet_forward.17} parent=11 // pred_check
        %p143 = pneg %p78
      $region18: #{shrinknet_forward.17} parent=11 // pred_check_branch
        %145 = sbr.rel (%p143) target = $region20
      $region19: #{shrinknet_forward.17} parent=11 // pred_region
        _
      $region20: #{shrinknet_forward.17} parent=11 // pred_fallthru
        _
      // Predicated region
      $region21: #{shrinknet_forward.17} parent=11 // pred_check
        %p146 = pneg %p99
      $region22: #{shrinknet_forward.17} parent=11 // pred_check_branch
        %148 = sbr.rel (%p146) target = $region24
      $region23: #{shrinknet_forward.17} parent=11 // pred_region
        _
      $region24: #{shrinknet_forward.17} parent=11 // pred_fallthru
        _
    $region12: #{shrinknet_forward.17} parent=5 // pred_fallthru
      _
    %p149 = scmp.lt.s32.totalorder %s10, 2
    // Predicated region
    $region25: #{shrinknet_forward.17} parent=5 // pred_check
      %p150 = pneg %p149
    $region26: #{shrinknet_forward.17} parent=5 // pred_check_branch
      %152 = sbr.rel (%p150) target = $region28
    $region27: #{shrinknet_forward.17} parent=5 // pred_region
      // Predicated region
      $region29: #{shrinknet_forward.17} parent=27 // pred_check
        %p153 = pneg %p30
      $region30: #{shrinknet_forward.17} parent=27 // pred_check_branch
        %155 = sbr.rel (%p153) target = $region32
      $region31: #{shrinknet_forward.17} parent=27 // pred_region
        %s156 = smul.u32 2, %s10
        %p157 = scmp.lt.s32.totalorder %s156, 3
        %s158 = scalar_select %p157, %s156, 3
        %s159 = smul.addr %s158, 4
        %s160 = scalar_lea.vmem %s0, %s159
        %s161 = smul.u32 2, %s10
      $region32: #{shrinknet_forward.17} parent=27 // pred_fallthru
        _
    $region28: #{shrinknet_forward.17} parent=5 // pred_fallthru
      _
    %p162 = scmp.le.s32.totalorder 1, %s10
    %p163 = scmp.lt.s32.totalorder %s10, 3
    %p164 = pnand %p162, %p163
    %p165 = pneg %p164
    // Predicated region
    $region33: #{shrinknet_forward.17} parent=5 // pred_check
      _
    $region34: #{shrinknet_forward.17} parent=5 // pred_check_branch
      %167 = sbr.rel (%p164) target = $region36
    $region35: #{shrinknet_forward.17} parent=5 // pred_region
      %s168 = ssub.s32 %s10, 1
      %s169 = smul.u32 2, %s15
      %p170 = scmp.lt.s32.totalorder %s169, 3
      %s171 = scalar_select %p170, %s169, 3
      %s172 = smul.addr %s171, 4
      %s173 = scalar_lea.vmem %s0, %s172
      %p174 = pneg %p36
      %p175 = pneg %p33
      %p176 = pneg %p57
      %p177 = pneg %p54
      %p178 = pneg %p78
      %p179 = pneg %p75
      %p180 = pneg %p99
      %p181 = pneg %p96
      %p182 = pneg %p125
      %p183 = pneg %p122
      %s184 = smul.u32 2, %s15
      %p185 = scmp.lt.s32.totalorder %s184, 3
      %s186 = scalar_select %p185, %s184, 3
      %s187 = smul.addr %s186, 4
      %s188 = scalar_lea.vmem %s4, %s187
      %s189 = smul.u32 2, %s15
      %p190 = scmp.lt.s32.totalorder %s189, 3
      %s191 = scalar_select %p190, %s189, 3
      %s192 = smul.addr %s191, 4
      %s193 = scalar_lea.vmem %s0, %s192
      %s194 = smul.u32 2, %s15
      %s195 = smul.u32 2, %s15
      %p196 = scmp.lt.s32.totalorder %s195, 3
      %s197 = scalar_select %p196, %s195, 3
      %s198 = smul.addr %s197, 4
      %s199 = scalar_lea.vmem %s4, %s198
      %s200 = smul.u32 2, %s15
      %v202 = vld [vmem:[%s193] sm:$0xf]
      %v203 = vld [vmem:[%s193 + $0x4] sm:$0xf]
      %v204 = vld [vmem:[%s1] sm:$0xf]
      %v205 = vld [vmem:[%s1 + $0x4] sm:$0xf]
      %v206 = vld [vmem:[%s1 + $0x8] sm:$0xf]
      %v207 = vld [vmem:[%s1 + $0xc] sm:$0xf]
      %v210 = vunpack.c.l.b16 %v202
      %v211 = vunpack.c.l.b16 %v203
      %v212 = vpack.c.b16 %v211, %v210
      %v217 = vunpack.c.l.b16 %v204
      %v218 = vunpack.c.l.b16 %v205
      %v219 = vunpack.c.l.b16 %v206
      %v220 = vunpack.c.l.b16 %v207
      %v221 = vpack.c.b16 %v218, %v217
      %v222 = vpack.c.b16 %v220, %v219
      %vm225 = vcmask 261120
      %v227 = vsel %vm225, %v212, 0
      %229 = vmatprep.subr.bf16.mxu0 0
      %230 = vmatpush1.bf16.msra.mxu0 %v221
      %231 = vmatprep.subr.bf16.mxu0 0
      %232 = vmatpush1.bf16.msra.mxu0 %v222
      %233 = vmatprep.subr.bf16.mxu0 0
      %234 = vmatpush1.bf16.msra.mxu0 0
      %235 = vmatprep.subr.bf16.mxu0 0
      %236 = vmatpush1.bf16.msra.mxu0 0
      %237 = vmatprep.subr.bf16.mxu0 0
      %238 = vmatpush1.bf16.msra.mxu0 0
      %239 = vmatprep.subr.bf16.mxu0 0
      %240 = vmatpush1.bf16.msra.mxu0 0
      %241 = vmatprep.subr.bf16.mxu0 0
      %242 = vmatpush1.bf16.msra.mxu0 0
      %243 = vmatprep.subr.bf16.mxu0 0
      %244 = vmatpush1.bf16.msra.mxu0 0
      %245 = vmatprep.subr.bf16.mxu0 0
      %246 = vmatpush1.bf16.msra.mxu0 0
      %247 = vmatprep.subr.bf16.mxu0 0
      %248 = vmatpush1.bf16.msra.mxu0 0
      %249 = vmatprep.subr.bf16.mxu0 0
      %250 = vmatpush1.bf16.msra.mxu0 0
      %251 = vmatprep.subr.bf16.mxu0 0
      %252 = vmatpush1.bf16.msra.mxu0 0
      %253 = vmatprep.subr.bf16.mxu0 0
      %254 = vmatpush1.bf16.msra.mxu0 0
      %255 = vmatprep.subr.bf16.mxu0 0
      %256 = vmatpush1.bf16.msra.mxu0 0
      %257 = vmatprep.subr.bf16.mxu0 0
      %258 = vmatpush1.bf16.msra.mxu0 0
      %259 = vmatprep.subr.bf16.mxu0 0
      %260 = vmatpush1.bf16.msra.mxu0 0
      %261 = vmatprep.mubr.bf16.mxu0 0
      %262 = vmatmul.mubr.bf16.gmra.mrb[0].mxu0 %v227
      %v263 = vpop.f32.mrb[0].mxu0
      %v264 = vadd.f32 0.0, %v263
      %v265 = vpop.f32.mrb[0].mxu0
      %v266 = vpop.f32.mrb[0].mxu0
      %v267 = vadd.f32 0.0, %v266
      %v268 = vpop.f32.mrb[0].mxu0
      %269 = vdwg.mxu0
      %v270 = vld [vmem:[%s2] sm:$0x1]
      %v272 = vlaneseq
      %v273 = vshrl.u32 %v272, 7
      %v274 = vsub.s32 0, %v273
      %v275 = vrot.slane %v270, %v274
      %v277 = vmul.f32 %v264, %v275
      %v278 = vmul.f32 %v267, %v275
      %v279 = vld [vmem:[%s3] sm:$0x1]
      %v281 = vlaneseq
      %v282 = vshrl.u32 %v281, 7
      %v283 = vsub.s32 0, %v282
      %v284 = vrot.slane %v279, %v283
      %v286 = vadd.f32 %v277, %v284
      %v287 = vadd.f32 %v278, %v284
      %v288 = vpack.c.bf16 %v287, %v286
      %v290 = vunpack.c.l.b16 %v288
      %v291 = vunpack.c.h.b16 %v288
      %v292 = vpack.c.b16 %v290, %v290
      %v293 = vpack.c.b16 %v291, %v291
      %296 = vst [vmem:[%s199] sm:$0xf] %v292
      %297 = vst [vmem:[%s199 + $0x4] sm:$0xf] %v293
      %s298 = smul.u32 2, %s15
      %p299 = scmp.lt.s32.totalorder %s298, 3
      %s300 = scalar_select %p299, %s298, 3
      %s301 = smul.addr %s300, 4
      %s302 = scalar_lea.vmem %s4, %s301
      // Predicated region
      $region37: #{shrinknet_forward.17} parent=35 // pred_check
        %p303 = pneg %p122
      $region38: #{shrinknet_forward.17} parent=35 // pred_check_branch
        %305 = sbr.rel (%p303) target = $region40
      $region39: #{shrinknet_forward.17} parent=35 // pred_region
        %s306 = smul.u32 2, %s15
      $region40: #{shrinknet_forward.17} parent=35 // pred_fallthru
        _
    $region36: #{shrinknet_forward.17} parent=5 // pred_fallthru
      _
    %p307 = scmp.le.s32.totalorder 2, %s10
    // Predicated region
    $region41: #{shrinknet_forward.17} parent=5 // pred_check
      %p308 = pneg %p307
    $region42: #{shrinknet_forward.17} parent=5 // pred_check_branch
      %310 = sbr.rel (%p308) target = $region44
    $region43: #{shrinknet_forward.17} parent=5 // pred_region
      %s311 = ssub.s32 %s10, 2
      // Predicated region
      $region45: #{shrinknet_forward.17} parent=43 // pred_check
        %p312 = pneg %p128
      $region46: #{shrinknet_forward.17} parent=43 // pred_check_branch
        %314 = sbr.rel (%p312) target = $region48
      $region47: #{shrinknet_forward.17} parent=43 // pred_region
        %s315 = smul.u32 2, %s16
        %p316 = scmp.lt.s32.totalorder %s315, 3
        %s317 = scalar_select %p316, %s315, 3
        %s318 = smul.addr %s317, 4
        %s319 = scalar_lea.vmem %s4, %s318
      $region48: #{shrinknet_forward.17} parent=43 // pred_fallthru
        _
    $region44: #{shrinknet_forward.17} parent=5 // pred_fallthru
      _
  $region6: #{shrinknet_forward.17} parent=0 // loop_footer
    %s14 = sadd.s32 1, %s10
  $region7: #{shrinknet_forward.17} parent=0 // loop_footer_branch
    %9 = sbr.rel target = $region3
  $region8: #{shrinknet_forward.17} parent=0 // loop_exit
    _

// kernel: shrinknet_forward.16
$region0: #{shrinknet_forward.16}
  #allocation0 [shape = 'u32[]', space=smem, size = 0x4, offset = 0x4, fixed_abs, tag = 'smem constant byte address 0x4 - core index']
  #allocation1 [shape = 'u32[144,128]{1,0:T(1,128)}', space=vmem, size = 0x12000, scoped, tag = 'internal scratch']
  %s0 = inlined_call_operand.vmem [shape: bf16[32,288], index: 0, kind: input, shape index: {}]
  %s1 = inlined_call_operand.vmem [shape: bf16[288,128], index: 1, kind: input, shape index: {}]
  %s2 = inlined_call_operand.vmem [shape: f32[1,128], index: 2, kind: input, shape index: {}]
  %s3 = inlined_call_operand.vmem [shape: f32[1,128], index: 3, kind: input, shape index: {}]
  %s4 = inlined_call_operand.vmem [shape: bf16[32,128], index: 4, kind: output, shape index: {}]
  %s5 = sld [smem:[#allocation0]]
  $region49: #{shrinknet_forward.16} parent=0
    _
  %s7 = ssub.s32 1, %s5
  %s8 = scalar_select 0, %s7, %s5
  loop: start=0, step=1, limit=4
  $region2: #{shrinknet_forward.16} parent=0 // loop_pre_header
    _
  $region3: #{shrinknet_forward.16} parent=0 // loop_header
    %s10 = sphi 0, %s14
    %p11 = scmp.ge.s32.totalorder %s10, 4
    %s20 = sphi 0, %s22
    %s23 = sphi 0, %s20
    %s24 = sphi 0, %s23
    %s40 = sphi 0, %s24
    %s44 = sphi 0, %s44
    %s46 = sphi 0, %s44
    %s47 = sphi 0, %s46
    %s61 = sphi 0, %s47
    %s65 = sphi 0, %s65
    %s67 = sphi 0, %s65
    %s68 = sphi 0, %s67
    %s82 = sphi 0, %s68
    %s86 = sphi 0, %s86
    %s88 = sphi 0, %s86
    %s89 = sphi 0, %s88
    %s103 = sphi 0, %s89
    %s109 = sphi 0, %s111
    %s112 = sphi 0, %s109
    %s113 = sphi 0, %s112
    %s129 = sphi 0, %s113
  $region4: #{shrinknet_forward.16} parent=0 // loop_header_branch
    %13 = sbr.rel (%p11) target = $region8
  $region5: #{shrinknet_forward.16} parent=0 // loop_body
    %s15 = ssub.s32 %s10, 1
    %s16 = ssub.s32 %s10, 2
    %s17 = sadd.s32 %s10, 1
    %s18 = ssub.s32 %s10, %s17
    %p19 = scmp.eq.s32.totalorder %s18, 0
    %s21 = sadd.s32 %s20, 1
    %s22 = scalar_select %p19, %s20, %s21
    %p25 = pneg %p19
    %p26 = scmp.eq.s32.totalorder %s10, 1
    %p27 = por %p25, %p26
    %p28 = scmp.ne.s32.totalorder %s20, %s23
    %p29 = scmp.eq.s32.totalorder %s10, 0
    %p30 = por %p28, %p29
    %p31 = scmp.ne.s32.totalorder %s20, %s23
    %p32 = scmp.eq.s32.totalorder %s15, 1
    %p33 = por %p31, %p32
    %p34 = scmp.ne.s32.totalorder %s23, %s24
    %p35 = scmp.eq.s32.totalorder %s15, 0
    %p36 = por %p34, %p35
    %p37 = scmp.ne.s32.totalorder %s23, %s24
    %p38 = scmp.eq.s32.totalorder %s16, 1
    %p39 = por %p37, %p38
    %p41 = scmp.ne.s32.totalorder %s24, %s40
    %p42 = scmp.eq.s32.totalorder %s16, 0
    %p43 = por %p41, %p42
    %s45 = sadd.s32 %s44, 1
    %p48 = scmp.eq.s32.totalorder %s10, 1
    %p49 = scmp.ne.s32.totalorder %s44, %s46
    %p50 = scmp.eq.s32.totalorder %s10, 0
    %p51 = por %p49, %p50
    %p52 = scmp.ne.s32.totalorder %s44, %s46
    %p53 = scmp.eq.s32.totalorder %s15, 1
    %p54 = por %p52, %p53
    %p55 = scmp.ne.s32.totalorder %s46, %s47
    %p56 = scmp.eq.s32.totalorder %s15, 0
    %p57 = por %p55, %p56
    %p58 = scmp.ne.s32.totalorder %s46, %s47
    %p59 = scmp.eq.s32.totalorder %s16, 1
    %p60 = por %p58, %p59
    %p62 = scmp.ne.s32.totalorder %s47, %s61
    %p63 = scmp.eq.s32.totalorder %s16, 0
    %p64 = por %p62, %p63
    %s66 = sadd.s32 %s65, 1
    %p69 = scmp.eq.s32.totalorder %s10, 1
    %p70 = scmp.ne.s32.totalorder %s65, %s67
    %p71 = scmp.eq.s32.totalorder %s10, 0
    %p72 = por %p70, %p71
    %p73 = scmp.ne.s32.totalorder %s65, %s67
    %p74 = scmp.eq.s32.totalorder %s15, 1
    %p75 = por %p73, %p74
    %p76 = scmp.ne.s32.totalorder %s67, %s68
    %p77 = scmp.eq.s32.totalorder %s15, 0
    %p78 = por %p76, %p77
    %p79 = scmp.ne.s32.totalorder %s67, %s68
    %p80 = scmp.eq.s32.totalorder %s16, 1
    %p81 = por %p79, %p80
    %p83 = scmp.ne.s32.totalorder %s68, %s82
    %p84 = scmp.eq.s32.totalorder %s16, 0
    %p85 = por %p83, %p84
    %s87 = sadd.s32 %s86, 1
    %p90 = scmp.eq.s32.totalorder %s10, 1
    %p91 = scmp.ne.s32.totalorder %s86, %s88
    %p92 = scmp.eq.s32.totalorder %s10, 0
    %p93 = por %p91, %p92
    %p94 = scmp.ne.s32.totalorder %s86, %s88
    %p95 = scmp.eq.s32.totalorder %s15, 1
    %p96 = por %p94, %p95
    %p97 = scmp.ne.s32.totalorder %s88, %s89
    %p98 = scmp.eq.s32.totalorder %s15, 0
    %p99 = por %p97, %p98
    %p100 = scmp.ne.s32.totalorder %s88, %s89
    %p101 = scmp.eq.s32.totalorder %s16, 1
    %p102 = por %p100, %p101
    %p104 = scmp.ne.s32.totalorder %s89, %s103
    %p105 = scmp.eq.s32.totalorder %s16, 0
    %p106 = por %p104, %p105
    %s107 = ssub.s32 %s10, %s17
    %p108 = scmp.eq.s32.totalorder %s107, 0
    %s110 = sadd.s32 %s109, 1
    %s111 = scalar_select %p108, %s109, %s110
    %p114 = pneg %p108
    %p115 = scmp.eq.s32.totalorder %s10, 1
    %p116 = por %p114, %p115
    %p117 = scmp.ne.s32.totalorder %s109, %s112
    %p118 = scmp.eq.s32.totalorder %s10, 0
    %p119 = por %p117, %p118
    %p120 = scmp.ne.s32.totalorder %s109, %s112
    %p121 = scmp.eq.s32.totalorder %s15, 1
    %p122 = por %p120, %p121
    %p123 = scmp.ne.s32.totalorder %s112, %s113
    %p124 = scmp.eq.s32.totalorder %s15, 0
    %p125 = por %p123, %p124
    %p126 = scmp.ne.s32.totalorder %s112, %s113
    %p127 = scmp.eq.s32.totalorder %s16, 1
    %p128 = por %p126, %p127
    %p130 = scmp.ne.s32.totalorder %s113, %s129
    %p131 = scmp.eq.s32.totalorder %s16, 0
    %p132 = por %p130, %p131
    %p133 = scmp.le.s32.totalorder 1, %s10
    %p134 = scmp.lt.s32.totalorder %s10, 3
    %p135 = pnand %p133, %p134
    %p136 = pneg %p135
    // Predicated region
    $region9: #{shrinknet_forward.16} parent=5 // pred_check
      _
    $region10: #{shrinknet_forward.16} parent=5 // pred_check_branch
      %138 = sbr.rel (%p135) target = $region12
    $region11: #{shrinknet_forward.16} parent=5 // pred_region
      %s139 = ssub.s32 %s10, 1
      // Predicated region
      $region13: #{shrinknet_forward.16} parent=11 // pred_check
        %p140 = pneg %p57
      $region14: #{shrinknet_forward.16} parent=11 // pred_check_branch
        %142 = sbr.rel (%p140) target = $region16
      $region15: #{shrinknet_forward.16} parent=11 // pred_region
        _
      $region16: #{shrinknet_forward.16} parent=11 // pred_fallthru
        _
      // Predicated region
      $region17: #{shrinknet_forward.16} parent=11 // pred_check
        %p143 = pneg %p78
      $region18: #{shrinknet_forward.16} parent=11 // pred_check_branch
        %145 = sbr.rel (%p143) target = $region20
      $region19: #{shrinknet_forward.16} parent=11 // pred_region
        _
      $region20: #{shrinknet_forward.16} parent=11 // pred_fallthru
        _
      // Predicated region
      $region21: #{shrinknet_forward.16} parent=11 // pred_check
        %p146 = pneg %p99
      $region22: #{shrinknet_forward.16} parent=11 // pred_check_branch
        %148 = sbr.rel (%p146) target = $region24
      $region23: #{shrinknet_forward.16} parent=11 // pred_region
        _
      $region24: #{shrinknet_forward.16} parent=11 // pred_fallthru
        _
    $region12: #{shrinknet_forward.16} parent=5 // pred_fallthru
      _
    %p149 = scmp.lt.s32.totalorder %s10, 2
    // Predicated region
    $region25: #{shrinknet_forward.16} parent=5 // pred_check
      %p150 = pneg %p149
    $region26: #{shrinknet_forward.16} parent=5 // pred_check_branch
      %152 = sbr.rel (%p150) target = $region28
    $region27: #{shrinknet_forward.16} parent=5 // pred_region
      // Predicated region
      $region29: #{shrinknet_forward.16} parent=27 // pred_check
        %p153 = pneg %p30
      $region30: #{shrinknet_forward.16} parent=27 // pred_check_branch
        %155 = sbr.rel (%p153) target = $region32
      $region31: #{shrinknet_forward.16} parent=27 // pred_region
        %s156 = smul.u32 2, %s10
        %p157 = scmp.lt.s32.totalorder %s156, 3
        %s158 = scalar_select %p157, %s156, 3
        %s159 = smul.addr %s158, 3
        %s160 = smul.addr %s159, 4
        %s161 = scalar_lea.vmem %s0, %s160
        %s162 = smul.u32 2, %s10
      $region32: #{shrinknet_forward.16} parent=27 // pred_fallthru
        _
    $region28: #{shrinknet_forward.16} parent=5 // pred_fallthru
      _
    %p163 = scmp.le.s32.totalorder 1, %s10
    %p164 = scmp.lt.s32.totalorder %s10, 3
    %p165 = pnand %p163, %p164
    %p166 = pneg %p165
    // Predicated region
    $region33: #{shrinknet_forward.16} parent=5 // pred_check
      _
    $region34: #{shrinknet_forward.16} parent=5 // pred_check_branch
      %168 = sbr.rel (%p165) target = $region36
    $region35: #{shrinknet_forward.16} parent=5 // pred_region
      %s169 = ssub.s32 %s10, 1
      %s170 = smul.u32 2, %s15
      %p171 = scmp.lt.s32.totalorder %s170, 3
      %s172 = scalar_select %p171, %s170, 3
      %s173 = smul.addr %s172, 3
      %s174 = smul.addr %s173, 4
      %s175 = scalar_lea.vmem %s0, %s174
      %p176 = pneg %p36
      %p177 = pneg %p33
      %p178 = pneg %p57
      %p179 = pneg %p54
      %p180 = pneg %p78
      %p181 = pneg %p75
      %p182 = pneg %p99
      %p183 = pneg %p96
      %p184 = pneg %p125
      %p185 = pneg %p122
      %s186 = smul.u32 2, %s15
      %p187 = scmp.lt.s32.totalorder %s186, 3
      %s188 = scalar_select %p187, %s186, 3
      %s189 = smul.addr %s188, 4
      %s190 = scalar_lea.vmem %s4, %s189
      %s191 = smul.u32 2, %s15
      %p192 = scmp.lt.s32.totalorder %s191, 3
      %s193 = scalar_select %p192, %s191, 3
      %s194 = smul.addr %s193, 3
      %s195 = smul.addr %s194, 4
      %s196 = scalar_lea.vmem %s0, %s195
      %s197 = smul.u32 2, %s15
      %s198 = smul.u32 2, %s15
      %p199 = scmp.lt.s32.totalorder %s198, 3
      %s200 = scalar_select %p199, %s198, 3
      %s201 = smul.addr %s200, 4
      %s202 = scalar_lea.vmem %s4, %s201
      %s203 = smul.u32 2, %s15
      %v205 = vld [vmem:[%s196] sm:$0xff]
      %v206 = vld [vmem:[%s196 + $0x8] sm:$0xf]
      %v207 = vld [vmem:[%s196 + $0xc] sm:$0xff]
      %v208 = vld [vmem:[%s196 + $0x14] sm:$0xf]
      %v209 = vld [vmem:[%s1] sm:$0xf]
      %v210 = vld [vmem:[%s1 + $0x4] sm:$0xf]
      %v211 = vld [vmem:[%s1 + $0x8] sm:$0xf]
      %v212 = vld [vmem:[%s1 + $0xc] sm:$0xf]
      %v213 = vld [vmem:[%s1 + $0x10] sm:$0xf]
      %v214 = vld [vmem:[%s1 + $0x14] sm:$0xf]
      %v215 = vld [vmem:[%s1 + $0x18] sm:$0xf]
      %v216 = vld [vmem:[%s1 + $0x1c] sm:$0xf]
      %v217 = vld [vmem:[%s1 + $0x20] sm:$0xf]
      %v218 = vld [vmem:[%s1 + $0x24] sm:$0xf]
      %v219 = vld [vmem:[%s1 + $0x28] sm:$0xf]
      %v220 = vld [vmem:[%s1 + $0x2c] sm:$0xf]
      %v221 = vld [vmem:[%s1 + $0x30] sm:$0xf]
      %v222 = vld [vmem:[%s1 + $0x34] sm:$0xf]
      %v223 = vld [vmem:[%s1 + $0x38] sm:$0xf]
      %v224 = vld [vmem:[%s1 + $0x3c] sm:$0xf]
      %v225 = vld [vmem:[%s1 + $0x40] sm:$0xf]
      %v226 = vld [vmem:[%s1 + $0x44] sm:$0xf]
      %v227 = vld [vmem:[%s1 + $0x48] sm:$0xf]
      %v228 = vld [vmem:[%s1 + $0x4c] sm:$0xf]
      %v229 = vld [vmem:[%s1 + $0x50] sm:$0xf]
      %v230 = vld [vmem:[%s1 + $0x54] sm:$0xf]
      %v231 = vld [vmem:[%s1 + $0x58] sm:$0xf]
      %v232 = vld [vmem:[%s1 + $0x5c] sm:$0xf]
      %v233 = vld [vmem:[%s1 + $0x60] sm:$0xf]
      %v234 = vld [vmem:[%s1 + $0x64] sm:$0xf]
      %v235 = vld [vmem:[%s1 + $0x68] sm:$0xf]
      %v236 = vld [vmem:[%s1 + $0x6c] sm:$0xf]
      %v237 = vld [vmem:[%s1 + $0x70] sm:$0xf]
      %v238 = vld [vmem:[%s1 + $0x74] sm:$0xf]
      %v239 = vld [vmem:[%s1 + $0x78] sm:$0xf]
      %v240 = vld [vmem:[%s1 + $0x7c] sm:$0xf]
      %v241 = vld [vmem:[%s1 + $0x80] sm:$0xf]
      %v242 = vld [vmem:[%s1 + $0x84] sm:$0xf]
      %v243 = vld [vmem:[%s1 + $0x88] sm:$0xf]
      %v244 = vld [vmem:[%s1 + $0x8c] sm:$0xf]
      %v249 = vunpack.c.l.b16 %v205
      %v250 = vunpack.c.h.b16 %v205
      %v251 = vunpack.c.l.b16 %v206
      %v252 = vunpack.c.l.b16 %v207
      %v253 = vunpack.c.h.b16 %v207
      %v254 = vunpack.c.l.b16 %v208
      %v255 = vpack.c.b16 %v252, %v249
      %v256 = vpack.c.b16 %v253, %v250
      %v257 = vpack.c.b16 %v254, %v251
      %v296 = vunpack.c.l.b16 %v209
      %v297 = vunpack.c.l.b16 %v210
      %v298 = vunpack.c.l.b16 %v211
      %v299 = vunpack.c.l.b16 %v212
      %v300 = vunpack.c.l.b16 %v213
      %v301 = vunpack.c.l.b16 %v214
      %v302 = vunpack.c.l.b16 %v215
      %v303 = vunpack.c.l.b16 %v216
      %v304 = vunpack.c.l.b16 %v217
      %v305 = vunpack.c.l.b16 %v218
      %v306 = vunpack.c.l.b16 %v219
      %v307 = vunpack.c.l.b16 %v220
      %v308 = vunpack.c.l.b16 %v221
      %v309 = vunpack.c.l.b16 %v222
      %v310 = vunpack.c.l.b16 %v223
      %v311 = vunpack.c.l.b16 %v224
      %v312 = vunpack.c.l.b16 %v225
      %v313 = vunpack.c.l.b16 %v226
      %v314 = vunpack.c.l.b16 %v227
      %v315 = vunpack.c.l.b16 %v228
      %v316 = vunpack.c.l.b16 %v229
      %v317 = vunpack.c.l.b16 %v230
      %v318 = vunpack.c.l.b16 %v231
      %v319 = vunpack.c.l.b16 %v232
      %v320 = vunpack.c.l.b16 %v233
      %v321 = vunpack.c.l.b16 %v234
      %v322 = vunpack.c.l.b16 %v235
      %v323 = vunpack.c.l.b16 %v236
      %v324 = vunpack.c.l.b16 %v237
      %v325 = vunpack.c.l.b16 %v238
      %v326 = vunpack.c.l.b16 %v239
      %v327 = vunpack.c.l.b16 %v240
      %v328 = vunpack.c.l.b16 %v241
      %v329 = vunpack.c.l.b16 %v242
      %v330 = vunpack.c.l.b16 %v243
      %v331 = vunpack.c.l.b16 %v244
      %v332 = vpack.c.b16 %v297, %v296
      %v333 = vpack.c.b16 %v299, %v298
      %v334 = vpack.c.b16 %v301, %v300
      %v335 = vpack.c.b16 %v303, %v302
      %v336 = vpack.c.b16 %v305, %v304
      %v337 = vpack.c.b16 %v307, %v306
      %v338 = vpack.c.b16 %v309, %v308
      %v339 = vpack.c.b16 %v311, %v310
      %v340 = vpack.c.b16 %v313, %v312
      %v341 = vpack.c.b16 %v315, %v314
      %v342 = vpack.c.b16 %v317, %v316
      %v343 = vpack.c.b16 %v319, %v318
      %v344 = vpack.c.b16 %v321, %v320
      %v345 = vpack.c.b16 %v323, %v322
      %v346 = vpack.c.b16 %v325, %v324
      %v347 = vpack.c.b16 %v327, %v326
      %v348 = vpack.c.b16 %v329, %v328
      %v349 = vpack.c.b16 %v331, %v330
      %vm368 = vcmask 261120
      %v370 = vsel %vm368, %v257, 0
      %372 = vmatprep.subr.bf16.mxu0 0
      %373 = vmatpush1.bf16.msra.mxu0 %v332
      %374 = vmatprep.subr.bf16.mxu0 0
      %375 = vmatpush1.bf16.msra.mxu0 %v333
      %376 = vmatprep.subr.bf16.mxu0 0
      %377 = vmatpush1.bf16.msra.mxu0 %v334
      %378 = vmatprep.subr.bf16.mxu0 0
      %379 = vmatpush1.bf16.msra.mxu0 %v335
      %380 = vmatprep.subr.bf16.mxu0 0
      %381 = vmatpush1.bf16.msra.mxu0 %v336
      %382 = vmatprep.subr.bf16.mxu0 0
      %383 = vmatpush1.bf16.msra.mxu0 %v337
      %384 = vmatprep.subr.bf16.mxu0 0
      %385 = vmatpush1.bf16.msra.mxu0 %v338
      %386 = vmatprep.subr.bf16.mxu0 0
      %387 = vmatpush1.bf16.msra.mxu0 %v339
      %388 = vmatprep.subr.bf16.mxu0 0
      %389 = vmatpush1.bf16.msra.mxu0 %v340
      %390 = vmatprep.subr.bf16.mxu0 0
      %391 = vmatpush1.bf16.msra.mxu0 %v341
      %392 = vmatprep.subr.bf16.mxu0 0
      %393 = vmatpush1.bf16.msra.mxu0 %v342
      %394 = vmatprep.subr.bf16.mxu0 0
      %395 = vmatpush1.bf16.msra.mxu0 %v343
      %396 = vmatprep.subr.bf16.mxu0 0
      %397 = vmatpush1.bf16.msra.mxu0 %v344
      %398 = vmatprep.subr.bf16.mxu0 0
      %399 = vmatpush1.bf16.msra.mxu0 %v345
      %400 = vmatprep.subr.bf16.mxu0 0
      %401 = vmatpush1.bf16.msra.mxu0 %v346
      %402 = vmatprep.subr.bf16.mxu0 0
      %403 = vmatpush1.bf16.msra.mxu0 %v347
      %404 = vmatprep.mubr.bf16.mxu0 %v256
      %405 = vmatmul.mubr.bf16.gmra.mrb[0].mxu0 %v255
      %v406 = vpop.f32.mrb[0].mxu0
      %v407 = vadd.f32 0.0, %v406
      %v408 = vpop.f32.mrb[0].mxu0
      %v409 = vpop.f32.mrb[0].mxu0
      %v410 = vadd.f32 0.0, %v409
      %v411 = vpop.f32.mrb[0].mxu0
      %412 = vdwg.mxu0
      %413 = vmatprep.subr.bf16.mxu0 0
      %414 = vmatpush1.bf16.msra.mxu0 %v348
      %415 = vmatprep.subr.bf16.mxu0 0
      %416 = vmatpush1.bf16.msra.mxu0 %v349
      %417 = vmatprep.subr.bf16.mxu0 0
      %418 = vmatpush1.bf16.msra.mxu0 0
      %419 = vmatprep.subr.bf16.mxu0 0
      %420 = vmatpush1.bf16.msra.mxu0 0
      %421 = vmatprep.subr.bf16.mxu0 0
      %422 = vmatpush1.bf16.msra.mxu0 0
      %423 = vmatprep.subr.bf16.mxu0 0
      %424 = vmatpush1.bf16.msra.mxu0 0
      %425 = vmatprep.subr.bf16.mxu0 0
      %426 = vmatpush1.bf16.msra.mxu0 0
      %427 = vmatprep.subr.bf16.mxu0 0
      %428 = vmatpush1.bf16.msra.mxu0 0
      %429 = vmatprep.subr.bf16.mxu0 0
      %430 = vmatpush1.bf16.msra.mxu0 0
      %431 = vmatprep.subr.bf16.mxu0 0
      %432 = vmatpush1.bf16.msra.mxu0 0
      %433 = vmatprep.subr.bf16.mxu0 0
      %434 = vmatpush1.bf16.msra.mxu0 0
      %435 = vmatprep.subr.bf16.mxu0 0
      %436 = vmatpush1.bf16.msra.mxu0 0
      %437 = vmatprep.subr.bf16.mxu0 0
      %438 = vmatpush1.bf16.msra.mxu0 0
      %439 = vmatprep.subr.bf16.mxu0 0
      %440 = vmatpush1.bf16.msra.mxu0 0
      %441 = vmatprep.subr.bf16.mxu0 0
      %442 = vmatpush1.bf16.msra.mxu0 0
      %443 = vmatprep.subr.bf16.mxu0 0
      %444 = vmatpush1.bf16.msra.mxu0 0
      %445 = vmatprep.mubr.bf16.mxu0 0
      %446 = vmatmul.mubr.bf16.gmra.mrb[0].mxu0 %v370
      %v447 = vpop.f32.mrb[0].mxu0
      %v448 = vadd.f32 %v407, %v447
      %v449 = vpop.f32.mrb[0].mxu0
      %v450 = vpop.f32.mrb[0].mxu0
      %v451 = vadd.f32 %v410, %v450
      %v452 = vpop.f32.mrb[0].mxu0
      %453 = vdwg.mxu0
      %v454 = vld [vmem:[%s2] sm:$0x1]
      %v456 = vlaneseq
      %v457 = vshrl.u32 %v456, 7
      %v458 = vsub.s32 0, %v457
      %v459 = vrot.slane %v454, %v458
      %v461 = vmul.f32 %v448, %v459
      %v462 = vmul.f32 %v451, %v459
      %v463 = vld [vmem:[%s3] sm:$0x1]
      %v465 = vlaneseq
      %v466 = vshrl.u32 %v465, 7
      %v467 = vsub.s32 0, %v466
      %v468 = vrot.slane %v463, %v467
      %v470 = vadd.f32 %v461, %v468
      %v471 = vadd.f32 %v462, %v468
      %v472 = vmax.f32 %v470, 0.0
      %v473 = vmax.f32 %v471, 0.0
      %v474 = vpack.c.bf16 %v473, %v472
      %v476 = vunpack.c.l.b16 %v474
      %v477 = vunpack.c.h.b16 %v474
      %v478 = vpack.c.b16 %v476, %v476
      %v479 = vpack.c.b16 %v477, %v477
      %482 = vst [vmem:[%s202] sm:$0xf] %v478
      %483 = vst [vmem:[%s202 + $0x4] sm:$0xf] %v479
      %s484 = smul.u32 2, %s15
      %p485 = scmp.lt.s32.totalorder %s484, 3
      %s486 = scalar_select %p485, %s484, 3
      %s487 = smul.addr %s486, 4
      %s488 = scalar_lea.vmem %s4, %s487
      // Predicated region
      $region37: #{shrinknet_forward.16} parent=35 // pred_check
        %p489 = pneg %p122
      $region38: #{shrinknet_forward.16} parent=35 // pred_check_branch
        %491 = sbr.rel (%p489) target = $region40
      $region39: #{shrinknet_forward.16} parent=35 // pred_region
        %s492 = smul.u32 2, %s15
      $region40: #{shrinknet_forward.16} parent=35 // pred_fallthru
        _
    $region36: #{shrinknet_forward.16} parent=5 // pred_fallthru
      _
    %p493 = scmp.le.s32.totalorder 2, %s10
    // Predicated region
    $region41: #{shrinknet_forward.16} parent=5 // pred_check
      %p494 = pneg %p493
    $region42: #{shrinknet_forward.16} parent=5 // pred_check_branch
      %496 = sbr.rel (%p494) target = $region44
    $region43: #{shrinknet_forward.16} parent=5 // pred_region
      %s497 = ssub.s32 %s10, 2
      // Predicated region
      $region45: #{shrinknet_forward.16} parent=43 // pred_check
        %p498 = pneg %p128
      $region46: #{shrinknet_forward.16} parent=43 // pred_check_branch
        %500 = sbr.rel (%p498) target = $region48
      $region47: #{shrinknet_forward.16} parent=43 // pred_region
        %s501 = smul.u32 2, %s16
        %p502 = scmp.lt.s32.totalorder %s501, 3
        %s503 = scalar_select %p502, %s501, 3
        %s504 = smul.addr %s503, 4
        %s505 = scalar_lea.vmem %s4, %s504
      $region48: #{shrinknet_forward.16} parent=43 // pred_fallthru
        _
    $region44: #{shrinknet_forward.16} parent=5 // pred_fallthru
      _
  $region6: #{shrinknet_forward.16} parent=0 // loop_footer
    %s14 = sadd.s32 1, %s10
  $region7: #{shrinknet_forward.16} parent=0 // loop_footer_branch
    %9 = sbr.rel target = $region3
  $region8: #{shrinknet_forward.16} parent=0 // loop_exit
    _

// kernel: shrinknet_forward.19
$region0: #{shrinknet_forward.19}
  #allocation0 [shape = 'u32[]', space=smem, size = 0x4, offset = 0x4, fixed_abs, tag = 'smem constant byte address 0x4 - core index']
  #allocation1 [shape = 'u32[144,128]{1,0:T(1,128)}', space=vmem, size = 0x12000, scoped, tag = 'internal scratch']
  %s0 = inlined_call_operand.vmem [shape: bf16[2,16,128], index: 0, kind: input, shape index: {}]
  %s1 = inlined_call_operand.vmem [shape: f32[128,128], index: 1, kind: input, shape index: {}]
  %s2 = inlined_call_operand.vmem [shape: f32[1,128], index: 2, kind: input, shape index: {}]
  %s3 = inlined_call_operand.hbm [shape: f32[2,128], index: 3, kind: output, shape index: {}]
  %s4 = sld [smem:[#allocation0]]
  $region22: #{shrinknet_forward.19} parent=0
    _
  %s6 = ssub.s32 1, %s4
  %s7 = scalar_select 0, %s6, %s4
  $region1: #{shrinknet_forward.19} parent=0
    #allocation2 [shape = 'u8[1024]{0}', space=vmem, size = 0x400, scoped, tag = 'output window, operand 0, single buffered']
    #allocation3 [shape = 's32[1]{0}', space=sflag, size = 0x4, scoped, tag = 'scoped memory for shrinknet_forward.19']
    %8 = vsyncpa [#allocation3], 0
    // Predicated region
    $region2: #{shrinknet_forward.19} parent=1 // pred_check
      _
    $region3: #{shrinknet_forward.19} parent=1 // pred_check_branch
      %10 = sbr.rel (0) target = $region5
    $region4: #{shrinknet_forward.19} parent=1 // pred_region
      _
    $region5: #{shrinknet_forward.19} parent=1 // pred_fallthru
      _
    // Predicated region
    $region6: #{shrinknet_forward.19} parent=1 // pred_check
      _
    $region7: #{shrinknet_forward.19} parent=1 // pred_check_branch
      %12 = sbr.rel (0) target = $region9
    $region8: #{shrinknet_forward.19} parent=1 // pred_region
      _
    $region9: #{shrinknet_forward.19} parent=1 // pred_fallthru
      _
    // Predicated region
    $region10: #{shrinknet_forward.19} parent=1 // pred_check
      _
    $region11: #{shrinknet_forward.19} parent=1 // pred_check_branch
      %14 = sbr.rel (0) target = $region13
    $region12: #{shrinknet_forward.19} parent=1 // pred_region
      _
    $region13: #{shrinknet_forward.19} parent=1 // pred_fallthru
      _
    %v15 = vld [vmem:[%s0] sm:$0xf]
    %v16 = vld [vmem:[%s0 + $0x4] sm:$0xf]
    %v17 = vld [vmem:[%s0 + $0x8] sm:$0xf]
    %v18 = vld [vmem:[%s0 + $0xc] sm:$0xf]
    %v19 = vunpack.c.l.bf16 %v15
    %v20 = vunpack.c.l.bf16 %v16
    %v21 = vunpack.c.l.bf16 %v17
    %v22 = vunpack.c.l.bf16 %v18
    %v23 = vadd.f32 %v19, %v20
    %v24 = vrot.slane %v23, 4
    %v25 = vadd.f32 %v23, %v24
    %v26 = vrot.slane %v25, 2
    %v27 = vadd.f32 %v25, %v26
    %v28 = vrot.slane %v27, 1
    %v29 = vadd.f32 %v27, %v28
    %v30 = vadd.f32 %v21, %v22
    %v31 = vrot.slane %v30, 4
    %v32 = vadd.f32 %v30, %v31
    %v33 = vrot.slane %v32, 2
    %v34 = vadd.f32 %v32, %v33
    %v35 = vrot.slane %v34, 1
    %v36 = vadd.f32 %v34, %v35
    %v37 = vrcp.pop 16.0
    %v38 = vmul.f32 %v29, %v37
    %v39 = vmul.f32 %v36, %v37
    %v40 = vld [vmem:[%s1] sm:$0xff]
    %v41 = vld [vmem:[%s1 + $0x8] sm:$0xff]
    %v42 = vld [vmem:[%s1 + $0x10] sm:$0xff]
    %v43 = vld [vmem:[%s1 + $0x18] sm:$0xff]
    %v44 = vld [vmem:[%s1 + $0x20] sm:$0xff]
    %v45 = vld [vmem:[%s1 + $0x28] sm:$0xff]
    %v46 = vld [vmem:[%s1 + $0x30] sm:$0xff]
    %v47 = vld [vmem:[%s1 + $0x38] sm:$0xff]
    %v48 = vld [vmem:[%s1 + $0x40] sm:$0xff]
    %v49 = vld [vmem:[%s1 + $0x48] sm:$0xff]
    %v50 = vld [vmem:[%s1 + $0x50] sm:$0xff]
    %v51 = vld [vmem:[%s1 + $0x58] sm:$0xff]
    %v52 = vld [vmem:[%s1 + $0x60] sm:$0xff]
    %v53 = vld [vmem:[%s1 + $0x68] sm:$0xff]
    %v54 = vld [vmem:[%s1 + $0x70] sm:$0xff]
    %v55 = vld [vmem:[%s1 + $0x78] sm:$0xff]
    %v56 = vld [vmem:[%s2] sm:$0x1]
    %v58 = vlaneseq
    %v59 = vshrl.u32 %v58, 7
    %v60 = vsub.s32 0, %v59
    %v61 = vrot.slane %v56, %v60
    %vm65 = vcmask 1041409
    %v66 = vsel %vm65, %v39, %v38
    %68 = vmatprep.subr.mxu0 0.0
    %69 = vmatpush1.msra.mxu0 %v40
    %70 = vmatprep.subr.mxu0 0.0
    %71 = vmatpush1.msra.mxu0 %v41
    %72 = vmatprep.subr.mxu0 0.0
    %73 = vmatpush1.msra.mxu0 %v42
    %74 = vmatprep.subr.mxu0 0.0
    %75 = vmatpush1.msra.mxu0 %v43
    %76 = vmatprep.subr.mxu0 0.0
    %77 = vmatpush1.msra.mxu0 %v44
    %78 = vmatprep.subr.mxu0 0.0
    %79 = vmatpush1.msra.mxu0 %v45
    %80 = vmatprep.subr.mxu0 0.0
    %81 = vmatpush1.msra.mxu0 %v46
    %82 = vmatprep.subr.mxu0 0.0
    %83 = vmatpush1.msra.mxu0 %v47
    %84 = vmatprep.subr.mxu0 0.0
    %85 = vmatpush1.msra.mxu0 %v48
    %86 = vmatprep.subr.mxu0 0.0
    %87 = vmatpush1.msra.mxu0 %v49
    %88 = vmatprep.subr.mxu0 0.0
    %89 = vmatpush1.msra.mxu0 %v50
    %90 = vmatprep.subr.mxu0 0.0
    %91 = vmatpush1.msra.mxu0 %v51
    %92 = vmatprep.subr.mxu0 0.0
    %93 = vmatpush1.msra.mxu0 %v52
    %94 = vmatprep.subr.mxu0 0.0
    %95 = vmatpush1.msra.mxu0 %v53
    %96 = vmatprep.subr.mxu0 0.0
    %97 = vmatpush1.msra.mxu0 %v54
    %98 = vmatprep.subr.mxu0 0.0
    %99 = vmatpush1.msra.mxu0 %v55
    %100 = vmatprep.subr.mxu0 0.0
    %101 = vmatpush1.msra.mxu0 0.0
    %102 = vmatprep.subr.mxu0 0.0
    %103 = vmatpush1.msra.mxu0 0.0
    %104 = vmatprep.subr.mxu0 0.0
    %105 = vmatpush1.msra.mxu0 0.0
    %106 = vmatprep.subr.mxu0 0.0
    %107 = vmatpush1.msra.mxu0 0.0
    %108 = vmatprep.subr.mxu0 0.0
    %109 = vmatpush1.msra.mxu0 0.0
    %110 = vmatprep.subr.mxu0 0.0
    %111 = vmatpush1.msra.mxu0 0.0
    %112 = vmatprep.subr.mxu0 0.0
    %113 = vmatpush1.msra.mxu0 0.0
    %114 = vmatprep.subr.mxu0 0.0
    %115 = vmatpush1.msra.mxu0 0.0
    %116 = vmatprep.subr.mxu0 0.0
    %117 = vmatpush1.msra.mxu0 0.0
    %118 = vmatprep.subr.mxu0 0.0
    %119 = vmatpush1.msra.mxu0 0.0
    %120 = vmatprep.subr.mxu0 0.0
    %121 = vmatpush1.msra.mxu0 0.0
    %122 = vmatprep.subr.mxu0 0.0
    %123 = vmatpush1.msra.mxu0 0.0
    %124 = vmatprep.subr.mxu0 0.0
    %125 = vmatpush1.msra.mxu0 0.0
    %126 = vmatprep.subr.mxu0 0.0
    %127 = vmatpush1.msra.mxu0 0.0
    %128 = vmatprep.subr.mxu0 0.0
    %129 = vmatpush1.msra.mxu0 0.0
    %130 = vmatprep.subr.mxu0 0.0
    %131 = vmatpush1.msra.mxu0 0.0
    %132 = vmatprep.mubr.f32.mxu0 0.0
    %133 = vmatmul.mubr.f32.gmra.mrb[0].mxu0 %v66
    %v134 = vpop.f32.mrb[0].mxu0
    %v135 = vadd.f32 %v61, %v134
    %v136 = vpop.f32.mrb[0].mxu0
    %137 = vdwg.mxu0
    %138 = vst [vmem:[#allocation2] sm:$0x3] %v135
    // Predicated region
    $region14: #{shrinknet_forward.19} parent=1 // pred_check
      _
    $region15: #{shrinknet_forward.19} parent=1 // pred_check_branch
      %140 = sbr.rel (0) target = $region17
    $region16: #{shrinknet_forward.19} parent=1 // pred_region
      %s142 = ssub.s32 32, 32
      %143 = vsyncadd [#allocation3], %s142
      %s145 = sshll.u32 [#allocation2], 4
      %s146 = int_to_ptr.vmem [resolvable:$true] %s145
      %148 = dma.vmem_to_hbm [thread:$0]  %s146, 32, %s3, [#allocation3]
    $region17: #{shrinknet_forward.19} parent=1 // pred_fallthru
      _
    // Predicated region
    $region18: #{shrinknet_forward.19} parent=1 // pred_check
      _
    $region19: #{shrinknet_forward.19} parent=1 // pred_check_branch
      %150 = sbr.rel (0) target = $region21
    $region20: #{shrinknet_forward.19} parent=1 // pred_region
      %151 = dma.done [#allocation3], 32
    $region21: #{shrinknet_forward.19} parent=1 // pred_fallthru
      _
    %152 = vsyncpa [#allocation3], 1

// kernel: shrinknet_forward.18
$region0: #{shrinknet_forward.18}
  #allocation0 [shape = 'u32[]', space=smem, size = 0x4, offset = 0x4, fixed_abs, tag = 'smem constant byte address 0x4 - core index']
  #allocation1 [shape = 'u32[144,128]{1,0:T(1,128)}', space=vmem, size = 0x12000, scoped, tag = 'internal scratch']
  %s0 = inlined_call_operand.vmem [shape: bf16[32,576], index: 0, kind: input, shape index: {}]
  %s1 = inlined_call_operand.vmem [shape: bf16[576,128], index: 1, kind: input, shape index: {}]
  %s2 = inlined_call_operand.vmem [shape: f32[1,128], index: 2, kind: input, shape index: {}]
  %s3 = inlined_call_operand.vmem [shape: f32[1,128], index: 3, kind: input, shape index: {}]
  %s4 = inlined_call_operand.vmem [shape: bf16[32,128], index: 4, kind: input, shape index: {}]
  %s5 = inlined_call_operand.vmem [shape: bf16[32,128], index: 5, kind: output, shape index: {}]
  %s6 = sld [smem:[#allocation0]]
  $region53: #{shrinknet_forward.18} parent=0
    _
  %s8 = ssub.s32 1, %s6
  %s9 = scalar_select 0, %s8, %s6
  loop: start=0, step=1, limit=4
  $region2: #{shrinknet_forward.18} parent=0 // loop_pre_header
    _
  $region3: #{shrinknet_forward.18} parent=0 // loop_header
    %s11 = sphi 0, %s15
    %p12 = scmp.ge.s32.totalorder %s11, 4
    %s21 = sphi 0, %s23
    %s24 = sphi 0, %s21
    %s25 = sphi 0, %s24
    %s41 = sphi 0, %s25
    %s45 = sphi 0, %s45
    %s47 = sphi 0, %s45
    %s48 = sphi 0, %s47
    %s62 = sphi 0, %s48
    %s66 = sphi 0, %s66
    %s68 = sphi 0, %s66
    %s69 = sphi 0, %s68
    %s83 = sphi 0, %s69
    %s87 = sphi 0, %s87
    %s89 = sphi 0, %s87
    %s90 = sphi 0, %s89
    %s104 = sphi 0, %s90
    %s110 = sphi 0, %s112
    %s113 = sphi 0, %s110
    %s114 = sphi 0, %s113
    %s130 = sphi 0, %s114
    %s136 = sphi 0, %s138
    %s139 = sphi 0, %s136
    %s140 = sphi 0, %s139
    %s156 = sphi 0, %s140
  $region4: #{shrinknet_forward.18} parent=0 // loop_header_branch
    %14 = sbr.rel (%p12) target = $region8
  $region5: #{shrinknet_forward.18} parent=0 // loop_body
    %s16 = ssub.s32 %s11, 1
    %s17 = ssub.s32 %s11, 2
    %s18 = sadd.s32 %s11, 1
    %s19 = ssub.s32 %s11, %s18
    %p20 = scmp.eq.s32.totalorder %s19, 0
    %s22 = sadd.s32 %s21, 1
    %s23 = scalar_select %p20, %s21, %s22
    %p26 = pneg %p20
    %p27 = scmp.eq.s32.totalorder %s11, 1
    %p28 = por %p26, %p27
    %p29 = scmp.ne.s32.totalorder %s21, %s24
    %p30 = scmp.eq.s32.totalorder %s11, 0
    %p31 = por %p29, %p30
    %p32 = scmp.ne.s32.totalorder %s21, %s24
    %p33 = scmp.eq.s32.totalorder %s16, 1
    %p34 = por %p32, %p33
    %p35 = scmp.ne.s32.totalorder %s24, %s25
    %p36 = scmp.eq.s32.totalorder %s16, 0
    %p37 = por %p35, %p36
    %p38 = scmp.ne.s32.totalorder %s24, %s25
    %p39 = scmp.eq.s32.totalorder %s17, 1
    %p40 = por %p38, %p39
    %p42 = scmp.ne.s32.totalorder %s25, %s41
    %p43 = scmp.eq.s32.totalorder %s17, 0
    %p44 = por %p42, %p43
    %s46 = sadd.s32 %s45, 1
    %p49 = scmp.eq.s32.totalorder %s11, 1
    %p50 = scmp.ne.s32.totalorder %s45, %s47
    %p51 = scmp.eq.s32.totalorder %s11, 0
    %p52 = por %p50, %p51
    %p53 = scmp.ne.s32.totalorder %s45, %s47
    %p54 = scmp.eq.s32.totalorder %s16, 1
    %p55 = por %p53, %p54
    %p56 = scmp.ne.s32.totalorder %s47, %s48
    %p57 = scmp.eq.s32.totalorder %s16, 0
    %p58 = por %p56, %p57
    %p59 = scmp.ne.s32.totalorder %s47, %s48
    %p60 = scmp.eq.s32.totalorder %s17, 1
    %p61 = por %p59, %p60
    %p63 = scmp.ne.s32.totalorder %s48, %s62
    %p64 = scmp.eq.s32.totalorder %s17, 0
    %p65 = por %p63, %p64
    %s67 = sadd.s32 %s66, 1
    %p70 = scmp.eq.s32.totalorder %s11, 1
    %p71 = scmp.ne.s32.totalorder %s66, %s68
    %p72 = scmp.eq.s32.totalorder %s11, 0
    %p73 = por %p71, %p72
    %p74 = scmp.ne.s32.totalorder %s66, %s68
    %p75 = scmp.eq.s32.totalorder %s16, 1
    %p76 = por %p74, %p75
    %p77 = scmp.ne.s32.totalorder %s68, %s69
    %p78 = scmp.eq.s32.totalorder %s16, 0
    %p79 = por %p77, %p78
    %p80 = scmp.ne.s32.totalorder %s68, %s69
    %p81 = scmp.eq.s32.totalorder %s17, 1
    %p82 = por %p80, %p81
    %p84 = scmp.ne.s32.totalorder %s69, %s83
    %p85 = scmp.eq.s32.totalorder %s17, 0
    %p86 = por %p84, %p85
    %s88 = sadd.s32 %s87, 1
    %p91 = scmp.eq.s32.totalorder %s11, 1
    %p92 = scmp.ne.s32.totalorder %s87, %s89
    %p93 = scmp.eq.s32.totalorder %s11, 0
    %p94 = por %p92, %p93
    %p95 = scmp.ne.s32.totalorder %s87, %s89
    %p96 = scmp.eq.s32.totalorder %s16, 1
    %p97 = por %p95, %p96
    %p98 = scmp.ne.s32.totalorder %s89, %s90
    %p99 = scmp.eq.s32.totalorder %s16, 0
    %p100 = por %p98, %p99
    %p101 = scmp.ne.s32.totalorder %s89, %s90
    %p102 = scmp.eq.s32.totalorder %s17, 1
    %p103 = por %p101, %p102
    %p105 = scmp.ne.s32.totalorder %s90, %s104
    %p106 = scmp.eq.s32.totalorder %s17, 0
    %p107 = por %p105, %p106
    %s108 = ssub.s32 %s11, %s18
    %p109 = scmp.eq.s32.totalorder %s108, 0
    %s111 = sadd.s32 %s110, 1
    %s112 = scalar_select %p109, %s110, %s111
    %p115 = pneg %p109
    %p116 = scmp.eq.s32.totalorder %s11, 1
    %p117 = por %p115, %p116
    %p118 = scmp.ne.s32.totalorder %s110, %s113
    %p119 = scmp.eq.s32.totalorder %s11, 0
    %p120 = por %p118, %p119
    %p121 = scmp.ne.s32.totalorder %s110, %s113
    %p122 = scmp.eq.s32.totalorder %s16, 1
    %p123 = por %p121, %p122
    %p124 = scmp.ne.s32.totalorder %s113, %s114
    %p125 = scmp.eq.s32.totalorder %s16, 0
    %p126 = por %p124, %p125
    %p127 = scmp.ne.s32.totalorder %s113, %s114
    %p128 = scmp.eq.s32.totalorder %s17, 1
    %p129 = por %p127, %p128
    %p131 = scmp.ne.s32.totalorder %s114, %s130
    %p132 = scmp.eq.s32.totalorder %s17, 0
    %p133 = por %p131, %p132
    %s134 = ssub.s32 %s11, %s18
    %p135 = scmp.eq.s32.totalorder %s134, 0
    %s137 = sadd.s32 %s136, 1
    %s138 = scalar_select %p135, %s136, %s137
    %p141 = pneg %p135
    %p142 = scmp.eq.s32.totalorder %s11, 1
    %p143 = por %p141, %p142
    %p144 = scmp.ne.s32.totalorder %s136, %s139
    %p145 = scmp.eq.s32.totalorder %s11, 0
    %p146 = por %p144, %p145
    %p147 = scmp.ne.s32.totalorder %s136, %s139
    %p148 = scmp.eq.s32.totalorder %s16, 1
    %p149 = por %p147, %p148
    %p150 = scmp.ne.s32.totalorder %s139, %s140
    %p151 = scmp.eq.s32.totalorder %s16, 0
    %p152 = por %p150, %p151
    %p153 = scmp.ne.s32.totalorder %s139, %s140
    %p154 = scmp.eq.s32.totalorder %s17, 1
    %p155 = por %p153, %p154
    %p157 = scmp.ne.s32.totalorder %s140, %s156
    %p158 = scmp.eq.s32.totalorder %s17, 0
    %p159 = por %p157, %p158
    %p160 = scmp.le.s32.totalorder 1, %s11
    %p161 = scmp.lt.s32.totalorder %s11, 3
    %p162 = pnand %p160, %p161
    %p163 = pneg %p162
    // Predicated region
    $region9: #{shrinknet_forward.18} parent=5 // pred_check
      _
    $region10: #{shrinknet_forward.18} parent=5 // pred_check_branch
      %165 = sbr.rel (%p162) target = $region12
    $region11: #{shrinknet_forward.18} parent=5 // pred_region
      %s166 = ssub.s32 %s11, 1
      // Predicated region
      $region13: #{shrinknet_forward.18} parent=11 // pred_check
        %p167 = pneg %p58
      $region14: #{shrinknet_forward.18} parent=11 // pred_check_branch
        %169 = sbr.rel (%p167) target = $region16
      $region15: #{shrinknet_forward.18} parent=11 // pred_region
        _
      $region16: #{shrinknet_forward.18} parent=11 // pred_fallthru
        _
      // Predicated region
      $region17: #{shrinknet_forward.18} parent=11 // pred_check
        %p170 = pneg %p79
      $region18: #{shrinknet_forward.18} parent=11 // pred_check_branch
        %172 = sbr.rel (%p170) target = $region20
      $region19: #{shrinknet_forward.18} parent=11 // pred_region
        _
      $region20: #{shrinknet_forward.18} parent=11 // pred_fallthru
        _
      // Predicated region
      $region21: #{shrinknet_forward.18} parent=11 // pred_check
        %p173 = pneg %p100
      $region22: #{shrinknet_forward.18} parent=11 // pred_check_branch
        %175 = sbr.rel (%p173) target = $region24
      $region23: #{shrinknet_forward.18} parent=11 // pred_region
        _
      $region24: #{shrinknet_forward.18} parent=11 // pred_fallthru
        _
    $region12: #{shrinknet_forward.18} parent=5 // pred_fallthru
      _
    %p176 = scmp.lt.s32.totalorder %s11, 2
    // Predicated region
    $region25: #{shrinknet_forward.18} parent=5 // pred_check
      %p177 = pneg %p176
    $region26: #{shrinknet_forward.18} parent=5 // pred_check_branch
      %179 = sbr.rel (%p177) target = $region28
    $region27: #{shrinknet_forward.18} parent=5 // pred_region
      // Predicated region
      $region29: #{shrinknet_forward.18} parent=27 // pred_check
        %p180 = pneg %p31
      $region30: #{shrinknet_forward.18} parent=27 // pred_check_branch
        %182 = sbr.rel (%p180) target = $region32
      $region31: #{shrinknet_forward.18} parent=27 // pred_region
        %s183 = smul.u32 2, %s11
        %p184 = scmp.lt.s32.totalorder %s183, 3
        %s185 = scalar_select %p184, %s183, 3
        %s186 = smul.addr %s185, 5
        %s187 = smul.addr %s186, 4
        %s188 = scalar_lea.vmem %s0, %s187
        %s189 = smul.u32 2, %s11
      $region32: #{shrinknet_forward.18} parent=27 // pred_fallthru
        _
      // Predicated region
      $region33: #{shrinknet_forward.18} parent=27 // pred_check
        %p190 = pneg %p120
      $region34: #{shrinknet_forward.18} parent=27 // pred_check_branch
        %192 = sbr.rel (%p190) target = $region36
      $region35: #{shrinknet_forward.18} parent=27 // pred_region
        %s193 = smul.u32 2, %s11
        %p194 = scmp.lt.s32.totalorder %s193, 3
        %s195 = scalar_select %p194, %s193, 3
        %s196 = smul.addr %s195, 4
        %s197 = scalar_lea.vmem %s4, %s196
        %s198 = smul.u32 2, %s11
      $region36: #{shrinknet_forward.18} parent=27 // pred_fallthru
        _
    $region28: #{shrinknet_forward.18} parent=5 // pred_fallthru
      _
    %p199 = scmp.le.s32.totalorder 1, %s11
    %p200 = scmp.lt.s32.totalorder %s11, 3
    %p201 = pnand %p199, %p200
    %p202 = pneg %p201
    // Predicated region
    $region37: #{shrinknet_forward.18} parent=5 // pred_check
      _
    $region38: #{shrinknet_forward.18} parent=5 // pred_check_branch
      %204 = sbr.rel (%p201) target = $region40
    $region39: #{shrinknet_forward.18} parent=5 // pred_region
      %s205 = ssub.s32 %s11, 1
      %s206 = smul.u32 2, %s16
      %p207 = scmp.lt.s32.totalorder %s206, 3
      %s208 = scalar_select %p207, %s206, 3
      %s209 = smul.addr %s208, 5
      %s210 = smul.addr %s209, 4
      %s211 = scalar_lea.vmem %s0, %s210
      %p212 = pneg %p37
      %p213 = pneg %p34
      %p214 = pneg %p58
      %p215 = pneg %p55
      %p216 = pneg %p79
      %p217 = pneg %p76
      %p218 = pneg %p100
      %p219 = pneg %p97
      %s220 = smul.u32 2, %s16
      %p221 = scmp.lt.s32.totalorder %s220, 3
      %s222 = scalar_select %p221, %s220, 3
      %s223 = smul.addr %s222, 4
      %s224 = scalar_lea.vmem %s4, %s223
      %p225 = pneg %p126
      %p226 = pneg %p123
      %p227 = pneg %p152
      %p228 = pneg %p149
      %s229 = smul.u32 2, %s16
      %p230 = scmp.lt.s32.totalorder %s229, 3
      %s231 = scalar_select %p230, %s229, 3
      %s232 = smul.addr %s231, 4
      %s233 = scalar_lea.vmem %s5, %s232
      %s234 = smul.u32 2, %s16
      %p235 = scmp.lt.s32.totalorder %s234, 3
      %s236 = scalar_select %p235, %s234, 3
      %s237 = smul.addr %s236, 5
      %s238 = smul.addr %s237, 4
      %s239 = scalar_lea.vmem %s0, %s238
      %s240 = smul.u32 2, %s16
      %s241 = smul.u32 2, %s16
      %p242 = scmp.lt.s32.totalorder %s241, 3
      %s243 = scalar_select %p242, %s241, 3
      %s244 = smul.addr %s243, 4
      %s245 = scalar_lea.vmem %s4, %s244
      %s246 = smul.u32 2, %s16
      %s247 = smul.u32 2, %s16
      %p248 = scmp.lt.s32.totalorder %s247, 3
      %s249 = scalar_select %p248, %s247, 3
      %s250 = smul.addr %s249, 4
      %s251 = scalar_lea.vmem %s5, %s250
      %s252 = smul.u32 2, %s16
      %v254 = vld [vmem:[%s239] sm:$0xff]
      %v255 = vld [vmem:[%s239 + $0x8] sm:$0xff]
      %v256 = vld [vmem:[%s239 + $0x10] sm:$0xf]
      %v257 = vld [vmem:[%s239 + $0x14] sm:$0xff]
      %v258 = vld [vmem:[%s239 + $0x1c] sm:$0xff]
      %v259 = vld [vmem:[%s239 + $0x24] sm:$0xf]
      %v260 = vld [vmem:[%s1] sm:$0xf]
      %v261 = vld [vmem:[%s1 + $0x4] sm:$0xf]
      %v262 = vld [vmem:[%s1 + $0x8] sm:$0xf]
      %v263 = vld [vmem:[%s1 + $0xc] sm:$0xf]
      %v264 = vld [vmem:[%s1 + $0x10] sm:$0xf]
      %v265 = vld [vmem:[%s1 + $0x14] sm:$0xf]
      %v266 = vld [vmem:[%s1 + $0x18] sm:$0xf]
      %v267 = vld [vmem:[%s1 + $0x1c] sm:$0xf]
      %v268 = vld [vmem:[%s1 + $0x20] sm:$0xf]
      %v269 = vld [vmem:[%s1 + $0x24] sm:$0xf]
      %v270 = vld [vmem:[%s1 + $0x28] sm:$0xf]
      %v271 = vld [vmem:[%s1 + $0x2c] sm:$0xf]
      %v272 = vld [vmem:[%s1 + $0x30] sm:$0xf]
      %v273 = vld [vmem:[%s1 + $0x34] sm:$0xf]
      %v274 = vld [vmem:[%s1 + $0x38] sm:$0xf]
      %v275 = vld [vmem:[%s1 + $0x3c] sm:$0xf]
      %v276 = vld [vmem:[%s1 + $0x40] sm:$0xf]
      %v277 = vld [vmem:[%s1 + $0x44] sm:$0xf]
      %v278 = vld [vmem:[%s1 + $0x48] sm:$0xf]
      %v279 = vld [vmem:[%s1 + $0x4c] sm:$0xf]
      %v280 = vld [vmem:[%s1 + $0x50] sm:$0xf]
      %v281 = vld [vmem:[%s1 + $0x54] sm:$0xf]
      %v282 = vld [vmem:[%s1 + $0x58] sm:$0xf]
      %v283 = vld [vmem:[%s1 + $0x5c] sm:$0xf]
      %v284 = vld [vmem:[%s1 + $0x60] sm:$0xf]
      %v285 = vld [vmem:[%s1 + $0x64] sm:$0xf]
      %v286 = vld [vmem:[%s1 + $0x68] sm:$0xf]
      %v287 = vld [vmem:[%s1 + $0x6c] sm:$0xf]
      %v288 = vld [vmem:[%s1 + $0x70] sm:$0xf]
      %v289 = vld [vmem:[%s1 + $0x74] sm:$0xf]
      %v290 = vld [vmem:[%s1 + $0x78] sm:$0xf]
      %v291 = vld [vmem:[%s1 + $0x7c] sm:$0xf]
      %v292 = vld [vmem:[%s1 + $0x80] sm:$0xf]
      %v293 = vld [vmem:[%s1 + $0x84] sm:$0xf]
      %v294 = vld [vmem:[%s1 + $0x88] sm:$0xf]
      %v295 = vld [vmem:[%s1 + $0x8c] sm:$0xf]
      %v296 = vld [vmem:[%s1 + $0x90] sm:$0xf]
      %v297 = vld [vmem:[%s1 + $0x94] sm:$0xf]
      %v298 = vld [vmem:[%s1 + $0x98] sm:$0xf]
      %v299 = vld [vmem:[%s1 + $0x9c] sm:$0xf]
      %v300 = vld [vmem:[%s1 + $0xa0] sm:$0xf]
      %v301 = vld [vmem:[%s1 + $0xa4] sm:$0xf]
      %v302 = vld [vmem:[%s1 + $0xa8] sm:$0xf]
      %v303 = vld [vmem:[%s1 + $0xac] sm:$0xf]
      %v304 = vld [vmem:[%s1 + $0xb0] sm:$0xf]
      %v305 = vld [vmem:[%s1 + $0xb4] sm:$0xf]
      %v306 = vld [vmem:[%s1 + $0xb8] sm:$0xf]
      %v307 = vld [vmem:[%s1 + $0xbc] sm:$0xf]
      %v308 = vld [vmem:[%s1 + $0xc0] sm:$0xf]
      %v309 = vld [vmem:[%s1 + $0xc4] sm:$0xf]
      %v310 = vld [vmem:[%s1 + $0xc8] sm:$0xf]
      %v311 = vld [vmem:[%s1 + $0xcc] sm:$0xf]
      %v312 = vld [vmem:[%s1 + $0xd0] sm:$0xf]
      %v313 = vld [vmem:[%s1 + $0xd4] sm:$0xf]
      %v314 = vld [vmem:[%s1 + $0xd8] sm:$0xf]
      %v315 = vld [vmem:[%s1 + $0xdc] sm:$0xf]
      %v316 = vld [vmem:[%s1 + $0xe0] sm:$0xf]
      %v317 = vld [vmem:[%s1 + $0xe4] sm:$0xf]
      %v318 = vld [vmem:[%s1 + $0xe8] sm:$0xf]
      %v319 = vld [vmem:[%s1 + $0xec] sm:$0xf]
      %v320 = vld [vmem:[%s1 + $0xf0] sm:$0xf]
      %v321 = vld [vmem:[%s1 + $0xf4] sm:$0xf]
      %v322 = vld [vmem:[%s1 + $0xf8] sm:$0xf]
      %v323 = vld [vmem:[%s1 + $0xfc] sm:$0xf]
      %v324 = vld [vmem:[%s1 + $0x100] sm:$0xf]
      %v325 = vld [vmem:[%s1 + $0x104] sm:$0xf]
      %v326 = vld [vmem:[%s1 + $0x108] sm:$0xf]
      %v327 = vld [vmem:[%s1 + $0x10c] sm:$0xf]
      %v328 = vld [vmem:[%s1 + $0x110] sm:$0xf]
      %v329 = vld [vmem:[%s1 + $0x114] sm:$0xf]
      %v330 = vld [vmem:[%s1 + $0x118] sm:$0xf]
      %v331 = vld [vmem:[%s1 + $0x11c] sm:$0xf]
      %v338 = vunpack.c.l.b16 %v254
      %v339 = vunpack.c.h.b16 %v254
      %v340 = vunpack.c.l.b16 %v255
      %v341 = vunpack.c.h.b16 %v255
      %v342 = vunpack.c.l.b16 %v256
      %v343 = vunpack.c.l.b16 %v257
      %v344 = vunpack.c.h.b16 %v257
      %v345 = vunpack.c.l.b16 %v258
      %v346 = vunpack.c.h.b16 %v258
      %v347 = vunpack.c.l.b16 %v259
      %v348 = vpack.c.b16 %v343, %v338
      %v349 = vpack.c.b16 %v344, %v339
      %v350 = vpack.c.b16 %v345, %v340
      %v351 = vpack.c.b16 %v346, %v341
      %v352 = vpack.c.b16 %v347, %v342
      %v429 = vunpack.c.l.b16 %v260
      %v430 = vunpack.c.l.b16 %v261
      %v431 = vunpack.c.l.b16 %v262
      %v432 = vunpack.c.l.b16 %v263
      %v433 = vunpack.c.l.b16 %v264
      %v434 = vunpack.c.l.b16 %v265
      %v435 = vunpack.c.l.b16 %v266
      %v436 = vunpack.c.l.b16 %v267
      %v437 = vunpack.c.l.b16 %v268
      %v438 = vunpack.c.l.b16 %v269
      %v439 = vunpack.c.l.b16 %v270
      %v440 = vunpack.c.l.b16 %v271
      %v441 = vunpack.c.l.b16 %v272
      %v442 = vunpack.c.l.b16 %v273
      %v443 = vunpack.c.l.b16 %v274
      %v444 = vunpack.c.l.b16 %v275
      %v445 = vunpack.c.l.b16 %v276
      %v446 = vunpack.c.l.b16 %v277
      %v447 = vunpack.c.l.b16 %v278
      %v448 = vunpack.c.l.b16 %v279
      %v449 = vunpack.c.l.b16 %v280
      %v450 = vunpack.c.l.b16 %v281
      %v451 = vunpack.c.l.b16 %v282
      %v452 = vunpack.c.l.b16 %v283
      %v453 = vunpack.c.l.b16 %v284
      %v454 = vunpack.c.l.b16 %v285
      %v455 = vunpack.c.l.b16 %v286
      %v456 = vunpack.c.l.b16 %v287
      %v457 = vunpack.c.l.b16 %v288
      %v458 = vunpack.c.l.b16 %v289
      %v459 = vunpack.c.l.b16 %v290
      %v460 = vunpack.c.l.b16 %v291
      %v461 = vunpack.c.l.b16 %v292
      %v462 = vunpack.c.l.b16 %v293
      %v463 = vunpack.c.l.b16 %v294
      %v464 = vunpack.c.l.b16 %v295
      %v465 = vunpack.c.l.b16 %v296
      %v466 = vunpack.c.l.b16 %v297
      %v467 = vunpack.c.l.b16 %v298
      %v468 = vunpack.c.l.b16 %v299
      %v469 = vunpack.c.l.b16 %v300
      %v470 = vunpack.c.l.b16 %v301
      %v471 = vunpack.c.l.b16 %v302
      %v472 = vunpack.c.l.b16 %v303
      %v473 = vunpack.c.l.b16 %v304
      %v474 = vunpack.c.l.b16 %v305
      %v475 = vunpack.c.l.b16 %v306
      %v476 = vunpack.c.l.b16 %v307
      %v477 = vunpack.c.l.b16 %v308
      %v478 = vunpack.c.l.b16 %v309
      %v479 = vunpack.c.l.b16 %v310
      %v480 = vunpack.c.l.b16 %v311
      %v481 = vunpack.c.l.b16 %v312
      %v482 = vunpack.c.l.b16 %v313
      %v483 = vunpack.c.l.b16 %v314
      %v484 = vunpack.c.l.b16 %v315
      %v485 = vunpack.c.l.b16 %v316
      %v486 = vunpack.c.l.b16 %v317
      %v487 = vunpack.c.l.b16 %v318
      %v488 = vunpack.c.l.b16 %v319
      %v489 = vunpack.c.l.b16 %v320
      %v490 = vunpack.c.l.b16 %v321
      %v491 = vunpack.c.l.b16 %v322
      %v492 = vunpack.c.l.b16 %v323
      %v493 = vunpack.c.l.b16 %v324
      %v494 = vunpack.c.l.b16 %v325
      %v495 = vunpack.c.l.b16 %v326
      %v496 = vunpack.c.l.b16 %v327
      %v497 = vunpack.c.l.b16 %v328
      %v498 = vunpack.c.l.b16 %v329
      %v499 = vunpack.c.l.b16 %v330
      %v500 = vunpack.c.l.b16 %v331
      %v501 = vpack.c.b16 %v430, %v429
      %v502 = vpack.c.b16 %v432, %v431
      %v503 = vpack.c.b16 %v434, %v433
      %v504 = vpack.c.b16 %v436, %v435
      %v505 = vpack.c.b16 %v438, %v437
      %v506 = vpack.c.b16 %v440, %v439
      %v507 = vpack.c.b16 %v442, %v441
      %v508 = vpack.c.b16 %v444, %v443
      %v509 = vpack.c.b16 %v446, %v445
      %v510 = vpack.c.b16 %v448, %v447
      %v511 = vpack.c.b16 %v450, %v449
      %v512 = vpack.c.b16 %v452, %v451
      %v513 = vpack.c.b16 %v454, %v453
      %v514 = vpack.c.b16 %v456, %v455
      %v515 = vpack.c.b16 %v458, %v457
      %v516 = vpack.c.b16 %v460, %v459
      %v517 = vpack.c.b16 %v462, %v461
      %v518 = vpack.c.b16 %v464, %v463
      %v519 = vpack.c.b16 %v466, %v465
      %v520 = vpack.c.b16 %v468, %v467
      %v521 = vpack.c.b16 %v470, %v469
      %v522 = vpack.c.b16 %v472, %v471
      %v523 = vpack.c.b16 %v474, %v473
      %v524 = vpack.c.b16 %v476, %v475
      %v525 = vpack.c.b16 %v478, %v477
      %v526 = vpack.c.b16 %v480, %v479
      %v527 = vpack.c.b16 %v482, %v481
      %v528 = vpack.c.b16 %v484, %v483
      %v529 = vpack.c.b16 %v486, %v485
      %v530 = vpack.c.b16 %v488, %v487
      %v531 = vpack.c.b16 %v490, %v489
      %v532 = vpack.c.b16 %v492, %v491
      %v533 = vpack.c.b16 %v494, %v493
      %v534 = vpack.c.b16 %v496, %v495
      %v535 = vpack.c.b16 %v498, %v497
      %v536 = vpack.c.b16 %v500, %v499
      %vm573 = vcmask 523264
      %v575 = vsel %vm573, %v352, 0
      %577 = vmatprep.subr.bf16.mxu0 0
      %578 = vmatpush1.bf16.msra.mxu0 %v501
      %579 = vmatprep.subr.bf16.mxu0 0
      %580 = vmatpush1.bf16.msra.mxu0 %v502
      %581 = vmatprep.subr.bf16.mxu0 0
      %582 = vmatpush1.bf16.msra.mxu0 %v503
      %583 = vmatprep.subr.bf16.mxu0 0
      %584 = vmatpush1.bf16.msra.mxu0 %v504
      %585 = vmatprep.subr.bf16.mxu0 0
      %586 = vmatpush1.bf16.msra.mxu0 %v505
      %587 = vmatprep.subr.bf16.mxu0 0
      %588 = vmatpush1.bf16.msra.mxu0 %v506
      %589 = vmatprep.subr.bf16.mxu0 0
      %590 = vmatpush1.bf16.msra.mxu0 %v507
      %591 = vmatprep.subr.bf16.mxu0 0
      %592 = vmatpush1.bf16.msra.mxu0 %v508
      %593 = vmatprep.subr.bf16.mxu0 0
      %594 = vmatpush1.bf16.msra.mxu0 %v509
      %595 = vmatprep.subr.bf16.mxu0 0
      %596 = vmatpush1.bf16.msra.mxu0 %v510
      %597 = vmatprep.subr.bf16.mxu0 0
      %598 = vmatpush1.bf16.msra.mxu0 %v511
      %599 = vmatprep.subr.bf16.mxu0 0
      %600 = vmatpush1.bf16.msra.mxu0 %v512
      %601 = vmatprep.subr.bf16.mxu0 0
      %602 = vmatpush1.bf16.msra.mxu0 %v513
      %603 = vmatprep.subr.bf16.mxu0 0
      %604 = vmatpush1.bf16.msra.mxu0 %v514
      %605 = vmatprep.subr.bf16.mxu0 0
      %606 = vmatpush1.bf16.msra.mxu0 %v515
      %607 = vmatprep.subr.bf16.mxu0 0
      %608 = vmatpush1.bf16.msra.mxu0 %v516
      %609 = vmatprep.mubr.bf16.mxu0 %v349
      %610 = vmatmul.mubr.bf16.gmra.mrb[0].mxu0 %v348
      %v611 = vpop.f32.mrb[0].mxu0
      %v612 = vadd.f32 0.0, %v611
      %v613 = vpop.f32.mrb[0].mxu0
      %v614 = vpop.f32.mrb[0].mxu0
      %v615 = vadd.f32 0.0, %v614
      %v616 = vpop.f32.mrb[0].mxu0
      %617 = vdwg.mxu0
      %618 = vmatprep.subr.bf16.mxu0 0
      %619 = vmatpush1.bf16.msra.mxu0 %v517
      %620 = vmatprep.subr.bf16.mxu0 0
      %621 = vmatpush1.bf16.msra.mxu0 %v518
      %622 = vmatprep.subr.bf16.mxu0 0
      %623 = vmatpush1.bf16.msra.mxu0 %v519
      %624 = vmatprep.subr.bf16.mxu0 0
      %625 = vmatpush1.bf16.msra.mxu0 %v520
      %626 = vmatprep.subr.bf16.mxu0 0
      %627 = vmatpush1.bf16.msra.mxu0 %v521
      %628 = vmatprep.subr.bf16.mxu0 0
      %629 = vmatpush1.bf16.msra.mxu0 %v522
      %630 = vmatprep.subr.bf16.mxu0 0
      %631 = vmatpush1.bf16.msra.mxu0 %v523
      %632 = vmatprep.subr.bf16.mxu0 0
      %633 = vmatpush1.bf16.msra.mxu0 %v524
      %634 = vmatprep.subr.bf16.mxu0 0
      %635 = vmatpush1.bf16.msra.mxu0 %v525
      %636 = vmatprep.subr.bf16.mxu0 0
      %637 = vmatpush1.bf16.msra.mxu0 %v526
      %638 = vmatprep.subr.bf16.mxu0 0
      %639 = vmatpush1.bf16.msra.mxu0 %v527
      %640 = vmatprep.subr.bf16.mxu0 0
      %641 = vmatpush1.bf16.msra.mxu0 %v528
      %642 = vmatprep.subr.bf16.mxu0 0
      %643 = vmatpush1.bf16.msra.mxu0 %v529
      %644 = vmatprep.subr.bf16.mxu0 0
      %645 = vmatpush1.bf16.msra.mxu0 %v530
      %646 = vmatprep.subr.bf16.mxu0 0
      %647 = vmatpush1.bf16.msra.mxu0 %v531
      %648 = vmatprep.subr.bf16.mxu0 0
      %649 = vmatpush1.bf16.msra.mxu0 %v532
      %650 = vmatprep.mubr.bf16.mxu0 %v351
      %651 = vmatmul.mubr.bf16.gmra.mrb[0].mxu0 %v350
      %v652 = vpop.f32.mrb[0].mxu0
      %v653 = vadd.f32 %v612, %v652
      %v654 = vpop.f32.mrb[0].mxu0
      %v655 = vpop.f32.mrb[0].mxu0
      %v656 = vadd.f32 %v615, %v655
      %v657 = vpop.f32.mrb[0].mxu0
      %658 = vdwg.mxu0
      %659 = vmatprep.subr.bf16.mxu0 0
      %660 = vmatpush1.bf16.msra.mxu0 %v533
      %661 = vmatprep.subr.bf16.mxu0 0
      %662 = vmatpush1.bf16.msra.mxu0 %v534
      %663 = vmatprep.subr.bf16.mxu0 0
      %664 = vmatpush1.bf16.msra.mxu0 %v535
      %665 = vmatprep.subr.bf16.mxu0 0
      %666 = vmatpush1.bf16.msra.mxu0 %v536
      %667 = vmatprep.subr.bf16.mxu0 0
      %668 = vmatpush1.bf16.msra.mxu0 0
      %669 = vmatprep.subr.bf16.mxu0 0
      %670 = vmatpush1.bf16.msra.mxu0 0
      %671 = vmatprep.subr.bf16.mxu0 0
      %672 = vmatpush1.bf16.msra.mxu0 0
      %673 = vmatprep.subr.bf16.mxu0 0
      %674 = vmatpush1.bf16.msra.mxu0 0
      %675 = vmatprep.subr.bf16.mxu0 0
      %676 = vmatpush1.bf16.msra.mxu0 0
      %677 = vmatprep.subr.bf16.mxu0 0
      %678 = vmatpush1.bf16.msra.mxu0 0
      %679 = vmatprep.subr.bf16.mxu0 0
      %680 = vmatpush1.bf16.msra.mxu0 0
      %681 = vmatprep.subr.bf16.mxu0 0
      %682 = vmatpush1.bf16.msra.mxu0 0
      %683 = vmatprep.subr.bf16.mxu0 0
      %684 = vmatpush1.bf16.msra.mxu0 0
      %685 = vmatprep.subr.bf16.mxu0 0
      %686 = vmatpush1.bf16.msra.mxu0 0
      %687 = vmatprep.subr.bf16.mxu0 0
      %688 = vmatpush1.bf16.msra.mxu0 0
      %689 = vmatprep.subr.bf16.mxu0 0
      %690 = vmatpush1.bf16.msra.mxu0 0
      %691 = vmatprep.mubr.bf16.mxu0 0
      %692 = vmatmul.mubr.bf16.gmra.mrb[0].mxu0 %v575
      %v693 = vpop.f32.mrb[0].mxu0
      %v694 = vadd.f32 %v653, %v693
      %v695 = vpop.f32.mrb[0].mxu0
      %v696 = vpop.f32.mrb[0].mxu0
      %v697 = vadd.f32 %v656, %v696
      %v698 = vpop.f32.mrb[0].mxu0
      %699 = vdwg.mxu0
      %v700 = vld [vmem:[%s2] sm:$0x1]
      %v702 = vlaneseq
      %v703 = vshrl.u32 %v702, 7
      %v704 = vsub.s32 0, %v703
      %v705 = vrot.slane %v700, %v704
      %v707 = vmul.f32 %v694, %v705
      %v708 = vmul.f32 %v697, %v705
      %v709 = vld [vmem:[%s3] sm:$0x1]
      %v711 = vlaneseq
      %v712 = vshrl.u32 %v711, 7
      %v713 = vsub.s32 0, %v712
      %v714 = vrot.slane %v709, %v713
      %v716 = vadd.f32 %v707, %v714
      %v717 = vadd.f32 %v708, %v714
      %v718 = vld [vmem:[%s245] sm:$0xf]
      %v719 = vld [vmem:[%s245 + $0x4] sm:$0xf]
      %v720 = vunpack.c.l.bf16 %v718
      %v721 = vunpack.c.l.bf16 %v719
      %v722 = vadd.f32 %v716, %v720
      %v723 = vadd.f32 %v717, %v721
      %v724 = vmax.f32 %v722, 0.0
      %v725 = vmax.f32 %v723, 0.0
      %v726 = vpack.c.bf16 %v725, %v724
      %v728 = vunpack.c.l.b16 %v726
      %v729 = vunpack.c.h.b16 %v726
      %v730 = vpack.c.b16 %v728, %v728
      %v731 = vpack.c.b16 %v729, %v729
      %734 = vst [vmem:[%s251] sm:$0xf] %v730
      %735 = vst [vmem:[%s251 + $0x4] sm:$0xf] %v731
      %s736 = smul.u32 2, %s16
      %p737 = scmp.lt.s32.totalorder %s736, 3
      %s738 = scalar_select %p737, %s736, 3
      %s739 = smul.addr %s738, 4
      %s740 = scalar_lea.vmem %s5, %s739
      // Predicated region
      $region41: #{shrinknet_forward.18} parent=39 // pred_check
        %p741 = pneg %p149
      $region42: #{shrinknet_forward.18} parent=39 // pred_check_branch
        %743 = sbr.rel (%p741) target = $region44
      $region43: #{shrinknet_forward.18} parent=39 // pred_region
        %s744 = smul.u32 2, %s16
      $region44: #{shrinknet_forward.18} parent=39 // pred_fallthru
        _
    $region40: #{shrinknet_forward.18} parent=5 // pred_fallthru
      _
    %p745 = scmp.le.s32.totalorder 2, %s11
    // Predicated region
    $region45: #{shrinknet_forward.18} parent=5 // pred_check
      %p746 = pneg %p745
    $region46: #{shrinknet_forward.18} parent=5 // pred_check_branch
      %748 = sbr.rel (%p746) target = $region48
    $region47: #{shrinknet_forward.18} parent=5 // pred_region
      %s749 = ssub.s32 %s11, 2
      // Predicated region
      $region49: #{shrinknet_forward.18} parent=47 // pred_check
        %p750 = pneg %p155
      $region50: #{shrinknet_forward.18} parent=47 // pred_check_branch
        %752 = sbr.rel (%p750) target = $region52
      $region51: #{shrinknet_forward.18} parent=47 // pred_region
        %s753 = smul.u32 2, %s17
        %p754 = scmp.lt.s32.totalorder %s753, 3
        %s755 = scalar_select %p754, %s753, 3
        %s756 = smul.addr %s755, 4
        %s757 = scalar_lea.vmem %s5, %s756
      $region52: #{shrinknet_forward.18} parent=47 // pred_fallthru
        _
    $region48: #{shrinknet_forward.18} parent=5 // pred_fallthru
      _
  $region6: #{shrinknet_forward.18} parent=0 // loop_footer
    %s15 = sadd.s32 1, %s11
  $region7: #{shrinknet_forward.18} parent=0 // loop_footer_branch
    %10 = sbr.rel target = $region3
  $region8: #{shrinknet_forward.18} parent=0 // loop_exit
    _

</llo_original>
